<compile_context>
chip_gen: v7x
topology: tpu7x:2x2x1
jax: 0.10.0
libtpu: 0.0.40
codegen_flags: <defaults>
</compile_context>

<pallas_src>
import math

import jax
import jax.numpy as jnp
from jax.experimental import pallas as pl
from jax.experimental.pallas import tpu as pltpu

# ----------------------------- model config ---------------------------------
ENCODER_VOCAB = 24
DECODER_VOCAB = 28
EMBED_DIM = 32
SEQ_LEN = 8
NUM_HEADS = 4
HEAD_DIM = EMBED_DIM // NUM_HEADS
NUM_ENC_LAYERS = 2
NUM_DEC_LAYERS = 2
FFN_DIM = 64
PAD_INDEX = 0          # english_characters_to_index[PADDING_TOKEN]
BATCH = 2
LN_EPS = 1e-5
ATTN_SCALE = 1.0 / math.sqrt(HEAD_DIM)


# ----------------------- in-kernel building blocks ---------------------------
def _mm(a, b):
    """MXU matmul, bf16 operands / f32 accumulation."""
    return jnp.dot(a.astype(jnp.bfloat16), b.astype(jnp.bfloat16),
                   preferred_element_type=jnp.float32)


def _mm_nt(a, b):
    """a @ b.T (transposed-RHS matmul) on the MXU, bf16 operands / f32 accum."""
    return jax.lax.dot_general(
        a.astype(jnp.bfloat16), b.astype(jnp.bfloat16),
        dimension_numbers=(((1,), (1,)), ((), ())),
        preferred_element_type=jnp.float32)


def _softmax_last(s):
    s = s - jnp.max(s, axis=-1, keepdims=True)
    p = jnp.exp(s)
    # divide on the EUP slot instead of the VALU
    return p * pl.reciprocal(jnp.sum(p, axis=-1, keepdims=True), approx=True)


def _add_ln(x, res, g, b):
    x = x + res
    mean = jnp.mean(x, axis=-1, keepdims=True)
    var = jnp.mean((x - mean) ** 2, axis=-1, keepdims=True)
    return (x - mean) * jax.lax.rsqrt(var + LN_EPS) * g + b


def _mha(q, k, v, mask, wo_w, wo_b):
    """q/k/v: (S, E) f32; mask: (S, S) additive; wo_w: (E, E) bf16; wo_b: (1, E)."""
    heads = []
    for h in range(NUM_HEADS):
        sl = slice(h * HEAD_DIM, (h + 1) * HEAD_DIM)
        s = _mm_nt(q[:, sl], k[:, sl]) * ATTN_SCALE + mask          # (S, S)
        p = _softmax_last(s)
        heads.append(_mm(p, v[:, sl]))                              # (S, D)
    o = jnp.concatenate(heads, axis=-1)                             # (S, E)
    return _mm(o, wo_w) + wo_b


def _ffn(x, w1, b1, w2, b2):
    h = jnp.maximum(_mm(x, w1) + b1, 0.0)
    return _mm(h, w2) + b2


# ----------------------------- fused kernels ---------------------------------
def _encoder_kernel(x_ref, mask_ref,
                    qkv_w, qkv_b, wo_w, wo_b, ln1_g, ln1_b,
                    ff1_w, ff1_b, ff2_w, ff2_b, ln2_g, ln2_b,
                    o_ref):
    # One grid point == one batch element; whole encoder stack stays in VMEM.
    x = x_ref[...]                     # (S, E) f32
    mask = mask_ref[...]               # (S, S) additive
    for l in range(NUM_ENC_LAYERS):
        qkv = _mm(x, qkv_w[l]) + qkv_b[l]                 # fused QKV, N = 3E
        q = qkv[:, :EMBED_DIM]
        k = qkv[:, EMBED_DIM:2 * EMBED_DIM]
        v = qkv[:, 2 * EMBED_DIM:]
        attn = _mha(q, k, v, mask, wo_w[l], wo_b[l])
        x = _add_ln(attn, x, ln1_g[l], ln1_b[l])
        ff = _ffn(x, ff1_w[l], ff1_b[l], ff2_w[l], ff2_b[l])
        x = _add_ln(ff, x, ln2_g[l], ln2_b[l])
    o_ref[...] = x


def _decoder_kernel(y_ref, enc_ref, smask_ref, cmask_ref, lab_ref,
                    sa_qkv_w, sa_qkv_b, sa_wo_w, sa_wo_b, ln1_g, ln1_b,
                    ca_q_w, ca_q_b, ca_kv_w, ca_kv_b, ca_wo_w, ca_wo_b,
                    ln2_g, ln2_b,
                    ff1_w, ff1_b, ff2_w, ff2_b, ln3_g, ln3_b,
                    fin_wt, fin_b, fin_bt,
                    logits_ref, loss_ref):
    y = y_ref[...]                     # (S, E)
    enc = enc_ref[...]                 # (S, E)
    smask = smask_ref[...]             # (S, S)
    cmask = cmask_ref[...]             # (S, S)
    labels = lab_ref[...]              # (1, S) int32

    for l in range(NUM_DEC_LAYERS):
        # masked self-attention (fused QKV)
        qkv = _mm(y, sa_qkv_w[l]) + sa_qkv_b[l]
        q = qkv[:, :EMBED_DIM]
        k = qkv[:, EMBED_DIM:2 * EMBED_DIM]
        v = qkv[:, 2 * EMBED_DIM:]
        sa = _mha(q, k, v, smask, sa_wo_w[l], sa_wo_b[l])
        y = _add_ln(sa, y, ln1_g[l], ln1_b[l])

        # cross-attention (Q from decoder, fused KV from encoder output)
        q = _mm(y, ca_q_w[l]) + ca_q_b[l]
        kv = _mm(enc, ca_kv_w[l]) + ca_kv_b[l]
        k = kv[:, :EMBED_DIM]
        v = kv[:, EMBED_DIM:]
        ca = _mha(q, k, v, cmask, ca_wo_w[l], ca_wo_b[l])
        y = _add_ln(ca, y, ln2_g[l], ln2_b[l])

        # feed-forward
        ff = _ffn(y, ff1_w[l], ff1_b[l], ff2_w[l], ff2_b[l])
        y = _add_ln(ff, y, ln3_g[l], ln3_b[l])

    # final projection (weight passed transposed: (V, E))
    wt = fin_wt[...]
    logits = _mm_nt(y, wt) + fin_b[...]                    # (S, V)
    logits_ref[...] = logits

    # cross-entropy with ignore_index, reduction='none', computed in the
    # transposed (V, S) layout so the loss store is a lane-dense (1, S) row.
    lt = _mm_nt(wt, y) + fin_bt[...]                       # (V, S)
    m = jnp.max(lt, axis=0, keepdims=True)                 # (1, S)
    lse = jnp.log(jnp.sum(jnp.exp(lt - m), axis=0, keepdims=True)) + m
    rows = jax.lax.broadcasted_iota(jnp.int32, (DECODER_VOCAB, SEQ_LEN), 0)
    picked = jnp.sum(jnp.where(rows == labels, lt, 0.0), axis=0, keepdims=True)
    loss = jnp.where(labels == PAD_INDEX, 0.0, lse - picked)   # (1, S)
    loss_ref[...] = loss


# ----------------------------- pallas_call wrappers ---------------------------
def _batch_spec(shape):
    """Per-batch block: squeeze leading batch dim, full extent elsewhere."""
    nd = len(shape)
    return pl.BlockSpec((None,) + tuple(shape[1:]),
                        lambda b: (b,) + (0,) * (nd - 1))


def _full_spec(shape):
    """Whole array as one block, same block for every grid step (weights)."""
    nd = len(shape)
    return pl.BlockSpec(tuple(shape), lambda b: (0,) * nd)


_ENC_KEYS = ("qkv_w", "qkv_b", "wo_w", "wo_b", "ln1_g", "ln1_b",
             "ff1_w", "ff1_b", "ff2_w", "ff2_b", "ln2_g", "ln2_b")
_DEC_KEYS = ("sa_qkv_w", "sa_qkv_b", "sa_wo_w", "sa_wo_b", "ln1_g", "ln1_b",
             "ca_q_w", "ca_q_b", "ca_kv_w", "ca_kv_b", "ca_wo_w", "ca_wo_b",
             "ln2_g", "ln2_b",
             "ff1_w", "ff1_b", "ff2_w", "ff2_b", "ln3_g", "ln3_b")


def encoder_stack(x_emb, mask, ep):
    data = [x_emb, mask]
    weights = [ep[k] for k in _ENC_KEYS]
    return pl.pallas_call(
        _encoder_kernel,
        out_shape=jax.ShapeDtypeStruct((BATCH, SEQ_LEN, EMBED_DIM), jnp.float32),
        grid=(BATCH,),
        in_specs=[_batch_spec(a.shape) for a in data]
                 + [_full_spec(w.shape) for w in weights],
        out_specs=_batch_spec((BATCH, SEQ_LEN, EMBED_DIM)),
        compiler_params=pltpu.CompilerParams(dimension_semantics=("parallel",)),
    )(*data, *weights)


def decoder_stack(y_emb, enc_out, smask, cmask, labels, dp, fin_wt, fin_b, fin_bt):
    data = [y_emb, enc_out, smask, cmask, labels]
    weights = [dp[k] for k in _DEC_KEYS] + [fin_wt, fin_b, fin_bt]
    out_shape = (jax.ShapeDtypeStruct((BATCH, SEQ_LEN, DECODER_VOCAB), jnp.float32),
                 jax.ShapeDtypeStruct((BATCH, 1, SEQ_LEN), jnp.float32))
    out_specs = (_batch_spec((BATCH, SEQ_LEN, DECODER_VOCAB)),
                 _batch_spec((BATCH, 1, SEQ_LEN)))
    return pl.pallas_call(
        _decoder_kernel,
        out_shape=out_shape,
        grid=(BATCH,),
        in_specs=[_batch_spec(a.shape) for a in data]
                 + [_full_spec(w.shape) for w in weights],
        out_specs=out_specs,
        compiler_params=pltpu.CompilerParams(dimension_semantics=("parallel",)),
    )(*data, *weights)


# ----------------------------- model glue ------------------------------------
def positional_encoding(seq_len, embed_dim):
    pos = jnp.arange(seq_len, dtype=jnp.float32)[:, None]
    i = jnp.arange(embed_dim, dtype=jnp.float32)[None, :]
    angle = pos / jnp.power(10000.0, (2.0 * jnp.floor(i / 2.0)) / embed_dim)
    pe = jnp.where(jnp.mod(jnp.arange(embed_dim), 2) == 0,
                   jnp.sin(angle), jnp.cos(angle))
    return pe  # (S, E)


def transformer_forward(params, encoder_input, decoder_input_x, decoder_input_y,
                        encoder_self_mask, decoder_self_mask, decoder_cross_mask):
    pe = positional_encoding(SEQ_LEN, EMBED_DIM)

    # embedding gather + positional encoding kept in plain JAX (glue)
    enc_x = params["enc_emb"][encoder_input] + pe[None, :, :]       # (B,S,E)
    dec_x = params["dec_emb"][decoder_input_x] + pe[None, :, :]     # (B,S,E)

    enc_mask = encoder_self_mask.reshape(BATCH, SEQ_LEN, SEQ_LEN)
    self_mask = decoder_self_mask.reshape(BATCH, SEQ_LEN, SEQ_LEN)
    cross_mask = decoder_cross_mask.reshape(BATCH, SEQ_LEN, SEQ_LEN)

    enc_out = encoder_stack(enc_x, enc_mask, params["enc"])         # (B,S,E)

    labels = decoder_input_y.reshape(BATCH, 1, SEQ_LEN).astype(jnp.int32)
    logits, loss = decoder_stack(dec_x, enc_out, self_mask, cross_mask, labels,
                                 params["dec"], params["fin_wt"],
                                 params["fin_b"], params["fin_bt"])
    return logits, loss.reshape(BATCH * SEQ_LEN)


# ----------------------------- parameter init --------------------------------
def init_params(key):
    keys = iter(jax.random.split(key, 256))
    E, F, Le, Ld, V = EMBED_DIM, FFN_DIM, NUM_ENC_LAYERS, NUM_DEC_LAYERS, DECODER_VOCAB

    def w(fan_in, fan_out):
        return (jax.random.normal(next(keys), (fan_in, fan_out), jnp.float32)
                / math.sqrt(fan_in))

    def stack_w(n, fan_in, fan_out):
        # matmul weights stored bf16 (MXU-native on v6e/v7x, fine on v5e)
        return jnp.stack([w(fan_in, fan_out) for _ in range(n)]).astype(jnp.bfloat16)

    def zeros_b(n, fan_out):
        return jnp.zeros((n, 1, fan_out), jnp.float32)

    def ones_g(n):
        return jnp.ones((n, 1, E), jnp.float32)

    def zeros_g(n):
        return jnp.zeros((n, 1, E), jnp.float32)

    enc = dict(
        qkv_w=stack_w(Le, E, 3 * E), qkv_b=zeros_b(Le, 3 * E),
        wo_w=stack_w(Le, E, E), wo_b=zeros_b(Le, E),
        ln1_g=ones_g(Le), ln1_b=zeros_g(Le),
        ff1_w=stack_w(Le, E, F), ff1_b=zeros_b(Le, F),
        ff2_w=stack_w(Le, F, E), ff2_b=zeros_b(Le, E),
        ln2_g=ones_g(Le), ln2_b=zeros_g(Le),
    )
    dec = dict(
        sa_qkv_w=stack_w(Ld, E, 3 * E), sa_qkv_b=zeros_b(Ld, 3 * E),
        sa_wo_w=stack_w(Ld, E, E), sa_wo_b=zeros_b(Ld, E),
        ln1_g=ones_g(Ld), ln1_b=zeros_g(Ld),
        ca_q_w=stack_w(Ld, E, E), ca_q_b=zeros_b(Ld, E),
        ca_kv_w=stack_w(Ld, E, 2 * E), ca_kv_b=zeros_b(Ld, 2 * E),
        ca_wo_w=stack_w(Ld, E, E), ca_wo_b=zeros_b(Ld, E),
        ln2_g=ones_g(Ld), ln2_b=zeros_g(Ld),
        ff1_w=stack_w(Ld, E, F), ff1_b=zeros_b(Ld, F),
        ff2_w=stack_w(Ld, F, E), ff2_b=zeros_b(Ld, E),
        ln3_g=ones_g(Ld), ln3_b=zeros_g(Ld),
    )
    fin_w = w(E, V)
    fin_b = jnp.zeros((1, V), jnp.float32)
    params = {
        "enc_emb": jax.random.normal(next(keys), (ENCODER_VOCAB, E), jnp.float32) * 0.02,
        "dec_emb": jax.random.normal(next(keys), (V, E), jnp.float32) * 0.02,
        "enc": enc,
        "dec": dec,
        "fin_wt": fin_w.T.astype(jnp.bfloat16),   # (V, E), used for both matmul orientations
        "fin_b": fin_b,                           # (1, V)
        "fin_bt": fin_b.reshape(V, 1),            # (V, 1) for the transposed CE path
    }
    return params


# ----------------------------- main -------------------------------------------
if __name__ == "__main__":
    key = jax.random.PRNGKey(0)
    k_params, k_enc, k_decx, k_decy = jax.random.split(key, 4)

    params = init_params(k_params)

    encoder_input = jax.random.randint(k_enc, (BATCH, SEQ_LEN), 0, ENCODER_VOCAB, jnp.int32)
    decoder_input_x = jax.random.randint(k_decx, (BATCH, SEQ_LEN), 0, DECODER_VOCAB, jnp.int32)
    decoder_input_y = jax.random.randint(k_decy, (BATCH, SEQ_LEN), 0, DECODER_VOCAB, jnp.int32)
    # make a few target positions padding so ignore_index path is exercised
    decoder_input_y = decoder_input_y.at[:, -2:].set(PAD_INDEX)

    # additive masks: 0.0 keep, -1e9 masked
    encoder_self_mask = jnp.zeros((BATCH, 1, SEQ_LEN, SEQ_LEN), jnp.float32)
    causal = jnp.where(jnp.tril(jnp.ones((SEQ_LEN, SEQ_LEN), jnp.float32)) == 1.0, 0.0, -1e9)
    decoder_self_mask = jnp.broadcast_to(causal[None, None], (BATCH, 1, SEQ_LEN, SEQ_LEN))
    decoder_cross_mask = jnp.zeros((BATCH, 1, SEQ_LEN, SEQ_LEN), jnp.float32)

    fwd = jax.jit(transformer_forward)
    logits, loss = fwd(params, encoder_input, decoder_input_x, decoder_input_y,
                       encoder_self_mask, decoder_self_mask, decoder_cross_mask)
    jax.block_until_ready((logits, loss))

    assert logits.shape == (BATCH, SEQ_LEN, DECODER_VOCAB)
    assert loss.shape == (BATCH * SEQ_LEN,)
    assert bool(jnp.all(jnp.isfinite(logits))) and bool(jnp.all(jnp.isfinite(loss)))
    # loss at padding targets must be exactly zero (reduction='none' + ignore_index)
    assert bool(jnp.all(loss.reshape(BATCH, SEQ_LEN)[:, -2:] == 0.0))
    # TODO(synk): dropout layers are identity here (eval-mode forward); training-time
    # stochastic dropout would use pltpu.prng_seed / pltpu.stateful_bernoulli.
    print("KERNEL_OK")
</pallas_src>

<mosaic_0001>
module attributes {stable_mosaic.version = 11 : i64} {
  func.func @_encoder_kernel(%arg0: i32, %arg1: memref<1x8x32xf32, #tpu.memory_space<vmem>>, %arg2: memref<1x8x8xf32, #tpu.memory_space<vmem>>, %arg3: memref<2x32x96xbf16, #tpu.memory_space<vmem>>, %arg4: memref<2x1x96xf32, #tpu.memory_space<vmem>>, %arg5: memref<2x32x32xbf16, #tpu.memory_space<vmem>>, %arg6: memref<2x1x32xf32, #tpu.memory_space<vmem>>, %arg7: memref<2x1x32xf32, #tpu.memory_space<vmem>>, %arg8: memref<2x1x32xf32, #tpu.memory_space<vmem>>, %arg9: memref<2x32x64xbf16, #tpu.memory_space<vmem>>, %arg10: memref<2x1x64xf32, #tpu.memory_space<vmem>>, %arg11: memref<2x64x32xbf16, #tpu.memory_space<vmem>>, %arg12: memref<2x1x32xf32, #tpu.memory_space<vmem>>, %arg13: memref<2x1x32xf32, #tpu.memory_space<vmem>>, %arg14: memref<2x1x32xf32, #tpu.memory_space<vmem>>, %arg15: memref<1x8x32xf32, #tpu.memory_space<vmem>>) attributes {dimension_semantics = [#tpu.dimension_semantics<parallel>], iteration_bounds = array<i64: 2>, scalar_prefetch = 0 : i64, scratch_operands = 0 : i64, tpu.core_type = #tpu.core_type<tc>, window_params = [{transform_indices = @transform_0, window_bounds = array<i64: 1, 8, 32>}, {transform_indices = @transform_1, window_bounds = array<i64: 1, 8, 8>}, {pipeline_mode = #tpu.pipeline_mode<synchronous>, transform_indices = @transform_2, window_bounds = array<i64: 2, 32, 96>}, {pipeline_mode = #tpu.pipeline_mode<synchronous>, transform_indices = @transform_3, window_bounds = array<i64: 2, 1, 96>}, {pipeline_mode = #tpu.pipeline_mode<synchronous>, transform_indices = @transform_4, window_bounds = array<i64: 2, 32, 32>}, {pipeline_mode = #tpu.pipeline_mode<synchronous>, transform_indices = @transform_5, window_bounds = array<i64: 2, 1, 32>}, {pipeline_mode = #tpu.pipeline_mode<synchronous>, transform_indices = @transform_6, window_bounds = array<i64: 2, 1, 32>}, {pipeline_mode = #tpu.pipeline_mode<synchronous>, transform_indices = @transform_7, window_bounds = array<i64: 2, 1, 32>}, {pipeline_mode = #tpu.pipeline_mode<synchronous>, transform_indices = @transform_8, window_bounds = array<i64: 2, 32, 64>}, {pipeline_mode = #tpu.pipeline_mode<synchronous>, transform_indices = @transform_9, window_bounds = array<i64: 2, 1, 64>}, {pipeline_mode = #tpu.pipeline_mode<synchronous>, transform_indices = @transform_10, window_bounds = array<i64: 2, 64, 32>}, {pipeline_mode = #tpu.pipeline_mode<synchronous>, transform_indices = @transform_11, window_bounds = array<i64: 2, 1, 32>}, {pipeline_mode = #tpu.pipeline_mode<synchronous>, transform_indices = @transform_12, window_bounds = array<i64: 2, 1, 32>}, {pipeline_mode = #tpu.pipeline_mode<synchronous>, transform_indices = @transform_13, window_bounds = array<i64: 2, 1, 32>}, {transform_indices = @transform_14, window_bounds = array<i64: 1, 8, 32>}]} {
    %c0 = arith.constant 0 : index
    %c0_0 = arith.constant 0 : index
    %c0_1 = arith.constant 0 : index
    %0 = vector.load %arg1[%c0, %c0_0, %c0_1] : memref<1x8x32xf32, #tpu.memory_space<vmem>>, vector<1x8x32xf32>
    %1 = vector.shape_cast %0 : vector<1x8x32xf32> to vector<8x32xf32>
    %c0_2 = arith.constant 0 : index
    %c0_3 = arith.constant 0 : index
    %c0_4 = arith.constant 0 : index
    %2 = vector.load %arg2[%c0_2, %c0_3, %c0_4] : memref<1x8x8xf32, #tpu.memory_space<vmem>>, vector<1x8x8xf32>
    %3 = vector.shape_cast %2 : vector<1x8x8xf32> to vector<8x8xf32>
    %c0_5 = arith.constant 0 : index
    %c0_6 = arith.constant 0 : index
    %c0_7 = arith.constant 0 : index
    %4 = vector.load %arg3[%c0_5, %c0_6, %c0_7] : memref<2x32x96xbf16, #tpu.memory_space<vmem>>, vector<1x32x96xbf16>
    %5 = vector.shape_cast %4 : vector<1x32x96xbf16> to vector<32x96xbf16>
    %6 = arith.truncf %1 : vector<8x32xf32> to vector<8x32xbf16>
    %cst = arith.constant dense<0.000000e+00> : vector<8x96xf32>
    %7 = tpu.matmul %6, %5, %cst {dimension_numbers = #tpu.dot_dimension_numbers<[1], [0], [0], [1], [0, 0, 1, 1], [], []>} : vector<8x32xbf16>, vector<32x96xbf16>, vector<8x96xf32> -> vector<8x96xf32>
    %c0_8 = arith.constant 0 : index
    %c0_9 = arith.constant 0 : index
    %c0_10 = arith.constant 0 : index
    %8 = vector.load %arg4[%c0_8, %c0_9, %c0_10] : memref<2x1x96xf32, #tpu.memory_space<vmem>>, vector<1x1x96xf32>
    %9 = vector.shape_cast %8 : vector<1x1x96xf32> to vector<1x96xf32>
    %10 = vector.broadcast %9 : vector<1x96xf32> to vector<8x96xf32>
    %11 = arith.addf %7, %10 : vector<8x96xf32>
    %12 = vector.extract_strided_slice %11 {offsets = [0, 0], sizes = [8, 32], strides = [1, 1]} : vector<8x96xf32> to vector<8x32xf32>
    %13 = vector.extract_strided_slice %11 {offsets = [0, 32], sizes = [8, 32], strides = [1, 1]} : vector<8x96xf32> to vector<8x32xf32>
    %14 = vector.extract_strided_slice %11 {offsets = [0, 64], sizes = [8, 32], strides = [1, 1]} : vector<8x96xf32> to vector<8x32xf32>
    %c0_11 = arith.constant 0 : index
    %c0_12 = arith.constant 0 : index
    %c0_13 = arith.constant 0 : index
    %15 = vector.load %arg5[%c0_11, %c0_12, %c0_13] : memref<2x32x32xbf16, #tpu.memory_space<vmem>>, vector<1x32x32xbf16>
    %16 = vector.shape_cast %15 : vector<1x32x32xbf16> to vector<32x32xbf16>
    %c0_14 = arith.constant 0 : index
    %c0_15 = arith.constant 0 : index
    %c0_16 = arith.constant 0 : index
    %17 = vector.load %arg6[%c0_14, %c0_15, %c0_16] : memref<2x1x32xf32, #tpu.memory_space<vmem>>, vector<1x1x32xf32>
    %18 = vector.shape_cast %17 : vector<1x1x32xf32> to vector<1x32xf32>
    %19 = vector.extract_strided_slice %12 {offsets = [0, 0], sizes = [8, 8], strides = [1, 1]} : vector<8x32xf32> to vector<8x8xf32>
    %20 = vector.extract_strided_slice %13 {offsets = [0, 0], sizes = [8, 8], strides = [1, 1]} : vector<8x32xf32> to vector<8x8xf32>
    %21 = arith.truncf %19 : vector<8x8xf32> to vector<8x8xbf16>
    %22 = arith.truncf %20 : vector<8x8xf32> to vector<8x8xbf16>
    %cst_17 = arith.constant dense<0.000000e+00> : vector<8x8xf32>
    %23 = tpu.matmul %21, %22, %cst_17 {dimension_numbers = #tpu.dot_dimension_numbers<[1], [1], [0], [0], [0, 0, 1, 0], [], []>} : vector<8x8xbf16>, vector<8x8xbf16>, vector<8x8xf32> -> vector<8x8xf32>
    %cst_18 = arith.constant 0.353553385 : f32
    %24 = vector.broadcast %cst_18 : f32 to vector<8x8xf32>
    %25 = arith.mulf %23, %24 : vector<8x8xf32>
    %26 = arith.addf %25, %3 : vector<8x8xf32>
    %cst_19 = arith.constant dense<0xFF800000> : vector<8xf32>
    %27 = vector.multi_reduction <maximumf>, %26, %cst_19 [1] : vector<8x8xf32> to vector<8xf32>
    %28 = vector.shape_cast %27 : vector<8xf32> to vector<8x1xf32>
    %29 = vector.broadcast %28 : vector<8x1xf32> to vector<8x8xf32>
    %30 = arith.subf %26, %29 : vector<8x8xf32>
    %31 = math.exp %30 : vector<8x8xf32>
    %cst_20 = arith.constant dense<0.000000e+00> : vector<8xf32>
    %32 = vector.multi_reduction <add>, %31, %cst_20 [1] : vector<8x8xf32> to vector<8xf32>
    %33 = vector.shape_cast %32 : vector<8xf32> to vector<8x1xf32>
    %34 = tpu.reciprocal %33 {approx = true} : vector<8x1xf32> -> vector<8x1xf32>
    %35 = vector.broadcast %34 : vector<8x1xf32> to vector<8x8xf32>
    %36 = arith.mulf %31, %35 : vector<8x8xf32>
    %37 = vector.extract_strided_slice %14 {offsets = [0, 0], sizes = [8, 8], strides = [1, 1]} : vector<8x32xf32> to vector<8x8xf32>
    %38 = arith.truncf %36 : vector<8x8xf32> to vector<8x8xbf16>
    %39 = arith.truncf %37 : vector<8x8xf32> to vector<8x8xbf16>
    %cst_21 = arith.constant dense<0.000000e+00> : vector<8x8xf32>
    %40 = tpu.matmul %38, %39, %cst_21 {dimension_numbers = #tpu.dot_dimension_numbers<[1], [0], [0], [1], [0, 0, 1, 1], [], []>} : vector<8x8xbf16>, vector<8x8xbf16>, vector<8x8xf32> -> vector<8x8xf32>
    %41 = vector.extract_strided_slice %12 {offsets = [0, 8], sizes = [8, 8], strides = [1, 1]} : vector<8x32xf32> to vector<8x8xf32>
    %42 = vector.extract_strided_slice %13 {offsets = [0, 8], sizes = [8, 8], strides = [1, 1]} : vector<8x32xf32> to vector<8x8xf32>
    %43 = arith.truncf %41 : vector<8x8xf32> to vector<8x8xbf16>
    %44 = arith.truncf %42 : vector<8x8xf32> to vector<8x8xbf16>
    %cst_22 = arith.constant dense<0.000000e+00> : vector<8x8xf32>
    %45 = tpu.matmul %43, %44, %cst_22 {dimension_numbers = #tpu.dot_dimension_numbers<[1], [1], [0], [0], [0, 0, 1, 0], [], []>} : vector<8x8xbf16>, vector<8x8xbf16>, vector<8x8xf32> -> vector<8x8xf32>
    %cst_23 = arith.constant 0.353553385 : f32
    %46 = vector.broadcast %cst_23 : f32 to vector<8x8xf32>
    %47 = arith.mulf %45, %46 : vector<8x8xf32>
    %48 = arith.addf %47, %3 : vector<8x8xf32>
    %cst_24 = arith.constant dense<0xFF800000> : vector<8xf32>
    %49 = vector.multi_reduction <maximumf>, %48, %cst_24 [1] : vector<8x8xf32> to vector<8xf32>
    %50 = vector.shape_cast %49 : vector<8xf32> to vector<8x1xf32>
    %51 = vector.broadcast %50 : vector<8x1xf32> to vector<8x8xf32>
    %52 = arith.subf %48, %51 : vector<8x8xf32>
    %53 = math.exp %52 : vector<8x8xf32>
    %cst_25 = arith.constant dense<0.000000e+00> : vector<8xf32>
    %54 = vector.multi_reduction <add>, %53, %cst_25 [1] : vector<8x8xf32> to vector<8xf32>
    %55 = vector.shape_cast %54 : vector<8xf32> to vector<8x1xf32>
    %56 = tpu.reciprocal %55 {approx = true} : vector<8x1xf32> -> vector<8x1xf32>
    %57 = vector.broadcast %56 : vector<8x1xf32> to vector<8x8xf32>
    %58 = arith.mulf %53, %57 : vector<8x8xf32>
    %59 = vector.extract_strided_slice %14 {offsets = [0, 8], sizes = [8, 8], strides = [1, 1]} : vector<8x32xf32> to vector<8x8xf32>
    %60 = arith.truncf %58 : vector<8x8xf32> to vector<8x8xbf16>
    %61 = arith.truncf %59 : vector<8x8xf32> to vector<8x8xbf16>
    %cst_26 = arith.constant dense<0.000000e+00> : vector<8x8xf32>
    %62 = tpu.matmul %60, %61, %cst_26 {dimension_numbers = #tpu.dot_dimension_numbers<[1], [0], [0], [1], [0, 0, 1, 1], [], []>} : vector<8x8xbf16>, vector<8x8xbf16>, vector<8x8xf32> -> vector<8x8xf32>
    %63 = vector.extract_strided_slice %12 {offsets = [0, 16], sizes = [8, 8], strides = [1, 1]} : vector<8x32xf32> to vector<8x8xf32>
    %64 = vector.extract_strided_slice %13 {offsets = [0, 16], sizes = [8, 8], strides = [1, 1]} : vector<8x32xf32> to vector<8x8xf32>
    %65 = arith.truncf %63 : vector<8x8xf32> to vector<8x8xbf16>
    %66 = arith.truncf %64 : vector<8x8xf32> to vector<8x8xbf16>
    %cst_27 = arith.constant dense<0.000000e+00> : vector<8x8xf32>
    %67 = tpu.matmul %65, %66, %cst_27 {dimension_numbers = #tpu.dot_dimension_numbers<[1], [1], [0], [0], [0, 0, 1, 0], [], []>} : vector<8x8xbf16>, vector<8x8xbf16>, vector<8x8xf32> -> vector<8x8xf32>
    %cst_28 = arith.constant 0.353553385 : f32
    %68 = vector.broadcast %cst_28 : f32 to vector<8x8xf32>
    %69 = arith.mulf %67, %68 : vector<8x8xf32>
    %70 = arith.addf %69, %3 : vector<8x8xf32>
    %cst_29 = arith.constant dense<0xFF800000> : vector<8xf32>
    %71 = vector.multi_reduction <maximumf>, %70, %cst_29 [1] : vector<8x8xf32> to vector<8xf32>
    %72 = vector.shape_cast %71 : vector<8xf32> to vector<8x1xf32>
    %73 = vector.broadcast %72 : vector<8x1xf32> to vector<8x8xf32>
    %74 = arith.subf %70, %73 : vector<8x8xf32>
    %75 = math.exp %74 : vector<8x8xf32>
    %cst_30 = arith.constant dense<0.000000e+00> : vector<8xf32>
    %76 = vector.multi_reduction <add>, %75, %cst_30 [1] : vector<8x8xf32> to vector<8xf32>
    %77 = vector.shape_cast %76 : vector<8xf32> to vector<8x1xf32>
    %78 = tpu.reciprocal %77 {approx = true} : vector<8x1xf32> -> vector<8x1xf32>
    %79 = vector.broadcast %78 : vector<8x1xf32> to vector<8x8xf32>
    %80 = arith.mulf %75, %79 : vector<8x8xf32>
    %81 = vector.extract_strided_slice %14 {offsets = [0, 16], sizes = [8, 8], strides = [1, 1]} : vector<8x32xf32> to vector<8x8xf32>
    %82 = arith.truncf %80 : vector<8x8xf32> to vector<8x8xbf16>
    %83 = arith.truncf %81 : vector<8x8xf32> to vector<8x8xbf16>
    %cst_31 = arith.constant dense<0.000000e+00> : vector<8x8xf32>
    %84 = tpu.matmul %82, %83, %cst_31 {dimension_numbers = #tpu.dot_dimension_numbers<[1], [0], [0], [1], [0, 0, 1, 1], [], []>} : vector<8x8xbf16>, vector<8x8xbf16>, vector<8x8xf32> -> vector<8x8xf32>
    %85 = vector.extract_strided_slice %12 {offsets = [0, 24], sizes = [8, 8], strides = [1, 1]} : vector<8x32xf32> to vector<8x8xf32>
    %86 = vector.extract_strided_slice %13 {offsets = [0, 24], sizes = [8, 8], strides = [1, 1]} : vector<8x32xf32> to vector<8x8xf32>
    %87 = arith.truncf %85 : vector<8x8xf32> to vector<8x8xbf16>
    %88 = arith.truncf %86 : vector<8x8xf32> to vector<8x8xbf16>
    %cst_32 = arith.constant dense<0.000000e+00> : vector<8x8xf32>
    %89 = tpu.matmul %87, %88, %cst_32 {dimension_numbers = #tpu.dot_dimension_numbers<[1], [1], [0], [0], [0, 0, 1, 0], [], []>} : vector<8x8xbf16>, vector<8x8xbf16>, vector<8x8xf32> -> vector<8x8xf32>
    %cst_33 = arith.constant 0.353553385 : f32
    %90 = vector.broadcast %cst_33 : f32 to vector<8x8xf32>
    %91 = arith.mulf %89, %90 : vector<8x8xf32>
    %92 = arith.addf %91, %3 : vector<8x8xf32>
    %cst_34 = arith.constant dense<0xFF800000> : vector<8xf32>
    %93 = vector.multi_reduction <maximumf>, %92, %cst_34 [1] : vector<8x8xf32> to vector<8xf32>
    %94 = vector.shape_cast %93 : vector<8xf32> to vector<8x1xf32>
    %95 = vector.broadcast %94 : vector<8x1xf32> to vector<8x8xf32>
    %96 = arith.subf %92, %95 : vector<8x8xf32>
    %97 = math.exp %96 : vector<8x8xf32>
    %cst_35 = arith.constant dense<0.000000e+00> : vector<8xf32>
    %98 = vector.multi_reduction <add>, %97, %cst_35 [1] : vector<8x8xf32> to vector<8xf32>
    %99 = vector.shape_cast %98 : vector<8xf32> to vector<8x1xf32>
    %100 = tpu.reciprocal %99 {approx = true} : vector<8x1xf32> -> vector<8x1xf32>
    %101 = vector.broadcast %100 : vector<8x1xf32> to vector<8x8xf32>
    %102 = arith.mulf %97, %101 : vector<8x8xf32>
    %103 = vector.extract_strided_slice %14 {offsets = [0, 24], sizes = [8, 8], strides = [1, 1]} : vector<8x32xf32> to vector<8x8xf32>
    %104 = arith.truncf %102 : vector<8x8xf32> to vector<8x8xbf16>
    %105 = arith.truncf %103 : vector<8x8xf32> to vector<8x8xbf16>
    %cst_36 = arith.constant dense<0.000000e+00> : vector<8x8xf32>
    %106 = tpu.matmul %104, %105, %cst_36 {dimension_numbers = #tpu.dot_dimension_numbers<[1], [0], [0], [1], [0, 0, 1, 1], [], []>} : vector<8x8xbf16>, vector<8x8xbf16>, vector<8x8xf32> -> vector<8x8xf32>
    %107 = tpu.concatenate %40, %62, %84, %106 in 1 : vector<8x8xf32>, vector<8x8xf32>, vector<8x8xf32>, vector<8x8xf32> -> vector<8x32xf32>
    %108 = arith.truncf %107 : vector<8x32xf32> to vector<8x32xbf16>
    %cst_37 = arith.constant dense<0.000000e+00> : vector<8x32xf32>
    %109 = tpu.matmul %108, %16, %cst_37 {dimension_numbers = #tpu.dot_dimension_numbers<[1], [0], [0], [1], [0, 0, 1, 1], [], []>} : vector<8x32xbf16>, vector<32x32xbf16>, vector<8x32xf32> -> vector<8x32xf32>
    %110 = vector.broadcast %18 : vector<1x32xf32> to vector<8x32xf32>
    %111 = arith.addf %109, %110 : vector<8x32xf32>
    %c0_38 = arith.constant 0 : index
    %c0_39 = arith.constant 0 : index
    %c0_40 = arith.constant 0 : index
    %112 = vector.load %arg7[%c0_38, %c0_39, %c0_40] : memref<2x1x32xf32, #tpu.memory_space<vmem>>, vector<1x1x32xf32>
    %113 = vector.shape_cast %112 : vector<1x1x32xf32> to vector<1x32xf32>
    %c0_41 = arith.constant 0 : index
    %c0_42 = arith.constant 0 : index
    %c0_43 = arith.constant 0 : index
    %114 = vector.load %arg8[%c0_41, %c0_42, %c0_43] : memref<2x1x32xf32, #tpu.memory_space<vmem>>, vector<1x1x32xf32>
    %115 = vector.shape_cast %114 : vector<1x1x32xf32> to vector<1x32xf32>
    %116 = arith.addf %111, %1 : vector<8x32xf32>
    %cst_44 = arith.constant dense<0.000000e+00> : vector<8xf32>
    %117 = vector.multi_reduction <add>, %116, %cst_44 [1] : vector<8x32xf32> to vector<8xf32>
    %118 = vector.shape_cast %117 : vector<8xf32> to vector<8x1xf32>
    %cst_45 = arith.constant 3.200000e+01 : f32
    %119 = vector.broadcast %cst_45 : f32 to vector<8x1xf32>
    %120 = arith.divf %118, %119 : vector<8x1xf32>
    %121 = vector.broadcast %120 : vector<8x1xf32> to vector<8x32xf32>
    %122 = arith.subf %116, %121 : vector<8x32xf32>
    %123 = arith.mulf %122, %122 : vector<8x32xf32>
    %cst_46 = arith.constant dense<0.000000e+00> : vector<8xf32>
    %124 = vector.multi_reduction <add>, %123, %cst_46 [1] : vector<8x32xf32> to vector<8xf32>
    %125 = vector.shape_cast %124 : vector<8xf32> to vector<8x1xf32>
    %cst_47 = arith.constant 3.200000e+01 : f32
    %126 = vector.broadcast %cst_47 : f32 to vector<8x1xf32>
    %127 = arith.divf %125, %126 : vector<8x1xf32>
    %128 = vector.broadcast %120 : vector<8x1xf32> to vector<8x32xf32>
    %129 = arith.subf %116, %128 : vector<8x32xf32>
    %cst_48 = arith.constant 9.99999974E-6 : f32
    %130 = vector.broadcast %cst_48 : f32 to vector<8x1xf32>
    %131 = arith.addf %127, %130 : vector<8x1xf32>
    %132 = math.rsqrt %131 : vector<8x1xf32>
    %133 = vector.broadcast %132 : vector<8x1xf32> to vector<8x32xf32>
    %134 = arith.mulf %129, %133 : vector<8x32xf32>
    %135 = vector.broadcast %113 : vector<1x32xf32> to vector<8x32xf32>
    %136 = arith.mulf %134, %135 : vector<8x32xf32>
    %137 = vector.broadcast %115 : vector<1x32xf32> to vector<8x32xf32>
    %138 = arith.addf %136, %137 : vector<8x32xf32>
    %c0_49 = arith.constant 0 : index
    %c0_50 = arith.constant 0 : index
    %c0_51 = arith.constant 0 : index
    %139 = vector.load %arg9[%c0_49, %c0_50, %c0_51] : memref<2x32x64xbf16, #tpu.memory_space<vmem>>, vector<1x32x64xbf16>
    %140 = vector.shape_cast %139 : vector<1x32x64xbf16> to vector<32x64xbf16>
    %c0_52 = arith.constant 0 : index
    %c0_53 = arith.constant 0 : index
    %c0_54 = arith.constant 0 : index
    %141 = vector.load %arg10[%c0_52, %c0_53, %c0_54] : memref<2x1x64xf32, #tpu.memory_space<vmem>>, vector<1x1x64xf32>
    %142 = vector.shape_cast %141 : vector<1x1x64xf32> to vector<1x64xf32>
    %c0_55 = arith.constant 0 : index
    %c0_56 = arith.constant 0 : index
    %c0_57 = arith.constant 0 : index
    %143 = vector.load %arg11[%c0_55, %c0_56, %c0_57] : memref<2x64x32xbf16, #tpu.memory_space<vmem>>, vector<1x64x32xbf16>
    %144 = vector.shape_cast %143 : vector<1x64x32xbf16> to vector<64x32xbf16>
    %c0_58 = arith.constant 0 : index
    %c0_59 = arith.constant 0 : index
    %c0_60 = arith.constant 0 : index
    %145 = vector.load %arg12[%c0_58, %c0_59, %c0_60] : memref<2x1x32xf32, #tpu.memory_space<vmem>>, vector<1x1x32xf32>
    %146 = vector.shape_cast %145 : vector<1x1x32xf32> to vector<1x32xf32>
    %147 = arith.truncf %138 : vector<8x32xf32> to vector<8x32xbf16>
    %cst_61 = arith.constant dense<0.000000e+00> : vector<8x64xf32>
    %148 = tpu.matmul %147, %140, %cst_61 {dimension_numbers = #tpu.dot_dimension_numbers<[1], [0], [0], [1], [0, 0, 1, 1], [], []>} : vector<8x32xbf16>, vector<32x64xbf16>, vector<8x64xf32> -> vector<8x64xf32>
    %149 = vector.broadcast %142 : vector<1x64xf32> to vector<8x64xf32>
    %150 = arith.addf %148, %149 : vector<8x64xf32>
    %cst_62 = arith.constant 0.000000e+00 : f32
    %151 = vector.broadcast %cst_62 : f32 to vector<8x64xf32>
    %152 = arith.maximumf %150, %151 : vector<8x64xf32>
    %153 = arith.truncf %152 : vector<8x64xf32> to vector<8x64xbf16>
    %cst_63 = arith.constant dense<0.000000e+00> : vector<8x32xf32>
    %154 = tpu.matmul %153, %144, %cst_63 {dimension_numbers = #tpu.dot_dimension_numbers<[1], [0], [0], [1], [0, 0, 1, 1], [], []>} : vector<8x64xbf16>, vector<64x32xbf16>, vector<8x32xf32> -> vector<8x32xf32>
    %155 = vector.broadcast %146 : vector<1x32xf32> to vector<8x32xf32>
    %156 = arith.addf %154, %155 : vector<8x32xf32>
    %c0_64 = arith.constant 0 : index
    %c0_65 = arith.constant 0 : index
    %c0_66 = arith.constant 0 : index
    %157 = vector.load %arg13[%c0_64, %c0_65, %c0_66] : memref<2x1x32xf32, #tpu.memory_space<vmem>>, vector<1x1x32xf32>
    %158 = vector.shape_cast %157 : vector<1x1x32xf32> to vector<1x32xf32>
    %c0_67 = arith.constant 0 : index
    %c0_68 = arith.constant 0 : index
    %c0_69 = arith.constant 0 : index
    %159 = vector.load %arg14[%c0_67, %c0_68, %c0_69] : memref<2x1x32xf32, #tpu.memory_space<vmem>>, vector<1x1x32xf32>
    %160 = vector.shape_cast %159 : vector<1x1x32xf32> to vector<1x32xf32>
    %161 = arith.addf %156, %138 : vector<8x32xf32>
    %cst_70 = arith.constant dense<0.000000e+00> : vector<8xf32>
    %162 = vector.multi_reduction <add>, %161, %cst_70 [1] : vector<8x32xf32> to vector<8xf32>
    %163 = vector.shape_cast %162 : vector<8xf32> to vector<8x1xf32>
    %cst_71 = arith.constant 3.200000e+01 : f32
    %164 = vector.broadcast %cst_71 : f32 to vector<8x1xf32>
    %165 = arith.divf %163, %164 : vector<8x1xf32>
    %166 = vector.broadcast %165 : vector<8x1xf32> to vector<8x32xf32>
    %167 = arith.subf %161, %166 : vector<8x32xf32>
    %168 = arith.mulf %167, %167 : vector<8x32xf32>
    %cst_72 = arith.constant dense<0.000000e+00> : vector<8xf32>
    %169 = vector.multi_reduction <add>, %168, %cst_72 [1] : vector<8x32xf32> to vector<8xf32>
    %170 = vector.shape_cast %169 : vector<8xf32> to vector<8x1xf32>
    %cst_73 = arith.constant 3.200000e+01 : f32
    %171 = vector.broadcast %cst_73 : f32 to vector<8x1xf32>
    %172 = arith.divf %170, %171 : vector<8x1xf32>
    %173 = vector.broadcast %165 : vector<8x1xf32> to vector<8x32xf32>
    %174 = arith.subf %161, %173 : vector<8x32xf32>
    %cst_74 = arith.constant 9.99999974E-6 : f32
    %175 = vector.broadcast %cst_74 : f32 to vector<8x1xf32>
    %176 = arith.addf %172, %175 : vector<8x1xf32>
    %177 = math.rsqrt %176 : vector<8x1xf32>
    %178 = vector.broadcast %177 : vector<8x1xf32> to vector<8x32xf32>
    %179 = arith.mulf %174, %178 : vector<8x32xf32>
    %180 = vector.broadcast %158 : vector<1x32xf32> to vector<8x32xf32>
    %181 = arith.mulf %179, %180 : vector<8x32xf32>
    %182 = vector.broadcast %160 : vector<1x32xf32> to vector<8x32xf32>
    %183 = arith.addf %181, %182 : vector<8x32xf32>
    %c1 = arith.constant 1 : index
    %c0_75 = arith.constant 0 : index
    %c0_76 = arith.constant 0 : index
    %184 = vector.load %arg3[%c1, %c0_75, %c0_76] : memref<2x32x96xbf16, #tpu.memory_space<vmem>>, vector<1x32x96xbf16>
    %185 = vector.shape_cast %184 : vector<1x32x96xbf16> to vector<32x96xbf16>
    %186 = arith.truncf %183 : vector<8x32xf32> to vector<8x32xbf16>
    %cst_77 = arith.constant dense<0.000000e+00> : vector<8x96xf32>
    %187 = tpu.matmul %186, %185, %cst_77 {dimension_numbers = #tpu.dot_dimension_numbers<[1], [0], [0], [1], [0, 0, 1, 1], [], []>} : vector<8x32xbf16>, vector<32x96xbf16>, vector<8x96xf32> -> vector<8x96xf32>
    %c1_78 = arith.constant 1 : index
    %c0_79 = arith.constant 0 : index
    %c0_80 = arith.constant 0 : index
    %188 = vector.load %arg4[%c1_78, %c0_79, %c0_80] : memref<2x1x96xf32, #tpu.memory_space<vmem>>, vector<1x1x96xf32>
    %189 = vector.shape_cast %188 : vector<1x1x96xf32> to vector<1x96xf32>
    %190 = vector.broadcast %189 : vector<1x96xf32> to vector<8x96xf32>
    %191 = arith.addf %187, %190 : vector<8x96xf32>
    %192 = vector.extract_strided_slice %191 {offsets = [0, 0], sizes = [8, 32], strides = [1, 1]} : vector<8x96xf32> to vector<8x32xf32>
    %193 = vector.extract_strided_slice %191 {offsets = [0, 32], sizes = [8, 32], strides = [1, 1]} : vector<8x96xf32> to vector<8x32xf32>
    %194 = vector.extract_strided_slice %191 {offsets = [0, 64], sizes = [8, 32], strides = [1, 1]} : vector<8x96xf32> to vector<8x32xf32>
    %c1_81 = arith.constant 1 : index
    %c0_82 = arith.constant 0 : index
    %c0_83 = arith.constant 0 : index
    %195 = vector.load %arg5[%c1_81, %c0_82, %c0_83] : memref<2x32x32xbf16, #tpu.memory_space<vmem>>, vector<1x32x32xbf16>
    %196 = vector.shape_cast %195 : vector<1x32x32xbf16> to vector<32x32xbf16>
    %c1_84 = arith.constant 1 : index
    %c0_85 = arith.constant 0 : index
    %c0_86 = arith.constant 0 : index
    %197 = vector.load %arg6[%c1_84, %c0_85, %c0_86] : memref<2x1x32xf32, #tpu.memory_space<vmem>>, vector<1x1x32xf32>
    %198 = vector.shape_cast %197 : vector<1x1x32xf32> to vector<1x32xf32>
    %199 = vector.extract_strided_slice %192 {offsets = [0, 0], sizes = [8, 8], strides = [1, 1]} : vector<8x32xf32> to vector<8x8xf32>
    %200 = vector.extract_strided_slice %193 {offsets = [0, 0], sizes = [8, 8], strides = [1, 1]} : vector<8x32xf32> to vector<8x8xf32>
    %201 = arith.truncf %199 : vector<8x8xf32> to vector<8x8xbf16>
    %202 = arith.truncf %200 : vector<8x8xf32> to vector<8x8xbf16>
    %cst_87 = arith.constant dense<0.000000e+00> : vector<8x8xf32>
    %203 = tpu.matmul %201, %202, %cst_87 {dimension_numbers = #tpu.dot_dimension_numbers<[1], [1], [0], [0], [0, 0, 1, 0], [], []>} : vector<8x8xbf16>, vector<8x8xbf16>, vector<8x8xf32> -> vector<8x8xf32>
    %cst_88 = arith.constant 0.353553385 : f32
    %204 = vector.broadcast %cst_88 : f32 to vector<8x8xf32>
    %205 = arith.mulf %203, %204 : vector<8x8xf32>
    %206 = arith.addf %205, %3 : vector<8x8xf32>
    %cst_89 = arith.constant dense<0xFF800000> : vector<8xf32>
    %207 = vector.multi_reduction <maximumf>, %206, %cst_89 [1] : vector<8x8xf32> to vector<8xf32>
    %208 = vector.shape_cast %207 : vector<8xf32> to vector<8x1xf32>
    %209 = vector.broadcast %208 : vector<8x1xf32> to vector<8x8xf32>
    %210 = arith.subf %206, %209 : vector<8x8xf32>
    %211 = math.exp %210 : vector<8x8xf32>
    %cst_90 = arith.constant dense<0.000000e+00> : vector<8xf32>
    %212 = vector.multi_reduction <add>, %211, %cst_90 [1] : vector<8x8xf32> to vector<8xf32>
    %213 = vector.shape_cast %212 : vector<8xf32> to vector<8x1xf32>
    %214 = tpu.reciprocal %213 {approx = true} : vector<8x1xf32> -> vector<8x1xf32>
    %215 = vector.broadcast %214 : vector<8x1xf32> to vector<8x8xf32>
    %216 = arith.mulf %211, %215 : vector<8x8xf32>
    %217 = vector.extract_strided_slice %194 {offsets = [0, 0], sizes = [8, 8], strides = [1, 1]} : vector<8x32xf32> to vector<8x8xf32>
    %218 = arith.truncf %216 : vector<8x8xf32> to vector<8x8xbf16>
    %219 = arith.truncf %217 : vector<8x8xf32> to vector<8x8xbf16>
    %cst_91 = arith.constant dense<0.000000e+00> : vector<8x8xf32>
    %220 = tpu.matmul %218, %219, %cst_91 {dimension_numbers = #tpu.dot_dimension_numbers<[1], [0], [0], [1], [0, 0, 1, 1], [], []>} : vector<8x8xbf16>, vector<8x8xbf16>, vector<8x8xf32> -> vector<8x8xf32>
    %221 = vector.extract_strided_slice %192 {offsets = [0, 8], sizes = [8, 8], strides = [1, 1]} : vector<8x32xf32> to vector<8x8xf32>
    %222 = vector.extract_strided_slice %193 {offsets = [0, 8], sizes = [8, 8], strides = [1, 1]} : vector<8x32xf32> to vector<8x8xf32>
    %223 = arith.truncf %221 : vector<8x8xf32> to vector<8x8xbf16>
    %224 = arith.truncf %222 : vector<8x8xf32> to vector<8x8xbf16>
    %cst_92 = arith.constant dense<0.000000e+00> : vector<8x8xf32>
    %225 = tpu.matmul %223, %224, %cst_92 {dimension_numbers = #tpu.dot_dimension_numbers<[1], [1], [0], [0], [0, 0, 1, 0], [], []>} : vector<8x8xbf16>, vector<8x8xbf16>, vector<8x8xf32> -> vector<8x8xf32>
    %cst_93 = arith.constant 0.353553385 : f32
    %226 = vector.broadcast %cst_93 : f32 to vector<8x8xf32>
    %227 = arith.mulf %225, %226 : vector<8x8xf32>
    %228 = arith.addf %227, %3 : vector<8x8xf32>
    %cst_94 = arith.constant dense<0xFF800000> : vector<8xf32>
    %229 = vector.multi_reduction <maximumf>, %228, %cst_94 [1] : vector<8x8xf32> to vector<8xf32>
    %230 = vector.shape_cast %229 : vector<8xf32> to vector<8x1xf32>
    %231 = vector.broadcast %230 : vector<8x1xf32> to vector<8x8xf32>
    %232 = arith.subf %228, %231 : vector<8x8xf32>
    %233 = math.exp %232 : vector<8x8xf32>
    %cst_95 = arith.constant dense<0.000000e+00> : vector<8xf32>
    %234 = vector.multi_reduction <add>, %233, %cst_95 [1] : vector<8x8xf32> to vector<8xf32>
    %235 = vector.shape_cast %234 : vector<8xf32> to vector<8x1xf32>
    %236 = tpu.reciprocal %235 {approx = true} : vector<8x1xf32> -> vector<8x1xf32>
    %237 = vector.broadcast %236 : vector<8x1xf32> to vector<8x8xf32>
    %238 = arith.mulf %233, %237 : vector<8x8xf32>
    %239 = vector.extract_strided_slice %194 {offsets = [0, 8], sizes = [8, 8], strides = [1, 1]} : vector<8x32xf32> to vector<8x8xf32>
    %240 = arith.truncf %238 : vector<8x8xf32> to vector<8x8xbf16>
    %241 = arith.truncf %239 : vector<8x8xf32> to vector<8x8xbf16>
    %cst_96 = arith.constant dense<0.000000e+00> : vector<8x8xf32>
    %242 = tpu.matmul %240, %241, %cst_96 {dimension_numbers = #tpu.dot_dimension_numbers<[1], [0], [0], [1], [0, 0, 1, 1], [], []>} : vector<8x8xbf16>, vector<8x8xbf16>, vector<8x8xf32> -> vector<8x8xf32>
    %243 = vector.extract_strided_slice %192 {offsets = [0, 16], sizes = [8, 8], strides = [1, 1]} : vector<8x32xf32> to vector<8x8xf32>
    %244 = vector.extract_strided_slice %193 {offsets = [0, 16], sizes = [8, 8], strides = [1, 1]} : vector<8x32xf32> to vector<8x8xf32>
    %245 = arith.truncf %243 : vector<8x8xf32> to vector<8x8xbf16>
    %246 = arith.truncf %244 : vector<8x8xf32> to vector<8x8xbf16>
    %cst_97 = arith.constant dense<0.000000e+00> : vector<8x8xf32>
    %247 = tpu.matmul %245, %246, %cst_97 {dimension_numbers = #tpu.dot_dimension_numbers<[1], [1], [0], [0], [0, 0, 1, 0], [], []>} : vector<8x8xbf16>, vector<8x8xbf16>, vector<8x8xf32> -> vector<8x8xf32>
    %cst_98 = arith.constant 0.353553385 : f32
    %248 = vector.broadcast %cst_98 : f32 to vector<8x8xf32>
    %249 = arith.mulf %247, %248 : vector<8x8xf32>
    %250 = arith.addf %249, %3 : vector<8x8xf32>
    %cst_99 = arith.constant dense<0xFF800000> : vector<8xf32>
    %251 = vector.multi_reduction <maximumf>, %250, %cst_99 [1] : vector<8x8xf32> to vector<8xf32>
    %252 = vector.shape_cast %251 : vector<8xf32> to vector<8x1xf32>
    %253 = vector.broadcast %252 : vector<8x1xf32> to vector<8x8xf32>
    %254 = arith.subf %250, %253 : vector<8x8xf32>
    %255 = math.exp %254 : vector<8x8xf32>
    %cst_100 = arith.constant dense<0.000000e+00> : vector<8xf32>
    %256 = vector.multi_reduction <add>, %255, %cst_100 [1] : vector<8x8xf32> to vector<8xf32>
    %257 = vector.shape_cast %256 : vector<8xf32> to vector<8x1xf32>
    %258 = tpu.reciprocal %257 {approx = true} : vector<8x1xf32> -> vector<8x1xf32>
    %259 = vector.broadcast %258 : vector<8x1xf32> to vector<8x8xf32>
    %260 = arith.mulf %255, %259 : vector<8x8xf32>
    %261 = vector.extract_strided_slice %194 {offsets = [0, 16], sizes = [8, 8], strides = [1, 1]} : vector<8x32xf32> to vector<8x8xf32>
    %262 = arith.truncf %260 : vector<8x8xf32> to vector<8x8xbf16>
    %263 = arith.truncf %261 : vector<8x8xf32> to vector<8x8xbf16>
    %cst_101 = arith.constant dense<0.000000e+00> : vector<8x8xf32>
    %264 = tpu.matmul %262, %263, %cst_101 {dimension_numbers = #tpu.dot_dimension_numbers<[1], [0], [0], [1], [0, 0, 1, 1], [], []>} : vector<8x8xbf16>, vector<8x8xbf16>, vector<8x8xf32> -> vector<8x8xf32>
    %265 = vector.extract_strided_slice %192 {offsets = [0, 24], sizes = [8, 8], strides = [1, 1]} : vector<8x32xf32> to vector<8x8xf32>
    %266 = vector.extract_strided_slice %193 {offsets = [0, 24], sizes = [8, 8], strides = [1, 1]} : vector<8x32xf32> to vector<8x8xf32>
    %267 = arith.truncf %265 : vector<8x8xf32> to vector<8x8xbf16>
    %268 = arith.truncf %266 : vector<8x8xf32> to vector<8x8xbf16>
    %cst_102 = arith.constant dense<0.000000e+00> : vector<8x8xf32>
    %269 = tpu.matmul %267, %268, %cst_102 {dimension_numbers = #tpu.dot_dimension_numbers<[1], [1], [0], [0], [0, 0, 1, 0], [], []>} : vector<8x8xbf16>, vector<8x8xbf16>, vector<8x8xf32> -> vector<8x8xf32>
    %cst_103 = arith.constant 0.353553385 : f32
    %270 = vector.broadcast %cst_103 : f32 to vector<8x8xf32>
    %271 = arith.mulf %269, %270 : vector<8x8xf32>
    %272 = arith.addf %271, %3 : vector<8x8xf32>
    %cst_104 = arith.constant dense<0xFF800000> : vector<8xf32>
    %273 = vector.multi_reduction <maximumf>, %272, %cst_104 [1] : vector<8x8xf32> to vector<8xf32>
    %274 = vector.shape_cast %273 : vector<8xf32> to vector<8x1xf32>
    %275 = vector.broadcast %274 : vector<8x1xf32> to vector<8x8xf32>
    %276 = arith.subf %272, %275 : vector<8x8xf32>
    %277 = math.exp %276 : vector<8x8xf32>
    %cst_105 = arith.constant dense<0.000000e+00> : vector<8xf32>
    %278 = vector.multi_reduction <add>, %277, %cst_105 [1] : vector<8x8xf32> to vector<8xf32>
    %279 = vector.shape_cast %278 : vector<8xf32> to vector<8x1xf32>
    %280 = tpu.reciprocal %279 {approx = true} : vector<8x1xf32> -> vector<8x1xf32>
    %281 = vector.broadcast %280 : vector<8x1xf32> to vector<8x8xf32>
    %282 = arith.mulf %277, %281 : vector<8x8xf32>
    %283 = vector.extract_strided_slice %194 {offsets = [0, 24], sizes = [8, 8], strides = [1, 1]} : vector<8x32xf32> to vector<8x8xf32>
    %284 = arith.truncf %282 : vector<8x8xf32> to vector<8x8xbf16>
    %285 = arith.truncf %283 : vector<8x8xf32> to vector<8x8xbf16>
    %cst_106 = arith.constant dense<0.000000e+00> : vector<8x8xf32>
    %286 = tpu.matmul %284, %285, %cst_106 {dimension_numbers = #tpu.dot_dimension_numbers<[1], [0], [0], [1], [0, 0, 1, 1], [], []>} : vector<8x8xbf16>, vector<8x8xbf16>, vector<8x8xf32> -> vector<8x8xf32>
    %287 = tpu.concatenate %220, %242, %264, %286 in 1 : vector<8x8xf32>, vector<8x8xf32>, vector<8x8xf32>, vector<8x8xf32> -> vector<8x32xf32>
    %288 = arith.truncf %287 : vector<8x32xf32> to vector<8x32xbf16>
    %cst_107 = arith.constant dense<0.000000e+00> : vector<8x32xf32>
    %289 = tpu.matmul %288, %196, %cst_107 {dimension_numbers = #tpu.dot_dimension_numbers<[1], [0], [0], [1], [0, 0, 1, 1], [], []>} : vector<8x32xbf16>, vector<32x32xbf16>, vector<8x32xf32> -> vector<8x32xf32>
    %290 = vector.broadcast %198 : vector<1x32xf32> to vector<8x32xf32>
    %291 = arith.addf %289, %290 : vector<8x32xf32>
    %c1_108 = arith.constant 1 : index
    %c0_109 = arith.constant 0 : index
    %c0_110 = arith.constant 0 : index
    %292 = vector.load %arg7[%c1_108, %c0_109, %c0_110] : memref<2x1x32xf32, #tpu.memory_space<vmem>>, vector<1x1x32xf32>
    %293 = vector.shape_cast %292 : vector<1x1x32xf32> to vector<1x32xf32>
    %c1_111 = arith.constant 1 : index
    %c0_112 = arith.constant 0 : index
    %c0_113 = arith.constant 0 : index
    %294 = vector.load %arg8[%c1_111, %c0_112, %c0_113] : memref<2x1x32xf32, #tpu.memory_space<vmem>>, vector<1x1x32xf32>
    %295 = vector.shape_cast %294 : vector<1x1x32xf32> to vector<1x32xf32>
    %296 = arith.addf %291, %183 : vector<8x32xf32>
    %cst_114 = arith.constant dense<0.000000e+00> : vector<8xf32>
    %297 = vector.multi_reduction <add>, %296, %cst_114 [1] : vector<8x32xf32> to vector<8xf32>
    %298 = vector.shape_cast %297 : vector<8xf32> to vector<8x1xf32>
    %cst_115 = arith.constant 3.200000e+01 : f32
    %299 = vector.broadcast %cst_115 : f32 to vector<8x1xf32>
    %300 = arith.divf %298, %299 : vector<8x1xf32>
    %301 = vector.broadcast %300 : vector<8x1xf32> to vector<8x32xf32>
    %302 = arith.subf %296, %301 : vector<8x32xf32>
    %303 = arith.mulf %302, %302 : vector<8x32xf32>
    %cst_116 = arith.constant dense<0.000000e+00> : vector<8xf32>
    %304 = vector.multi_reduction <add>, %303, %cst_116 [1] : vector<8x32xf32> to vector<8xf32>
    %305 = vector.shape_cast %304 : vector<8xf32> to vector<8x1xf32>
    %cst_117 = arith.constant 3.200000e+01 : f32
    %306 = vector.broadcast %cst_117 : f32 to vector<8x1xf32>
    %307 = arith.divf %305, %306 : vector<8x1xf32>
    %308 = vector.broadcast %300 : vector<8x1xf32> to vector<8x32xf32>
    %309 = arith.subf %296, %308 : vector<8x32xf32>
    %cst_118 = arith.constant 9.99999974E-6 : f32
    %310 = vector.broadcast %cst_118 : f32 to vector<8x1xf32>
    %311 = arith.addf %307, %310 : vector<8x1xf32>
    %312 = math.rsqrt %311 : vector<8x1xf32>
    %313 = vector.broadcast %312 : vector<8x1xf32> to vector<8x32xf32>
    %314 = arith.mulf %309, %313 : vector<8x32xf32>
    %315 = vector.broadcast %293 : vector<1x32xf32> to vector<8x32xf32>
    %316 = arith.mulf %314, %315 : vector<8x32xf32>
    %317 = vector.broadcast %295 : vector<1x32xf32> to vector<8x32xf32>
    %318 = arith.addf %316, %317 : vector<8x32xf32>
    %c1_119 = arith.constant 1 : index
    %c0_120 = arith.constant 0 : index
    %c0_121 = arith.constant 0 : index
    %319 = vector.load %arg9[%c1_119, %c0_120, %c0_121] : memref<2x32x64xbf16, #tpu.memory_space<vmem>>, vector<1x32x64xbf16>
    %320 = vector.shape_cast %319 : vector<1x32x64xbf16> to vector<32x64xbf16>
    %c1_122 = arith.constant 1 : index
    %c0_123 = arith.constant 0 : index
    %c0_124 = arith.constant 0 : index
    %321 = vector.load %arg10[%c1_122, %c0_123, %c0_124] : memref<2x1x64xf32, #tpu.memory_space<vmem>>, vector<1x1x64xf32>
    %322 = vector.shape_cast %321 : vector<1x1x64xf32> to vector<1x64xf32>
    %c1_125 = arith.constant 1 : index
    %c0_126 = arith.constant 0 : index
    %c0_127 = arith.constant 0 : index
    %323 = vector.load %arg11[%c1_125, %c0_126, %c0_127] : memref<2x64x32xbf16, #tpu.memory_space<vmem>>, vector<1x64x32xbf16>
    %324 = vector.shape_cast %323 : vector<1x64x32xbf16> to vector<64x32xbf16>
    %c1_128 = arith.constant 1 : index
    %c0_129 = arith.constant 0 : index
    %c0_130 = arith.constant 0 : index
    %325 = vector.load %arg12[%c1_128, %c0_129, %c0_130] : memref<2x1x32xf32, #tpu.memory_space<vmem>>, vector<1x1x32xf32>
    %326 = vector.shape_cast %325 : vector<1x1x32xf32> to vector<1x32xf32>
    %327 = arith.truncf %318 : vector<8x32xf32> to vector<8x32xbf16>
    %cst_131 = arith.constant dense<0.000000e+00> : vector<8x64xf32>
    %328 = tpu.matmul %327, %320, %cst_131 {dimension_numbers = #tpu.dot_dimension_numbers<[1], [0], [0], [1], [0, 0, 1, 1], [], []>} : vector<8x32xbf16>, vector<32x64xbf16>, vector<8x64xf32> -> vector<8x64xf32>
    %329 = vector.broadcast %322 : vector<1x64xf32> to vector<8x64xf32>
    %330 = arith.addf %328, %329 : vector<8x64xf32>
    %cst_132 = arith.constant 0.000000e+00 : f32
    %331 = vector.broadcast %cst_132 : f32 to vector<8x64xf32>
    %332 = arith.maximumf %330, %331 : vector<8x64xf32>
    %333 = arith.truncf %332 : vector<8x64xf32> to vector<8x64xbf16>
    %cst_133 = arith.constant dense<0.000000e+00> : vector<8x32xf32>
    %334 = tpu.matmul %333, %324, %cst_133 {dimension_numbers = #tpu.dot_dimension_numbers<[1], [0], [0], [1], [0, 0, 1, 1], [], []>} : vector<8x64xbf16>, vector<64x32xbf16>, vector<8x32xf32> -> vector<8x32xf32>
    %335 = vector.broadcast %326 : vector<1x32xf32> to vector<8x32xf32>
    %336 = arith.addf %334, %335 : vector<8x32xf32>
    %c1_134 = arith.constant 1 : index
    %c0_135 = arith.constant 0 : index
    %c0_136 = arith.constant 0 : index
    %337 = vector.load %arg13[%c1_134, %c0_135, %c0_136] : memref<2x1x32xf32, #tpu.memory_space<vmem>>, vector<1x1x32xf32>
    %338 = vector.shape_cast %337 : vector<1x1x32xf32> to vector<1x32xf32>
    %c1_137 = arith.constant 1 : index
    %c0_138 = arith.constant 0 : index
    %c0_139 = arith.constant 0 : index
    %339 = vector.load %arg14[%c1_137, %c0_138, %c0_139] : memref<2x1x32xf32, #tpu.memory_space<vmem>>, vector<1x1x32xf32>
    %340 = vector.shape_cast %339 : vector<1x1x32xf32> to vector<1x32xf32>
    %341 = arith.addf %336, %318 : vector<8x32xf32>
    %cst_140 = arith.constant dense<0.000000e+00> : vector<8xf32>
    %342 = vector.multi_reduction <add>, %341, %cst_140 [1] : vector<8x32xf32> to vector<8xf32>
    %343 = vector.shape_cast %342 : vector<8xf32> to vector<8x1xf32>
    %cst_141 = arith.constant 3.200000e+01 : f32
    %344 = vector.broadcast %cst_141 : f32 to vector<8x1xf32>
    %345 = arith.divf %343, %344 : vector<8x1xf32>
    %346 = vector.broadcast %345 : vector<8x1xf32> to vector<8x32xf32>
    %347 = arith.subf %341, %346 : vector<8x32xf32>
    %348 = arith.mulf %347, %347 : vector<8x32xf32>
    %cst_142 = arith.constant dense<0.000000e+00> : vector<8xf32>
    %349 = vector.multi_reduction <add>, %348, %cst_142 [1] : vector<8x32xf32> to vector<8xf32>
    %350 = vector.shape_cast %349 : vector<8xf32> to vector<8x1xf32>
    %cst_143 = arith.constant 3.200000e+01 : f32
    %351 = vector.broadcast %cst_143 : f32 to vector<8x1xf32>
    %352 = arith.divf %350, %351 : vector<8x1xf32>
    %353 = vector.broadcast %345 : vector<8x1xf32> to vector<8x32xf32>
    %354 = arith.subf %341, %353 : vector<8x32xf32>
    %cst_144 = arith.constant 9.99999974E-6 : f32
    %355 = vector.broadcast %cst_144 : f32 to vector<8x1xf32>
    %356 = arith.addf %352, %355 : vector<8x1xf32>
    %357 = math.rsqrt %356 : vector<8x1xf32>
    %358 = vector.broadcast %357 : vector<8x1xf32> to vector<8x32xf32>
    %359 = arith.mulf %354, %358 : vector<8x32xf32>
    %360 = vector.broadcast %338 : vector<1x32xf32> to vector<8x32xf32>
    %361 = arith.mulf %359, %360 : vector<8x32xf32>
    %362 = vector.broadcast %340 : vector<1x32xf32> to vector<8x32xf32>
    %363 = arith.addf %361, %362 : vector<8x32xf32>
    %c0_145 = arith.constant 0 : index
    %c0_146 = arith.constant 0 : index
    %c0_147 = arith.constant 0 : index
    %364 = vector.load %arg15[%c0_145, %c0_146, %c0_147] : memref<1x8x32xf32, #tpu.memory_space<vmem>>, vector<1x8x32xf32>
    %365 = vector.shape_cast %364 : vector<1x8x32xf32> to vector<8x32xf32>
    %366 = vector.shape_cast %363 : vector<8x32xf32> to vector<1x8x32xf32>
    tpu.vector_store %arg15[%c0_145, %c0_146, %c0_147], %366 {strides = array<i32>} : memref<1x8x32xf32, #tpu.memory_space<vmem>>, vector<1x8x32xf32>,
    return
  }
  func.func @transform_0(%arg0: i32) -> (i32, i32, i32) {
    %c0_i32 = arith.constant 0 : i32
    %c0_i32_0 = arith.constant 0 : i32
    %c0_i32_1 = arith.constant 0 : i32
    return %arg0, %c0_i32, %c0_i32_0 : i32, i32, i32
  }
  func.func @transform_1(%arg0: i32) -> (i32, i32, i32) {
    %c0_i32 = arith.constant 0 : i32
    %c0_i32_0 = arith.constant 0 : i32
    %c0_i32_1 = arith.constant 0 : i32
    return %arg0, %c0_i32, %c0_i32_0 : i32, i32, i32
  }
  func.func @transform_2(%arg0: i32) -> (i32, i32, i32) {
    %c0_i32 = arith.constant 0 : i32
    %c0_i32_0 = arith.constant 0 : i32
    %c0_i32_1 = arith.constant 0 : i32
    %c0_i32_2 = arith.constant 0 : i32
    return %c0_i32, %c0_i32_0, %c0_i32_1 : i32, i32, i32
  }
  func.func @transform_3(%arg0: i32) -> (i32, i32, i32) {
    %c0_i32 = arith.constant 0 : i32
    %c0_i32_0 = arith.constant 0 : i32
    %c0_i32_1 = arith.constant 0 : i32
    %c0_i32_2 = arith.constant 0 : i32
    return %c0_i32, %c0_i32_0, %c0_i32_1 : i32, i32, i32
  }
  func.func @transform_4(%arg0: i32) -> (i32, i32, i32) {
    %c0_i32 = arith.constant 0 : i32
    %c0_i32_0 = arith.constant 0 : i32
    %c0_i32_1 = arith.constant 0 : i32
    %c0_i32_2 = arith.constant 0 : i32
    return %c0_i32, %c0_i32_0, %c0_i32_1 : i32, i32, i32
  }
  func.func @transform_5(%arg0: i32) -> (i32, i32, i32) {
    %c0_i32 = arith.constant 0 : i32
    %c0_i32_0 = arith.constant 0 : i32
    %c0_i32_1 = arith.constant 0 : i32
    %c0_i32_2 = arith.constant 0 : i32
    return %c0_i32, %c0_i32_0, %c0_i32_1 : i32, i32, i32
  }
  func.func @transform_6(%arg0: i32) -> (i32, i32, i32) {
    %c0_i32 = arith.constant 0 : i32
    %c0_i32_0 = arith.constant 0 : i32
    %c0_i32_1 = arith.constant 0 : i32
    %c0_i32_2 = arith.constant 0 : i32
    return %c0_i32, %c0_i32_0, %c0_i32_1 : i32, i32, i32
  }
  func.func @transform_7(%arg0: i32) -> (i32, i32, i32) {
    %c0_i32 = arith.constant 0 : i32
    %c0_i32_0 = arith.constant 0 : i32
    %c0_i32_1 = arith.constant 0 : i32
    %c0_i32_2 = arith.constant 0 : i32
    return %c0_i32, %c0_i32_0, %c0_i32_1 : i32, i32, i32
  }
  func.func @transform_8(%arg0: i32) -> (i32, i32, i32) {
    %c0_i32 = arith.constant 0 : i32
    %c0_i32_0 = arith.constant 0 : i32
    %c0_i32_1 = arith.constant 0 : i32
    %c0_i32_2 = arith.constant 0 : i32
    return %c0_i32, %c0_i32_0, %c0_i32_1 : i32, i32, i32
  }
  func.func @transform_9(%arg0: i32) -> (i32, i32, i32) {
    %c0_i32 = arith.constant 0 : i32
    %c0_i32_0 = arith.constant 0 : i32
    %c0_i32_1 = arith.constant 0 : i32
    %c0_i32_2 = arith.constant 0 : i32
    return %c0_i32, %c0_i32_0, %c0_i32_1 : i32, i32, i32
  }
  func.func @transform_10(%arg0: i32) -> (i32, i32, i32) {
    %c0_i32 = arith.constant 0 : i32
    %c0_i32_0 = arith.constant 0 : i32
    %c0_i32_1 = arith.constant 0 : i32
    %c0_i32_2 = arith.constant 0 : i32
    return %c0_i32, %c0_i32_0, %c0_i32_1 : i32, i32, i32
  }
  func.func @transform_11(%arg0: i32) -> (i32, i32, i32) {
    %c0_i32 = arith.constant 0 : i32
    %c0_i32_0 = arith.constant 0 : i32
    %c0_i32_1 = arith.constant 0 : i32
    %c0_i32_2 = arith.constant 0 : i32
    return %c0_i32, %c0_i32_0, %c0_i32_1 : i32, i32, i32
  }
  func.func @transform_12(%arg0: i32) -> (i32, i32, i32) {
    %c0_i32 = arith.constant 0 : i32
    %c0_i32_0 = arith.constant 0 : i32
    %c0_i32_1 = arith.constant 0 : i32
    %c0_i32_2 = arith.constant 0 : i32
    return %c0_i32, %c0_i32_0, %c0_i32_1 : i32, i32, i32
  }
  func.func @transform_13(%arg0: i32) -> (i32, i32, i32) {
    %c0_i32 = arith.constant 0 : i32
    %c0_i32_0 = arith.constant 0 : i32
    %c0_i32_1 = arith.constant 0 : i32
    %c0_i32_2 = arith.constant 0 : i32
    return %c0_i32, %c0_i32_0, %c0_i32_1 : i32, i32, i32
  }
  func.func @transform_14(%arg0: i32) -> (i32, i32, i32) {
    %c0_i32 = arith.constant 0 : i32
    %c0_i32_0 = arith.constant 0 : i32
    %c0_i32_1 = arith.constant 0 : i32
    return %arg0, %c0_i32, %c0_i32_0 : i32, i32, i32
  }
}

module attributes {stable_mosaic.version = 11 : i64} {
  func.func @_decoder_kernel(%arg0: i32, %arg1: memref<1x8x32xf32, #tpu.memory_space<vmem>>, %arg2: memref<1x8x32xf32, #tpu.memory_space<vmem>>, %arg3: memref<1x8x8xf32, #tpu.memory_space<vmem>>, %arg4: memref<1x8x8xf32, #tpu.memory_space<vmem>>, %arg5: memref<1x1x8xi32, #tpu.memory_space<vmem>>, %arg6: memref<2x32x96xbf16, #tpu.memory_space<vmem>>, %arg7: memref<2x1x96xf32, #tpu.memory_space<vmem>>, %arg8: memref<2x32x32xbf16, #tpu.memory_space<vmem>>, %arg9: memref<2x1x32xf32, #tpu.memory_space<vmem>>, %arg10: memref<2x1x32xf32, #tpu.memory_space<vmem>>, %arg11: memref<2x1x32xf32, #tpu.memory_space<vmem>>, %arg12: memref<2x32x32xbf16, #tpu.memory_space<vmem>>, %arg13: memref<2x1x32xf32, #tpu.memory_space<vmem>>, %arg14: memref<2x32x64xbf16, #tpu.memory_space<vmem>>, %arg15: memref<2x1x64xf32, #tpu.memory_space<vmem>>, %arg16: memref<2x32x32xbf16, #tpu.memory_space<vmem>>, %arg17: memref<2x1x32xf32, #tpu.memory_space<vmem>>, %arg18: memref<2x1x32xf32, #tpu.memory_space<vmem>>, %arg19: memref<2x1x32xf32, #tpu.memory_space<vmem>>, %arg20: memref<2x32x64xbf16, #tpu.memory_space<vmem>>, %arg21: memref<2x1x64xf32, #tpu.memory_space<vmem>>, %arg22: memref<2x64x32xbf16, #tpu.memory_space<vmem>>, %arg23: memref<2x1x32xf32, #tpu.memory_space<vmem>>, %arg24: memref<2x1x32xf32, #tpu.memory_space<vmem>>, %arg25: memref<2x1x32xf32, #tpu.memory_space<vmem>>, %arg26: memref<28x32xbf16, #tpu.memory_space<vmem>>, %arg27: memref<1x28xf32, #tpu.memory_space<vmem>>, %arg28: memref<28x1xf32, #tpu.memory_space<vmem>>, %arg29: memref<1x8x28xf32, #tpu.memory_space<vmem>>, %arg30: memref<1x1x8xf32, #tpu.memory_space<vmem>>) attributes {dimension_semantics = [#tpu.dimension_semantics<parallel>], iteration_bounds = array<i64: 2>, scalar_prefetch = 0 : i64, scratch_operands = 0 : i64, tpu.core_type = #tpu.core_type<tc>, window_params = [{transform_indices = @transform_0, window_bounds = array<i64: 1, 8, 32>}, {transform_indices = @transform_1, window_bounds = array<i64: 1, 8, 32>}, {transform_indices = @transform_2, window_bounds = array<i64: 1, 8, 8>}, {transform_indices = @transform_3, window_bounds = array<i64: 1, 8, 8>}, {transform_indices = @transform_4, window_bounds = array<i64: 1, 1, 8>}, {pipeline_mode = #tpu.pipeline_mode<synchronous>, transform_indices = @transform_5, window_bounds = array<i64: 2, 32, 96>}, {pipeline_mode = #tpu.pipeline_mode<synchronous>, transform_indices = @transform_6, window_bounds = array<i64: 2, 1, 96>}, {pipeline_mode = #tpu.pipeline_mode<synchronous>, transform_indices = @transform_7, window_bounds = array<i64: 2, 32, 32>}, {pipeline_mode = #tpu.pipeline_mode<synchronous>, transform_indices = @transform_8, window_bounds = array<i64: 2, 1, 32>}, {pipeline_mode = #tpu.pipeline_mode<synchronous>, transform_indices = @transform_9, window_bounds = array<i64: 2, 1, 32>}, {pipeline_mode = #tpu.pipeline_mode<synchronous>, transform_indices = @transform_10, window_bounds = array<i64: 2, 1, 32>}, {pipeline_mode = #tpu.pipeline_mode<synchronous>, transform_indices = @transform_11, window_bounds = array<i64: 2, 32, 32>}, {pipeline_mode = #tpu.pipeline_mode<synchronous>, transform_indices = @transform_12, window_bounds = array<i64: 2, 1, 32>}, {pipeline_mode = #tpu.pipeline_mode<synchronous>, transform_indices = @transform_13, window_bounds = array<i64: 2, 32, 64>}, {pipeline_mode = #tpu.pipeline_mode<synchronous>, transform_indices = @transform_14, window_bounds = array<i64: 2, 1, 64>}, {pipeline_mode = #tpu.pipeline_mode<synchronous>, transform_indices = @transform_15, window_bounds = array<i64: 2, 32, 32>}, {pipeline_mode = #tpu.pipeline_mode<synchronous>, transform_indices = @transform_16, window_bounds = array<i64: 2, 1, 32>}, {pipeline_mode = #tpu.pipeline_mode<synchronous>, transform_indices = @transform_17, window_bounds = array<i64: 2, 1, 32>}, {pipeline_mode = #tpu.pipeline_mode<synchronous>, transform_indices = @transform_18, window_bounds = array<i64: 2, 1, 32>}, {pipeline_mode = #tpu.pipeline_mode<synchronous>, transform_indices = @transform_19, window_bounds = array<i64: 2, 32, 64>}, {pipeline_mode = #tpu.pipeline_mode<synchronous>, transform_indices = @transform_20, window_bounds = array<i64: 2, 1, 64>}, {pipeline_mode = #tpu.pipeline_mode<synchronous>, transform_indices = @transform_21, window_bounds = array<i64: 2, 64, 32>}, {pipeline_mode = #tpu.pipeline_mode<synchronous>, transform_indices = @transform_22, window_bounds = array<i64: 2, 1, 32>}, {pipeline_mode = #tpu.pipeline_mode<synchronous>, transform_indices = @transform_23, window_bounds = array<i64: 2, 1, 32>}, {pipeline_mode = #tpu.pipeline_mode<synchronous>, transform_indices = @transform_24, window_bounds = array<i64: 2, 1, 32>}, {pipeline_mode = #tpu.pipeline_mode<synchronous>, transform_indices = @transform_25, window_bounds = array<i64: 28, 32>}, {pipeline_mode = #tpu.pipeline_mode<synchronous>, transform_indices = @transform_26, window_bounds = array<i64: 1, 28>}, {pipeline_mode = #tpu.pipeline_mode<synchronous>, transform_indices = @transform_27, window_bounds = array<i64: 28, 1>}, {transform_indices = @transform_28, window_bounds = array<i64: 1, 8, 28>}, {transform_indices = @transform_29, window_bounds = array<i64: 1, 1, 8>}]} {
    %c0 = arith.constant 0 : index
    %c0_0 = arith.constant 0 : index
    %c0_1 = arith.constant 0 : index
    %0 = vector.load %arg1[%c0, %c0_0, %c0_1] : memref<1x8x32xf32, #tpu.memory_space<vmem>>, vector<1x8x32xf32>
    %1 = vector.shape_cast %0 : vector<1x8x32xf32> to vector<8x32xf32>
    %c0_2 = arith.constant 0 : index
    %c0_3 = arith.constant 0 : index
    %c0_4 = arith.constant 0 : index
    %2 = vector.load %arg2[%c0_2, %c0_3, %c0_4] : memref<1x8x32xf32, #tpu.memory_space<vmem>>, vector<1x8x32xf32>
    %3 = vector.shape_cast %2 : vector<1x8x32xf32> to vector<8x32xf32>
    %c0_5 = arith.constant 0 : index
    %c0_6 = arith.constant 0 : index
    %c0_7 = arith.constant 0 : index
    %4 = vector.load %arg3[%c0_5, %c0_6, %c0_7] : memref<1x8x8xf32, #tpu.memory_space<vmem>>, vector<1x8x8xf32>
    %5 = vector.shape_cast %4 : vector<1x8x8xf32> to vector<8x8xf32>
    %c0_8 = arith.constant 0 : index
    %c0_9 = arith.constant 0 : index
    %c0_10 = arith.constant 0 : index
    %6 = vector.load %arg4[%c0_8, %c0_9, %c0_10] : memref<1x8x8xf32, #tpu.memory_space<vmem>>, vector<1x8x8xf32>
    %7 = vector.shape_cast %6 : vector<1x8x8xf32> to vector<8x8xf32>
    %c0_11 = arith.constant 0 : index
    %c0_12 = arith.constant 0 : index
    %c0_13 = arith.constant 0 : index
    %8 = vector.load %arg5[%c0_11, %c0_12, %c0_13] : memref<1x1x8xi32, #tpu.memory_space<vmem>>, vector<1x1x8xi32>
    %9 = vector.shape_cast %8 : vector<1x1x8xi32> to vector<1x8xi32>
    %c0_14 = arith.constant 0 : index
    %c0_15 = arith.constant 0 : index
    %c0_16 = arith.constant 0 : index
    %10 = vector.load %arg6[%c0_14, %c0_15, %c0_16] : memref<2x32x96xbf16, #tpu.memory_space<vmem>>, vector<1x32x96xbf16>
    %11 = vector.shape_cast %10 : vector<1x32x96xbf16> to vector<32x96xbf16>
    %12 = arith.truncf %1 : vector<8x32xf32> to vector<8x32xbf16>
    %cst = arith.constant dense<0.000000e+00> : vector<8x96xf32>
    %13 = tpu.matmul %12, %11, %cst {dimension_numbers = #tpu.dot_dimension_numbers<[1], [0], [0], [1], [0, 0, 1, 1], [], []>} : vector<8x32xbf16>, vector<32x96xbf16>, vector<8x96xf32> -> vector<8x96xf32>
    %c0_17 = arith.constant 0 : index
    %c0_18 = arith.constant 0 : index
    %c0_19 = arith.constant 0 : index
    %14 = vector.load %arg7[%c0_17, %c0_18, %c0_19] : memref<2x1x96xf32, #tpu.memory_space<vmem>>, vector<1x1x96xf32>
    %15 = vector.shape_cast %14 : vector<1x1x96xf32> to vector<1x96xf32>
    %16 = vector.broadcast %15 : vector<1x96xf32> to vector<8x96xf32>
    %17 = arith.addf %13, %16 : vector<8x96xf32>
    %18 = vector.extract_strided_slice %17 {offsets = [0, 0], sizes = [8, 32], strides = [1, 1]} : vector<8x96xf32> to vector<8x32xf32>
    %19 = vector.extract_strided_slice %17 {offsets = [0, 32], sizes = [8, 32], strides = [1, 1]} : vector<8x96xf32> to vector<8x32xf32>
    %20 = vector.extract_strided_slice %17 {offsets = [0, 64], sizes = [8, 32], strides = [1, 1]} : vector<8x96xf32> to vector<8x32xf32>
    %c0_20 = arith.constant 0 : index
    %c0_21 = arith.constant 0 : index
    %c0_22 = arith.constant 0 : index
    %21 = vector.load %arg8[%c0_20, %c0_21, %c0_22] : memref<2x32x32xbf16, #tpu.memory_space<vmem>>, vector<1x32x32xbf16>
    %22 = vector.shape_cast %21 : vector<1x32x32xbf16> to vector<32x32xbf16>
    %c0_23 = arith.constant 0 : index
    %c0_24 = arith.constant 0 : index
    %c0_25 = arith.constant 0 : index
    %23 = vector.load %arg9[%c0_23, %c0_24, %c0_25] : memref<2x1x32xf32, #tpu.memory_space<vmem>>, vector<1x1x32xf32>
    %24 = vector.shape_cast %23 : vector<1x1x32xf32> to vector<1x32xf32>
    %25 = vector.extract_strided_slice %18 {offsets = [0, 0], sizes = [8, 8], strides = [1, 1]} : vector<8x32xf32> to vector<8x8xf32>
    %26 = vector.extract_strided_slice %19 {offsets = [0, 0], sizes = [8, 8], strides = [1, 1]} : vector<8x32xf32> to vector<8x8xf32>
    %27 = arith.truncf %25 : vector<8x8xf32> to vector<8x8xbf16>
    %28 = arith.truncf %26 : vector<8x8xf32> to vector<8x8xbf16>
    %cst_26 = arith.constant dense<0.000000e+00> : vector<8x8xf32>
    %29 = tpu.matmul %27, %28, %cst_26 {dimension_numbers = #tpu.dot_dimension_numbers<[1], [1], [0], [0], [0, 0, 1, 0], [], []>} : vector<8x8xbf16>, vector<8x8xbf16>, vector<8x8xf32> -> vector<8x8xf32>
    %cst_27 = arith.constant 0.353553385 : f32
    %30 = vector.broadcast %cst_27 : f32 to vector<8x8xf32>
    %31 = arith.mulf %29, %30 : vector<8x8xf32>
    %32 = arith.addf %31, %5 : vector<8x8xf32>
    %cst_28 = arith.constant dense<0xFF800000> : vector<8xf32>
    %33 = vector.multi_reduction <maximumf>, %32, %cst_28 [1] : vector<8x8xf32> to vector<8xf32>
    %34 = vector.shape_cast %33 : vector<8xf32> to vector<8x1xf32>
    %35 = vector.broadcast %34 : vector<8x1xf32> to vector<8x8xf32>
    %36 = arith.subf %32, %35 : vector<8x8xf32>
    %37 = math.exp %36 : vector<8x8xf32>
    %cst_29 = arith.constant dense<0.000000e+00> : vector<8xf32>
    %38 = vector.multi_reduction <add>, %37, %cst_29 [1] : vector<8x8xf32> to vector<8xf32>
    %39 = vector.shape_cast %38 : vector<8xf32> to vector<8x1xf32>
    %40 = tpu.reciprocal %39 {approx = true} : vector<8x1xf32> -> vector<8x1xf32>
    %41 = vector.broadcast %40 : vector<8x1xf32> to vector<8x8xf32>
    %42 = arith.mulf %37, %41 : vector<8x8xf32>
    %43 = vector.extract_strided_slice %20 {offsets = [0, 0], sizes = [8, 8], strides = [1, 1]} : vector<8x32xf32> to vector<8x8xf32>
    %44 = arith.truncf %42 : vector<8x8xf32> to vector<8x8xbf16>
    %45 = arith.truncf %43 : vector<8x8xf32> to vector<8x8xbf16>
    %cst_30 = arith.constant dense<0.000000e+00> : vector<8x8xf32>
    %46 = tpu.matmul %44, %45, %cst_30 {dimension_numbers = #tpu.dot_dimension_numbers<[1], [0], [0], [1], [0, 0, 1, 1], [], []>} : vector<8x8xbf16>, vector<8x8xbf16>, vector<8x8xf32> -> vector<8x8xf32>
    %47 = vector.extract_strided_slice %18 {offsets = [0, 8], sizes = [8, 8], strides = [1, 1]} : vector<8x32xf32> to vector<8x8xf32>
    %48 = vector.extract_strided_slice %19 {offsets = [0, 8], sizes = [8, 8], strides = [1, 1]} : vector<8x32xf32> to vector<8x8xf32>
    %49 = arith.truncf %47 : vector<8x8xf32> to vector<8x8xbf16>
    %50 = arith.truncf %48 : vector<8x8xf32> to vector<8x8xbf16>
    %cst_31 = arith.constant dense<0.000000e+00> : vector<8x8xf32>
    %51 = tpu.matmul %49, %50, %cst_31 {dimension_numbers = #tpu.dot_dimension_numbers<[1], [1], [0], [0], [0, 0, 1, 0], [], []>} : vector<8x8xbf16>, vector<8x8xbf16>, vector<8x8xf32> -> vector<8x8xf32>
    %cst_32 = arith.constant 0.353553385 : f32
    %52 = vector.broadcast %cst_32 : f32 to vector<8x8xf32>
    %53 = arith.mulf %51, %52 : vector<8x8xf32>
    %54 = arith.addf %53, %5 : vector<8x8xf32>
    %cst_33 = arith.constant dense<0xFF800000> : vector<8xf32>
    %55 = vector.multi_reduction <maximumf>, %54, %cst_33 [1] : vector<8x8xf32> to vector<8xf32>
    %56 = vector.shape_cast %55 : vector<8xf32> to vector<8x1xf32>
    %57 = vector.broadcast %56 : vector<8x1xf32> to vector<8x8xf32>
    %58 = arith.subf %54, %57 : vector<8x8xf32>
    %59 = math.exp %58 : vector<8x8xf32>
    %cst_34 = arith.constant dense<0.000000e+00> : vector<8xf32>
    %60 = vector.multi_reduction <add>, %59, %cst_34 [1] : vector<8x8xf32> to vector<8xf32>
    %61 = vector.shape_cast %60 : vector<8xf32> to vector<8x1xf32>
    %62 = tpu.reciprocal %61 {approx = true} : vector<8x1xf32> -> vector<8x1xf32>
    %63 = vector.broadcast %62 : vector<8x1xf32> to vector<8x8xf32>
    %64 = arith.mulf %59, %63 : vector<8x8xf32>
    %65 = vector.extract_strided_slice %20 {offsets = [0, 8], sizes = [8, 8], strides = [1, 1]} : vector<8x32xf32> to vector<8x8xf32>
    %66 = arith.truncf %64 : vector<8x8xf32> to vector<8x8xbf16>
    %67 = arith.truncf %65 : vector<8x8xf32> to vector<8x8xbf16>
    %cst_35 = arith.constant dense<0.000000e+00> : vector<8x8xf32>
    %68 = tpu.matmul %66, %67, %cst_35 {dimension_numbers = #tpu.dot_dimension_numbers<[1], [0], [0], [1], [0, 0, 1, 1], [], []>} : vector<8x8xbf16>, vector<8x8xbf16>, vector<8x8xf32> -> vector<8x8xf32>
    %69 = vector.extract_strided_slice %18 {offsets = [0, 16], sizes = [8, 8], strides = [1, 1]} : vector<8x32xf32> to vector<8x8xf32>
    %70 = vector.extract_strided_slice %19 {offsets = [0, 16], sizes = [8, 8], strides = [1, 1]} : vector<8x32xf32> to vector<8x8xf32>
    %71 = arith.truncf %69 : vector<8x8xf32> to vector<8x8xbf16>
    %72 = arith.truncf %70 : vector<8x8xf32> to vector<8x8xbf16>
    %cst_36 = arith.constant dense<0.000000e+00> : vector<8x8xf32>
    %73 = tpu.matmul %71, %72, %cst_36 {dimension_numbers = #tpu.dot_dimension_numbers<[1], [1], [0], [0], [0, 0, 1, 0], [], []>} : vector<8x8xbf16>, vector<8x8xbf16>, vector<8x8xf32> -> vector<8x8xf32>
    %cst_37 = arith.constant 0.353553385 : f32
    %74 = vector.broadcast %cst_37 : f32 to vector<8x8xf32>
    %75 = arith.mulf %73, %74 : vector<8x8xf32>
    %76 = arith.addf %75, %5 : vector<8x8xf32>
    %cst_38 = arith.constant dense<0xFF800000> : vector<8xf32>
    %77 = vector.multi_reduction <maximumf>, %76, %cst_38 [1] : vector<8x8xf32> to vector<8xf32>
    %78 = vector.shape_cast %77 : vector<8xf32> to vector<8x1xf32>
    %79 = vector.broadcast %78 : vector<8x1xf32> to vector<8x8xf32>
    %80 = arith.subf %76, %79 : vector<8x8xf32>
    %81 = math.exp %80 : vector<8x8xf32>
    %cst_39 = arith.constant dense<0.000000e+00> : vector<8xf32>
    %82 = vector.multi_reduction <add>, %81, %cst_39 [1] : vector<8x8xf32> to vector<8xf32>
    %83 = vector.shape_cast %82 : vector<8xf32> to vector<8x1xf32>
    %84 = tpu.reciprocal %83 {approx = true} : vector<8x1xf32> -> vector<8x1xf32>
    %85 = vector.broadcast %84 : vector<8x1xf32> to vector<8x8xf32>
    %86 = arith.mulf %81, %85 : vector<8x8xf32>
    %87 = vector.extract_strided_slice %20 {offsets = [0, 16], sizes = [8, 8], strides = [1, 1]} : vector<8x32xf32> to vector<8x8xf32>
    %88 = arith.truncf %86 : vector<8x8xf32> to vector<8x8xbf16>
    %89 = arith.truncf %87 : vector<8x8xf32> to vector<8x8xbf16>
    %cst_40 = arith.constant dense<0.000000e+00> : vector<8x8xf32>
    %90 = tpu.matmul %88, %89, %cst_40 {dimension_numbers = #tpu.dot_dimension_numbers<[1], [0], [0], [1], [0, 0, 1, 1], [], []>} : vector<8x8xbf16>, vector<8x8xbf16>, vector<8x8xf32> -> vector<8x8xf32>
    %91 = vector.extract_strided_slice %18 {offsets = [0, 24], sizes = [8, 8], strides = [1, 1]} : vector<8x32xf32> to vector<8x8xf32>
    %92 = vector.extract_strided_slice %19 {offsets = [0, 24], sizes = [8, 8], strides = [1, 1]} : vector<8x32xf32> to vector<8x8xf32>
    %93 = arith.truncf %91 : vector<8x8xf32> to vector<8x8xbf16>
    %94 = arith.truncf %92 : vector<8x8xf32> to vector<8x8xbf16>
    %cst_41 = arith.constant dense<0.000000e+00> : vector<8x8xf32>
    %95 = tpu.matmul %93, %94, %cst_41 {dimension_numbers = #tpu.dot_dimension_numbers<[1], [1], [0], [0], [0, 0, 1, 0], [], []>} : vector<8x8xbf16>, vector<8x8xbf16>, vector<8x8xf32> -> vector<8x8xf32>
    %cst_42 = arith.constant 0.353553385 : f32
    %96 = vector.broadcast %cst_42 : f32 to vector<8x8xf32>
    %97 = arith.mulf %95, %96 : vector<8x8xf32>
    %98 = arith.addf %97, %5 : vector<8x8xf32>
    %cst_43 = arith.constant dense<0xFF800000> : vector<8xf32>
    %99 = vector.multi_reduction <maximumf>, %98, %cst_43 [1] : vector<8x8xf32> to vector<8xf32>
    %100 = vector.shape_cast %99 : vector<8xf32> to vector<8x1xf32>
    %101 = vector.broadcast %100 : vector<8x1xf32> to vector<8x8xf32>
    %102 = arith.subf %98, %101 : vector<8x8xf32>
    %103 = math.exp %102 : vector<8x8xf32>
    %cst_44 = arith.constant dense<0.000000e+00> : vector<8xf32>
    %104 = vector.multi_reduction <add>, %103, %cst_44 [1] : vector<8x8xf32> to vector<8xf32>
    %105 = vector.shape_cast %104 : vector<8xf32> to vector<8x1xf32>
    %106 = tpu.reciprocal %105 {approx = true} : vector<8x1xf32> -> vector<8x1xf32>
    %107 = vector.broadcast %106 : vector<8x1xf32> to vector<8x8xf32>
    %108 = arith.mulf %103, %107 : vector<8x8xf32>
    %109 = vector.extract_strided_slice %20 {offsets = [0, 24], sizes = [8, 8], strides = [1, 1]} : vector<8x32xf32> to vector<8x8xf32>
    %110 = arith.truncf %108 : vector<8x8xf32> to vector<8x8xbf16>
    %111 = arith.truncf %109 : vector<8x8xf32> to vector<8x8xbf16>
    %cst_45 = arith.constant dense<0.000000e+00> : vector<8x8xf32>
    %112 = tpu.matmul %110, %111, %cst_45 {dimension_numbers = #tpu.dot_dimension_numbers<[1], [0], [0], [1], [0, 0, 1, 1], [], []>} : vector<8x8xbf16>, vector<8x8xbf16>, vector<8x8xf32> -> vector<8x8xf32>
    %113 = tpu.concatenate %46, %68, %90, %112 in 1 : vector<8x8xf32>, vector<8x8xf32>, vector<8x8xf32>, vector<8x8xf32> -> vector<8x32xf32>
    %114 = arith.truncf %113 : vector<8x32xf32> to vector<8x32xbf16>
    %cst_46 = arith.constant dense<0.000000e+00> : vector<8x32xf32>
    %115 = tpu.matmul %114, %22, %cst_46 {dimension_numbers = #tpu.dot_dimension_numbers<[1], [0], [0], [1], [0, 0, 1, 1], [], []>} : vector<8x32xbf16>, vector<32x32xbf16>, vector<8x32xf32> -> vector<8x32xf32>
    %116 = vector.broadcast %24 : vector<1x32xf32> to vector<8x32xf32>
    %117 = arith.addf %115, %116 : vector<8x32xf32>
    %c0_47 = arith.constant 0 : index
    %c0_48 = arith.constant 0 : index
    %c0_49 = arith.constant 0 : index
    %118 = vector.load %arg10[%c0_47, %c0_48, %c0_49] : memref<2x1x32xf32, #tpu.memory_space<vmem>>, vector<1x1x32xf32>
    %119 = vector.shape_cast %118 : vector<1x1x32xf32> to vector<1x32xf32>
    %c0_50 = arith.constant 0 : index
    %c0_51 = arith.constant 0 : index
    %c0_52 = arith.constant 0 : index
    %120 = vector.load %arg11[%c0_50, %c0_51, %c0_52] : memref<2x1x32xf32, #tpu.memory_space<vmem>>, vector<1x1x32xf32>
    %121 = vector.shape_cast %120 : vector<1x1x32xf32> to vector<1x32xf32>
    %122 = arith.addf %117, %1 : vector<8x32xf32>
    %cst_53 = arith.constant dense<0.000000e+00> : vector<8xf32>
    %123 = vector.multi_reduction <add>, %122, %cst_53 [1] : vector<8x32xf32> to vector<8xf32>
    %124 = vector.shape_cast %123 : vector<8xf32> to vector<8x1xf32>
    %cst_54 = arith.constant 3.200000e+01 : f32
    %125 = vector.broadcast %cst_54 : f32 to vector<8x1xf32>
    %126 = arith.divf %124, %125 : vector<8x1xf32>
    %127 = vector.broadcast %126 : vector<8x1xf32> to vector<8x32xf32>
    %128 = arith.subf %122, %127 : vector<8x32xf32>
    %129 = arith.mulf %128, %128 : vector<8x32xf32>
    %cst_55 = arith.constant dense<0.000000e+00> : vector<8xf32>
    %130 = vector.multi_reduction <add>, %129, %cst_55 [1] : vector<8x32xf32> to vector<8xf32>
    %131 = vector.shape_cast %130 : vector<8xf32> to vector<8x1xf32>
    %cst_56 = arith.constant 3.200000e+01 : f32
    %132 = vector.broadcast %cst_56 : f32 to vector<8x1xf32>
    %133 = arith.divf %131, %132 : vector<8x1xf32>
    %134 = vector.broadcast %126 : vector<8x1xf32> to vector<8x32xf32>
    %135 = arith.subf %122, %134 : vector<8x32xf32>
    %cst_57 = arith.constant 9.99999974E-6 : f32
    %136 = vector.broadcast %cst_57 : f32 to vector<8x1xf32>
    %137 = arith.addf %133, %136 : vector<8x1xf32>
    %138 = math.rsqrt %137 : vector<8x1xf32>
    %139 = vector.broadcast %138 : vector<8x1xf32> to vector<8x32xf32>
    %140 = arith.mulf %135, %139 : vector<8x32xf32>
    %141 = vector.broadcast %119 : vector<1x32xf32> to vector<8x32xf32>
    %142 = arith.mulf %140, %141 : vector<8x32xf32>
    %143 = vector.broadcast %121 : vector<1x32xf32> to vector<8x32xf32>
    %144 = arith.addf %142, %143 : vector<8x32xf32>
    %c0_58 = arith.constant 0 : index
    %c0_59 = arith.constant 0 : index
    %c0_60 = arith.constant 0 : index
    %145 = vector.load %arg12[%c0_58, %c0_59, %c0_60] : memref<2x32x32xbf16, #tpu.memory_space<vmem>>, vector<1x32x32xbf16>
    %146 = vector.shape_cast %145 : vector<1x32x32xbf16> to vector<32x32xbf16>
    %147 = arith.truncf %144 : vector<8x32xf32> to vector<8x32xbf16>
    %cst_61 = arith.constant dense<0.000000e+00> : vector<8x32xf32>
    %148 = tpu.matmul %147, %146, %cst_61 {dimension_numbers = #tpu.dot_dimension_numbers<[1], [0], [0], [1], [0, 0, 1, 1], [], []>} : vector<8x32xbf16>, vector<32x32xbf16>, vector<8x32xf32> -> vector<8x32xf32>
    %c0_62 = arith.constant 0 : index
    %c0_63 = arith.constant 0 : index
    %c0_64 = arith.constant 0 : index
    %149 = vector.load %arg13[%c0_62, %c0_63, %c0_64] : memref<2x1x32xf32, #tpu.memory_space<vmem>>, vector<1x1x32xf32>
    %150 = vector.shape_cast %149 : vector<1x1x32xf32> to vector<1x32xf32>
    %151 = vector.broadcast %150 : vector<1x32xf32> to vector<8x32xf32>
    %152 = arith.addf %148, %151 : vector<8x32xf32>
    %c0_65 = arith.constant 0 : index
    %c0_66 = arith.constant 0 : index
    %c0_67 = arith.constant 0 : index
    %153 = vector.load %arg14[%c0_65, %c0_66, %c0_67] : memref<2x32x64xbf16, #tpu.memory_space<vmem>>, vector<1x32x64xbf16>
    %154 = vector.shape_cast %153 : vector<1x32x64xbf16> to vector<32x64xbf16>
    %155 = arith.truncf %3 : vector<8x32xf32> to vector<8x32xbf16>
    %cst_68 = arith.constant dense<0.000000e+00> : vector<8x64xf32>
    %156 = tpu.matmul %155, %154, %cst_68 {dimension_numbers = #tpu.dot_dimension_numbers<[1], [0], [0], [1], [0, 0, 1, 1], [], []>} : vector<8x32xbf16>, vector<32x64xbf16>, vector<8x64xf32> -> vector<8x64xf32>
    %c0_69 = arith.constant 0 : index
    %c0_70 = arith.constant 0 : index
    %c0_71 = arith.constant 0 : index
    %157 = vector.load %arg15[%c0_69, %c0_70, %c0_71] : memref<2x1x64xf32, #tpu.memory_space<vmem>>, vector<1x1x64xf32>
    %158 = vector.shape_cast %157 : vector<1x1x64xf32> to vector<1x64xf32>
    %159 = vector.broadcast %158 : vector<1x64xf32> to vector<8x64xf32>
    %160 = arith.addf %156, %159 : vector<8x64xf32>
    %161 = vector.extract_strided_slice %160 {offsets = [0, 0], sizes = [8, 32], strides = [1, 1]} : vector<8x64xf32> to vector<8x32xf32>
    %162 = vector.extract_strided_slice %160 {offsets = [0, 32], sizes = [8, 32], strides = [1, 1]} : vector<8x64xf32> to vector<8x32xf32>
    %c0_72 = arith.constant 0 : index
    %c0_73 = arith.constant 0 : index
    %c0_74 = arith.constant 0 : index
    %163 = vector.load %arg16[%c0_72, %c0_73, %c0_74] : memref<2x32x32xbf16, #tpu.memory_space<vmem>>, vector<1x32x32xbf16>
    %164 = vector.shape_cast %163 : vector<1x32x32xbf16> to vector<32x32xbf16>
    %c0_75 = arith.constant 0 : index
    %c0_76 = arith.constant 0 : index
    %c0_77 = arith.constant 0 : index
    %165 = vector.load %arg17[%c0_75, %c0_76, %c0_77] : memref<2x1x32xf32, #tpu.memory_space<vmem>>, vector<1x1x32xf32>
    %166 = vector.shape_cast %165 : vector<1x1x32xf32> to vector<1x32xf32>
    %167 = vector.extract_strided_slice %152 {offsets = [0, 0], sizes = [8, 8], strides = [1, 1]} : vector<8x32xf32> to vector<8x8xf32>
    %168 = vector.extract_strided_slice %161 {offsets = [0, 0], sizes = [8, 8], strides = [1, 1]} : vector<8x32xf32> to vector<8x8xf32>
    %169 = arith.truncf %167 : vector<8x8xf32> to vector<8x8xbf16>
    %170 = arith.truncf %168 : vector<8x8xf32> to vector<8x8xbf16>
    %cst_78 = arith.constant dense<0.000000e+00> : vector<8x8xf32>
    %171 = tpu.matmul %169, %170, %cst_78 {dimension_numbers = #tpu.dot_dimension_numbers<[1], [1], [0], [0], [0, 0, 1, 0], [], []>} : vector<8x8xbf16>, vector<8x8xbf16>, vector<8x8xf32> -> vector<8x8xf32>
    %cst_79 = arith.constant 0.353553385 : f32
    %172 = vector.broadcast %cst_79 : f32 to vector<8x8xf32>
    %173 = arith.mulf %171, %172 : vector<8x8xf32>
    %174 = arith.addf %173, %7 : vector<8x8xf32>
    %cst_80 = arith.constant dense<0xFF800000> : vector<8xf32>
    %175 = vector.multi_reduction <maximumf>, %174, %cst_80 [1] : vector<8x8xf32> to vector<8xf32>
    %176 = vector.shape_cast %175 : vector<8xf32> to vector<8x1xf32>
    %177 = vector.broadcast %176 : vector<8x1xf32> to vector<8x8xf32>
    %178 = arith.subf %174, %177 : vector<8x8xf32>
    %179 = math.exp %178 : vector<8x8xf32>
    %cst_81 = arith.constant dense<0.000000e+00> : vector<8xf32>
    %180 = vector.multi_reduction <add>, %179, %cst_81 [1] : vector<8x8xf32> to vector<8xf32>
    %181 = vector.shape_cast %180 : vector<8xf32> to vector<8x1xf32>
    %182 = tpu.reciprocal %181 {approx = true} : vector<8x1xf32> -> vector<8x1xf32>
    %183 = vector.broadcast %182 : vector<8x1xf32> to vector<8x8xf32>
    %184 = arith.mulf %179, %183 : vector<8x8xf32>
    %185 = vector.extract_strided_slice %162 {offsets = [0, 0], sizes = [8, 8], strides = [1, 1]} : vector<8x32xf32> to vector<8x8xf32>
    %186 = arith.truncf %184 : vector<8x8xf32> to vector<8x8xbf16>
    %187 = arith.truncf %185 : vector<8x8xf32> to vector<8x8xbf16>
    %cst_82 = arith.constant dense<0.000000e+00> : vector<8x8xf32>
    %188 = tpu.matmul %186, %187, %cst_82 {dimension_numbers = #tpu.dot_dimension_numbers<[1], [0], [0], [1], [0, 0, 1, 1], [], []>} : vector<8x8xbf16>, vector<8x8xbf16>, vector<8x8xf32> -> vector<8x8xf32>
    %189 = vector.extract_strided_slice %152 {offsets = [0, 8], sizes = [8, 8], strides = [1, 1]} : vector<8x32xf32> to vector<8x8xf32>
    %190 = vector.extract_strided_slice %161 {offsets = [0, 8], sizes = [8, 8], strides = [1, 1]} : vector<8x32xf32> to vector<8x8xf32>
    %191 = arith.truncf %189 : vector<8x8xf32> to vector<8x8xbf16>
    %192 = arith.truncf %190 : vector<8x8xf32> to vector<8x8xbf16>
    %cst_83 = arith.constant dense<0.000000e+00> : vector<8x8xf32>
    %193 = tpu.matmul %191, %192, %cst_83 {dimension_numbers = #tpu.dot_dimension_numbers<[1], [1], [0], [0], [0, 0, 1, 0], [], []>} : vector<8x8xbf16>, vector<8x8xbf16>, vector<8x8xf32> -> vector<8x8xf32>
    %cst_84 = arith.constant 0.353553385 : f32
    %194 = vector.broadcast %cst_84 : f32 to vector<8x8xf32>
    %195 = arith.mulf %193, %194 : vector<8x8xf32>
    %196 = arith.addf %195, %7 : vector<8x8xf32>
    %cst_85 = arith.constant dense<0xFF800000> : vector<8xf32>
    %197 = vector.multi_reduction <maximumf>, %196, %cst_85 [1] : vector<8x8xf32> to vector<8xf32>
    %198 = vector.shape_cast %197 : vector<8xf32> to vector<8x1xf32>
    %199 = vector.broadcast %198 : vector<8x1xf32> to vector<8x8xf32>
    %200 = arith.subf %196, %199 : vector<8x8xf32>
    %201 = math.exp %200 : vector<8x8xf32>
    %cst_86 = arith.constant dense<0.000000e+00> : vector<8xf32>
    %202 = vector.multi_reduction <add>, %201, %cst_86 [1] : vector<8x8xf32> to vector<8xf32>
    %203 = vector.shape_cast %202 : vector<8xf32> to vector<8x1xf32>
    %204 = tpu.reciprocal %203 {approx = true} : vector<8x1xf32> -> vector<8x1xf32>
    %205 = vector.broadcast %204 : vector<8x1xf32> to vector<8x8xf32>
    %206 = arith.mulf %201, %205 : vector<8x8xf32>
    %207 = vector.extract_strided_slice %162 {offsets = [0, 8], sizes = [8, 8], strides = [1, 1]} : vector<8x32xf32> to vector<8x8xf32>
    %208 = arith.truncf %206 : vector<8x8xf32> to vector<8x8xbf16>
    %209 = arith.truncf %207 : vector<8x8xf32> to vector<8x8xbf16>
    %cst_87 = arith.constant dense<0.000000e+00> : vector<8x8xf32>
    %210 = tpu.matmul %208, %209, %cst_87 {dimension_numbers = #tpu.dot_dimension_numbers<[1], [0], [0], [1], [0, 0, 1, 1], [], []>} : vector<8x8xbf16>, vector<8x8xbf16>, vector<8x8xf32> -> vector<8x8xf32>
    %211 = vector.extract_strided_slice %152 {offsets = [0, 16], sizes = [8, 8], strides = [1, 1]} : vector<8x32xf32> to vector<8x8xf32>
    %212 = vector.extract_strided_slice %161 {offsets = [0, 16], sizes = [8, 8], strides = [1, 1]} : vector<8x32xf32> to vector<8x8xf32>
    %213 = arith.truncf %211 : vector<8x8xf32> to vector<8x8xbf16>
    %214 = arith.truncf %212 : vector<8x8xf32> to vector<8x8xbf16>
    %cst_88 = arith.constant dense<0.000000e+00> : vector<8x8xf32>
    %215 = tpu.matmul %213, %214, %cst_88 {dimension_numbers = #tpu.dot_dimension_numbers<[1], [1], [0], [0], [0, 0, 1, 0], [], []>} : vector<8x8xbf16>, vector<8x8xbf16>, vector<8x8xf32> -> vector<8x8xf32>
    %cst_89 = arith.constant 0.353553385 : f32
    %216 = vector.broadcast %cst_89 : f32 to vector<8x8xf32>
    %217 = arith.mulf %215, %216 : vector<8x8xf32>
    %218 = arith.addf %217, %7 : vector<8x8xf32>
    %cst_90 = arith.constant dense<0xFF800000> : vector<8xf32>
    %219 = vector.multi_reduction <maximumf>, %218, %cst_90 [1] : vector<8x8xf32> to vector<8xf32>
    %220 = vector.shape_cast %219 : vector<8xf32> to vector<8x1xf32>
    %221 = vector.broadcast %220 : vector<8x1xf32> to vector<8x8xf32>
    %222 = arith.subf %218, %221 : vector<8x8xf32>
    %223 = math.exp %222 : vector<8x8xf32>
    %cst_91 = arith.constant dense<0.000000e+00> : vector<8xf32>
    %224 = vector.multi_reduction <add>, %223, %cst_91 [1] : vector<8x8xf32> to vector<8xf32>
    %225 = vector.shape_cast %224 : vector<8xf32> to vector<8x1xf32>
    %226 = tpu.reciprocal %225 {approx = true} : vector<8x1xf32> -> vector<8x1xf32>
    %227 = vector.broadcast %226 : vector<8x1xf32> to vector<8x8xf32>
    %228 = arith.mulf %223, %227 : vector<8x8xf32>
    %229 = vector.extract_strided_slice %162 {offsets = [0, 16], sizes = [8, 8], strides = [1, 1]} : vector<8x32xf32> to vector<8x8xf32>
    %230 = arith.truncf %228 : vector<8x8xf32> to vector<8x8xbf16>
    %231 = arith.truncf %229 : vector<8x8xf32> to vector<8x8xbf16>
    %cst_92 = arith.constant dense<0.000000e+00> : vector<8x8xf32>
    %232 = tpu.matmul %230, %231, %cst_92 {dimension_numbers = #tpu.dot_dimension_numbers<[1], [0], [0], [1], [0, 0, 1, 1], [], []>} : vector<8x8xbf16>, vector<8x8xbf16>, vector<8x8xf32> -> vector<8x8xf32>
    %233 = vector.extract_strided_slice %152 {offsets = [0, 24], sizes = [8, 8], strides = [1, 1]} : vector<8x32xf32> to vector<8x8xf32>
    %234 = vector.extract_strided_slice %161 {offsets = [0, 24], sizes = [8, 8], strides = [1, 1]} : vector<8x32xf32> to vector<8x8xf32>
    %235 = arith.truncf %233 : vector<8x8xf32> to vector<8x8xbf16>
    %236 = arith.truncf %234 : vector<8x8xf32> to vector<8x8xbf16>
    %cst_93 = arith.constant dense<0.000000e+00> : vector<8x8xf32>
    %237 = tpu.matmul %235, %236, %cst_93 {dimension_numbers = #tpu.dot_dimension_numbers<[1], [1], [0], [0], [0, 0, 1, 0], [], []>} : vector<8x8xbf16>, vector<8x8xbf16>, vector<8x8xf32> -> vector<8x8xf32>
    %cst_94 = arith.constant 0.353553385 : f32
    %238 = vector.broadcast %cst_94 : f32 to vector<8x8xf32>
    %239 = arith.mulf %237, %238 : vector<8x8xf32>
    %240 = arith.addf %239, %7 : vector<8x8xf32>
    %cst_95 = arith.constant dense<0xFF800000> : vector<8xf32>
    %241 = vector.multi_reduction <maximumf>, %240, %cst_95 [1] : vector<8x8xf32> to vector<8xf32>
    %242 = vector.shape_cast %241 : vector<8xf32> to vector<8x1xf32>
    %243 = vector.broadcast %242 : vector<8x1xf32> to vector<8x8xf32>
    %244 = arith.subf %240, %243 : vector<8x8xf32>
    %245 = math.exp %244 : vector<8x8xf32>
    %cst_96 = arith.constant dense<0.000000e+00> : vector<8xf32>
    %246 = vector.multi_reduction <add>, %245, %cst_96 [1] : vector<8x8xf32> to vector<8xf32>
    %247 = vector.shape_cast %246 : vector<8xf32> to vector<8x1xf32>
    %248 = tpu.reciprocal %247 {approx = true} : vector<8x1xf32> -> vector<8x1xf32>
    %249 = vector.broadcast %248 : vector<8x1xf32> to vector<8x8xf32>
    %250 = arith.mulf %245, %249 : vector<8x8xf32>
    %251 = vector.extract_strided_slice %162 {offsets = [0, 24], sizes = [8, 8], strides = [1, 1]} : vector<8x32xf32> to vector<8x8xf32>
    %252 = arith.truncf %250 : vector<8x8xf32> to vector<8x8xbf16>
    %253 = arith.truncf %251 : vector<8x8xf32> to vector<8x8xbf16>
    %cst_97 = arith.constant dense<0.000000e+00> : vector<8x8xf32>
    %254 = tpu.matmul %252, %253, %cst_97 {dimension_numbers = #tpu.dot_dimension_numbers<[1], [0], [0], [1], [0, 0, 1, 1], [], []>} : vector<8x8xbf16>, vector<8x8xbf16>, vector<8x8xf32> -> vector<8x8xf32>
    %255 = tpu.concatenate %188, %210, %232, %254 in 1 : vector<8x8xf32>, vector<8x8xf32>, vector<8x8xf32>, vector<8x8xf32> -> vector<8x32xf32>
    %256 = arith.truncf %255 : vector<8x32xf32> to vector<8x32xbf16>
    %cst_98 = arith.constant dense<0.000000e+00> : vector<8x32xf32>
    %257 = tpu.matmul %256, %164, %cst_98 {dimension_numbers = #tpu.dot_dimension_numbers<[1], [0], [0], [1], [0, 0, 1, 1], [], []>} : vector<8x32xbf16>, vector<32x32xbf16>, vector<8x32xf32> -> vector<8x32xf32>
    %258 = vector.broadcast %166 : vector<1x32xf32> to vector<8x32xf32>
    %259 = arith.addf %257, %258 : vector<8x32xf32>
    %c0_99 = arith.constant 0 : index
    %c0_100 = arith.constant 0 : index
    %c0_101 = arith.constant 0 : index
    %260 = vector.load %arg18[%c0_99, %c0_100, %c0_101] : memref<2x1x32xf32, #tpu.memory_space<vmem>>, vector<1x1x32xf32>
    %261 = vector.shape_cast %260 : vector<1x1x32xf32> to vector<1x32xf32>
    %c0_102 = arith.constant 0 : index
    %c0_103 = arith.constant 0 : index
    %c0_104 = arith.constant 0 : index
    %262 = vector.load %arg19[%c0_102, %c0_103, %c0_104] : memref<2x1x32xf32, #tpu.memory_space<vmem>>, vector<1x1x32xf32>
    %263 = vector.shape_cast %262 : vector<1x1x32xf32> to vector<1x32xf32>
    %264 = arith.addf %259, %144 : vector<8x32xf32>
    %cst_105 = arith.constant dense<0.000000e+00> : vector<8xf32>
    %265 = vector.multi_reduction <add>, %264, %cst_105 [1] : vector<8x32xf32> to vector<8xf32>
    %266 = vector.shape_cast %265 : vector<8xf32> to vector<8x1xf32>
    %cst_106 = arith.constant 3.200000e+01 : f32
    %267 = vector.broadcast %cst_106 : f32 to vector<8x1xf32>
    %268 = arith.divf %266, %267 : vector<8x1xf32>
    %269 = vector.broadcast %268 : vector<8x1xf32> to vector<8x32xf32>
    %270 = arith.subf %264, %269 : vector<8x32xf32>
    %271 = arith.mulf %270, %270 : vector<8x32xf32>
    %cst_107 = arith.constant dense<0.000000e+00> : vector<8xf32>
    %272 = vector.multi_reduction <add>, %271, %cst_107 [1] : vector<8x32xf32> to vector<8xf32>
    %273 = vector.shape_cast %272 : vector<8xf32> to vector<8x1xf32>
    %cst_108 = arith.constant 3.200000e+01 : f32
    %274 = vector.broadcast %cst_108 : f32 to vector<8x1xf32>
    %275 = arith.divf %273, %274 : vector<8x1xf32>
    %276 = vector.broadcast %268 : vector<8x1xf32> to vector<8x32xf32>
    %277 = arith.subf %264, %276 : vector<8x32xf32>
    %cst_109 = arith.constant 9.99999974E-6 : f32
    %278 = vector.broadcast %cst_109 : f32 to vector<8x1xf32>
    %279 = arith.addf %275, %278 : vector<8x1xf32>
    %280 = math.rsqrt %279 : vector<8x1xf32>
    %281 = vector.broadcast %280 : vector<8x1xf32> to vector<8x32xf32>
    %282 = arith.mulf %277, %281 : vector<8x32xf32>
    %283 = vector.broadcast %261 : vector<1x32xf32> to vector<8x32xf32>
    %284 = arith.mulf %282, %283 : vector<8x32xf32>
    %285 = vector.broadcast %263 : vector<1x32xf32> to vector<8x32xf32>
    %286 = arith.addf %284, %285 : vector<8x32xf32>
    %c0_110 = arith.constant 0 : index
    %c0_111 = arith.constant 0 : index
    %c0_112 = arith.constant 0 : index
    %287 = vector.load %arg20[%c0_110, %c0_111, %c0_112] : memref<2x32x64xbf16, #tpu.memory_space<vmem>>, vector<1x32x64xbf16>
    %288 = vector.shape_cast %287 : vector<1x32x64xbf16> to vector<32x64xbf16>
    %c0_113 = arith.constant 0 : index
    %c0_114 = arith.constant 0 : index
    %c0_115 = arith.constant 0 : index
    %289 = vector.load %arg21[%c0_113, %c0_114, %c0_115] : memref<2x1x64xf32, #tpu.memory_space<vmem>>, vector<1x1x64xf32>
    %290 = vector.shape_cast %289 : vector<1x1x64xf32> to vector<1x64xf32>
    %c0_116 = arith.constant 0 : index
    %c0_117 = arith.constant 0 : index
    %c0_118 = arith.constant 0 : index
    %291 = vector.load %arg22[%c0_116, %c0_117, %c0_118] : memref<2x64x32xbf16, #tpu.memory_space<vmem>>, vector<1x64x32xbf16>
    %292 = vector.shape_cast %291 : vector<1x64x32xbf16> to vector<64x32xbf16>
    %c0_119 = arith.constant 0 : index
    %c0_120 = arith.constant 0 : index
    %c0_121 = arith.constant 0 : index
    %293 = vector.load %arg23[%c0_119, %c0_120, %c0_121] : memref<2x1x32xf32, #tpu.memory_space<vmem>>, vector<1x1x32xf32>
    %294 = vector.shape_cast %293 : vector<1x1x32xf32> to vector<1x32xf32>
    %295 = arith.truncf %286 : vector<8x32xf32> to vector<8x32xbf16>
    %cst_122 = arith.constant dense<0.000000e+00> : vector<8x64xf32>
    %296 = tpu.matmul %295, %288, %cst_122 {dimension_numbers = #tpu.dot_dimension_numbers<[1], [0], [0], [1], [0, 0, 1, 1], [], []>} : vector<8x32xbf16>, vector<32x64xbf16>, vector<8x64xf32> -> vector<8x64xf32>
    %297 = vector.broadcast %290 : vector<1x64xf32> to vector<8x64xf32>
    %298 = arith.addf %296, %297 : vector<8x64xf32>
    %cst_123 = arith.constant 0.000000e+00 : f32
    %299 = vector.broadcast %cst_123 : f32 to vector<8x64xf32>
    %300 = arith.maximumf %298, %299 : vector<8x64xf32>
    %301 = arith.truncf %300 : vector<8x64xf32> to vector<8x64xbf16>
    %cst_124 = arith.constant dense<0.000000e+00> : vector<8x32xf32>
    %302 = tpu.matmul %301, %292, %cst_124 {dimension_numbers = #tpu.dot_dimension_numbers<[1], [0], [0], [1], [0, 0, 1, 1], [], []>} : vector<8x64xbf16>, vector<64x32xbf16>, vector<8x32xf32> -> vector<8x32xf32>
    %303 = vector.broadcast %294 : vector<1x32xf32> to vector<8x32xf32>
    %304 = arith.addf %302, %303 : vector<8x32xf32>
    %c0_125 = arith.constant 0 : index
    %c0_126 = arith.constant 0 : index
    %c0_127 = arith.constant 0 : index
    %305 = vector.load %arg24[%c0_125, %c0_126, %c0_127] : memref<2x1x32xf32, #tpu.memory_space<vmem>>, vector<1x1x32xf32>
    %306 = vector.shape_cast %305 : vector<1x1x32xf32> to vector<1x32xf32>
    %c0_128 = arith.constant 0 : index
    %c0_129 = arith.constant 0 : index
    %c0_130 = arith.constant 0 : index
    %307 = vector.load %arg25[%c0_128, %c0_129, %c0_130] : memref<2x1x32xf32, #tpu.memory_space<vmem>>, vector<1x1x32xf32>
    %308 = vector.shape_cast %307 : vector<1x1x32xf32> to vector<1x32xf32>
    %309 = arith.addf %304, %286 : vector<8x32xf32>
    %cst_131 = arith.constant dense<0.000000e+00> : vector<8xf32>
    %310 = vector.multi_reduction <add>, %309, %cst_131 [1] : vector<8x32xf32> to vector<8xf32>
    %311 = vector.shape_cast %310 : vector<8xf32> to vector<8x1xf32>
    %cst_132 = arith.constant 3.200000e+01 : f32
    %312 = vector.broadcast %cst_132 : f32 to vector<8x1xf32>
    %313 = arith.divf %311, %312 : vector<8x1xf32>
    %314 = vector.broadcast %313 : vector<8x1xf32> to vector<8x32xf32>
    %315 = arith.subf %309, %314 : vector<8x32xf32>
    %316 = arith.mulf %315, %315 : vector<8x32xf32>
    %cst_133 = arith.constant dense<0.000000e+00> : vector<8xf32>
    %317 = vector.multi_reduction <add>, %316, %cst_133 [1] : vector<8x32xf32> to vector<8xf32>
    %318 = vector.shape_cast %317 : vector<8xf32> to vector<8x1xf32>
    %cst_134 = arith.constant 3.200000e+01 : f32
    %319 = vector.broadcast %cst_134 : f32 to vector<8x1xf32>
    %320 = arith.divf %318, %319 : vector<8x1xf32>
    %321 = vector.broadcast %313 : vector<8x1xf32> to vector<8x32xf32>
    %322 = arith.subf %309, %321 : vector<8x32xf32>
    %cst_135 = arith.constant 9.99999974E-6 : f32
    %323 = vector.broadcast %cst_135 : f32 to vector<8x1xf32>
    %324 = arith.addf %320, %323 : vector<8x1xf32>
    %325 = math.rsqrt %324 : vector<8x1xf32>
    %326 = vector.broadcast %325 : vector<8x1xf32> to vector<8x32xf32>
    %327 = arith.mulf %322, %326 : vector<8x32xf32>
    %328 = vector.broadcast %306 : vector<1x32xf32> to vector<8x32xf32>
    %329 = arith.mulf %327, %328 : vector<8x32xf32>
    %330 = vector.broadcast %308 : vector<1x32xf32> to vector<8x32xf32>
    %331 = arith.addf %329, %330 : vector<8x32xf32>
    %c1 = arith.constant 1 : index
    %c0_136 = arith.constant 0 : index
    %c0_137 = arith.constant 0 : index
    %332 = vector.load %arg6[%c1, %c0_136, %c0_137] : memref<2x32x96xbf16, #tpu.memory_space<vmem>>, vector<1x32x96xbf16>
    %333 = vector.shape_cast %332 : vector<1x32x96xbf16> to vector<32x96xbf16>
    %334 = arith.truncf %331 : vector<8x32xf32> to vector<8x32xbf16>
    %cst_138 = arith.constant dense<0.000000e+00> : vector<8x96xf32>
    %335 = tpu.matmul %334, %333, %cst_138 {dimension_numbers = #tpu.dot_dimension_numbers<[1], [0], [0], [1], [0, 0, 1, 1], [], []>} : vector<8x32xbf16>, vector<32x96xbf16>, vector<8x96xf32> -> vector<8x96xf32>
    %c1_139 = arith.constant 1 : index
    %c0_140 = arith.constant 0 : index
    %c0_141 = arith.constant 0 : index
    %336 = vector.load %arg7[%c1_139, %c0_140, %c0_141] : memref<2x1x96xf32, #tpu.memory_space<vmem>>, vector<1x1x96xf32>
    %337 = vector.shape_cast %336 : vector<1x1x96xf32> to vector<1x96xf32>
    %338 = vector.broadcast %337 : vector<1x96xf32> to vector<8x96xf32>
    %339 = arith.addf %335, %338 : vector<8x96xf32>
    %340 = vector.extract_strided_slice %339 {offsets = [0, 0], sizes = [8, 32], strides = [1, 1]} : vector<8x96xf32> to vector<8x32xf32>
    %341 = vector.extract_strided_slice %339 {offsets = [0, 32], sizes = [8, 32], strides = [1, 1]} : vector<8x96xf32> to vector<8x32xf32>
    %342 = vector.extract_strided_slice %339 {offsets = [0, 64], sizes = [8, 32], strides = [1, 1]} : vector<8x96xf32> to vector<8x32xf32>
    %c1_142 = arith.constant 1 : index
    %c0_143 = arith.constant 0 : index
    %c0_144 = arith.constant 0 : index
    %343 = vector.load %arg8[%c1_142, %c0_143, %c0_144] : memref<2x32x32xbf16, #tpu.memory_space<vmem>>, vector<1x32x32xbf16>
    %344 = vector.shape_cast %343 : vector<1x32x32xbf16> to vector<32x32xbf16>
    %c1_145 = arith.constant 1 : index
    %c0_146 = arith.constant 0 : index
    %c0_147 = arith.constant 0 : index
    %345 = vector.load %arg9[%c1_145, %c0_146, %c0_147] : memref<2x1x32xf32, #tpu.memory_space<vmem>>, vector<1x1x32xf32>
    %346 = vector.shape_cast %345 : vector<1x1x32xf32> to vector<1x32xf32>
    %347 = vector.extract_strided_slice %340 {offsets = [0, 0], sizes = [8, 8], strides = [1, 1]} : vector<8x32xf32> to vector<8x8xf32>
    %348 = vector.extract_strided_slice %341 {offsets = [0, 0], sizes = [8, 8], strides = [1, 1]} : vector<8x32xf32> to vector<8x8xf32>
    %349 = arith.truncf %347 : vector<8x8xf32> to vector<8x8xbf16>
    %350 = arith.truncf %348 : vector<8x8xf32> to vector<8x8xbf16>
    %cst_148 = arith.constant dense<0.000000e+00> : vector<8x8xf32>
    %351 = tpu.matmul %349, %350, %cst_148 {dimension_numbers = #tpu.dot_dimension_numbers<[1], [1], [0], [0], [0, 0, 1, 0], [], []>} : vector<8x8xbf16>, vector<8x8xbf16>, vector<8x8xf32> -> vector<8x8xf32>
    %cst_149 = arith.constant 0.353553385 : f32
    %352 = vector.broadcast %cst_149 : f32 to vector<8x8xf32>
    %353 = arith.mulf %351, %352 : vector<8x8xf32>
    %354 = arith.addf %353, %5 : vector<8x8xf32>
    %cst_150 = arith.constant dense<0xFF800000> : vector<8xf32>
    %355 = vector.multi_reduction <maximumf>, %354, %cst_150 [1] : vector<8x8xf32> to vector<8xf32>
    %356 = vector.shape_cast %355 : vector<8xf32> to vector<8x1xf32>
    %357 = vector.broadcast %356 : vector<8x1xf32> to vector<8x8xf32>
    %358 = arith.subf %354, %357 : vector<8x8xf32>
    %359 = math.exp %358 : vector<8x8xf32>
    %cst_151 = arith.constant dense<0.000000e+00> : vector<8xf32>
    %360 = vector.multi_reduction <add>, %359, %cst_151 [1] : vector<8x8xf32> to vector<8xf32>
    %361 = vector.shape_cast %360 : vector<8xf32> to vector<8x1xf32>
    %362 = tpu.reciprocal %361 {approx = true} : vector<8x1xf32> -> vector<8x1xf32>
    %363 = vector.broadcast %362 : vector<8x1xf32> to vector<8x8xf32>
    %364 = arith.mulf %359, %363 : vector<8x8xf32>
    %365 = vector.extract_strided_slice %342 {offsets = [0, 0], sizes = [8, 8], strides = [1, 1]} : vector<8x32xf32> to vector<8x8xf32>
    %366 = arith.truncf %364 : vector<8x8xf32> to vector<8x8xbf16>
    %367 = arith.truncf %365 : vector<8x8xf32> to vector<8x8xbf16>
    %cst_152 = arith.constant dense<0.000000e+00> : vector<8x8xf32>
    %368 = tpu.matmul %366, %367, %cst_152 {dimension_numbers = #tpu.dot_dimension_numbers<[1], [0], [0], [1], [0, 0, 1, 1], [], []>} : vector<8x8xbf16>, vector<8x8xbf16>, vector<8x8xf32> -> vector<8x8xf32>
    %369 = vector.extract_strided_slice %340 {offsets = [0, 8], sizes = [8, 8], strides = [1, 1]} : vector<8x32xf32> to vector<8x8xf32>
    %370 = vector.extract_strided_slice %341 {offsets = [0, 8], sizes = [8, 8], strides = [1, 1]} : vector<8x32xf32> to vector<8x8xf32>
    %371 = arith.truncf %369 : vector<8x8xf32> to vector<8x8xbf16>
    %372 = arith.truncf %370 : vector<8x8xf32> to vector<8x8xbf16>
    %cst_153 = arith.constant dense<0.000000e+00> : vector<8x8xf32>
    %373 = tpu.matmul %371, %372, %cst_153 {dimension_numbers = #tpu.dot_dimension_numbers<[1], [1], [0], [0], [0, 0, 1, 0], [], []>} : vector<8x8xbf16>, vector<8x8xbf16>, vector<8x8xf32> -> vector<8x8xf32>
    %cst_154 = arith.constant 0.353553385 : f32
    %374 = vector.broadcast %cst_154 : f32 to vector<8x8xf32>
    %375 = arith.mulf %373, %374 : vector<8x8xf32>
    %376 = arith.addf %375, %5 : vector<8x8xf32>
    %cst_155 = arith.constant dense<0xFF800000> : vector<8xf32>
    %377 = vector.multi_reduction <maximumf>, %376, %cst_155 [1] : vector<8x8xf32> to vector<8xf32>
    %378 = vector.shape_cast %377 : vector<8xf32> to vector<8x1xf32>
    %379 = vector.broadcast %378 : vector<8x1xf32> to vector<8x8xf32>
    %380 = arith.subf %376, %379 : vector<8x8xf32>
    %381 = math.exp %380 : vector<8x8xf32>
    %cst_156 = arith.constant dense<0.000000e+00> : vector<8xf32>
    %382 = vector.multi_reduction <add>, %381, %cst_156 [1] : vector<8x8xf32> to vector<8xf32>
    %383 = vector.shape_cast %382 : vector<8xf32> to vector<8x1xf32>
    %384 = tpu.reciprocal %383 {approx = true} : vector<8x1xf32> -> vector<8x1xf32>
    %385 = vector.broadcast %384 : vector<8x1xf32> to vector<8x8xf32>
    %386 = arith.mulf %381, %385 : vector<8x8xf32>
    %387 = vector.extract_strided_slice %342 {offsets = [0, 8], sizes = [8, 8], strides = [1, 1]} : vector<8x32xf32> to vector<8x8xf32>
    %388 = arith.truncf %386 : vector<8x8xf32> to vector<8x8xbf16>
    %389 = arith.truncf %387 : vector<8x8xf32> to vector<8x8xbf16>
    %cst_157 = arith.constant dense<0.000000e+00> : vector<8x8xf32>
    %390 = tpu.matmul %388, %389, %cst_157 {dimension_numbers = #tpu.dot_dimension_numbers<[1], [0], [0], [1], [0, 0, 1, 1], [], []>} : vector<8x8xbf16>, vector<8x8xbf16>, vector<8x8xf32> -> vector<8x8xf32>
    %391 = vector.extract_strided_slice %340 {offsets = [0, 16], sizes = [8, 8], strides = [1, 1]} : vector<8x32xf32> to vector<8x8xf32>
    %392 = vector.extract_strided_slice %341 {offsets = [0, 16], sizes = [8, 8], strides = [1, 1]} : vector<8x32xf32> to vector<8x8xf32>
    %393 = arith.truncf %391 : vector<8x8xf32> to vector<8x8xbf16>
    %394 = arith.truncf %392 : vector<8x8xf32> to vector<8x8xbf16>
    %cst_158 = arith.constant dense<0.000000e+00> : vector<8x8xf32>
    %395 = tpu.matmul %393, %394, %cst_158 {dimension_numbers = #tpu.dot_dimension_numbers<[1], [1], [0], [0], [0, 0, 1, 0], [], []>} : vector<8x8xbf16>, vector<8x8xbf16>, vector<8x8xf32> -> vector<8x8xf32>
    %cst_159 = arith.constant 0.353553385 : f32
    %396 = vector.broadcast %cst_159 : f32 to vector<8x8xf32>
    %397 = arith.mulf %395, %396 : vector<8x8xf32>
    %398 = arith.addf %397, %5 : vector<8x8xf32>
    %cst_160 = arith.constant dense<0xFF800000> : vector<8xf32>
    %399 = vector.multi_reduction <maximumf>, %398, %cst_160 [1] : vector<8x8xf32> to vector<8xf32>
    %400 = vector.shape_cast %399 : vector<8xf32> to vector<8x1xf32>
    %401 = vector.broadcast %400 : vector<8x1xf32> to vector<8x8xf32>
    %402 = arith.subf %398, %401 : vector<8x8xf32>
    %403 = math.exp %402 : vector<8x8xf32>
    %cst_161 = arith.constant dense<0.000000e+00> : vector<8xf32>
    %404 = vector.multi_reduction <add>, %403, %cst_161 [1] : vector<8x8xf32> to vector<8xf32>
    %405 = vector.shape_cast %404 : vector<8xf32> to vector<8x1xf32>
    %406 = tpu.reciprocal %405 {approx = true} : vector<8x1xf32> -> vector<8x1xf32>
    %407 = vector.broadcast %406 : vector<8x1xf32> to vector<8x8xf32>
    %408 = arith.mulf %403, %407 : vector<8x8xf32>
    %409 = vector.extract_strided_slice %342 {offsets = [0, 16], sizes = [8, 8], strides = [1, 1]} : vector<8x32xf32> to vector<8x8xf32>
    %410 = arith.truncf %408 : vector<8x8xf32> to vector<8x8xbf16>
    %411 = arith.truncf %409 : vector<8x8xf32> to vector<8x8xbf16>
    %cst_162 = arith.constant dense<0.000000e+00> : vector<8x8xf32>
    %412 = tpu.matmul %410, %411, %cst_162 {dimension_numbers = #tpu.dot_dimension_numbers<[1], [0], [0], [1], [0, 0, 1, 1], [], []>} : vector<8x8xbf16>, vector<8x8xbf16>, vector<8x8xf32> -> vector<8x8xf32>
    %413 = vector.extract_strided_slice %340 {offsets = [0, 24], sizes = [8, 8], strides = [1, 1]} : vector<8x32xf32> to vector<8x8xf32>
    %414 = vector.extract_strided_slice %341 {offsets = [0, 24], sizes = [8, 8], strides = [1, 1]} : vector<8x32xf32> to vector<8x8xf32>
    %415 = arith.truncf %413 : vector<8x8xf32> to vector<8x8xbf16>
    %416 = arith.truncf %414 : vector<8x8xf32> to vector<8x8xbf16>
    %cst_163 = arith.constant dense<0.000000e+00> : vector<8x8xf32>
    %417 = tpu.matmul %415, %416, %cst_163 {dimension_numbers = #tpu.dot_dimension_numbers<[1], [1], [0], [0], [0, 0, 1, 0], [], []>} : vector<8x8xbf16>, vector<8x8xbf16>, vector<8x8xf32> -> vector<8x8xf32>
    %cst_164 = arith.constant 0.353553385 : f32
    %418 = vector.broadcast %cst_164 : f32 to vector<8x8xf32>
    %419 = arith.mulf %417, %418 : vector<8x8xf32>
    %420 = arith.addf %419, %5 : vector<8x8xf32>
    %cst_165 = arith.constant dense<0xFF800000> : vector<8xf32>
    %421 = vector.multi_reduction <maximumf>, %420, %cst_165 [1] : vector<8x8xf32> to vector<8xf32>
    %422 = vector.shape_cast %421 : vector<8xf32> to vector<8x1xf32>
    %423 = vector.broadcast %422 : vector<8x1xf32> to vector<8x8xf32>
    %424 = arith.subf %420, %423 : vector<8x8xf32>
    %425 = math.exp %424 : vector<8x8xf32>
    %cst_166 = arith.constant dense<0.000000e+00> : vector<8xf32>
    %426 = vector.multi_reduction <add>, %425, %cst_166 [1] : vector<8x8xf32> to vector<8xf32>
    %427 = vector.shape_cast %426 : vector<8xf32> to vector<8x1xf32>
    %428 = tpu.reciprocal %427 {approx = true} : vector<8x1xf32> -> vector<8x1xf32>
    %429 = vector.broadcast %428 : vector<8x1xf32> to vector<8x8xf32>
    %430 = arith.mulf %425, %429 : vector<8x8xf32>
    %431 = vector.extract_strided_slice %342 {offsets = [0, 24], sizes = [8, 8], strides = [1, 1]} : vector<8x32xf32> to vector<8x8xf32>
    %432 = arith.truncf %430 : vector<8x8xf32> to vector<8x8xbf16>
    %433 = arith.truncf %431 : vector<8x8xf32> to vector<8x8xbf16>
    %cst_167 = arith.constant dense<0.000000e+00> : vector<8x8xf32>
    %434 = tpu.matmul %432, %433, %cst_167 {dimension_numbers = #tpu.dot_dimension_numbers<[1], [0], [0], [1], [0, 0, 1, 1], [], []>} : vector<8x8xbf16>, vector<8x8xbf16>, vector<8x8xf32> -> vector<8x8xf32>
    %435 = tpu.concatenate %368, %390, %412, %434 in 1 : vector<8x8xf32>, vector<8x8xf32>, vector<8x8xf32>, vector<8x8xf32> -> vector<8x32xf32>
    %436 = arith.truncf %435 : vector<8x32xf32> to vector<8x32xbf16>
    %cst_168 = arith.constant dense<0.000000e+00> : vector<8x32xf32>
    %437 = tpu.matmul %436, %344, %cst_168 {dimension_numbers = #tpu.dot_dimension_numbers<[1], [0], [0], [1], [0, 0, 1, 1], [], []>} : vector<8x32xbf16>, vector<32x32xbf16>, vector<8x32xf32> -> vector<8x32xf32>
    %438 = vector.broadcast %346 : vector<1x32xf32> to vector<8x32xf32>
    %439 = arith.addf %437, %438 : vector<8x32xf32>
    %c1_169 = arith.constant 1 : index
    %c0_170 = arith.constant 0 : index
    %c0_171 = arith.constant 0 : index
    %440 = vector.load %arg10[%c1_169, %c0_170, %c0_171] : memref<2x1x32xf32, #tpu.memory_space<vmem>>, vector<1x1x32xf32>
    %441 = vector.shape_cast %440 : vector<1x1x32xf32> to vector<1x32xf32>
    %c1_172 = arith.constant 1 : index
    %c0_173 = arith.constant 0 : index
    %c0_174 = arith.constant 0 : index
    %442 = vector.load %arg11[%c1_172, %c0_173, %c0_174] : memref<2x1x32xf32, #tpu.memory_space<vmem>>, vector<1x1x32xf32>
    %443 = vector.shape_cast %442 : vector<1x1x32xf32> to vector<1x32xf32>
    %444 = arith.addf %439, %331 : vector<8x32xf32>
    %cst_175 = arith.constant dense<0.000000e+00> : vector<8xf32>
    %445 = vector.multi_reduction <add>, %444, %cst_175 [1] : vector<8x32xf32> to vector<8xf32>
    %446 = vector.shape_cast %445 : vector<8xf32> to vector<8x1xf32>
    %cst_176 = arith.constant 3.200000e+01 : f32
    %447 = vector.broadcast %cst_176 : f32 to vector<8x1xf32>
    %448 = arith.divf %446, %447 : vector<8x1xf32>
    %449 = vector.broadcast %448 : vector<8x1xf32> to vector<8x32xf32>
    %450 = arith.subf %444, %449 : vector<8x32xf32>
    %451 = arith.mulf %450, %450 : vector<8x32xf32>
    %cst_177 = arith.constant dense<0.000000e+00> : vector<8xf32>
    %452 = vector.multi_reduction <add>, %451, %cst_177 [1] : vector<8x32xf32> to vector<8xf32>
    %453 = vector.shape_cast %452 : vector<8xf32> to vector<8x1xf32>
    %cst_178 = arith.constant 3.200000e+01 : f32
    %454 = vector.broadcast %cst_178 : f32 to vector<8x1xf32>
    %455 = arith.divf %453, %454 : vector<8x1xf32>
    %456 = vector.broadcast %448 : vector<8x1xf32> to vector<8x32xf32>
    %457 = arith.subf %444, %456 : vector<8x32xf32>
    %cst_179 = arith.constant 9.99999974E-6 : f32
    %458 = vector.broadcast %cst_179 : f32 to vector<8x1xf32>
    %459 = arith.addf %455, %458 : vector<8x1xf32>
    %460 = math.rsqrt %459 : vector<8x1xf32>
    %461 = vector.broadcast %460 : vector<8x1xf32> to vector<8x32xf32>
    %462 = arith.mulf %457, %461 : vector<8x32xf32>
    %463 = vector.broadcast %441 : vector<1x32xf32> to vector<8x32xf32>
    %464 = arith.mulf %462, %463 : vector<8x32xf32>
    %465 = vector.broadcast %443 : vector<1x32xf32> to vector<8x32xf32>
    %466 = arith.addf %464, %465 : vector<8x32xf32>
    %c1_180 = arith.constant 1 : index
    %c0_181 = arith.constant 0 : index
    %c0_182 = arith.constant 0 : index
    %467 = vector.load %arg12[%c1_180, %c0_181, %c0_182] : memref<2x32x32xbf16, #tpu.memory_space<vmem>>, vector<1x32x32xbf16>
    %468 = vector.shape_cast %467 : vector<1x32x32xbf16> to vector<32x32xbf16>
    %469 = arith.truncf %466 : vector<8x32xf32> to vector<8x32xbf16>
    %cst_183 = arith.constant dense<0.000000e+00> : vector<8x32xf32>
    %470 = tpu.matmul %469, %468, %cst_183 {dimension_numbers = #tpu.dot_dimension_numbers<[1], [0], [0], [1], [0, 0, 1, 1], [], []>} : vector<8x32xbf16>, vector<32x32xbf16>, vector<8x32xf32> -> vector<8x32xf32>
    %c1_184 = arith.constant 1 : index
    %c0_185 = arith.constant 0 : index
    %c0_186 = arith.constant 0 : index
    %471 = vector.load %arg13[%c1_184, %c0_185, %c0_186] : memref<2x1x32xf32, #tpu.memory_space<vmem>>, vector<1x1x32xf32>
    %472 = vector.shape_cast %471 : vector<1x1x32xf32> to vector<1x32xf32>
    %473 = vector.broadcast %472 : vector<1x32xf32> to vector<8x32xf32>
    %474 = arith.addf %470, %473 : vector<8x32xf32>
    %c1_187 = arith.constant 1 : index
    %c0_188 = arith.constant 0 : index
    %c0_189 = arith.constant 0 : index
    %475 = vector.load %arg14[%c1_187, %c0_188, %c0_189] : memref<2x32x64xbf16, #tpu.memory_space<vmem>>, vector<1x32x64xbf16>
    %476 = vector.shape_cast %475 : vector<1x32x64xbf16> to vector<32x64xbf16>
    %477 = arith.truncf %3 : vector<8x32xf32> to vector<8x32xbf16>
    %cst_190 = arith.constant dense<0.000000e+00> : vector<8x64xf32>
    %478 = tpu.matmul %477, %476, %cst_190 {dimension_numbers = #tpu.dot_dimension_numbers<[1], [0], [0], [1], [0, 0, 1, 1], [], []>} : vector<8x32xbf16>, vector<32x64xbf16>, vector<8x64xf32> -> vector<8x64xf32>
    %c1_191 = arith.constant 1 : index
    %c0_192 = arith.constant 0 : index
    %c0_193 = arith.constant 0 : index
    %479 = vector.load %arg15[%c1_191, %c0_192, %c0_193] : memref<2x1x64xf32, #tpu.memory_space<vmem>>, vector<1x1x64xf32>
    %480 = vector.shape_cast %479 : vector<1x1x64xf32> to vector<1x64xf32>
    %481 = vector.broadcast %480 : vector<1x64xf32> to vector<8x64xf32>
    %482 = arith.addf %478, %481 : vector<8x64xf32>
    %483 = vector.extract_strided_slice %482 {offsets = [0, 0], sizes = [8, 32], strides = [1, 1]} : vector<8x64xf32> to vector<8x32xf32>
    %484 = vector.extract_strided_slice %482 {offsets = [0, 32], sizes = [8, 32], strides = [1, 1]} : vector<8x64xf32> to vector<8x32xf32>
    %c1_194 = arith.constant 1 : index
    %c0_195 = arith.constant 0 : index
    %c0_196 = arith.constant 0 : index
    %485 = vector.load %arg16[%c1_194, %c0_195, %c0_196] : memref<2x32x32xbf16, #tpu.memory_space<vmem>>, vector<1x32x32xbf16>
    %486 = vector.shape_cast %485 : vector<1x32x32xbf16> to vector<32x32xbf16>
    %c1_197 = arith.constant 1 : index
    %c0_198 = arith.constant 0 : index
    %c0_199 = arith.constant 0 : index
    %487 = vector.load %arg17[%c1_197, %c0_198, %c0_199] : memref<2x1x32xf32, #tpu.memory_space<vmem>>, vector<1x1x32xf32>
    %488 = vector.shape_cast %487 : vector<1x1x32xf32> to vector<1x32xf32>
    %489 = vector.extract_strided_slice %474 {offsets = [0, 0], sizes = [8, 8], strides = [1, 1]} : vector<8x32xf32> to vector<8x8xf32>
    %490 = vector.extract_strided_slice %483 {offsets = [0, 0], sizes = [8, 8], strides = [1, 1]} : vector<8x32xf32> to vector<8x8xf32>
    %491 = arith.truncf %489 : vector<8x8xf32> to vector<8x8xbf16>
    %492 = arith.truncf %490 : vector<8x8xf32> to vector<8x8xbf16>
    %cst_200 = arith.constant dense<0.000000e+00> : vector<8x8xf32>
    %493 = tpu.matmul %491, %492, %cst_200 {dimension_numbers = #tpu.dot_dimension_numbers<[1], [1], [0], [0], [0, 0, 1, 0], [], []>} : vector<8x8xbf16>, vector<8x8xbf16>, vector<8x8xf32> -> vector<8x8xf32>
    %cst_201 = arith.constant 0.353553385 : f32
    %494 = vector.broadcast %cst_201 : f32 to vector<8x8xf32>
    %495 = arith.mulf %493, %494 : vector<8x8xf32>
    %496 = arith.addf %495, %7 : vector<8x8xf32>
    %cst_202 = arith.constant dense<0xFF800000> : vector<8xf32>
    %497 = vector.multi_reduction <maximumf>, %496, %cst_202 [1] : vector<8x8xf32> to vector<8xf32>
    %498 = vector.shape_cast %497 : vector<8xf32> to vector<8x1xf32>
    %499 = vector.broadcast %498 : vector<8x1xf32> to vector<8x8xf32>
    %500 = arith.subf %496, %499 : vector<8x8xf32>
    %501 = math.exp %500 : vector<8x8xf32>
    %cst_203 = arith.constant dense<0.000000e+00> : vector<8xf32>
    %502 = vector.multi_reduction <add>, %501, %cst_203 [1] : vector<8x8xf32> to vector<8xf32>
    %503 = vector.shape_cast %502 : vector<8xf32> to vector<8x1xf32>
    %504 = tpu.reciprocal %503 {approx = true} : vector<8x1xf32> -> vector<8x1xf32>
    %505 = vector.broadcast %504 : vector<8x1xf32> to vector<8x8xf32>
    %506 = arith.mulf %501, %505 : vector<8x8xf32>
    %507 = vector.extract_strided_slice %484 {offsets = [0, 0], sizes = [8, 8], strides = [1, 1]} : vector<8x32xf32> to vector<8x8xf32>
    %508 = arith.truncf %506 : vector<8x8xf32> to vector<8x8xbf16>
    %509 = arith.truncf %507 : vector<8x8xf32> to vector<8x8xbf16>
    %cst_204 = arith.constant dense<0.000000e+00> : vector<8x8xf32>
    %510 = tpu.matmul %508, %509, %cst_204 {dimension_numbers = #tpu.dot_dimension_numbers<[1], [0], [0], [1], [0, 0, 1, 1], [], []>} : vector<8x8xbf16>, vector<8x8xbf16>, vector<8x8xf32> -> vector<8x8xf32>
    %511 = vector.extract_strided_slice %474 {offsets = [0, 8], sizes = [8, 8], strides = [1, 1]} : vector<8x32xf32> to vector<8x8xf32>
    %512 = vector.extract_strided_slice %483 {offsets = [0, 8], sizes = [8, 8], strides = [1, 1]} : vector<8x32xf32> to vector<8x8xf32>
    %513 = arith.truncf %511 : vector<8x8xf32> to vector<8x8xbf16>
    %514 = arith.truncf %512 : vector<8x8xf32> to vector<8x8xbf16>
    %cst_205 = arith.constant dense<0.000000e+00> : vector<8x8xf32>
    %515 = tpu.matmul %513, %514, %cst_205 {dimension_numbers = #tpu.dot_dimension_numbers<[1], [1], [0], [0], [0, 0, 1, 0], [], []>} : vector<8x8xbf16>, vector<8x8xbf16>, vector<8x8xf32> -> vector<8x8xf32>
    %cst_206 = arith.constant 0.353553385 : f32
    %516 = vector.broadcast %cst_206 : f32 to vector<8x8xf32>
    %517 = arith.mulf %515, %516 : vector<8x8xf32>
    %518 = arith.addf %517, %7 : vector<8x8xf32>
    %cst_207 = arith.constant dense<0xFF800000> : vector<8xf32>
    %519 = vector.multi_reduction <maximumf>, %518, %cst_207 [1] : vector<8x8xf32> to vector<8xf32>
    %520 = vector.shape_cast %519 : vector<8xf32> to vector<8x1xf32>
    %521 = vector.broadcast %520 : vector<8x1xf32> to vector<8x8xf32>
    %522 = arith.subf %518, %521 : vector<8x8xf32>
    %523 = math.exp %522 : vector<8x8xf32>
    %cst_208 = arith.constant dense<0.000000e+00> : vector<8xf32>
    %524 = vector.multi_reduction <add>, %523, %cst_208 [1] : vector<8x8xf32> to vector<8xf32>
    %525 = vector.shape_cast %524 : vector<8xf32> to vector<8x1xf32>
    %526 = tpu.reciprocal %525 {approx = true} : vector<8x1xf32> -> vector<8x1xf32>
    %527 = vector.broadcast %526 : vector<8x1xf32> to vector<8x8xf32>
    %528 = arith.mulf %523, %527 : vector<8x8xf32>
    %529 = vector.extract_strided_slice %484 {offsets = [0, 8], sizes = [8, 8], strides = [1, 1]} : vector<8x32xf32> to vector<8x8xf32>
    %530 = arith.truncf %528 : vector<8x8xf32> to vector<8x8xbf16>
    %531 = arith.truncf %529 : vector<8x8xf32> to vector<8x8xbf16>
    %cst_209 = arith.constant dense<0.000000e+00> : vector<8x8xf32>
    %532 = tpu.matmul %530, %531, %cst_209 {dimension_numbers = #tpu.dot_dimension_numbers<[1], [0], [0], [1], [0, 0, 1, 1], [], []>} : vector<8x8xbf16>, vector<8x8xbf16>, vector<8x8xf32> -> vector<8x8xf32>
    %533 = vector.extract_strided_slice %474 {offsets = [0, 16], sizes = [8, 8], strides = [1, 1]} : vector<8x32xf32> to vector<8x8xf32>
    %534 = vector.extract_strided_slice %483 {offsets = [0, 16], sizes = [8, 8], strides = [1, 1]} : vector<8x32xf32> to vector<8x8xf32>
    %535 = arith.truncf %533 : vector<8x8xf32> to vector<8x8xbf16>
    %536 = arith.truncf %534 : vector<8x8xf32> to vector<8x8xbf16>
    %cst_210 = arith.constant dense<0.000000e+00> : vector<8x8xf32>
    %537 = tpu.matmul %535, %536, %cst_210 {dimension_numbers = #tpu.dot_dimension_numbers<[1], [1], [0], [0], [0, 0, 1, 0], [], []>} : vector<8x8xbf16>, vector<8x8xbf16>, vector<8x8xf32> -> vector<8x8xf32>
    %cst_211 = arith.constant 0.353553385 : f32
    %538 = vector.broadcast %cst_211 : f32 to vector<8x8xf32>
    %539 = arith.mulf %537, %538 : vector<8x8xf32>
    %540 = arith.addf %539, %7 : vector<8x8xf32>
    %cst_212 = arith.constant dense<0xFF800000> : vector<8xf32>
    %541 = vector.multi_reduction <maximumf>, %540, %cst_212 [1] : vector<8x8xf32> to vector<8xf32>
    %542 = vector.shape_cast %541 : vector<8xf32> to vector<8x1xf32>
    %543 = vector.broadcast %542 : vector<8x1xf32> to vector<8x8xf32>
    %544 = arith.subf %540, %543 : vector<8x8xf32>
    %545 = math.exp %544 : vector<8x8xf32>
    %cst_213 = arith.constant dense<0.000000e+00> : vector<8xf32>
    %546 = vector.multi_reduction <add>, %545, %cst_213 [1] : vector<8x8xf32> to vector<8xf32>
    %547 = vector.shape_cast %546 : vector<8xf32> to vector<8x1xf32>
    %548 = tpu.reciprocal %547 {approx = true} : vector<8x1xf32> -> vector<8x1xf32>
    %549 = vector.broadcast %548 : vector<8x1xf32> to vector<8x8xf32>
    %550 = arith.mulf %545, %549 : vector<8x8xf32>
    %551 = vector.extract_strided_slice %484 {offsets = [0, 16], sizes = [8, 8], strides = [1, 1]} : vector<8x32xf32> to vector<8x8xf32>
    %552 = arith.truncf %550 : vector<8x8xf32> to vector<8x8xbf16>
    %553 = arith.truncf %551 : vector<8x8xf32> to vector<8x8xbf16>
    %cst_214 = arith.constant dense<0.000000e+00> : vector<8x8xf32>
    %554 = tpu.matmul %552, %553, %cst_214 {dimension_numbers = #tpu.dot_dimension_numbers<[1], [0], [0], [1], [0, 0, 1, 1], [], []>} : vector<8x8xbf16>, vector<8x8xbf16>, vector<8x8xf32> -> vector<8x8xf32>
    %555 = vector.extract_strided_slice %474 {offsets = [0, 24], sizes = [8, 8], strides = [1, 1]} : vector<8x32xf32> to vector<8x8xf32>
    %556 = vector.extract_strided_slice %483 {offsets = [0, 24], sizes = [8, 8], strides = [1, 1]} : vector<8x32xf32> to vector<8x8xf32>
    %557 = arith.truncf %555 : vector<8x8xf32> to vector<8x8xbf16>
    %558 = arith.truncf %556 : vector<8x8xf32> to vector<8x8xbf16>
    %cst_215 = arith.constant dense<0.000000e+00> : vector<8x8xf32>
    %559 = tpu.matmul %557, %558, %cst_215 {dimension_numbers = #tpu.dot_dimension_numbers<[1], [1], [0], [0], [0, 0, 1, 0], [], []>} : vector<8x8xbf16>, vector<8x8xbf16>, vector<8x8xf32> -> vector<8x8xf32>
    %cst_216 = arith.constant 0.353553385 : f32
    %560 = vector.broadcast %cst_216 : f32 to vector<8x8xf32>
    %561 = arith.mulf %559, %560 : vector<8x8xf32>
    %562 = arith.addf %561, %7 : vector<8x8xf32>
    %cst_217 = arith.constant dense<0xFF800000> : vector<8xf32>
    %563 = vector.multi_reduction <maximumf>, %562, %cst_217 [1] : vector<8x8xf32> to vector<8xf32>
    %564 = vector.shape_cast %563 : vector<8xf32> to vector<8x1xf32>
    %565 = vector.broadcast %564 : vector<8x1xf32> to vector<8x8xf32>
    %566 = arith.subf %562, %565 : vector<8x8xf32>
    %567 = math.exp %566 : vector<8x8xf32>
    %cst_218 = arith.constant dense<0.000000e+00> : vector<8xf32>
    %568 = vector.multi_reduction <add>, %567, %cst_218 [1] : vector<8x8xf32> to vector<8xf32>
    %569 = vector.shape_cast %568 : vector<8xf32> to vector<8x1xf32>
    %570 = tpu.reciprocal %569 {approx = true} : vector<8x1xf32> -> vector<8x1xf32>
    %571 = vector.broadcast %570 : vector<8x1xf32> to vector<8x8xf32>
    %572 = arith.mulf %567, %571 : vector<8x8xf32>
    %573 = vector.extract_strided_slice %484 {offsets = [0, 24], sizes = [8, 8], strides = [1, 1]} : vector<8x32xf32> to vector<8x8xf32>
    %574 = arith.truncf %572 : vector<8x8xf32> to vector<8x8xbf16>
    %575 = arith.truncf %573 : vector<8x8xf32> to vector<8x8xbf16>
    %cst_219 = arith.constant dense<0.000000e+00> : vector<8x8xf32>
    %576 = tpu.matmul %574, %575, %cst_219 {dimension_numbers = #tpu.dot_dimension_numbers<[1], [0], [0], [1], [0, 0, 1, 1], [], []>} : vector<8x8xbf16>, vector<8x8xbf16>, vector<8x8xf32> -> vector<8x8xf32>
    %577 = tpu.concatenate %510, %532, %554, %576 in 1 : vector<8x8xf32>, vector<8x8xf32>, vector<8x8xf32>, vector<8x8xf32> -> vector<8x32xf32>
    %578 = arith.truncf %577 : vector<8x32xf32> to vector<8x32xbf16>
    %cst_220 = arith.constant dense<0.000000e+00> : vector<8x32xf32>
    %579 = tpu.matmul %578, %486, %cst_220 {dimension_numbers = #tpu.dot_dimension_numbers<[1], [0], [0], [1], [0, 0, 1, 1], [], []>} : vector<8x32xbf16>, vector<32x32xbf16>, vector<8x32xf32> -> vector<8x32xf32>
    %580 = vector.broadcast %488 : vector<1x32xf32> to vector<8x32xf32>
    %581 = arith.addf %579, %580 : vector<8x32xf32>
    %c1_221 = arith.constant 1 : index
    %c0_222 = arith.constant 0 : index
    %c0_223 = arith.constant 0 : index
    %582 = vector.load %arg18[%c1_221, %c0_222, %c0_223] : memref<2x1x32xf32, #tpu.memory_space<vmem>>, vector<1x1x32xf32>
    %583 = vector.shape_cast %582 : vector<1x1x32xf32> to vector<1x32xf32>
    %c1_224 = arith.constant 1 : index
    %c0_225 = arith.constant 0 : index
    %c0_226 = arith.constant 0 : index
    %584 = vector.load %arg19[%c1_224, %c0_225, %c0_226] : memref<2x1x32xf32, #tpu.memory_space<vmem>>, vector<1x1x32xf32>
    %585 = vector.shape_cast %584 : vector<1x1x32xf32> to vector<1x32xf32>
    %586 = arith.addf %581, %466 : vector<8x32xf32>
    %cst_227 = arith.constant dense<0.000000e+00> : vector<8xf32>
    %587 = vector.multi_reduction <add>, %586, %cst_227 [1] : vector<8x32xf32> to vector<8xf32>
    %588 = vector.shape_cast %587 : vector<8xf32> to vector<8x1xf32>
    %cst_228 = arith.constant 3.200000e+01 : f32
    %589 = vector.broadcast %cst_228 : f32 to vector<8x1xf32>
    %590 = arith.divf %588, %589 : vector<8x1xf32>
    %591 = vector.broadcast %590 : vector<8x1xf32> to vector<8x32xf32>
    %592 = arith.subf %586, %591 : vector<8x32xf32>
    %593 = arith.mulf %592, %592 : vector<8x32xf32>
    %cst_229 = arith.constant dense<0.000000e+00> : vector<8xf32>
    %594 = vector.multi_reduction <add>, %593, %cst_229 [1] : vector<8x32xf32> to vector<8xf32>
    %595 = vector.shape_cast %594 : vector<8xf32> to vector<8x1xf32>
    %cst_230 = arith.constant 3.200000e+01 : f32
    %596 = vector.broadcast %cst_230 : f32 to vector<8x1xf32>
    %597 = arith.divf %595, %596 : vector<8x1xf32>
    %598 = vector.broadcast %590 : vector<8x1xf32> to vector<8x32xf32>
    %599 = arith.subf %586, %598 : vector<8x32xf32>
    %cst_231 = arith.constant 9.99999974E-6 : f32
    %600 = vector.broadcast %cst_231 : f32 to vector<8x1xf32>
    %601 = arith.addf %597, %600 : vector<8x1xf32>
    %602 = math.rsqrt %601 : vector<8x1xf32>
    %603 = vector.broadcast %602 : vector<8x1xf32> to vector<8x32xf32>
    %604 = arith.mulf %599, %603 : vector<8x32xf32>
    %605 = vector.broadcast %583 : vector<1x32xf32> to vector<8x32xf32>
    %606 = arith.mulf %604, %605 : vector<8x32xf32>
    %607 = vector.broadcast %585 : vector<1x32xf32> to vector<8x32xf32>
    %608 = arith.addf %606, %607 : vector<8x32xf32>
    %c1_232 = arith.constant 1 : index
    %c0_233 = arith.constant 0 : index
    %c0_234 = arith.constant 0 : index
    %609 = vector.load %arg20[%c1_232, %c0_233, %c0_234] : memref<2x32x64xbf16, #tpu.memory_space<vmem>>, vector<1x32x64xbf16>
    %610 = vector.shape_cast %609 : vector<1x32x64xbf16> to vector<32x64xbf16>
    %c1_235 = arith.constant 1 : index
    %c0_236 = arith.constant 0 : index
    %c0_237 = arith.constant 0 : index
    %611 = vector.load %arg21[%c1_235, %c0_236, %c0_237] : memref<2x1x64xf32, #tpu.memory_space<vmem>>, vector<1x1x64xf32>
    %612 = vector.shape_cast %611 : vector<1x1x64xf32> to vector<1x64xf32>
    %c1_238 = arith.constant 1 : index
    %c0_239 = arith.constant 0 : index
    %c0_240 = arith.constant 0 : index
    %613 = vector.load %arg22[%c1_238, %c0_239, %c0_240] : memref<2x64x32xbf16, #tpu.memory_space<vmem>>, vector<1x64x32xbf16>
    %614 = vector.shape_cast %613 : vector<1x64x32xbf16> to vector<64x32xbf16>
    %c1_241 = arith.constant 1 : index
    %c0_242 = arith.constant 0 : index
    %c0_243 = arith.constant 0 : index
    %615 = vector.load %arg23[%c1_241, %c0_242, %c0_243] : memref<2x1x32xf32, #tpu.memory_space<vmem>>, vector<1x1x32xf32>
    %616 = vector.shape_cast %615 : vector<1x1x32xf32> to vector<1x32xf32>
    %617 = arith.truncf %608 : vector<8x32xf32> to vector<8x32xbf16>
    %cst_244 = arith.constant dense<0.000000e+00> : vector<8x64xf32>
    %618 = tpu.matmul %617, %610, %cst_244 {dimension_numbers = #tpu.dot_dimension_numbers<[1], [0], [0], [1], [0, 0, 1, 1], [], []>} : vector<8x32xbf16>, vector<32x64xbf16>, vector<8x64xf32> -> vector<8x64xf32>
    %619 = vector.broadcast %612 : vector<1x64xf32> to vector<8x64xf32>
    %620 = arith.addf %618, %619 : vector<8x64xf32>
    %cst_245 = arith.constant 0.000000e+00 : f32
    %621 = vector.broadcast %cst_245 : f32 to vector<8x64xf32>
    %622 = arith.maximumf %620, %621 : vector<8x64xf32>
    %623 = arith.truncf %622 : vector<8x64xf32> to vector<8x64xbf16>
    %cst_246 = arith.constant dense<0.000000e+00> : vector<8x32xf32>
    %624 = tpu.matmul %623, %614, %cst_246 {dimension_numbers = #tpu.dot_dimension_numbers<[1], [0], [0], [1], [0, 0, 1, 1], [], []>} : vector<8x64xbf16>, vector<64x32xbf16>, vector<8x32xf32> -> vector<8x32xf32>
    %625 = vector.broadcast %616 : vector<1x32xf32> to vector<8x32xf32>
    %626 = arith.addf %624, %625 : vector<8x32xf32>
    %c1_247 = arith.constant 1 : index
    %c0_248 = arith.constant 0 : index
    %c0_249 = arith.constant 0 : index
    %627 = vector.load %arg24[%c1_247, %c0_248, %c0_249] : memref<2x1x32xf32, #tpu.memory_space<vmem>>, vector<1x1x32xf32>
    %628 = vector.shape_cast %627 : vector<1x1x32xf32> to vector<1x32xf32>
    %c1_250 = arith.constant 1 : index
    %c0_251 = arith.constant 0 : index
    %c0_252 = arith.constant 0 : index
    %629 = vector.load %arg25[%c1_250, %c0_251, %c0_252] : memref<2x1x32xf32, #tpu.memory_space<vmem>>, vector<1x1x32xf32>
    %630 = vector.shape_cast %629 : vector<1x1x32xf32> to vector<1x32xf32>
    %631 = arith.addf %626, %608 : vector<8x32xf32>
    %cst_253 = arith.constant dense<0.000000e+00> : vector<8xf32>
    %632 = vector.multi_reduction <add>, %631, %cst_253 [1] : vector<8x32xf32> to vector<8xf32>
    %633 = vector.shape_cast %632 : vector<8xf32> to vector<8x1xf32>
    %cst_254 = arith.constant 3.200000e+01 : f32
    %634 = vector.broadcast %cst_254 : f32 to vector<8x1xf32>
    %635 = arith.divf %633, %634 : vector<8x1xf32>
    %636 = vector.broadcast %635 : vector<8x1xf32> to vector<8x32xf32>
    %637 = arith.subf %631, %636 : vector<8x32xf32>
    %638 = arith.mulf %637, %637 : vector<8x32xf32>
    %cst_255 = arith.constant dense<0.000000e+00> : vector<8xf32>
    %639 = vector.multi_reduction <add>, %638, %cst_255 [1] : vector<8x32xf32> to vector<8xf32>
    %640 = vector.shape_cast %639 : vector<8xf32> to vector<8x1xf32>
    %cst_256 = arith.constant 3.200000e+01 : f32
    %641 = vector.broadcast %cst_256 : f32 to vector<8x1xf32>
    %642 = arith.divf %640, %641 : vector<8x1xf32>
    %643 = vector.broadcast %635 : vector<8x1xf32> to vector<8x32xf32>
    %644 = arith.subf %631, %643 : vector<8x32xf32>
    %cst_257 = arith.constant 9.99999974E-6 : f32
    %645 = vector.broadcast %cst_257 : f32 to vector<8x1xf32>
    %646 = arith.addf %642, %645 : vector<8x1xf32>
    %647 = math.rsqrt %646 : vector<8x1xf32>
    %648 = vector.broadcast %647 : vector<8x1xf32> to vector<8x32xf32>
    %649 = arith.mulf %644, %648 : vector<8x32xf32>
    %650 = vector.broadcast %628 : vector<1x32xf32> to vector<8x32xf32>
    %651 = arith.mulf %649, %650 : vector<8x32xf32>
    %652 = vector.broadcast %630 : vector<1x32xf32> to vector<8x32xf32>
    %653 = arith.addf %651, %652 : vector<8x32xf32>
    %c0_258 = arith.constant 0 : index
    %c0_259 = arith.constant 0 : index
    %654 = vector.load %arg26[%c0_258, %c0_259] : memref<28x32xbf16, #tpu.memory_space<vmem>>, vector<28x32xbf16>
    %655 = arith.truncf %653 : vector<8x32xf32> to vector<8x32xbf16>
    %cst_260 = arith.constant dense<0.000000e+00> : vector<8x28xf32>
    %656 = tpu.matmul %655, %654, %cst_260 {dimension_numbers = #tpu.dot_dimension_numbers<[1], [1], [0], [0], [0, 0, 1, 0], [], []>} : vector<8x32xbf16>, vector<28x32xbf16>, vector<8x28xf32> -> vector<8x28xf32>
    %c0_261 = arith.constant 0 : index
    %c0_262 = arith.constant 0 : index
    %657 = vector.load %arg27[%c0_261, %c0_262] : memref<1x28xf32, #tpu.memory_space<vmem>>, vector<1x28xf32>
    %658 = vector.broadcast %657 : vector<1x28xf32> to vector<8x28xf32>
    %659 = arith.addf %656, %658 : vector<8x28xf32>
    %c0_263 = arith.constant 0 : index
    %c0_264 = arith.constant 0 : index
    %c0_265 = arith.constant 0 : index
    %660 = vector.load %arg29[%c0_263, %c0_264, %c0_265] : memref<1x8x28xf32, #tpu.memory_space<vmem>>, vector<1x8x28xf32>
    %661 = vector.shape_cast %660 : vector<1x8x28xf32> to vector<8x28xf32>
    %662 = vector.shape_cast %659 : vector<8x28xf32> to vector<1x8x28xf32>
    tpu.vector_store %arg29[%c0_263, %c0_264, %c0_265], %662 {strides = array<i32>} : memref<1x8x28xf32, #tpu.memory_space<vmem>>, vector<1x8x28xf32>,
    %663 = arith.truncf %653 : vector<8x32xf32> to vector<8x32xbf16>
    %cst_266 = arith.constant dense<0.000000e+00> : vector<28x8xf32>
    %664 = tpu.matmul %654, %663, %cst_266 {dimension_numbers = #tpu.dot_dimension_numbers<[1], [1], [0], [0], [0, 0, 1, 0], [], []>} : vector<28x32xbf16>, vector<8x32xbf16>, vector<28x8xf32> -> vector<28x8xf32>
    %c0_267 = arith.constant 0 : index
    %c0_268 = arith.constant 0 : index
    %665 = vector.load %arg28[%c0_267, %c0_268] : memref<28x1xf32, #tpu.memory_space<vmem>>, vector<28x1xf32>
    %666 = vector.broadcast %665 : vector<28x1xf32> to vector<28x8xf32>
    %667 = arith.addf %664, %666 : vector<28x8xf32>
    %cst_269 = arith.constant dense<0xFF800000> : vector<8xf32>
    %668 = vector.multi_reduction <maximumf>, %667, %cst_269 [0] : vector<28x8xf32> to vector<8xf32>
    %669 = vector.shape_cast %668 : vector<8xf32> to vector<1x8xf32>
    %670 = vector.broadcast %669 : vector<1x8xf32> to vector<28x8xf32>
    %671 = arith.subf %667, %670 : vector<28x8xf32>
    %672 = math.exp %671 : vector<28x8xf32>
    %cst_270 = arith.constant dense<0.000000e+00> : vector<8xf32>
    %673 = vector.multi_reduction <add>, %672, %cst_270 [0] : vector<28x8xf32> to vector<8xf32>
    %674 = vector.shape_cast %673 : vector<8xf32> to vector<1x8xf32>
    %675 = math.log %674 : vector<1x8xf32>
    %676 = arith.addf %675, %669 : vector<1x8xf32>
    %677 = tpu.iota {dimensions = array<i32: 0>} : vector<28x8xi32>
    %678 = vector.broadcast %9 : vector<1x8xi32> to vector<28x8xi32>
    %679 = arith.cmpi eq, %677, %678 : vector<28x8xi32>
    %cst_271 = arith.constant 0.000000e+00 : f32
    %680 = vector.broadcast %cst_271 : f32 to vector<28x8xf32>
    %681 = arith.select %679, %667, %680 : vector<28x8xi1>, vector<28x8xf32>
    %cst_272 = arith.constant dense<0.000000e+00> : vector<8xf32>
    %682 = vector.multi_reduction <add>, %681, %cst_272 [0] : vector<28x8xf32> to vector<8xf32>
    %683 = vector.shape_cast %682 : vector<8xf32> to vector<1x8xf32>
    %c0_i32 = arith.constant 0 : i32
    %684 = vector.broadcast %c0_i32 : i32 to vector<1x8xi32>
    %685 = arith.cmpi eq, %9, %684 : vector<1x8xi32>
    %686 = arith.subf %676, %683 : vector<1x8xf32>
    %cst_273 = arith.constant 0.000000e+00 : f32
    %687 = vector.broadcast %cst_273 : f32 to vector<1x8xf32>
    %688 = arith.select %685, %687, %686 : vector<1x8xi1>, vector<1x8xf32>
    %c0_274 = arith.constant 0 : index
    %c0_275 = arith.constant 0 : index
    %c0_276 = arith.constant 0 : index
    %689 = vector.load %arg30[%c0_274, %c0_275, %c0_276] : memref<1x1x8xf32, #tpu.memory_space<vmem>>, vector<1x1x8xf32>
    %690 = vector.shape_cast %689 : vector<1x1x8xf32> to vector<1x8xf32>
    %691 = vector.shape_cast %688 : vector<1x8xf32> to vector<1x1x8xf32>
    tpu.vector_store %arg30[%c0_274, %c0_275, %c0_276], %691 {strides = array<i32>} : memref<1x1x8xf32, #tpu.memory_space<vmem>>, vector<1x1x8xf32>,
    return
  }
  func.func @transform_0(%arg0: i32) -> (i32, i32, i32) {
    %c0_i32 = arith.constant 0 : i32
    %c0_i32_0 = arith.constant 0 : i32
    %c0_i32_1 = arith.constant 0 : i32
    return %arg0, %c0_i32, %c0_i32_0 : i32, i32, i32
  }
  func.func @transform_1(%arg0: i32) -> (i32, i32, i32) {
    %c0_i32 = arith.constant 0 : i32
    %c0_i32_0 = arith.constant 0 : i32
    %c0_i32_1 = arith.constant 0 : i32
    return %arg0, %c0_i32, %c0_i32_0 : i32, i32, i32
  }
  func.func @transform_2(%arg0: i32) -> (i32, i32, i32) {
    %c0_i32 = arith.constant 0 : i32
    %c0_i32_0 = arith.constant 0 : i32
    %c0_i32_1 = arith.constant 0 : i32
    return %arg0, %c0_i32, %c0_i32_0 : i32, i32, i32
  }
  func.func @transform_3(%arg0: i32) -> (i32, i32, i32) {
    %c0_i32 = arith.constant 0 : i32
    %c0_i32_0 = arith.constant 0 : i32
    %c0_i32_1 = arith.constant 0 : i32
    return %arg0, %c0_i32, %c0_i32_0 : i32, i32, i32
  }
  func.func @transform_4(%arg0: i32) -> (i32, i32, i32) {
    %c0_i32 = arith.constant 0 : i32
    %c0_i32_0 = arith.constant 0 : i32
    %c0_i32_1 = arith.constant 0 : i32
    return %arg0, %c0_i32, %c0_i32_0 : i32, i32, i32
  }
  func.func @transform_5(%arg0: i32) -> (i32, i32, i32) {
    %c0_i32 = arith.constant 0 : i32
    %c0_i32_0 = arith.constant 0 : i32
    %c0_i32_1 = arith.constant 0 : i32
    %c0_i32_2 = arith.constant 0 : i32
    return %c0_i32, %c0_i32_0, %c0_i32_1 : i32, i32, i32
  }
  func.func @transform_6(%arg0: i32) -> (i32, i32, i32) {
    %c0_i32 = arith.constant 0 : i32
    %c0_i32_0 = arith.constant 0 : i32
    %c0_i32_1 = arith.constant 0 : i32
    %c0_i32_2 = arith.constant 0 : i32
    return %c0_i32, %c0_i32_0, %c0_i32_1 : i32, i32, i32
  }
  func.func @transform_7(%arg0: i32) -> (i32, i32, i32) {
    %c0_i32 = arith.constant 0 : i32
    %c0_i32_0 = arith.constant 0 : i32
    %c0_i32_1 = arith.constant 0 : i32
    %c0_i32_2 = arith.constant 0 : i32
    return %c0_i32, %c0_i32_0, %c0_i32_1 : i32, i32, i32
  }
  func.func @transform_8(%arg0: i32) -> (i32, i32, i32) {
    %c0_i32 = arith.constant 0 : i32
    %c0_i32_0 = arith.constant 0 : i32
    %c0_i32_1 = arith.constant 0 : i32
    %c0_i32_2 = arith.constant 0 : i32
    return %c0_i32, %c0_i32_0, %c0_i32_1 : i32, i32, i32
  }
  func.func @transform_9(%arg0: i32) -> (i32, i32, i32) {
    %c0_i32 = arith.constant 0 : i32
    %c0_i32_0 = arith.constant 0 : i32
    %c0_i32_1 = arith.constant 0 : i32
    %c0_i32_2 = arith.constant 0 : i32
    return %c0_i32, %c0_i32_0, %c0_i32_1 : i32, i32, i32
  }
  func.func @transform_10(%arg0: i32) -> (i32, i32, i32) {
    %c0_i32 = arith.constant 0 : i32
    %c0_i32_0 = arith.constant 0 : i32
    %c0_i32_1 = arith.constant 0 : i32
    %c0_i32_2 = arith.constant 0 : i32
    return %c0_i32, %c0_i32_0, %c0_i32_1 : i32, i32, i32
  }
  func.func @transform_11(%arg0: i32) -> (i32, i32, i32) {
    %c0_i32 = arith.constant 0 : i32
    %c0_i32_0 = arith.constant 0 : i32
    %c0_i32_1 = arith.constant 0 : i32
    %c0_i32_2 = arith.constant 0 : i32
    return %c0_i32, %c0_i32_0, %c0_i32_1 : i32, i32, i32
  }
  func.func @transform_12(%arg0: i32) -> (i32, i32, i32) {
    %c0_i32 = arith.constant 0 : i32
    %c0_i32_0 = arith.constant 0 : i32
    %c0_i32_1 = arith.constant 0 : i32
    %c0_i32_2 = arith.constant 0 : i32
    return %c0_i32, %c0_i32_0, %c0_i32_1 : i32, i32, i32
  }
  func.func @transform_13(%arg0: i32) -> (i32, i32, i32) {
    %c0_i32 = arith.constant 0 : i32
    %c0_i32_0 = arith.constant 0 : i32
    %c0_i32_1 = arith.constant 0 : i32
    %c0_i32_2 = arith.constant 0 : i32
    return %c0_i32, %c0_i32_0, %c0_i32_1 : i32, i32, i32
  }
  func.func @transform_14(%arg0: i32) -> (i32, i32, i32) {
    %c0_i32 = arith.constant 0 : i32
    %c0_i32_0 = arith.constant 0 : i32
    %c0_i32_1 = arith.constant 0 : i32
    %c0_i32_2 = arith.constant 0 : i32
    return %c0_i32, %c0_i32_0, %c0_i32_1 : i32, i32, i32
  }
  func.func @transform_15(%arg0: i32) -> (i32, i32, i32) {
    %c0_i32 = arith.constant 0 : i32
    %c0_i32_0 = arith.constant 0 : i32
    %c0_i32_1 = arith.constant 0 : i32
    %c0_i32_2 = arith.constant 0 : i32
    return %c0_i32, %c0_i32_0, %c0_i32_1 : i32, i32, i32
  }
  func.func @transform_16(%arg0: i32) -> (i32, i32, i32) {
    %c0_i32 = arith.constant 0 : i32
    %c0_i32_0 = arith.constant 0 : i32
    %c0_i32_1 = arith.constant 0 : i32
    %c0_i32_2 = arith.constant 0 : i32
    return %c0_i32, %c0_i32_0, %c0_i32_1 : i32, i32, i32
  }
  func.func @transform_17(%arg0: i32) -> (i32, i32, i32) {
    %c0_i32 = arith.constant 0 : i32
    %c0_i32_0 = arith.constant 0 : i32
    %c0_i32_1 = arith.constant 0 : i32
    %c0_i32_2 = arith.constant 0 : i32
    return %c0_i32, %c0_i32_0, %c0_i32_1 : i32, i32, i32
  }
  func.func @transform_18(%arg0: i32) -> (i32, i32, i32) {
    %c0_i32 = arith.constant 0 : i32
    %c0_i32_0 = arith.constant 0 : i32
    %c0_i32_1 = arith.constant 0 : i32
    %c0_i32_2 = arith.constant 0 : i32
    return %c0_i32, %c0_i32_0, %c0_i32_1 : i32, i32, i32
  }
  func.func @transform_19(%arg0: i32) -> (i32, i32, i32) {
    %c0_i32 = arith.constant 0 : i32
    %c0_i32_0 = arith.constant 0 : i32
    %c0_i32_1 = arith.constant 0 : i32
    %c0_i32_2 = arith.constant 0 : i32
    return %c0_i32, %c0_i32_0, %c0_i32_1 : i32, i32, i32
  }
  func.func @transform_20(%arg0: i32) -> (i32, i32, i32) {
    %c0_i32 = arith.constant 0 : i32
    %c0_i32_0 = arith.constant 0 : i32
    %c0_i32_1 = arith.constant 0 : i32
    %c0_i32_2 = arith.constant 0 : i32
    return %c0_i32, %c0_i32_0, %c0_i32_1 : i32, i32, i32
  }
  func.func @transform_21(%arg0: i32) -> (i32, i32, i32) {
    %c0_i32 = arith.constant 0 : i32
    %c0_i32_0 = arith.constant 0 : i32
    %c0_i32_1 = arith.constant 0 : i32
    %c0_i32_2 = arith.constant 0 : i32
    return %c0_i32, %c0_i32_0, %c0_i32_1 : i32, i32, i32
  }
  func.func @transform_22(%arg0: i32) -> (i32, i32, i32) {
    %c0_i32 = arith.constant 0 : i32
    %c0_i32_0 = arith.constant 0 : i32
    %c0_i32_1 = arith.constant 0 : i32
    %c0_i32_2 = arith.constant 0 : i32
    return %c0_i32, %c0_i32_0, %c0_i32_1 : i32, i32, i32
  }
  func.func @transform_23(%arg0: i32) -> (i32, i32, i32) {
    %c0_i32 = arith.constant 0 : i32
    %c0_i32_0 = arith.constant 0 : i32
    %c0_i32_1 = arith.constant 0 : i32
    %c0_i32_2 = arith.constant 0 : i32
    return %c0_i32, %c0_i32_0, %c0_i32_1 : i32, i32, i32
  }
  func.func @transform_24(%arg0: i32) -> (i32, i32, i32) {
    %c0_i32 = arith.constant 0 : i32
    %c0_i32_0 = arith.constant 0 : i32
    %c0_i32_1 = arith.constant 0 : i32
    %c0_i32_2 = arith.constant 0 : i32
    return %c0_i32, %c0_i32_0, %c0_i32_1 : i32, i32, i32
  }
  func.func @transform_25(%arg0: i32) -> (i32, i32) {
    %c0_i32 = arith.constant 0 : i32
    %c0_i32_0 = arith.constant 0 : i32
    %c0_i32_1 = arith.constant 0 : i32
    return %c0_i32, %c0_i32_0 : i32, i32
  }
  func.func @transform_26(%arg0: i32) -> (i32, i32) {
    %c0_i32 = arith.constant 0 : i32
    %c0_i32_0 = arith.constant 0 : i32
    %c0_i32_1 = arith.constant 0 : i32
    return %c0_i32, %c0_i32_0 : i32, i32
  }
  func.func @transform_27(%arg0: i32) -> (i32, i32) {
    %c0_i32 = arith.constant 0 : i32
    %c0_i32_0 = arith.constant 0 : i32
    %c0_i32_1 = arith.constant 0 : i32
    return %c0_i32, %c0_i32_0 : i32, i32
  }
  func.func @transform_28(%arg0: i32) -> (i32, i32, i32) {
    %c0_i32 = arith.constant 0 : i32
    %c0_i32_0 = arith.constant 0 : i32
    %c0_i32_1 = arith.constant 0 : i32
    return %arg0, %c0_i32, %c0_i32_0 : i32, i32, i32
  }
  func.func @transform_29(%arg0: i32) -> (i32, i32, i32) {
    %c0_i32 = arith.constant 0 : i32
    %c0_i32_0 = arith.constant 0 : i32
    %c0_i32_1 = arith.constant 0 : i32
    return %arg0, %c0_i32, %c0_i32_0 : i32, i32, i32
  }
}

</mosaic_0001>

<llo_original>
// kernel: transformer_forward.2
$region0: #{transformer_forward.2}
  #allocation0 [shape = 'u32[]', space=smem, size = 0x4, offset = 0x4, fixed_abs, tag = 'smem constant byte address 0x4 - core index']
  #allocation1 [shape = 'u32[144,128]{1,0:T(1,128)}', space=vmem, size = 0x12000, scoped, tag = 'internal scratch']
  %s0 = inlined_call_operand.vmem [shape: f32[2,8,32], index: 0, kind: input, shape index: {}]
  %s1 = inlined_call_operand.vmem [shape: f32[2,8,8], index: 1, kind: input, shape index: {}]
  %s2 = inlined_call_operand.vmem [shape: bf16[2,32,96], index: 2, kind: input, shape index: {}]
  %s3 = inlined_call_operand.vmem [shape: f32[2,1,96], index: 3, kind: input, shape index: {}]
  %s4 = inlined_call_operand.vmem [shape: bf16[2,32,32], index: 4, kind: input, shape index: {}]
  %s5 = inlined_call_operand.vmem [shape: f32[2,1,32], index: 5, kind: input, shape index: {}]
  %s6 = inlined_call_operand.vmem [shape: f32[2,1,32], index: 6, kind: input, shape index: {}]
  %s7 = inlined_call_operand.vmem [shape: f32[2,1,32], index: 7, kind: input, shape index: {}]
  %s8 = inlined_call_operand.vmem [shape: bf16[2,32,64], index: 8, kind: input, shape index: {}]
  %s9 = inlined_call_operand.vmem [shape: f32[2,1,64], index: 9, kind: input, shape index: {}]
  %s10 = inlined_call_operand.vmem [shape: bf16[2,64,32], index: 10, kind: input, shape index: {}]
  %s11 = inlined_call_operand.vmem [shape: f32[2,1,32], index: 11, kind: input, shape index: {}]
  %s12 = inlined_call_operand.vmem [shape: f32[2,1,32], index: 12, kind: input, shape index: {}]
  %s13 = inlined_call_operand.vmem [shape: f32[2,1,32], index: 13, kind: input, shape index: {}]
  %s14 = inlined_call_operand.vmem [shape: f32[2,8,32], index: 14, kind: output, shape index: {}]
  %s15 = sld [smem:[#allocation0]]
  $region89: #{transformer_forward.2} parent=0
    _
  %s17 = ssub.s32 1, %s15
  %s18 = scalar_select 0, %s17, %s15
  loop: start=0, step=1, limit=4
  $region2: #{transformer_forward.2} parent=0 // loop_pre_header
    _
  $region3: #{transformer_forward.2} parent=0 // loop_header
    %s20 = sphi 0, %s24
    %p21 = scmp.ge.s32.totalorder %s20, 4
    %s30 = sphi 0, %s32
    %s33 = sphi 0, %s30
    %s34 = sphi 0, %s33
    %s50 = sphi 0, %s34
    %s56 = sphi 0, %s58
    %s59 = sphi 0, %s56
    %s60 = sphi 0, %s59
    %s76 = sphi 0, %s60
    %s80 = sphi 0, %s80
    %s82 = sphi 0, %s80
    %s83 = sphi 0, %s82
    %s97 = sphi 0, %s83
    %s101 = sphi 0, %s101
    %s103 = sphi 0, %s101
    %s104 = sphi 0, %s103
    %s118 = sphi 0, %s104
    %s122 = sphi 0, %s122
    %s124 = sphi 0, %s122
    %s125 = sphi 0, %s124
    %s139 = sphi 0, %s125
    %s143 = sphi 0, %s143
    %s145 = sphi 0, %s143
    %s146 = sphi 0, %s145
    %s160 = sphi 0, %s146
    %s164 = sphi 0, %s164
    %s166 = sphi 0, %s164
    %s167 = sphi 0, %s166
    %s181 = sphi 0, %s167
    %s185 = sphi 0, %s185
    %s187 = sphi 0, %s185
    %s188 = sphi 0, %s187
    %s202 = sphi 0, %s188
    %s206 = sphi 0, %s206
    %s208 = sphi 0, %s206
    %s209 = sphi 0, %s208
    %s223 = sphi 0, %s209
    %s227 = sphi 0, %s227
    %s229 = sphi 0, %s227
    %s230 = sphi 0, %s229
    %s244 = sphi 0, %s230
    %s248 = sphi 0, %s248
    %s250 = sphi 0, %s248
    %s251 = sphi 0, %s250
    %s265 = sphi 0, %s251
    %s269 = sphi 0, %s269
    %s271 = sphi 0, %s269
    %s272 = sphi 0, %s271
    %s286 = sphi 0, %s272
    %s290 = sphi 0, %s290
    %s292 = sphi 0, %s290
    %s293 = sphi 0, %s292
    %s307 = sphi 0, %s293
    %s311 = sphi 0, %s311
    %s313 = sphi 0, %s311
    %s314 = sphi 0, %s313
    %s328 = sphi 0, %s314
    %s334 = sphi 0, %s336
    %s337 = sphi 0, %s334
    %s338 = sphi 0, %s337
    %s354 = sphi 0, %s338
  $region4: #{transformer_forward.2} parent=0 // loop_header_branch
    %23 = sbr.rel (%p21) target = $region8
  $region5: #{transformer_forward.2} parent=0 // loop_body
    %s25 = ssub.s32 %s20, 1
    %s26 = ssub.s32 %s20, 2
    %s27 = sadd.s32 %s20, 1
    %s28 = ssub.s32 %s20, %s27
    %p29 = scmp.eq.s32.totalorder %s28, 0
    %s31 = sadd.s32 %s30, 1
    %s32 = scalar_select %p29, %s30, %s31
    %p35 = pneg %p29
    %p36 = scmp.eq.s32.totalorder %s20, 1
    %p37 = por %p35, %p36
    %p38 = scmp.ne.s32.totalorder %s30, %s33
    %p39 = scmp.eq.s32.totalorder %s20, 0
    %p40 = por %p38, %p39
    %p41 = scmp.ne.s32.totalorder %s30, %s33
    %p42 = scmp.eq.s32.totalorder %s25, 1
    %p43 = por %p41, %p42
    %p44 = scmp.ne.s32.totalorder %s33, %s34
    %p45 = scmp.eq.s32.totalorder %s25, 0
    %p46 = por %p44, %p45
    %p47 = scmp.ne.s32.totalorder %s33, %s34
    %p48 = scmp.eq.s32.totalorder %s26, 1
    %p49 = por %p47, %p48
    %p51 = scmp.ne.s32.totalorder %s34, %s50
    %p52 = scmp.eq.s32.totalorder %s26, 0
    %p53 = por %p51, %p52
    %s54 = ssub.s32 %s20, %s27
    %p55 = scmp.eq.s32.totalorder %s54, 0
    %s57 = sadd.s32 %s56, 1
    %s58 = scalar_select %p55, %s56, %s57
    %p61 = pneg %p55
    %p62 = scmp.eq.s32.totalorder %s20, 1
    %p63 = por %p61, %p62
    %p64 = scmp.ne.s32.totalorder %s56, %s59
    %p65 = scmp.eq.s32.totalorder %s20, 0
    %p66 = por %p64, %p65
    %p67 = scmp.ne.s32.totalorder %s56, %s59
    %p68 = scmp.eq.s32.totalorder %s25, 1
    %p69 = por %p67, %p68
    %p70 = scmp.ne.s32.totalorder %s59, %s60
    %p71 = scmp.eq.s32.totalorder %s25, 0
    %p72 = por %p70, %p71
    %p73 = scmp.ne.s32.totalorder %s59, %s60
    %p74 = scmp.eq.s32.totalorder %s26, 1
    %p75 = por %p73, %p74
    %p77 = scmp.ne.s32.totalorder %s60, %s76
    %p78 = scmp.eq.s32.totalorder %s26, 0
    %p79 = por %p77, %p78
    %s81 = sadd.s32 %s80, 1
    %p84 = scmp.eq.s32.totalorder %s20, 1
    %p85 = scmp.ne.s32.totalorder %s80, %s82
    %p86 = scmp.eq.s32.totalorder %s20, 0
    %p87 = por %p85, %p86
    %p88 = scmp.ne.s32.totalorder %s80, %s82
    %p89 = scmp.eq.s32.totalorder %s25, 1
    %p90 = por %p88, %p89
    %p91 = scmp.ne.s32.totalorder %s82, %s83
    %p92 = scmp.eq.s32.totalorder %s25, 0
    %p93 = por %p91, %p92
    %p94 = scmp.ne.s32.totalorder %s82, %s83
    %p95 = scmp.eq.s32.totalorder %s26, 1
    %p96 = por %p94, %p95
    %p98 = scmp.ne.s32.totalorder %s83, %s97
    %p99 = scmp.eq.s32.totalorder %s26, 0
    %p100 = por %p98, %p99
    %s102 = sadd.s32 %s101, 1
    %p105 = scmp.eq.s32.totalorder %s20, 1
    %p106 = scmp.ne.s32.totalorder %s101, %s103
    %p107 = scmp.eq.s32.totalorder %s20, 0
    %p108 = por %p106, %p107
    %p109 = scmp.ne.s32.totalorder %s101, %s103
    %p110 = scmp.eq.s32.totalorder %s25, 1
    %p111 = por %p109, %p110
    %p112 = scmp.ne.s32.totalorder %s103, %s104
    %p113 = scmp.eq.s32.totalorder %s25, 0
    %p114 = por %p112, %p113
    %p115 = scmp.ne.s32.totalorder %s103, %s104
    %p116 = scmp.eq.s32.totalorder %s26, 1
    %p117 = por %p115, %p116
    %p119 = scmp.ne.s32.totalorder %s104, %s118
    %p120 = scmp.eq.s32.totalorder %s26, 0
    %p121 = por %p119, %p120
    %s123 = sadd.s32 %s122, 1
    %p126 = scmp.eq.s32.totalorder %s20, 1
    %p127 = scmp.ne.s32.totalorder %s122, %s124
    %p128 = scmp.eq.s32.totalorder %s20, 0
    %p129 = por %p127, %p128
    %p130 = scmp.ne.s32.totalorder %s122, %s124
    %p131 = scmp.eq.s32.totalorder %s25, 1
    %p132 = por %p130, %p131
    %p133 = scmp.ne.s32.totalorder %s124, %s125
    %p134 = scmp.eq.s32.totalorder %s25, 0
    %p135 = por %p133, %p134
    %p136 = scmp.ne.s32.totalorder %s124, %s125
    %p137 = scmp.eq.s32.totalorder %s26, 1
    %p138 = por %p136, %p137
    %p140 = scmp.ne.s32.totalorder %s125, %s139
    %p141 = scmp.eq.s32.totalorder %s26, 0
    %p142 = por %p140, %p141
    %s144 = sadd.s32 %s143, 1
    %p147 = scmp.eq.s32.totalorder %s20, 1
    %p148 = scmp.ne.s32.totalorder %s143, %s145
    %p149 = scmp.eq.s32.totalorder %s20, 0
    %p150 = por %p148, %p149
    %p151 = scmp.ne.s32.totalorder %s143, %s145
    %p152 = scmp.eq.s32.totalorder %s25, 1
    %p153 = por %p151, %p152
    %p154 = scmp.ne.s32.totalorder %s145, %s146
    %p155 = scmp.eq.s32.totalorder %s25, 0
    %p156 = por %p154, %p155
    %p157 = scmp.ne.s32.totalorder %s145, %s146
    %p158 = scmp.eq.s32.totalorder %s26, 1
    %p159 = por %p157, %p158
    %p161 = scmp.ne.s32.totalorder %s146, %s160
    %p162 = scmp.eq.s32.totalorder %s26, 0
    %p163 = por %p161, %p162
    %s165 = sadd.s32 %s164, 1
    %p168 = scmp.eq.s32.totalorder %s20, 1
    %p169 = scmp.ne.s32.totalorder %s164, %s166
    %p170 = scmp.eq.s32.totalorder %s20, 0
    %p171 = por %p169, %p170
    %p172 = scmp.ne.s32.totalorder %s164, %s166
    %p173 = scmp.eq.s32.totalorder %s25, 1
    %p174 = por %p172, %p173
    %p175 = scmp.ne.s32.totalorder %s166, %s167
    %p176 = scmp.eq.s32.totalorder %s25, 0
    %p177 = por %p175, %p176
    %p178 = scmp.ne.s32.totalorder %s166, %s167
    %p179 = scmp.eq.s32.totalorder %s26, 1
    %p180 = por %p178, %p179
    %p182 = scmp.ne.s32.totalorder %s167, %s181
    %p183 = scmp.eq.s32.totalorder %s26, 0
    %p184 = por %p182, %p183
    %s186 = sadd.s32 %s185, 1
    %p189 = scmp.eq.s32.totalorder %s20, 1
    %p190 = scmp.ne.s32.totalorder %s185, %s187
    %p191 = scmp.eq.s32.totalorder %s20, 0
    %p192 = por %p190, %p191
    %p193 = scmp.ne.s32.totalorder %s185, %s187
    %p194 = scmp.eq.s32.totalorder %s25, 1
    %p195 = por %p193, %p194
    %p196 = scmp.ne.s32.totalorder %s187, %s188
    %p197 = scmp.eq.s32.totalorder %s25, 0
    %p198 = por %p196, %p197
    %p199 = scmp.ne.s32.totalorder %s187, %s188
    %p200 = scmp.eq.s32.totalorder %s26, 1
    %p201 = por %p199, %p200
    %p203 = scmp.ne.s32.totalorder %s188, %s202
    %p204 = scmp.eq.s32.totalorder %s26, 0
    %p205 = por %p203, %p204
    %s207 = sadd.s32 %s206, 1
    %p210 = scmp.eq.s32.totalorder %s20, 1
    %p211 = scmp.ne.s32.totalorder %s206, %s208
    %p212 = scmp.eq.s32.totalorder %s20, 0
    %p213 = por %p211, %p212
    %p214 = scmp.ne.s32.totalorder %s206, %s208
    %p215 = scmp.eq.s32.totalorder %s25, 1
    %p216 = por %p214, %p215
    %p217 = scmp.ne.s32.totalorder %s208, %s209
    %p218 = scmp.eq.s32.totalorder %s25, 0
    %p219 = por %p217, %p218
    %p220 = scmp.ne.s32.totalorder %s208, %s209
    %p221 = scmp.eq.s32.totalorder %s26, 1
    %p222 = por %p220, %p221
    %p224 = scmp.ne.s32.totalorder %s209, %s223
    %p225 = scmp.eq.s32.totalorder %s26, 0
    %p226 = por %p224, %p225
    %s228 = sadd.s32 %s227, 1
    %p231 = scmp.eq.s32.totalorder %s20, 1
    %p232 = scmp.ne.s32.totalorder %s227, %s229
    %p233 = scmp.eq.s32.totalorder %s20, 0
    %p234 = por %p232, %p233
    %p235 = scmp.ne.s32.totalorder %s227, %s229
    %p236 = scmp.eq.s32.totalorder %s25, 1
    %p237 = por %p235, %p236
    %p238 = scmp.ne.s32.totalorder %s229, %s230
    %p239 = scmp.eq.s32.totalorder %s25, 0
    %p240 = por %p238, %p239
    %p241 = scmp.ne.s32.totalorder %s229, %s230
    %p242 = scmp.eq.s32.totalorder %s26, 1
    %p243 = por %p241, %p242
    %p245 = scmp.ne.s32.totalorder %s230, %s244
    %p246 = scmp.eq.s32.totalorder %s26, 0
    %p247 = por %p245, %p246
    %s249 = sadd.s32 %s248, 1
    %p252 = scmp.eq.s32.totalorder %s20, 1
    %p253 = scmp.ne.s32.totalorder %s248, %s250
    %p254 = scmp.eq.s32.totalorder %s20, 0
    %p255 = por %p253, %p254
    %p256 = scmp.ne.s32.totalorder %s248, %s250
    %p257 = scmp.eq.s32.totalorder %s25, 1
    %p258 = por %p256, %p257
    %p259 = scmp.ne.s32.totalorder %s250, %s251
    %p260 = scmp.eq.s32.totalorder %s25, 0
    %p261 = por %p259, %p260
    %p262 = scmp.ne.s32.totalorder %s250, %s251
    %p263 = scmp.eq.s32.totalorder %s26, 1
    %p264 = por %p262, %p263
    %p266 = scmp.ne.s32.totalorder %s251, %s265
    %p267 = scmp.eq.s32.totalorder %s26, 0
    %p268 = por %p266, %p267
    %s270 = sadd.s32 %s269, 1
    %p273 = scmp.eq.s32.totalorder %s20, 1
    %p274 = scmp.ne.s32.totalorder %s269, %s271
    %p275 = scmp.eq.s32.totalorder %s20, 0
    %p276 = por %p274, %p275
    %p277 = scmp.ne.s32.totalorder %s269, %s271
    %p278 = scmp.eq.s32.totalorder %s25, 1
    %p279 = por %p277, %p278
    %p280 = scmp.ne.s32.totalorder %s271, %s272
    %p281 = scmp.eq.s32.totalorder %s25, 0
    %p282 = por %p280, %p281
    %p283 = scmp.ne.s32.totalorder %s271, %s272
    %p284 = scmp.eq.s32.totalorder %s26, 1
    %p285 = por %p283, %p284
    %p287 = scmp.ne.s32.totalorder %s272, %s286
    %p288 = scmp.eq.s32.totalorder %s26, 0
    %p289 = por %p287, %p288
    %s291 = sadd.s32 %s290, 1
    %p294 = scmp.eq.s32.totalorder %s20, 1
    %p295 = scmp.ne.s32.totalorder %s290, %s292
    %p296 = scmp.eq.s32.totalorder %s20, 0
    %p297 = por %p295, %p296
    %p298 = scmp.ne.s32.totalorder %s290, %s292
    %p299 = scmp.eq.s32.totalorder %s25, 1
    %p300 = por %p298, %p299
    %p301 = scmp.ne.s32.totalorder %s292, %s293
    %p302 = scmp.eq.s32.totalorder %s25, 0
    %p303 = por %p301, %p302
    %p304 = scmp.ne.s32.totalorder %s292, %s293
    %p305 = scmp.eq.s32.totalorder %s26, 1
    %p306 = por %p304, %p305
    %p308 = scmp.ne.s32.totalorder %s293, %s307
    %p309 = scmp.eq.s32.totalorder %s26, 0
    %p310 = por %p308, %p309
    %s312 = sadd.s32 %s311, 1
    %p315 = scmp.eq.s32.totalorder %s20, 1
    %p316 = scmp.ne.s32.totalorder %s311, %s313
    %p317 = scmp.eq.s32.totalorder %s20, 0
    %p318 = por %p316, %p317
    %p319 = scmp.ne.s32.totalorder %s311, %s313
    %p320 = scmp.eq.s32.totalorder %s25, 1
    %p321 = por %p319, %p320
    %p322 = scmp.ne.s32.totalorder %s313, %s314
    %p323 = scmp.eq.s32.totalorder %s25, 0
    %p324 = por %p322, %p323
    %p325 = scmp.ne.s32.totalorder %s313, %s314
    %p326 = scmp.eq.s32.totalorder %s26, 1
    %p327 = por %p325, %p326
    %p329 = scmp.ne.s32.totalorder %s314, %s328
    %p330 = scmp.eq.s32.totalorder %s26, 0
    %p331 = por %p329, %p330
    %s332 = ssub.s32 %s20, %s27
    %p333 = scmp.eq.s32.totalorder %s332, 0
    %s335 = sadd.s32 %s334, 1
    %s336 = scalar_select %p333, %s334, %s335
    %p339 = pneg %p333
    %p340 = scmp.eq.s32.totalorder %s20, 1
    %p341 = por %p339, %p340
    %p342 = scmp.ne.s32.totalorder %s334, %s337
    %p343 = scmp.eq.s32.totalorder %s20, 0
    %p344 = por %p342, %p343
    %p345 = scmp.ne.s32.totalorder %s334, %s337
    %p346 = scmp.eq.s32.totalorder %s25, 1
    %p347 = por %p345, %p346
    %p348 = scmp.ne.s32.totalorder %s337, %s338
    %p349 = scmp.eq.s32.totalorder %s25, 0
    %p350 = por %p348, %p349
    %p351 = scmp.ne.s32.totalorder %s337, %s338
    %p352 = scmp.eq.s32.totalorder %s26, 1
    %p353 = por %p351, %p352
    %p355 = scmp.ne.s32.totalorder %s338, %s354
    %p356 = scmp.eq.s32.totalorder %s26, 0
    %p357 = por %p355, %p356
    %p358 = scmp.le.s32.totalorder 1, %s20
    %p359 = scmp.lt.s32.totalorder %s20, 3
    %p360 = pnand %p358, %p359
    %p361 = pneg %p360
    // Predicated region
    $region9: #{transformer_forward.2} parent=5 // pred_check
      _
    $region10: #{transformer_forward.2} parent=5 // pred_check_branch
      %363 = sbr.rel (%p360) target = $region12
    $region11: #{transformer_forward.2} parent=5 // pred_region
      %s364 = ssub.s32 %s20, 1
      // Predicated region
      $region13: #{transformer_forward.2} parent=11 // pred_check
        %p365 = pneg %p93
      $region14: #{transformer_forward.2} parent=11 // pred_check_branch
        %367 = sbr.rel (%p365) target = $region16
      $region15: #{transformer_forward.2} parent=11 // pred_region
        _
      $region16: #{transformer_forward.2} parent=11 // pred_fallthru
        _
      // Predicated region
      $region17: #{transformer_forward.2} parent=11 // pred_check
        %p368 = pneg %p114
      $region18: #{transformer_forward.2} parent=11 // pred_check_branch
        %370 = sbr.rel (%p368) target = $region20
      $region19: #{transformer_forward.2} parent=11 // pred_region
        _
      $region20: #{transformer_forward.2} parent=11 // pred_fallthru
        _
      // Predicated region
      $region21: #{transformer_forward.2} parent=11 // pred_check
        %p371 = pneg %p135
      $region22: #{transformer_forward.2} parent=11 // pred_check_branch
        %373 = sbr.rel (%p371) target = $region24
      $region23: #{transformer_forward.2} parent=11 // pred_region
        _
      $region24: #{transformer_forward.2} parent=11 // pred_fallthru
        _
      // Predicated region
      $region25: #{transformer_forward.2} parent=11 // pred_check
        %p374 = pneg %p156
      $region26: #{transformer_forward.2} parent=11 // pred_check_branch
        %376 = sbr.rel (%p374) target = $region28
      $region27: #{transformer_forward.2} parent=11 // pred_region
        _
      $region28: #{transformer_forward.2} parent=11 // pred_fallthru
        _
      // Predicated region
      $region29: #{transformer_forward.2} parent=11 // pred_check
        %p377 = pneg %p177
      $region30: #{transformer_forward.2} parent=11 // pred_check_branch
        %379 = sbr.rel (%p377) target = $region32
      $region31: #{transformer_forward.2} parent=11 // pred_region
        _
      $region32: #{transformer_forward.2} parent=11 // pred_fallthru
        _
      // Predicated region
      $region33: #{transformer_forward.2} parent=11 // pred_check
        %p380 = pneg %p198
      $region34: #{transformer_forward.2} parent=11 // pred_check_branch
        %382 = sbr.rel (%p380) target = $region36
      $region35: #{transformer_forward.2} parent=11 // pred_region
        _
      $region36: #{transformer_forward.2} parent=11 // pred_fallthru
        _
      // Predicated region
      $region37: #{transformer_forward.2} parent=11 // pred_check
        %p383 = pneg %p219
      $region38: #{transformer_forward.2} parent=11 // pred_check_branch
        %385 = sbr.rel (%p383) target = $region40
      $region39: #{transformer_forward.2} parent=11 // pred_region
        _
      $region40: #{transformer_forward.2} parent=11 // pred_fallthru
        _
      // Predicated region
      $region41: #{transformer_forward.2} parent=11 // pred_check
        %p386 = pneg %p240
      $region42: #{transformer_forward.2} parent=11 // pred_check_branch
        %388 = sbr.rel (%p386) target = $region44
      $region43: #{transformer_forward.2} parent=11 // pred_region
        _
      $region44: #{transformer_forward.2} parent=11 // pred_fallthru
        _
      // Predicated region
      $region45: #{transformer_forward.2} parent=11 // pred_check
        %p389 = pneg %p261
      $region46: #{transformer_forward.2} parent=11 // pred_check_branch
        %391 = sbr.rel (%p389) target = $region48
      $region47: #{transformer_forward.2} parent=11 // pred_region
        _
      $region48: #{transformer_forward.2} parent=11 // pred_fallthru
        _
      // Predicated region
      $region49: #{transformer_forward.2} parent=11 // pred_check
        %p392 = pneg %p282
      $region50: #{transformer_forward.2} parent=11 // pred_check_branch
        %394 = sbr.rel (%p392) target = $region52
      $region51: #{transformer_forward.2} parent=11 // pred_region
        _
      $region52: #{transformer_forward.2} parent=11 // pred_fallthru
        _
      // Predicated region
      $region53: #{transformer_forward.2} parent=11 // pred_check
        %p395 = pneg %p303
      $region54: #{transformer_forward.2} parent=11 // pred_check_branch
        %397 = sbr.rel (%p395) target = $region56
      $region55: #{transformer_forward.2} parent=11 // pred_region
        _
      $region56: #{transformer_forward.2} parent=11 // pred_fallthru
        _
      // Predicated region
      $region57: #{transformer_forward.2} parent=11 // pred_check
        %p398 = pneg %p324
      $region58: #{transformer_forward.2} parent=11 // pred_check_branch
        %400 = sbr.rel (%p398) target = $region60
      $region59: #{transformer_forward.2} parent=11 // pred_region
        _
      $region60: #{transformer_forward.2} parent=11 // pred_fallthru
        _
    $region12: #{transformer_forward.2} parent=5 // pred_fallthru
      _
    %p401 = scmp.lt.s32.totalorder %s20, 2
    // Predicated region
    $region61: #{transformer_forward.2} parent=5 // pred_check
      %p402 = pneg %p401
    $region62: #{transformer_forward.2} parent=5 // pred_check_branch
      %404 = sbr.rel (%p402) target = $region64
    $region63: #{transformer_forward.2} parent=5 // pred_region
      // Predicated region
      $region65: #{transformer_forward.2} parent=63 // pred_check
        %p405 = pneg %p40
      $region66: #{transformer_forward.2} parent=63 // pred_check_branch
        %407 = sbr.rel (%p405) target = $region68
      $region67: #{transformer_forward.2} parent=63 // pred_region
        %p408 = scmp.lt.s32.totalorder %s20, 1
        %s409 = scalar_select %p408, %s20, 1
        %s410 = smul.addr %s409, 8
        %s411 = scalar_lea.vmem %s0, %s410
      $region68: #{transformer_forward.2} parent=63 // pred_fallthru
        _
      // Predicated region
      $region69: #{transformer_forward.2} parent=63 // pred_check
        %p412 = pneg %p66
      $region70: #{transformer_forward.2} parent=63 // pred_check_branch
        %414 = sbr.rel (%p412) target = $region72
      $region71: #{transformer_forward.2} parent=63 // pred_region
        %p415 = scmp.lt.s32.totalorder %s20, 1
        %s416 = scalar_select %p415, %s20, 1
        %s417 = smul.addr %s416, 8
        %s418 = scalar_lea.vmem %s1, %s417
      $region72: #{transformer_forward.2} parent=63 // pred_fallthru
        _
    $region64: #{transformer_forward.2} parent=5 // pred_fallthru
      _
    %p419 = scmp.le.s32.totalorder 1, %s20
    %p420 = scmp.lt.s32.totalorder %s20, 3
    %p421 = pnand %p419, %p420
    %p422 = pneg %p421
    // Predicated region
    $region73: #{transformer_forward.2} parent=5 // pred_check
      _
    $region74: #{transformer_forward.2} parent=5 // pred_check_branch
      %424 = sbr.rel (%p421) target = $region76
    $region75: #{transformer_forward.2} parent=5 // pred_region
      %s425 = ssub.s32 %s20, 1
      %p426 = scmp.lt.s32.totalorder %s25, 1
      %s427 = scalar_select %p426, %s25, 1
      %s428 = smul.addr %s427, 8
      %s429 = scalar_lea.vmem %s0, %s428
      %p430 = pneg %p46
      %p431 = pneg %p43
      %p432 = scmp.lt.s32.totalorder %s25, 1
      %s433 = scalar_select %p432, %s25, 1
      %s434 = smul.addr %s433, 8
      %s435 = scalar_lea.vmem %s1, %s434
      %p436 = pneg %p72
      %p437 = pneg %p69
      %p438 = pneg %p93
      %p439 = pneg %p90
      %p440 = pneg %p114
      %p441 = pneg %p111
      %p442 = pneg %p135
      %p443 = pneg %p132
      %p444 = pneg %p156
      %p445 = pneg %p153
      %p446 = pneg %p177
      %p447 = pneg %p174
      %p448 = pneg %p198
      %p449 = pneg %p195
      %p450 = pneg %p219
      %p451 = pneg %p216
      %p452 = pneg %p240
      %p453 = pneg %p237
      %p454 = pneg %p261
      %p455 = pneg %p258
      %p456 = pneg %p282
      %p457 = pneg %p279
      %p458 = pneg %p303
      %p459 = pneg %p300
      %p460 = pneg %p324
      %p461 = pneg %p321
      %p462 = pneg %p350
      %p463 = pneg %p347
      %p464 = scmp.lt.s32.totalorder %s25, 1
      %s465 = scalar_select %p464, %s25, 1
      %s466 = smul.addr %s465, 8
      %s467 = scalar_lea.vmem %s14, %s466
      %p468 = scmp.lt.s32.totalorder %s25, 1
      %s469 = scalar_select %p468, %s25, 1
      %s470 = smul.addr %s469, 8
      %s471 = scalar_lea.vmem %s0, %s470
      %p472 = scmp.lt.s32.totalorder %s25, 1
      %s473 = scalar_select %p472, %s25, 1
      %s474 = smul.addr %s473, 8
      %s475 = scalar_lea.vmem %s1, %s474
      %p476 = scmp.lt.s32.totalorder %s25, 1
      %s477 = scalar_select %p476, %s25, 1
      %s478 = smul.addr %s477, 8
      %s479 = scalar_lea.vmem %s14, %s478
      %v481 = vld [vmem:[%s471] sm:$0xff]
      %v482 = vld [vmem:[%s475] sm:$0xff]
      %v483 = vld [vmem:[%s2] sm:$0xf]
      %v484 = vld [vmem:[%s2 + $0x4] sm:$0xf]
      %v485 = vld [vmem:[%s2 + $0x8] sm:$0xf]
      %v486 = vld [vmem:[%s2 + $0xc] sm:$0xf]
      %v487 = vpack.c.bf16 %v481, %v481
      %v488 = vld [vmem:[%s3] sm:$0x1]
      %v490 = vlaneseq
      %v491 = vshrl.u32 %v490, 7
      %v492 = vsub.s32 0, %v491
      %v493 = vrot.slane %v488, %v492
      %v499 = vunpack.c.l.b16 %v483
      %v500 = vunpack.c.l.b16 %v484
      %v501 = vunpack.c.l.b16 %v485
      %v502 = vunpack.c.l.b16 %v486
      %v503 = vpack.c.b16 %v500, %v499
      %v504 = vpack.c.b16 %v502, %v501
      %vm507 = vcmask 261120
      %v509 = vsel %vm507, %v487, 0
      %511 = vmatprep.subr.bf16.mxu0 0
      %512 = vmatpush1.bf16.msra.mxu0 %v503
      %513 = vmatprep.subr.bf16.mxu0 0
      %514 = vmatpush1.bf16.msra.mxu0 %v504
      %515 = vmatprep.subr.bf16.mxu0 0
      %516 = vmatpush1.bf16.msra.mxu0 0
      %517 = vmatprep.subr.bf16.mxu0 0
      %518 = vmatpush1.bf16.msra.mxu0 0
      %519 = vmatprep.subr.bf16.mxu0 0
      %520 = vmatpush1.bf16.msra.mxu0 0
      %521 = vmatprep.subr.bf16.mxu0 0
      %522 = vmatpush1.bf16.msra.mxu0 0
      %523 = vmatprep.subr.bf16.mxu0 0
      %524 = vmatpush1.bf16.msra.mxu0 0
      %525 = vmatprep.subr.bf16.mxu0 0
      %526 = vmatpush1.bf16.msra.mxu0 0
      %527 = vmatprep.subr.bf16.mxu0 0
      %528 = vmatpush1.bf16.msra.mxu0 0
      %529 = vmatprep.subr.bf16.mxu0 0
      %530 = vmatpush1.bf16.msra.mxu0 0
      %531 = vmatprep.subr.bf16.mxu0 0
      %532 = vmatpush1.bf16.msra.mxu0 0
      %533 = vmatprep.subr.bf16.mxu0 0
      %534 = vmatpush1.bf16.msra.mxu0 0
      %535 = vmatprep.subr.bf16.mxu0 0
      %536 = vmatpush1.bf16.msra.mxu0 0
      %537 = vmatprep.subr.bf16.mxu0 0
      %538 = vmatpush1.bf16.msra.mxu0 0
      %539 = vmatprep.subr.bf16.mxu0 0
      %540 = vmatpush1.bf16.msra.mxu0 0
      %541 = vmatprep.subr.bf16.mxu0 0
      %542 = vmatpush1.bf16.msra.mxu0 0
      %543 = vmatprep.mubr.bf16.mxu0 0
      %544 = vmatmul.mubr.bf16.gmra.mrb[0].mxu0 %v509
      %v545 = vpop.f32.mrb[0].mxu0
      %v546 = vadd.f32 %v493, %v545
      %v547 = vpop.f32.mrb[0].mxu0
      %v548 = vpop.f32.mrb[0].mxu0
      %v549 = vpop.f32.mrb[0].mxu0
      %550 = vdwg.mxu0
      %v551 = vld [vmem:[%s4] sm:$0xf]
      %v552 = vld [vmem:[%s4 + $0x4] sm:$0xf]
      %v553 = vld [vmem:[%s4 + $0x8] sm:$0xf]
      %v554 = vld [vmem:[%s4 + $0xc] sm:$0xf]
      %v555 = vld [vmem:[%s5] sm:$0x1]
      %v556 = vpack.c.bf16 %v546, %v546
      %558 = vrot.lane.b32.xlu0 %v556, 96
      %v559 = vpop.permute.xlu0 %558
      %vm560 = vcmask 64512
      %v562 = vsel %vm560, %v556, 0
      %v565 = vsel %vm560, %v559, 0
      %567 = vmatprep.subr.bf16.mxu0 0
      %568 = vmatpush1.bf16.xpose.msra.mxu0 %v565
      %569 = vmatprep.subr.bf16.mxu0 0
      %570 = vmatpush1.bf16.xpose.msra.mxu0 0
      %571 = vmatprep.subr.bf16.mxu0 0
      %572 = vmatpush1.bf16.xpose.msra.mxu0 0
      %573 = vmatprep.subr.bf16.mxu0 0
      %574 = vmatpush1.bf16.xpose.msra.mxu0 0
      %575 = vmatprep.subr.bf16.mxu0 0
      %576 = vmatpush1.bf16.xpose.msra.mxu0 0
      %577 = vmatprep.subr.bf16.mxu0 0
      %578 = vmatpush1.bf16.xpose.msra.mxu0 0
      %579 = vmatprep.subr.bf16.mxu0 0
      %580 = vmatpush1.bf16.xpose.msra.mxu0 0
      %581 = vmatprep.subr.bf16.mxu0 0
      %582 = vmatpush1.bf16.xpose.msra.mxu0 0
      %583 = vmatprep.subr.bf16.mxu0 0
      %584 = vmatpush1.bf16.xpose.msra.mxu0 0
      %585 = vmatprep.subr.bf16.mxu0 0
      %586 = vmatpush1.bf16.xpose.msra.mxu0 0
      %587 = vmatprep.subr.bf16.mxu0 0
      %588 = vmatpush1.bf16.xpose.msra.mxu0 0
      %589 = vmatprep.subr.bf16.mxu0 0
      %590 = vmatpush1.bf16.xpose.msra.mxu0 0
      %591 = vmatprep.subr.bf16.mxu0 0
      %592 = vmatpush1.bf16.xpose.msra.mxu0 0
      %593 = vmatprep.subr.bf16.mxu0 0
      %594 = vmatpush1.bf16.xpose.msra.mxu0 0
      %595 = vmatprep.subr.bf16.mxu0 0
      %596 = vmatpush1.bf16.xpose.msra.mxu0 0
      %597 = vmatprep.subr.bf16.mxu0 0
      %598 = vmatpush1.bf16.xpose.msra.mxu0 0
      %599 = vmatprep.mubr.bf16.mxu0 0
      %600 = vmatmul.mubr.bf16.gmra.mrb[0].mxu0 %v562
      %v601 = vpop.f32.mrb[0].mxu0
      %v602 = vadd.f32 0.0, %v601
      %v603 = vpop.f32.mrb[0].mxu0
      %v604 = vpop.f32.mrb[0].mxu0
      %v605 = vpop.f32.mrb[0].mxu0
      %606 = vdwg.mxu0
      %v607 = vmul.f32 %v602, 0.35355338
      %v608 = vadd.f32 %v607, %v482
      %v609 = vsel %vm560, %v608, -inf
      %610 = vmax.xlane.f32.xlu0 %v609
      %v611 = vpop.xlane.xlu0 %610
      %v612 = vsub.f32 %v608, %v611
      %v613 = vmul.f32 %v612, 1.442695
      %v614 = vpow.pop %v613
      %v615 = vsel %vm560, %v614, 0.0
      %616 = vadd.xlane.f32.xlu0 %v615
      %v617 = vpop.xlane.xlu0 %616
      %v618 = vrcp.pop %v617
      %v619 = vmul.f32 %v614, %v618
      %v620 = vpack.c.bf16 %v619, %v619
      %621 = vrot.lane.b32.xlu0 %v556, 64
      %v622 = vpop.permute.xlu0 %621
      %v624 = vsel %vm560, %v620, 0
      %vm626 = vcmask 1043456
      %v628 = vsel %vm626, %v622, 0
      %630 = vmatprep.subr.bf16.mxu0 0
      %631 = vmatpush1.bf16.msra.mxu0 %v628
      %632 = vmatprep.subr.bf16.mxu0 0
      %633 = vmatpush1.bf16.msra.mxu0 0
      %634 = vmatprep.subr.bf16.mxu0 0
      %635 = vmatpush1.bf16.msra.mxu0 0
      %636 = vmatprep.subr.bf16.mxu0 0
      %637 = vmatpush1.bf16.msra.mxu0 0
      %638 = vmatprep.subr.bf16.mxu0 0
      %639 = vmatpush1.bf16.msra.mxu0 0
      %640 = vmatprep.subr.bf16.mxu0 0
      %641 = vmatpush1.bf16.msra.mxu0 0
      %642 = vmatprep.subr.bf16.mxu0 0
      %643 = vmatpush1.bf16.msra.mxu0 0
      %644 = vmatprep.subr.bf16.mxu0 0
      %645 = vmatpush1.bf16.msra.mxu0 0
      %646 = vmatprep.subr.bf16.mxu0 0
      %647 = vmatpush1.bf16.msra.mxu0 0
      %648 = vmatprep.subr.bf16.mxu0 0
      %649 = vmatpush1.bf16.msra.mxu0 0
      %650 = vmatprep.subr.bf16.mxu0 0
      %651 = vmatpush1.bf16.msra.mxu0 0
      %652 = vmatprep.subr.bf16.mxu0 0
      %653 = vmatpush1.bf16.msra.mxu0 0
      %654 = vmatprep.subr.bf16.mxu0 0
      %655 = vmatpush1.bf16.msra.mxu0 0
      %656 = vmatprep.subr.bf16.mxu0 0
      %657 = vmatpush1.bf16.msra.mxu0 0
      %658 = vmatprep.subr.bf16.mxu0 0
      %659 = vmatpush1.bf16.msra.mxu0 0
      %660 = vmatprep.subr.bf16.mxu0 0
      %661 = vmatpush1.bf16.msra.mxu0 0
      %662 = vmatprep.mubr.bf16.mxu0 0
      %663 = vmatmul.mubr.bf16.gmra.mrb[0].mxu0 %v624
      %v664 = vpop.f32.mrb[0].mxu0
      %v665 = vadd.f32 0.0, %v664
      %v666 = vpop.f32.mrb[0].mxu0
      %v667 = vpop.f32.mrb[0].mxu0
      %v668 = vpop.f32.mrb[0].mxu0
      %669 = vdwg.mxu0
      %670 = vrot.lane.b32.xlu0 %v556, 120
      %v671 = vpop.permute.xlu0 %670
      %672 = vrot.lane.b32.xlu0 %v556, 88
      %v673 = vpop.permute.xlu0 %672
      %v675 = vsel %vm560, %v671, 0
      %v678 = vsel %vm560, %v673, 0
      %680 = vmatprep.subr.bf16.mxu0 0
      %681 = vmatpush1.bf16.xpose.msra.mxu0 %v678
      %682 = vmatprep.subr.bf16.mxu0 0
      %683 = vmatpush1.bf16.xpose.msra.mxu0 0
      %684 = vmatprep.subr.bf16.mxu0 0
      %685 = vmatpush1.bf16.xpose.msra.mxu0 0
      %686 = vmatprep.subr.bf16.mxu0 0
      %687 = vmatpush1.bf16.xpose.msra.mxu0 0
      %688 = vmatprep.subr.bf16.mxu0 0
      %689 = vmatpush1.bf16.xpose.msra.mxu0 0
      %690 = vmatprep.subr.bf16.mxu0 0
      %691 = vmatpush1.bf16.xpose.msra.mxu0 0
      %692 = vmatprep.subr.bf16.mxu0 0
      %693 = vmatpush1.bf16.xpose.msra.mxu0 0
      %694 = vmatprep.subr.bf16.mxu0 0
      %695 = vmatpush1.bf16.xpose.msra.mxu0 0
      %696 = vmatprep.subr.bf16.mxu0 0
      %697 = vmatpush1.bf16.xpose.msra.mxu0 0
      %698 = vmatprep.subr.bf16.mxu0 0
      %699 = vmatpush1.bf16.xpose.msra.mxu0 0
      %700 = vmatprep.subr.bf16.mxu0 0
      %701 = vmatpush1.bf16.xpose.msra.mxu0 0
      %702 = vmatprep.subr.bf16.mxu0 0
      %703 = vmatpush1.bf16.xpose.msra.mxu0 0
      %704 = vmatprep.subr.bf16.mxu0 0
      %705 = vmatpush1.bf16.xpose.msra.mxu0 0
      %706 = vmatprep.subr.bf16.mxu0 0
      %707 = vmatpush1.bf16.xpose.msra.mxu0 0
      %708 = vmatprep.subr.bf16.mxu0 0
      %709 = vmatpush1.bf16.xpose.msra.mxu0 0
      %710 = vmatprep.subr.bf16.mxu0 0
      %711 = vmatpush1.bf16.xpose.msra.mxu0 0
      %712 = vmatprep.mubr.bf16.mxu0 0
      %713 = vmatmul.mubr.bf16.gmra.mrb[0].mxu0 %v675
      %v714 = vpop.f32.mrb[0].mxu0
      %v715 = vadd.f32 0.0, %v714
      %v716 = vpop.f32.mrb[0].mxu0
      %v717 = vpop.f32.mrb[0].mxu0
      %v718 = vpop.f32.mrb[0].mxu0
      %719 = vdwg.mxu0
      %v720 = vmul.f32 %v715, 0.35355338
      %v721 = vadd.f32 %v720, %v482
      %v722 = vsel %vm560, %v721, -inf
      %723 = vmax.xlane.f32.xlu0 %v722
      %v724 = vpop.xlane.xlu0 %723
      %v725 = vsub.f32 %v721, %v724
      %v726 = vmul.f32 %v725, 1.442695
      %v727 = vpow.pop %v726
      %v728 = vsel %vm560, %v727, 0.0
      %729 = vadd.xlane.f32.xlu0 %v728
      %v730 = vpop.xlane.xlu0 %729
      %v731 = vrcp.pop %v730
      %v732 = vmul.f32 %v727, %v731
      %v733 = vpack.c.bf16 %v732, %v732
      %734 = vrot.lane.b32.xlu0 %v556, 56
      %v735 = vpop.permute.xlu0 %734
      %v737 = vsel %vm560, %v733, 0
      %v740 = vsel %vm626, %v735, 0
      %742 = vmatprep.subr.bf16.mxu0 0
      %743 = vmatpush1.bf16.msra.mxu0 %v740
      %744 = vmatprep.subr.bf16.mxu0 0
      %745 = vmatpush1.bf16.msra.mxu0 0
      %746 = vmatprep.subr.bf16.mxu0 0
      %747 = vmatpush1.bf16.msra.mxu0 0
      %748 = vmatprep.subr.bf16.mxu0 0
      %749 = vmatpush1.bf16.msra.mxu0 0
      %750 = vmatprep.subr.bf16.mxu0 0
      %751 = vmatpush1.bf16.msra.mxu0 0
      %752 = vmatprep.subr.bf16.mxu0 0
      %753 = vmatpush1.bf16.msra.mxu0 0
      %754 = vmatprep.subr.bf16.mxu0 0
      %755 = vmatpush1.bf16.msra.mxu0 0
      %756 = vmatprep.subr.bf16.mxu0 0
      %757 = vmatpush1.bf16.msra.mxu0 0
      %758 = vmatprep.subr.bf16.mxu0 0
      %759 = vmatpush1.bf16.msra.mxu0 0
      %760 = vmatprep.subr.bf16.mxu0 0
      %761 = vmatpush1.bf16.msra.mxu0 0
      %762 = vmatprep.subr.bf16.mxu0 0
      %763 = vmatpush1.bf16.msra.mxu0 0
      %764 = vmatprep.subr.bf16.mxu0 0
      %765 = vmatpush1.bf16.msra.mxu0 0
      %766 = vmatprep.subr.bf16.mxu0 0
      %767 = vmatpush1.bf16.msra.mxu0 0
      %768 = vmatprep.subr.bf16.mxu0 0
      %769 = vmatpush1.bf16.msra.mxu0 0
      %770 = vmatprep.subr.bf16.mxu0 0
      %771 = vmatpush1.bf16.msra.mxu0 0
      %772 = vmatprep.subr.bf16.mxu0 0
      %773 = vmatpush1.bf16.msra.mxu0 0
      %774 = vmatprep.mubr.bf16.mxu0 0
      %775 = vmatmul.mubr.bf16.gmra.mrb[0].mxu0 %v737
      %v776 = vpop.f32.mrb[0].mxu0
      %v777 = vadd.f32 0.0, %v776
      %v778 = vpop.f32.mrb[0].mxu0
      %v779 = vpop.f32.mrb[0].mxu0
      %v780 = vpop.f32.mrb[0].mxu0
      %781 = vdwg.mxu0
      %782 = vrot.lane.b32.xlu0 %v556, 112
      %v783 = vpop.permute.xlu0 %782
      %784 = vrot.lane.b32.xlu0 %v556, 80
      %v785 = vpop.permute.xlu0 %784
      %v787 = vsel %vm560, %v783, 0
      %v790 = vsel %vm560, %v785, 0
      %792 = vmatprep.subr.bf16.mxu0 0
      %793 = vmatpush1.bf16.xpose.msra.mxu0 %v790
      %794 = vmatprep.subr.bf16.mxu0 0
      %795 = vmatpush1.bf16.xpose.msra.mxu0 0
      %796 = vmatprep.subr.bf16.mxu0 0
      %797 = vmatpush1.bf16.xpose.msra.mxu0 0
      %798 = vmatprep.subr.bf16.mxu0 0
      %799 = vmatpush1.bf16.xpose.msra.mxu0 0
      %800 = vmatprep.subr.bf16.mxu0 0
      %801 = vmatpush1.bf16.xpose.msra.mxu0 0
      %802 = vmatprep.subr.bf16.mxu0 0
      %803 = vmatpush1.bf16.xpose.msra.mxu0 0
      %804 = vmatprep.subr.bf16.mxu0 0
      %805 = vmatpush1.bf16.xpose.msra.mxu0 0
      %806 = vmatprep.subr.bf16.mxu0 0
      %807 = vmatpush1.bf16.xpose.msra.mxu0 0
      %808 = vmatprep.subr.bf16.mxu0 0
      %809 = vmatpush1.bf16.xpose.msra.mxu0 0
      %810 = vmatprep.subr.bf16.mxu0 0
      %811 = vmatpush1.bf16.xpose.msra.mxu0 0
      %812 = vmatprep.subr.bf16.mxu0 0
      %813 = vmatpush1.bf16.xpose.msra.mxu0 0
      %814 = vmatprep.subr.bf16.mxu0 0
      %815 = vmatpush1.bf16.xpose.msra.mxu0 0
      %816 = vmatprep.subr.bf16.mxu0 0
      %817 = vmatpush1.bf16.xpose.msra.mxu0 0
      %818 = vmatprep.subr.bf16.mxu0 0
      %819 = vmatpush1.bf16.xpose.msra.mxu0 0
      %820 = vmatprep.subr.bf16.mxu0 0
      %821 = vmatpush1.bf16.xpose.msra.mxu0 0
      %822 = vmatprep.subr.bf16.mxu0 0
      %823 = vmatpush1.bf16.xpose.msra.mxu0 0
      %824 = vmatprep.mubr.bf16.mxu0 0
      %825 = vmatmul.mubr.bf16.gmra.mrb[0].mxu0 %v787
      %v826 = vpop.f32.mrb[0].mxu0
      %v827 = vadd.f32 0.0, %v826
      %v828 = vpop.f32.mrb[0].mxu0
      %v829 = vpop.f32.mrb[0].mxu0
      %v830 = vpop.f32.mrb[0].mxu0
      %831 = vdwg.mxu0
      %v832 = vmul.f32 %v827, 0.35355338
      %v833 = vadd.f32 %v832, %v482
      %v834 = vsel %vm560, %v833, -inf
      %835 = vmax.xlane.f32.xlu0 %v834
      %v836 = vpop.xlane.xlu0 %835
      %v837 = vsub.f32 %v833, %v836
      %v838 = vmul.f32 %v837, 1.442695
      %v839 = vpow.pop %v838
      %v840 = vsel %vm560, %v839, 0.0
      %841 = vadd.xlane.f32.xlu0 %v840
      %v842 = vpop.xlane.xlu0 %841
      %v843 = vrcp.pop %v842
      %v844 = vmul.f32 %v839, %v843
      %v845 = vpack.c.bf16 %v844, %v844
      %846 = vrot.lane.b32.xlu0 %v556, 48
      %v847 = vpop.permute.xlu0 %846
      %v849 = vsel %vm560, %v845, 0
      %v852 = vsel %vm626, %v847, 0
      %854 = vmatprep.subr.bf16.mxu0 0
      %855 = vmatpush1.bf16.msra.mxu0 %v852
      %856 = vmatprep.subr.bf16.mxu0 0
      %857 = vmatpush1.bf16.msra.mxu0 0
      %858 = vmatprep.subr.bf16.mxu0 0
      %859 = vmatpush1.bf16.msra.mxu0 0
      %860 = vmatprep.subr.bf16.mxu0 0
      %861 = vmatpush1.bf16.msra.mxu0 0
      %862 = vmatprep.subr.bf16.mxu0 0
      %863 = vmatpush1.bf16.msra.mxu0 0
      %864 = vmatprep.subr.bf16.mxu0 0
      %865 = vmatpush1.bf16.msra.mxu0 0
      %866 = vmatprep.subr.bf16.mxu0 0
      %867 = vmatpush1.bf16.msra.mxu0 0
      %868 = vmatprep.subr.bf16.mxu0 0
      %869 = vmatpush1.bf16.msra.mxu0 0
      %870 = vmatprep.subr.bf16.mxu0 0
      %871 = vmatpush1.bf16.msra.mxu0 0
      %872 = vmatprep.subr.bf16.mxu0 0
      %873 = vmatpush1.bf16.msra.mxu0 0
      %874 = vmatprep.subr.bf16.mxu0 0
      %875 = vmatpush1.bf16.msra.mxu0 0
      %876 = vmatprep.subr.bf16.mxu0 0
      %877 = vmatpush1.bf16.msra.mxu0 0
      %878 = vmatprep.subr.bf16.mxu0 0
      %879 = vmatpush1.bf16.msra.mxu0 0
      %880 = vmatprep.subr.bf16.mxu0 0
      %881 = vmatpush1.bf16.msra.mxu0 0
      %882 = vmatprep.subr.bf16.mxu0 0
      %883 = vmatpush1.bf16.msra.mxu0 0
      %884 = vmatprep.subr.bf16.mxu0 0
      %885 = vmatpush1.bf16.msra.mxu0 0
      %886 = vmatprep.mubr.bf16.mxu0 0
      %887 = vmatmul.mubr.bf16.gmra.mrb[0].mxu0 %v849
      %v888 = vpop.f32.mrb[0].mxu0
      %v889 = vadd.f32 0.0, %v888
      %v890 = vpop.f32.mrb[0].mxu0
      %v891 = vpop.f32.mrb[0].mxu0
      %v892 = vpop.f32.mrb[0].mxu0
      %893 = vdwg.mxu0
      %894 = vrot.lane.b32.xlu0 %v556, 104
      %v895 = vpop.permute.xlu0 %894
      %896 = vrot.lane.b32.xlu0 %v556, 72
      %v897 = vpop.permute.xlu0 %896
      %v899 = vsel %vm560, %v895, 0
      %v902 = vsel %vm560, %v897, 0
      %904 = vmatprep.subr.bf16.mxu0 0
      %905 = vmatpush1.bf16.xpose.msra.mxu0 %v902
      %906 = vmatprep.subr.bf16.mxu0 0
      %907 = vmatpush1.bf16.xpose.msra.mxu0 0
      %908 = vmatprep.subr.bf16.mxu0 0
      %909 = vmatpush1.bf16.xpose.msra.mxu0 0
      %910 = vmatprep.subr.bf16.mxu0 0
      %911 = vmatpush1.bf16.xpose.msra.mxu0 0
      %912 = vmatprep.subr.bf16.mxu0 0
      %913 = vmatpush1.bf16.xpose.msra.mxu0 0
      %914 = vmatprep.subr.bf16.mxu0 0
      %915 = vmatpush1.bf16.xpose.msra.mxu0 0
      %916 = vmatprep.subr.bf16.mxu0 0
      %917 = vmatpush1.bf16.xpose.msra.mxu0 0
      %918 = vmatprep.subr.bf16.mxu0 0
      %919 = vmatpush1.bf16.xpose.msra.mxu0 0
      %920 = vmatprep.subr.bf16.mxu0 0
      %921 = vmatpush1.bf16.xpose.msra.mxu0 0
      %922 = vmatprep.subr.bf16.mxu0 0
      %923 = vmatpush1.bf16.xpose.msra.mxu0 0
      %924 = vmatprep.subr.bf16.mxu0 0
      %925 = vmatpush1.bf16.xpose.msra.mxu0 0
      %926 = vmatprep.subr.bf16.mxu0 0
      %927 = vmatpush1.bf16.xpose.msra.mxu0 0
      %928 = vmatprep.subr.bf16.mxu0 0
      %929 = vmatpush1.bf16.xpose.msra.mxu0 0
      %930 = vmatprep.subr.bf16.mxu0 0
      %931 = vmatpush1.bf16.xpose.msra.mxu0 0
      %932 = vmatprep.subr.bf16.mxu0 0
      %933 = vmatpush1.bf16.xpose.msra.mxu0 0
      %934 = vmatprep.subr.bf16.mxu0 0
      %935 = vmatpush1.bf16.xpose.msra.mxu0 0
      %936 = vmatprep.mubr.bf16.mxu0 0
      %937 = vmatmul.mubr.bf16.gmra.mrb[0].mxu0 %v899
      %v938 = vpop.f32.mrb[0].mxu0
      %v939 = vadd.f32 0.0, %v938
      %v940 = vpop.f32.mrb[0].mxu0
      %v941 = vpop.f32.mrb[0].mxu0
      %v942 = vpop.f32.mrb[0].mxu0
      %943 = vdwg.mxu0
      %v944 = vmul.f32 %v939, 0.35355338
      %v945 = vadd.f32 %v944, %v482
      %v946 = vsel %vm560, %v945, -inf
      %947 = vmax.xlane.f32.xlu0 %v946
      %v948 = vpop.xlane.xlu0 %947
      %v949 = vsub.f32 %v945, %v948
      %v950 = vmul.f32 %v949, 1.442695
      %v951 = vpow.pop %v950
      %v952 = vsel %vm560, %v951, 0.0
      %953 = vadd.xlane.f32.xlu0 %v952
      %v954 = vpop.xlane.xlu0 %953
      %v955 = vrcp.pop %v954
      %v956 = vmul.f32 %v951, %v955
      %v957 = vpack.c.bf16 %v956, %v956
      %958 = vrot.lane.b32.xlu0 %v556, 40
      %v959 = vpop.permute.xlu0 %958
      %v961 = vsel %vm560, %v957, 0
      %v964 = vsel %vm626, %v959, 0
      %966 = vmatprep.subr.bf16.mxu0 0
      %967 = vmatpush1.bf16.msra.mxu0 %v964
      %968 = vmatprep.subr.bf16.mxu0 0
      %969 = vmatpush1.bf16.msra.mxu0 0
      %970 = vmatprep.subr.bf16.mxu0 0
      %971 = vmatpush1.bf16.msra.mxu0 0
      %972 = vmatprep.subr.bf16.mxu0 0
      %973 = vmatpush1.bf16.msra.mxu0 0
      %974 = vmatprep.subr.bf16.mxu0 0
      %975 = vmatpush1.bf16.msra.mxu0 0
      %976 = vmatprep.subr.bf16.mxu0 0
      %977 = vmatpush1.bf16.msra.mxu0 0
      %978 = vmatprep.subr.bf16.mxu0 0
      %979 = vmatpush1.bf16.msra.mxu0 0
      %980 = vmatprep.subr.bf16.mxu0 0
      %981 = vmatpush1.bf16.msra.mxu0 0
      %982 = vmatprep.subr.bf16.mxu0 0
      %983 = vmatpush1.bf16.msra.mxu0 0
      %984 = vmatprep.subr.bf16.mxu0 0
      %985 = vmatpush1.bf16.msra.mxu0 0
      %986 = vmatprep.subr.bf16.mxu0 0
      %987 = vmatpush1.bf16.msra.mxu0 0
      %988 = vmatprep.subr.bf16.mxu0 0
      %989 = vmatpush1.bf16.msra.mxu0 0
      %990 = vmatprep.subr.bf16.mxu0 0
      %991 = vmatpush1.bf16.msra.mxu0 0
      %992 = vmatprep.subr.bf16.mxu0 0
      %993 = vmatpush1.bf16.msra.mxu0 0
      %994 = vmatprep.subr.bf16.mxu0 0
      %995 = vmatpush1.bf16.msra.mxu0 0
      %996 = vmatprep.subr.bf16.mxu0 0
      %997 = vmatpush1.bf16.msra.mxu0 0
      %998 = vmatprep.mubr.bf16.mxu0 0
      %999 = vmatmul.mubr.bf16.gmra.mrb[0].mxu0 %v961
      %v1000 = vpop.f32.mrb[0].mxu0
      %v1001 = vadd.f32 0.0, %v1000
      %v1002 = vpop.f32.mrb[0].mxu0
      %v1003 = vpop.f32.mrb[0].mxu0
      %v1004 = vpop.f32.mrb[0].mxu0
      %1005 = vdwg.mxu0
      %1007 = vrot.lane.b32.xlu0 %v777, 8
      %v1008 = vpop.permute.xlu0 %1007
      %1011 = vrot.lane.b32.xlu0 %v889, 16
      %v1012 = vpop.permute.xlu0 %1011
      %1015 = vrot.lane.b32.xlu0 %v1001, 24
      %v1016 = vpop.permute.xlu0 %1015
      %v1018 = vsel %vm560, %v665, %v1008
      %vm1019 = vcmask 130048
      %v1020 = vsel %vm1019, %v1018, %v1012
      %vm1021 = vcmask 195584
      %v1022 = vsel %vm1021, %v1020, %v1016
      %v1023 = vpack.c.bf16 %v1022, %v1022
      %v1025 = vlaneseq
      %v1026 = vshrl.u32 %v1025, 7
      %v1027 = vsub.s32 0, %v1026
      %v1028 = vrot.slane %v555, %v1027
      %v1034 = vunpack.c.l.b16 %v551
      %v1035 = vunpack.c.l.b16 %v552
      %v1036 = vunpack.c.l.b16 %v553
      %v1037 = vunpack.c.l.b16 %v554
      %v1038 = vpack.c.b16 %v1035, %v1034
      %v1039 = vpack.c.b16 %v1037, %v1036
      %v1043 = vsel %vm507, %v1023, 0
      %1045 = vmatprep.subr.bf16.mxu0 0
      %1046 = vmatpush1.bf16.msra.mxu0 %v1038
      %1047 = vmatprep.subr.bf16.mxu0 0
      %1048 = vmatpush1.bf16.msra.mxu0 %v1039
      %1049 = vmatprep.subr.bf16.mxu0 0
      %1050 = vmatpush1.bf16.msra.mxu0 0
      %1051 = vmatprep.subr.bf16.mxu0 0
      %1052 = vmatpush1.bf16.msra.mxu0 0
      %1053 = vmatprep.subr.bf16.mxu0 0
      %1054 = vmatpush1.bf16.msra.mxu0 0
      %1055 = vmatprep.subr.bf16.mxu0 0
      %1056 = vmatpush1.bf16.msra.mxu0 0
      %1057 = vmatprep.subr.bf16.mxu0 0
      %1058 = vmatpush1.bf16.msra.mxu0 0
      %1059 = vmatprep.subr.bf16.mxu0 0
      %1060 = vmatpush1.bf16.msra.mxu0 0
      %1061 = vmatprep.subr.bf16.mxu0 0
      %1062 = vmatpush1.bf16.msra.mxu0 0
      %1063 = vmatprep.subr.bf16.mxu0 0
      %1064 = vmatpush1.bf16.msra.mxu0 0
      %1065 = vmatprep.subr.bf16.mxu0 0
      %1066 = vmatpush1.bf16.msra.mxu0 0
      %1067 = vmatprep.subr.bf16.mxu0 0
      %1068 = vmatpush1.bf16.msra.mxu0 0
      %1069 = vmatprep.subr.bf16.mxu0 0
      %1070 = vmatpush1.bf16.msra.mxu0 0
      %1071 = vmatprep.subr.bf16.mxu0 0
      %1072 = vmatpush1.bf16.msra.mxu0 0
      %1073 = vmatprep.subr.bf16.mxu0 0
      %1074 = vmatpush1.bf16.msra.mxu0 0
      %1075 = vmatprep.subr.bf16.mxu0 0
      %1076 = vmatpush1.bf16.msra.mxu0 0
      %1077 = vmatprep.mubr.bf16.mxu0 0
      %1078 = vmatmul.mubr.bf16.gmra.mrb[0].mxu0 %v1043
      %v1079 = vpop.f32.mrb[0].mxu0
      %v1080 = vadd.f32 %v1028, %v1079
      %v1081 = vpop.f32.mrb[0].mxu0
      %v1082 = vpop.f32.mrb[0].mxu0
      %v1083 = vpop.f32.mrb[0].mxu0
      %1084 = vdwg.mxu0
      %v1085 = vld [vmem:[%s6] sm:$0x1]
      %v1086 = vld [vmem:[%s7] sm:$0x1]
      %v1087 = vadd.f32 %v1080, %v481
      %v1088 = vsel %vm507, %v1087, 0.0
      %1089 = vadd.xlane.f32.xlu0 %v1088
      %v1090 = vpop.xlane.xlu0 %1089
      %v1091 = vrcp.pop 32.0
      %v1092 = vmul.f32 %v1090, %v1091
      %v1093 = vsub.f32 %v1087, %v1092
      %v1094 = vmul.f32 %v1093, %v1093
      %v1095 = vsel %vm507, %v1094, 0.0
      %1096 = vadd.xlane.f32.xlu0 %v1095
      %v1097 = vpop.xlane.xlu0 %1096
      %v1098 = vmul.f32 %v1097, %v1091
      %v1099 = vadd.f32 %v1098, 1e-05
      %v1100 = vrsqrt.pop %v1099
      %v1101 = vmul.f32 %v1093, %v1100
      %v1103 = vlaneseq
      %v1104 = vshrl.u32 %v1103, 7
      %v1105 = vsub.s32 0, %v1104
      %v1106 = vrot.slane %v1085, %v1105
      %v1108 = vmul.f32 %v1101, %v1106
      %v1110 = vlaneseq
      %v1111 = vshrl.u32 %v1110, 7
      %v1112 = vsub.s32 0, %v1111
      %v1113 = vrot.slane %v1086, %v1112
      %v1115 = vadd.f32 %v1108, %v1113
      %v1116 = vld [vmem:[%s8] sm:$0xf]
      %v1117 = vld [vmem:[%s8 + $0x4] sm:$0xf]
      %v1118 = vld [vmem:[%s8 + $0x8] sm:$0xf]
      %v1119 = vld [vmem:[%s8 + $0xc] sm:$0xf]
      %v1120 = vld [vmem:[%s9] sm:$0x1]
      %v1121 = vld [vmem:[%s10] sm:$0xf]
      %v1122 = vld [vmem:[%s10 + $0x4] sm:$0xf]
      %v1123 = vld [vmem:[%s10 + $0x8] sm:$0xf]
      %v1124 = vld [vmem:[%s10 + $0xc] sm:$0xf]
      %v1125 = vld [vmem:[%s10 + $0x10] sm:$0xf]
      %v1126 = vld [vmem:[%s10 + $0x14] sm:$0xf]
      %v1127 = vld [vmem:[%s10 + $0x18] sm:$0xf]
      %v1128 = vld [vmem:[%s10 + $0x1c] sm:$0xf]
      %v1129 = vld [vmem:[%s11] sm:$0x1]
      %v1130 = vpack.c.bf16 %v1115, %v1115
      %v1132 = vlaneseq
      %v1133 = vshrl.u32 %v1132, 7
      %v1134 = vsub.s32 0, %v1133
      %v1135 = vrot.slane %v1120, %v1134
      %v1141 = vunpack.c.l.b16 %v1116
      %v1142 = vunpack.c.l.b16 %v1117
      %v1143 = vunpack.c.l.b16 %v1118
      %v1144 = vunpack.c.l.b16 %v1119
      %v1145 = vpack.c.b16 %v1142, %v1141
      %v1146 = vpack.c.b16 %v1144, %v1143
      %v1150 = vsel %vm507, %v1130, 0
      %1152 = vmatprep.subr.bf16.mxu0 0
      %1153 = vmatpush1.bf16.msra.mxu0 %v1145
      %1154 = vmatprep.subr.bf16.mxu0 0
      %1155 = vmatpush1.bf16.msra.mxu0 %v1146
      %1156 = vmatprep.subr.bf16.mxu0 0
      %1157 = vmatpush1.bf16.msra.mxu0 0
      %1158 = vmatprep.subr.bf16.mxu0 0
      %1159 = vmatpush1.bf16.msra.mxu0 0
      %1160 = vmatprep.subr.bf16.mxu0 0
      %1161 = vmatpush1.bf16.msra.mxu0 0
      %1162 = vmatprep.subr.bf16.mxu0 0
      %1163 = vmatpush1.bf16.msra.mxu0 0
      %1164 = vmatprep.subr.bf16.mxu0 0
      %1165 = vmatpush1.bf16.msra.mxu0 0
      %1166 = vmatprep.subr.bf16.mxu0 0
      %1167 = vmatpush1.bf16.msra.mxu0 0
      %1168 = vmatprep.subr.bf16.mxu0 0
      %1169 = vmatpush1.bf16.msra.mxu0 0
      %1170 = vmatprep.subr.bf16.mxu0 0
      %1171 = vmatpush1.bf16.msra.mxu0 0
      %1172 = vmatprep.subr.bf16.mxu0 0
      %1173 = vmatpush1.bf16.msra.mxu0 0
      %1174 = vmatprep.subr.bf16.mxu0 0
      %1175 = vmatpush1.bf16.msra.mxu0 0
      %1176 = vmatprep.subr.bf16.mxu0 0
      %1177 = vmatpush1.bf16.msra.mxu0 0
      %1178 = vmatprep.subr.bf16.mxu0 0
      %1179 = vmatpush1.bf16.msra.mxu0 0
      %1180 = vmatprep.subr.bf16.mxu0 0
      %1181 = vmatpush1.bf16.msra.mxu0 0
      %1182 = vmatprep.subr.bf16.mxu0 0
      %1183 = vmatpush1.bf16.msra.mxu0 0
      %1184 = vmatprep.mubr.bf16.mxu0 0
      %1185 = vmatmul.mubr.bf16.gmra.mrb[0].mxu0 %v1150
      %v1186 = vpop.f32.mrb[0].mxu0
      %v1187 = vadd.f32 %v1135, %v1186
      %v1188 = vpop.f32.mrb[0].mxu0
      %v1189 = vpop.f32.mrb[0].mxu0
      %v1190 = vpop.f32.mrb[0].mxu0
      %1191 = vdwg.mxu0
      %v1192 = vmax.f32 %v1187, 0.0
      %v1193 = vpack.c.bf16 %v1192, %v1192
      %v1195 = vlaneseq
      %v1196 = vshrl.u32 %v1195, 7
      %v1197 = vsub.s32 0, %v1196
      %v1198 = vrot.slane %v1129, %v1197
      %v1208 = vunpack.c.l.b16 %v1121
      %v1209 = vunpack.c.l.b16 %v1122
      %v1210 = vunpack.c.l.b16 %v1123
      %v1211 = vunpack.c.l.b16 %v1124
      %v1212 = vunpack.c.l.b16 %v1125
      %v1213 = vunpack.c.l.b16 %v1126
      %v1214 = vunpack.c.l.b16 %v1127
      %v1215 = vunpack.c.l.b16 %v1128
      %v1216 = vpack.c.b16 %v1209, %v1208
      %v1217 = vpack.c.b16 %v1211, %v1210
      %v1218 = vpack.c.b16 %v1213, %v1212
      %v1219 = vpack.c.b16 %v1215, %v1214
      %vm1224 = vcmask 523264
      %v1226 = vsel %vm1224, %v1193, 0
      %1228 = vmatprep.subr.bf16.mxu0 0
      %1229 = vmatpush1.bf16.msra.mxu0 %v1216
      %1230 = vmatprep.subr.bf16.mxu0 0
      %1231 = vmatpush1.bf16.msra.mxu0 %v1217
      %1232 = vmatprep.subr.bf16.mxu0 0
      %1233 = vmatpush1.bf16.msra.mxu0 %v1218
      %1234 = vmatprep.subr.bf16.mxu0 0
      %1235 = vmatpush1.bf16.msra.mxu0 %v1219
      %1236 = vmatprep.subr.bf16.mxu0 0
      %1237 = vmatpush1.bf16.msra.mxu0 0
      %1238 = vmatprep.subr.bf16.mxu0 0
      %1239 = vmatpush1.bf16.msra.mxu0 0
      %1240 = vmatprep.subr.bf16.mxu0 0
      %1241 = vmatpush1.bf16.msra.mxu0 0
      %1242 = vmatprep.subr.bf16.mxu0 0
      %1243 = vmatpush1.bf16.msra.mxu0 0
      %1244 = vmatprep.subr.bf16.mxu0 0
      %1245 = vmatpush1.bf16.msra.mxu0 0
      %1246 = vmatprep.subr.bf16.mxu0 0
      %1247 = vmatpush1.bf16.msra.mxu0 0
      %1248 = vmatprep.subr.bf16.mxu0 0
      %1249 = vmatpush1.bf16.msra.mxu0 0
      %1250 = vmatprep.subr.bf16.mxu0 0
      %1251 = vmatpush1.bf16.msra.mxu0 0
      %1252 = vmatprep.subr.bf16.mxu0 0
      %1253 = vmatpush1.bf16.msra.mxu0 0
      %1254 = vmatprep.subr.bf16.mxu0 0
      %1255 = vmatpush1.bf16.msra.mxu0 0
      %1256 = vmatprep.subr.bf16.mxu0 0
      %1257 = vmatpush1.bf16.msra.mxu0 0
      %1258 = vmatprep.subr.bf16.mxu0 0
      %1259 = vmatpush1.bf16.msra.mxu0 0
      %1260 = vmatprep.mubr.bf16.mxu0 0
      %1261 = vmatmul.mubr.bf16.gmra.mrb[0].mxu0 %v1226
      %v1262 = vpop.f32.mrb[0].mxu0
      %v1263 = vadd.f32 %v1198, %v1262
      %v1264 = vpop.f32.mrb[0].mxu0
      %v1265 = vpop.f32.mrb[0].mxu0
      %v1266 = vpop.f32.mrb[0].mxu0
      %1267 = vdwg.mxu0
      %v1268 = vld [vmem:[%s12] sm:$0x1]
      %v1269 = vld [vmem:[%s13] sm:$0x1]
      %v1270 = vadd.f32 %v1263, %v1115
      %v1271 = vsel %vm507, %v1270, 0.0
      %1272 = vadd.xlane.f32.xlu0 %v1271
      %v1273 = vpop.xlane.xlu0 %1272
      %v1274 = vmul.f32 %v1273, %v1091
      %v1275 = vsub.f32 %v1270, %v1274
      %v1276 = vmul.f32 %v1275, %v1275
      %v1277 = vsel %vm507, %v1276, 0.0
      %1278 = vadd.xlane.f32.xlu0 %v1277
      %v1279 = vpop.xlane.xlu0 %1278
      %v1280 = vmul.f32 %v1279, %v1091
      %v1281 = vadd.f32 %v1280, 1e-05
      %v1282 = vrsqrt.pop %v1281
      %v1283 = vmul.f32 %v1275, %v1282
      %v1285 = vlaneseq
      %v1286 = vshrl.u32 %v1285, 7
      %v1287 = vsub.s32 0, %v1286
      %v1288 = vrot.slane %v1268, %v1287
      %v1290 = vmul.f32 %v1283, %v1288
      %v1292 = vlaneseq
      %v1293 = vshrl.u32 %v1292, 7
      %v1294 = vsub.s32 0, %v1293
      %v1295 = vrot.slane %v1269, %v1294
      %v1297 = vadd.f32 %v1290, %v1295
      %s1298 = scalar_lea.vmem %s2, 16
      %v1299 = vld [vmem:[%s1298] sm:$0xf]
      %v1300 = vld [vmem:[%s1298 + $0x4] sm:$0xf]
      %v1301 = vld [vmem:[%s1298 + $0x8] sm:$0xf]
      %v1302 = vld [vmem:[%s1298 + $0xc] sm:$0xf]
      %v1303 = vpack.c.bf16 %v1297, %v1297
      %s1304 = scalar_lea.vmem %s3, 1
      %v1305 = vld [vmem:[%s1304] sm:$0x1]
      %v1307 = vlaneseq
      %v1308 = vshrl.u32 %v1307, 7
      %v1309 = vsub.s32 0, %v1308
      %v1310 = vrot.slane %v1305, %v1309
      %v1316 = vunpack.c.l.b16 %v1299
      %v1317 = vunpack.c.l.b16 %v1300
      %v1318 = vunpack.c.l.b16 %v1301
      %v1319 = vunpack.c.l.b16 %v1302
      %v1320 = vpack.c.b16 %v1317, %v1316
      %v1321 = vpack.c.b16 %v1319, %v1318
      %v1325 = vsel %vm507, %v1303, 0
      %1327 = vmatprep.subr.bf16.mxu0 0
      %1328 = vmatpush1.bf16.msra.mxu0 %v1320
      %1329 = vmatprep.subr.bf16.mxu0 0
      %1330 = vmatpush1.bf16.msra.mxu0 %v1321
      %1331 = vmatprep.subr.bf16.mxu0 0
      %1332 = vmatpush1.bf16.msra.mxu0 0
      %1333 = vmatprep.subr.bf16.mxu0 0
      %1334 = vmatpush1.bf16.msra.mxu0 0
      %1335 = vmatprep.subr.bf16.mxu0 0
      %1336 = vmatpush1.bf16.msra.mxu0 0
      %1337 = vmatprep.subr.bf16.mxu0 0
      %1338 = vmatpush1.bf16.msra.mxu0 0
      %1339 = vmatprep.subr.bf16.mxu0 0
      %1340 = vmatpush1.bf16.msra.mxu0 0
      %1341 = vmatprep.subr.bf16.mxu0 0
      %1342 = vmatpush1.bf16.msra.mxu0 0
      %1343 = vmatprep.subr.bf16.mxu0 0
      %1344 = vmatpush1.bf16.msra.mxu0 0
      %1345 = vmatprep.subr.bf16.mxu0 0
      %1346 = vmatpush1.bf16.msra.mxu0 0
      %1347 = vmatprep.subr.bf16.mxu0 0
      %1348 = vmatpush1.bf16.msra.mxu0 0
      %1349 = vmatprep.subr.bf16.mxu0 0
      %1350 = vmatpush1.bf16.msra.mxu0 0
      %1351 = vmatprep.subr.bf16.mxu0 0
      %1352 = vmatpush1.bf16.msra.mxu0 0
      %1353 = vmatprep.subr.bf16.mxu0 0
      %1354 = vmatpush1.bf16.msra.mxu0 0
      %1355 = vmatprep.subr.bf16.mxu0 0
      %1356 = vmatpush1.bf16.msra.mxu0 0
      %1357 = vmatprep.subr.bf16.mxu0 0
      %1358 = vmatpush1.bf16.msra.mxu0 0
      %1359 = vmatprep.mubr.bf16.mxu0 0
      %1360 = vmatmul.mubr.bf16.gmra.mrb[0].mxu0 %v1325
      %v1361 = vpop.f32.mrb[0].mxu0
      %v1362 = vadd.f32 %v1310, %v1361
      %v1363 = vpop.f32.mrb[0].mxu0
      %v1364 = vpop.f32.mrb[0].mxu0
      %v1365 = vpop.f32.mrb[0].mxu0
      %1366 = vdwg.mxu0
      %s1367 = scalar_lea.vmem %s4, 16
      %v1368 = vld [vmem:[%s1367] sm:$0xf]
      %v1369 = vld [vmem:[%s1367 + $0x4] sm:$0xf]
      %v1370 = vld [vmem:[%s1367 + $0x8] sm:$0xf]
      %v1371 = vld [vmem:[%s1367 + $0xc] sm:$0xf]
      %s1372 = scalar_lea.vmem %s5, 1
      %v1373 = vld [vmem:[%s1372] sm:$0x1]
      %v1374 = vpack.c.bf16 %v1362, %v1362
      %1376 = vrot.lane.b32.xlu0 %v1374, 96
      %v1377 = vpop.permute.xlu0 %1376
      %v1379 = vsel %vm560, %v1374, 0
      %v1382 = vsel %vm560, %v1377, 0
      %1384 = vmatprep.subr.bf16.mxu0 0
      %1385 = vmatpush1.bf16.xpose.msra.mxu0 %v1382
      %1386 = vmatprep.subr.bf16.mxu0 0
      %1387 = vmatpush1.bf16.xpose.msra.mxu0 0
      %1388 = vmatprep.subr.bf16.mxu0 0
      %1389 = vmatpush1.bf16.xpose.msra.mxu0 0
      %1390 = vmatprep.subr.bf16.mxu0 0
      %1391 = vmatpush1.bf16.xpose.msra.mxu0 0
      %1392 = vmatprep.subr.bf16.mxu0 0
      %1393 = vmatpush1.bf16.xpose.msra.mxu0 0
      %1394 = vmatprep.subr.bf16.mxu0 0
      %1395 = vmatpush1.bf16.xpose.msra.mxu0 0
      %1396 = vmatprep.subr.bf16.mxu0 0
      %1397 = vmatpush1.bf16.xpose.msra.mxu0 0
      %1398 = vmatprep.subr.bf16.mxu0 0
      %1399 = vmatpush1.bf16.xpose.msra.mxu0 0
      %1400 = vmatprep.subr.bf16.mxu0 0
      %1401 = vmatpush1.bf16.xpose.msra.mxu0 0
      %1402 = vmatprep.subr.bf16.mxu0 0
      %1403 = vmatpush1.bf16.xpose.msra.mxu0 0
      %1404 = vmatprep.subr.bf16.mxu0 0
      %1405 = vmatpush1.bf16.xpose.msra.mxu0 0
      %1406 = vmatprep.subr.bf16.mxu0 0
      %1407 = vmatpush1.bf16.xpose.msra.mxu0 0
      %1408 = vmatprep.subr.bf16.mxu0 0
      %1409 = vmatpush1.bf16.xpose.msra.mxu0 0
      %1410 = vmatprep.subr.bf16.mxu0 0
      %1411 = vmatpush1.bf16.xpose.msra.mxu0 0
      %1412 = vmatprep.subr.bf16.mxu0 0
      %1413 = vmatpush1.bf16.xpose.msra.mxu0 0
      %1414 = vmatprep.subr.bf16.mxu0 0
      %1415 = vmatpush1.bf16.xpose.msra.mxu0 0
      %1416 = vmatprep.mubr.bf16.mxu0 0
      %1417 = vmatmul.mubr.bf16.gmra.mrb[0].mxu0 %v1379
      %v1418 = vpop.f32.mrb[0].mxu0
      %v1419 = vadd.f32 0.0, %v1418
      %v1420 = vpop.f32.mrb[0].mxu0
      %v1421 = vpop.f32.mrb[0].mxu0
      %v1422 = vpop.f32.mrb[0].mxu0
      %1423 = vdwg.mxu0
      %v1424 = vmul.f32 %v1419, 0.35355338
      %v1425 = vadd.f32 %v1424, %v482
      %v1426 = vsel %vm560, %v1425, -inf
      %1427 = vmax.xlane.f32.xlu0 %v1426
      %v1428 = vpop.xlane.xlu0 %1427
      %v1429 = vsub.f32 %v1425, %v1428
      %v1430 = vmul.f32 %v1429, 1.442695
      %v1431 = vpow.pop %v1430
      %v1432 = vsel %vm560, %v1431, 0.0
      %1433 = vadd.xlane.f32.xlu0 %v1432
      %v1434 = vpop.xlane.xlu0 %1433
      %v1435 = vrcp.pop %v1434
      %v1436 = vmul.f32 %v1431, %v1435
      %v1437 = vpack.c.bf16 %v1436, %v1436
      %1438 = vrot.lane.b32.xlu0 %v1374, 64
      %v1439 = vpop.permute.xlu0 %1438
      %v1441 = vsel %vm560, %v1437, 0
      %v1444 = vsel %vm626, %v1439, 0
      %1446 = vmatprep.subr.bf16.mxu0 0
      %1447 = vmatpush1.bf16.msra.mxu0 %v1444
      %1448 = vmatprep.subr.bf16.mxu0 0
      %1449 = vmatpush1.bf16.msra.mxu0 0
      %1450 = vmatprep.subr.bf16.mxu0 0
      %1451 = vmatpush1.bf16.msra.mxu0 0
      %1452 = vmatprep.subr.bf16.mxu0 0
      %1453 = vmatpush1.bf16.msra.mxu0 0
      %1454 = vmatprep.subr.bf16.mxu0 0
      %1455 = vmatpush1.bf16.msra.mxu0 0
      %1456 = vmatprep.subr.bf16.mxu0 0
      %1457 = vmatpush1.bf16.msra.mxu0 0
      %1458 = vmatprep.subr.bf16.mxu0 0
      %1459 = vmatpush1.bf16.msra.mxu0 0
      %1460 = vmatprep.subr.bf16.mxu0 0
      %1461 = vmatpush1.bf16.msra.mxu0 0
      %1462 = vmatprep.subr.bf16.mxu0 0
      %1463 = vmatpush1.bf16.msra.mxu0 0
      %1464 = vmatprep.subr.bf16.mxu0 0
      %1465 = vmatpush1.bf16.msra.mxu0 0
      %1466 = vmatprep.subr.bf16.mxu0 0
      %1467 = vmatpush1.bf16.msra.mxu0 0
      %1468 = vmatprep.subr.bf16.mxu0 0
      %1469 = vmatpush1.bf16.msra.mxu0 0
      %1470 = vmatprep.subr.bf16.mxu0 0
      %1471 = vmatpush1.bf16.msra.mxu0 0
      %1472 = vmatprep.subr.bf16.mxu0 0
      %1473 = vmatpush1.bf16.msra.mxu0 0
      %1474 = vmatprep.subr.bf16.mxu0 0
      %1475 = vmatpush1.bf16.msra.mxu0 0
      %1476 = vmatprep.subr.bf16.mxu0 0
      %1477 = vmatpush1.bf16.msra.mxu0 0
      %1478 = vmatprep.mubr.bf16.mxu0 0
      %1479 = vmatmul.mubr.bf16.gmra.mrb[0].mxu0 %v1441
      %v1480 = vpop.f32.mrb[0].mxu0
      %v1481 = vadd.f32 0.0, %v1480
      %v1482 = vpop.f32.mrb[0].mxu0
      %v1483 = vpop.f32.mrb[0].mxu0
      %v1484 = vpop.f32.mrb[0].mxu0
      %1485 = vdwg.mxu0
      %1486 = vrot.lane.b32.xlu0 %v1374, 120
      %v1487 = vpop.permute.xlu0 %1486
      %1488 = vrot.lane.b32.xlu0 %v1374, 88
      %v1489 = vpop.permute.xlu0 %1488
      %v1491 = vsel %vm560, %v1487, 0
      %v1494 = vsel %vm560, %v1489, 0
      %1496 = vmatprep.subr.bf16.mxu0 0
      %1497 = vmatpush1.bf16.xpose.msra.mxu0 %v1494
      %1498 = vmatprep.subr.bf16.mxu0 0
      %1499 = vmatpush1.bf16.xpose.msra.mxu0 0
      %1500 = vmatprep.subr.bf16.mxu0 0
      %1501 = vmatpush1.bf16.xpose.msra.mxu0 0
      %1502 = vmatprep.subr.bf16.mxu0 0
      %1503 = vmatpush1.bf16.xpose.msra.mxu0 0
      %1504 = vmatprep.subr.bf16.mxu0 0
      %1505 = vmatpush1.bf16.xpose.msra.mxu0 0
      %1506 = vmatprep.subr.bf16.mxu0 0
      %1507 = vmatpush1.bf16.xpose.msra.mxu0 0
      %1508 = vmatprep.subr.bf16.mxu0 0
      %1509 = vmatpush1.bf16.xpose.msra.mxu0 0
      %1510 = vmatprep.subr.bf16.mxu0 0
      %1511 = vmatpush1.bf16.xpose.msra.mxu0 0
      %1512 = vmatprep.subr.bf16.mxu0 0
      %1513 = vmatpush1.bf16.xpose.msra.mxu0 0
      %1514 = vmatprep.subr.bf16.mxu0 0
      %1515 = vmatpush1.bf16.xpose.msra.mxu0 0
      %1516 = vmatprep.subr.bf16.mxu0 0
      %1517 = vmatpush1.bf16.xpose.msra.mxu0 0
      %1518 = vmatprep.subr.bf16.mxu0 0
      %1519 = vmatpush1.bf16.xpose.msra.mxu0 0
      %1520 = vmatprep.subr.bf16.mxu0 0
      %1521 = vmatpush1.bf16.xpose.msra.mxu0 0
      %1522 = vmatprep.subr.bf16.mxu0 0
      %1523 = vmatpush1.bf16.xpose.msra.mxu0 0
      %1524 = vmatprep.subr.bf16.mxu0 0
      %1525 = vmatpush1.bf16.xpose.msra.mxu0 0
      %1526 = vmatprep.subr.bf16.mxu0 0
      %1527 = vmatpush1.bf16.xpose.msra.mxu0 0
      %1528 = vmatprep.mubr.bf16.mxu0 0
      %1529 = vmatmul.mubr.bf16.gmra.mrb[0].mxu0 %v1491
      %v1530 = vpop.f32.mrb[0].mxu0
      %v1531 = vadd.f32 0.0, %v1530
      %v1532 = vpop.f32.mrb[0].mxu0
      %v1533 = vpop.f32.mrb[0].mxu0
      %v1534 = vpop.f32.mrb[0].mxu0
      %1535 = vdwg.mxu0
      %v1536 = vmul.f32 %v1531, 0.35355338
      %v1537 = vadd.f32 %v1536, %v482
      %v1538 = vsel %vm560, %v1537, -inf
      %1539 = vmax.xlane.f32.xlu0 %v1538
      %v1540 = vpop.xlane.xlu0 %1539
      %v1541 = vsub.f32 %v1537, %v1540
      %v1542 = vmul.f32 %v1541, 1.442695
      %v1543 = vpow.pop %v1542
      %v1544 = vsel %vm560, %v1543, 0.0
      %1545 = vadd.xlane.f32.xlu0 %v1544
      %v1546 = vpop.xlane.xlu0 %1545
      %v1547 = vrcp.pop %v1546
      %v1548 = vmul.f32 %v1543, %v1547
      %v1549 = vpack.c.bf16 %v1548, %v1548
      %1550 = vrot.lane.b32.xlu0 %v1374, 56
      %v1551 = vpop.permute.xlu0 %1550
      %v1553 = vsel %vm560, %v1549, 0
      %v1556 = vsel %vm626, %v1551, 0
      %1558 = vmatprep.subr.bf16.mxu0 0
      %1559 = vmatpush1.bf16.msra.mxu0 %v1556
      %1560 = vmatprep.subr.bf16.mxu0 0
      %1561 = vmatpush1.bf16.msra.mxu0 0
      %1562 = vmatprep.subr.bf16.mxu0 0
      %1563 = vmatpush1.bf16.msra.mxu0 0
      %1564 = vmatprep.subr.bf16.mxu0 0
      %1565 = vmatpush1.bf16.msra.mxu0 0
      %1566 = vmatprep.subr.bf16.mxu0 0
      %1567 = vmatpush1.bf16.msra.mxu0 0
      %1568 = vmatprep.subr.bf16.mxu0 0
      %1569 = vmatpush1.bf16.msra.mxu0 0
      %1570 = vmatprep.subr.bf16.mxu0 0
      %1571 = vmatpush1.bf16.msra.mxu0 0
      %1572 = vmatprep.subr.bf16.mxu0 0
      %1573 = vmatpush1.bf16.msra.mxu0 0
      %1574 = vmatprep.subr.bf16.mxu0 0
      %1575 = vmatpush1.bf16.msra.mxu0 0
      %1576 = vmatprep.subr.bf16.mxu0 0
      %1577 = vmatpush1.bf16.msra.mxu0 0
      %1578 = vmatprep.subr.bf16.mxu0 0
      %1579 = vmatpush1.bf16.msra.mxu0 0
      %1580 = vmatprep.subr.bf16.mxu0 0
      %1581 = vmatpush1.bf16.msra.mxu0 0
      %1582 = vmatprep.subr.bf16.mxu0 0
      %1583 = vmatpush1.bf16.msra.mxu0 0
      %1584 = vmatprep.subr.bf16.mxu0 0
      %1585 = vmatpush1.bf16.msra.mxu0 0
      %1586 = vmatprep.subr.bf16.mxu0 0
      %1587 = vmatpush1.bf16.msra.mxu0 0
      %1588 = vmatprep.subr.bf16.mxu0 0
      %1589 = vmatpush1.bf16.msra.mxu0 0
      %1590 = vmatprep.mubr.bf16.mxu0 0
      %1591 = vmatmul.mubr.bf16.gmra.mrb[0].mxu0 %v1553
      %v1592 = vpop.f32.mrb[0].mxu0
      %v1593 = vadd.f32 0.0, %v1592
      %v1594 = vpop.f32.mrb[0].mxu0
      %v1595 = vpop.f32.mrb[0].mxu0
      %v1596 = vpop.f32.mrb[0].mxu0
      %1597 = vdwg.mxu0
      %1598 = vrot.lane.b32.xlu0 %v1374, 112
      %v1599 = vpop.permute.xlu0 %1598
      %1600 = vrot.lane.b32.xlu0 %v1374, 80
      %v1601 = vpop.permute.xlu0 %1600
      %v1603 = vsel %vm560, %v1599, 0
      %v1606 = vsel %vm560, %v1601, 0
      %1608 = vmatprep.subr.bf16.mxu0 0
      %1609 = vmatpush1.bf16.xpose.msra.mxu0 %v1606
      %1610 = vmatprep.subr.bf16.mxu0 0
      %1611 = vmatpush1.bf16.xpose.msra.mxu0 0
      %1612 = vmatprep.subr.bf16.mxu0 0
      %1613 = vmatpush1.bf16.xpose.msra.mxu0 0
      %1614 = vmatprep.subr.bf16.mxu0 0
      %1615 = vmatpush1.bf16.xpose.msra.mxu0 0
      %1616 = vmatprep.subr.bf16.mxu0 0
      %1617 = vmatpush1.bf16.xpose.msra.mxu0 0
      %1618 = vmatprep.subr.bf16.mxu0 0
      %1619 = vmatpush1.bf16.xpose.msra.mxu0 0
      %1620 = vmatprep.subr.bf16.mxu0 0
      %1621 = vmatpush1.bf16.xpose.msra.mxu0 0
      %1622 = vmatprep.subr.bf16.mxu0 0
      %1623 = vmatpush1.bf16.xpose.msra.mxu0 0
      %1624 = vmatprep.subr.bf16.mxu0 0
      %1625 = vmatpush1.bf16.xpose.msra.mxu0 0
      %1626 = vmatprep.subr.bf16.mxu0 0
      %1627 = vmatpush1.bf16.xpose.msra.mxu0 0
      %1628 = vmatprep.subr.bf16.mxu0 0
      %1629 = vmatpush1.bf16.xpose.msra.mxu0 0
      %1630 = vmatprep.subr.bf16.mxu0 0
      %1631 = vmatpush1.bf16.xpose.msra.mxu0 0
      %1632 = vmatprep.subr.bf16.mxu0 0
      %1633 = vmatpush1.bf16.xpose.msra.mxu0 0
      %1634 = vmatprep.subr.bf16.mxu0 0
      %1635 = vmatpush1.bf16.xpose.msra.mxu0 0
      %1636 = vmatprep.subr.bf16.mxu0 0
      %1637 = vmatpush1.bf16.xpose.msra.mxu0 0
      %1638 = vmatprep.subr.bf16.mxu0 0
      %1639 = vmatpush1.bf16.xpose.msra.mxu0 0
      %1640 = vmatprep.mubr.bf16.mxu0 0
      %1641 = vmatmul.mubr.bf16.gmra.mrb[0].mxu0 %v1603
      %v1642 = vpop.f32.mrb[0].mxu0
      %v1643 = vadd.f32 0.0, %v1642
      %v1644 = vpop.f32.mrb[0].mxu0
      %v1645 = vpop.f32.mrb[0].mxu0
      %v1646 = vpop.f32.mrb[0].mxu0
      %1647 = vdwg.mxu0
      %v1648 = vmul.f32 %v1643, 0.35355338
      %v1649 = vadd.f32 %v1648, %v482
      %v1650 = vsel %vm560, %v1649, -inf
      %1651 = vmax.xlane.f32.xlu0 %v1650
      %v1652 = vpop.xlane.xlu0 %1651
      %v1653 = vsub.f32 %v1649, %v1652
      %v1654 = vmul.f32 %v1653, 1.442695
      %v1655 = vpow.pop %v1654
      %v1656 = vsel %vm560, %v1655, 0.0
      %1657 = vadd.xlane.f32.xlu0 %v1656
      %v1658 = vpop.xlane.xlu0 %1657
      %v1659 = vrcp.pop %v1658
      %v1660 = vmul.f32 %v1655, %v1659
      %v1661 = vpack.c.bf16 %v1660, %v1660
      %1662 = vrot.lane.b32.xlu0 %v1374, 48
      %v1663 = vpop.permute.xlu0 %1662
      %v1665 = vsel %vm560, %v1661, 0
      %v1668 = vsel %vm626, %v1663, 0
      %1670 = vmatprep.subr.bf16.mxu0 0
      %1671 = vmatpush1.bf16.msra.mxu0 %v1668
      %1672 = vmatprep.subr.bf16.mxu0 0
      %1673 = vmatpush1.bf16.msra.mxu0 0
      %1674 = vmatprep.subr.bf16.mxu0 0
      %1675 = vmatpush1.bf16.msra.mxu0 0
      %1676 = vmatprep.subr.bf16.mxu0 0
      %1677 = vmatpush1.bf16.msra.mxu0 0
      %1678 = vmatprep.subr.bf16.mxu0 0
      %1679 = vmatpush1.bf16.msra.mxu0 0
      %1680 = vmatprep.subr.bf16.mxu0 0
      %1681 = vmatpush1.bf16.msra.mxu0 0
      %1682 = vmatprep.subr.bf16.mxu0 0
      %1683 = vmatpush1.bf16.msra.mxu0 0
      %1684 = vmatprep.subr.bf16.mxu0 0
      %1685 = vmatpush1.bf16.msra.mxu0 0
      %1686 = vmatprep.subr.bf16.mxu0 0
      %1687 = vmatpush1.bf16.msra.mxu0 0
      %1688 = vmatprep.subr.bf16.mxu0 0
      %1689 = vmatpush1.bf16.msra.mxu0 0
      %1690 = vmatprep.subr.bf16.mxu0 0
      %1691 = vmatpush1.bf16.msra.mxu0 0
      %1692 = vmatprep.subr.bf16.mxu0 0
      %1693 = vmatpush1.bf16.msra.mxu0 0
      %1694 = vmatprep.subr.bf16.mxu0 0
      %1695 = vmatpush1.bf16.msra.mxu0 0
      %1696 = vmatprep.subr.bf16.mxu0 0
      %1697 = vmatpush1.bf16.msra.mxu0 0
      %1698 = vmatprep.subr.bf16.mxu0 0
      %1699 = vmatpush1.bf16.msra.mxu0 0
      %1700 = vmatprep.subr.bf16.mxu0 0
      %1701 = vmatpush1.bf16.msra.mxu0 0
      %1702 = vmatprep.mubr.bf16.mxu0 0
      %1703 = vmatmul.mubr.bf16.gmra.mrb[0].mxu0 %v1665
      %v1704 = vpop.f32.mrb[0].mxu0
      %v1705 = vadd.f32 0.0, %v1704
      %v1706 = vpop.f32.mrb[0].mxu0
      %v1707 = vpop.f32.mrb[0].mxu0
      %v1708 = vpop.f32.mrb[0].mxu0
      %1709 = vdwg.mxu0
      %1710 = vrot.lane.b32.xlu0 %v1374, 104
      %v1711 = vpop.permute.xlu0 %1710
      %1712 = vrot.lane.b32.xlu0 %v1374, 72
      %v1713 = vpop.permute.xlu0 %1712
      %v1715 = vsel %vm560, %v1711, 0
      %v1718 = vsel %vm560, %v1713, 0
      %1720 = vmatprep.subr.bf16.mxu0 0
      %1721 = vmatpush1.bf16.xpose.msra.mxu0 %v1718
      %1722 = vmatprep.subr.bf16.mxu0 0
      %1723 = vmatpush1.bf16.xpose.msra.mxu0 0
      %1724 = vmatprep.subr.bf16.mxu0 0
      %1725 = vmatpush1.bf16.xpose.msra.mxu0 0
      %1726 = vmatprep.subr.bf16.mxu0 0
      %1727 = vmatpush1.bf16.xpose.msra.mxu0 0
      %1728 = vmatprep.subr.bf16.mxu0 0
      %1729 = vmatpush1.bf16.xpose.msra.mxu0 0
      %1730 = vmatprep.subr.bf16.mxu0 0
      %1731 = vmatpush1.bf16.xpose.msra.mxu0 0
      %1732 = vmatprep.subr.bf16.mxu0 0
      %1733 = vmatpush1.bf16.xpose.msra.mxu0 0
      %1734 = vmatprep.subr.bf16.mxu0 0
      %1735 = vmatpush1.bf16.xpose.msra.mxu0 0
      %1736 = vmatprep.subr.bf16.mxu0 0
      %1737 = vmatpush1.bf16.xpose.msra.mxu0 0
      %1738 = vmatprep.subr.bf16.mxu0 0
      %1739 = vmatpush1.bf16.xpose.msra.mxu0 0
      %1740 = vmatprep.subr.bf16.mxu0 0
      %1741 = vmatpush1.bf16.xpose.msra.mxu0 0
      %1742 = vmatprep.subr.bf16.mxu0 0
      %1743 = vmatpush1.bf16.xpose.msra.mxu0 0
      %1744 = vmatprep.subr.bf16.mxu0 0
      %1745 = vmatpush1.bf16.xpose.msra.mxu0 0
      %1746 = vmatprep.subr.bf16.mxu0 0
      %1747 = vmatpush1.bf16.xpose.msra.mxu0 0
      %1748 = vmatprep.subr.bf16.mxu0 0
      %1749 = vmatpush1.bf16.xpose.msra.mxu0 0
      %1750 = vmatprep.subr.bf16.mxu0 0
      %1751 = vmatpush1.bf16.xpose.msra.mxu0 0
      %1752 = vmatprep.mubr.bf16.mxu0 0
      %1753 = vmatmul.mubr.bf16.gmra.mrb[0].mxu0 %v1715
      %v1754 = vpop.f32.mrb[0].mxu0
      %v1755 = vadd.f32 0.0, %v1754
      %v1756 = vpop.f32.mrb[0].mxu0
      %v1757 = vpop.f32.mrb[0].mxu0
      %v1758 = vpop.f32.mrb[0].mxu0
      %1759 = vdwg.mxu0
      %v1760 = vmul.f32 %v1755, 0.35355338
      %v1761 = vadd.f32 %v1760, %v482
      %v1762 = vsel %vm560, %v1761, -inf
      %1763 = vmax.xlane.f32.xlu0 %v1762
      %v1764 = vpop.xlane.xlu0 %1763
      %v1765 = vsub.f32 %v1761, %v1764
      %v1766 = vmul.f32 %v1765, 1.442695
      %v1767 = vpow.pop %v1766
      %v1768 = vsel %vm560, %v1767, 0.0
      %1769 = vadd.xlane.f32.xlu0 %v1768
      %v1770 = vpop.xlane.xlu0 %1769
      %v1771 = vrcp.pop %v1770
      %v1772 = vmul.f32 %v1767, %v1771
      %v1773 = vpack.c.bf16 %v1772, %v1772
      %1774 = vrot.lane.b32.xlu0 %v1374, 40
      %v1775 = vpop.permute.xlu0 %1774
      %v1777 = vsel %vm560, %v1773, 0
      %v1780 = vsel %vm626, %v1775, 0
      %1782 = vmatprep.subr.bf16.mxu0 0
      %1783 = vmatpush1.bf16.msra.mxu0 %v1780
      %1784 = vmatprep.subr.bf16.mxu0 0
      %1785 = vmatpush1.bf16.msra.mxu0 0
      %1786 = vmatprep.subr.bf16.mxu0 0
      %1787 = vmatpush1.bf16.msra.mxu0 0
      %1788 = vmatprep.subr.bf16.mxu0 0
      %1789 = vmatpush1.bf16.msra.mxu0 0
      %1790 = vmatprep.subr.bf16.mxu0 0
      %1791 = vmatpush1.bf16.msra.mxu0 0
      %1792 = vmatprep.subr.bf16.mxu0 0
      %1793 = vmatpush1.bf16.msra.mxu0 0
      %1794 = vmatprep.subr.bf16.mxu0 0
      %1795 = vmatpush1.bf16.msra.mxu0 0
      %1796 = vmatprep.subr.bf16.mxu0 0
      %1797 = vmatpush1.bf16.msra.mxu0 0
      %1798 = vmatprep.subr.bf16.mxu0 0
      %1799 = vmatpush1.bf16.msra.mxu0 0
      %1800 = vmatprep.subr.bf16.mxu0 0
      %1801 = vmatpush1.bf16.msra.mxu0 0
      %1802 = vmatprep.subr.bf16.mxu0 0
      %1803 = vmatpush1.bf16.msra.mxu0 0
      %1804 = vmatprep.subr.bf16.mxu0 0
      %1805 = vmatpush1.bf16.msra.mxu0 0
      %1806 = vmatprep.subr.bf16.mxu0 0
      %1807 = vmatpush1.bf16.msra.mxu0 0
      %1808 = vmatprep.subr.bf16.mxu0 0
      %1809 = vmatpush1.bf16.msra.mxu0 0
      %1810 = vmatprep.subr.bf16.mxu0 0
      %1811 = vmatpush1.bf16.msra.mxu0 0
      %1812 = vmatprep.subr.bf16.mxu0 0
      %1813 = vmatpush1.bf16.msra.mxu0 0
      %1814 = vmatprep.mubr.bf16.mxu0 0
      %1815 = vmatmul.mubr.bf16.gmra.mrb[0].mxu0 %v1777
      %v1816 = vpop.f32.mrb[0].mxu0
      %v1817 = vadd.f32 0.0, %v1816
      %v1818 = vpop.f32.mrb[0].mxu0
      %v1819 = vpop.f32.mrb[0].mxu0
      %v1820 = vpop.f32.mrb[0].mxu0
      %1821 = vdwg.mxu0
      %1823 = vrot.lane.b32.xlu0 %v1593, 8
      %v1824 = vpop.permute.xlu0 %1823
      %1827 = vrot.lane.b32.xlu0 %v1705, 16
      %v1828 = vpop.permute.xlu0 %1827
      %1831 = vrot.lane.b32.xlu0 %v1817, 24
      %v1832 = vpop.permute.xlu0 %1831
      %v1834 = vsel %vm560, %v1481, %v1824
      %v1835 = vsel %vm1019, %v1834, %v1828
      %v1836 = vsel %vm1021, %v1835, %v1832
      %v1837 = vpack.c.bf16 %v1836, %v1836
      %v1839 = vlaneseq
      %v1840 = vshrl.u32 %v1839, 7
      %v1841 = vsub.s32 0, %v1840
      %v1842 = vrot.slane %v1373, %v1841
      %v1848 = vunpack.c.l.b16 %v1368
      %v1849 = vunpack.c.l.b16 %v1369
      %v1850 = vunpack.c.l.b16 %v1370
      %v1851 = vunpack.c.l.b16 %v1371
      %v1852 = vpack.c.b16 %v1849, %v1848
      %v1853 = vpack.c.b16 %v1851, %v1850
      %v1857 = vsel %vm507, %v1837, 0
      %1859 = vmatprep.subr.bf16.mxu0 0
      %1860 = vmatpush1.bf16.msra.mxu0 %v1852
      %1861 = vmatprep.subr.bf16.mxu0 0
      %1862 = vmatpush1.bf16.msra.mxu0 %v1853
      %1863 = vmatprep.subr.bf16.mxu0 0
      %1864 = vmatpush1.bf16.msra.mxu0 0
      %1865 = vmatprep.subr.bf16.mxu0 0
      %1866 = vmatpush1.bf16.msra.mxu0 0
      %1867 = vmatprep.subr.bf16.mxu0 0
      %1868 = vmatpush1.bf16.msra.mxu0 0
      %1869 = vmatprep.subr.bf16.mxu0 0
      %1870 = vmatpush1.bf16.msra.mxu0 0
      %1871 = vmatprep.subr.bf16.mxu0 0
      %1872 = vmatpush1.bf16.msra.mxu0 0
      %1873 = vmatprep.subr.bf16.mxu0 0
      %1874 = vmatpush1.bf16.msra.mxu0 0
      %1875 = vmatprep.subr.bf16.mxu0 0
      %1876 = vmatpush1.bf16.msra.mxu0 0
      %1877 = vmatprep.subr.bf16.mxu0 0
      %1878 = vmatpush1.bf16.msra.mxu0 0
      %1879 = vmatprep.subr.bf16.mxu0 0
      %1880 = vmatpush1.bf16.msra.mxu0 0
      %1881 = vmatprep.subr.bf16.mxu0 0
      %1882 = vmatpush1.bf16.msra.mxu0 0
      %1883 = vmatprep.subr.bf16.mxu0 0
      %1884 = vmatpush1.bf16.msra.mxu0 0
      %1885 = vmatprep.subr.bf16.mxu0 0
      %1886 = vmatpush1.bf16.msra.mxu0 0
      %1887 = vmatprep.subr.bf16.mxu0 0
      %1888 = vmatpush1.bf16.msra.mxu0 0
      %1889 = vmatprep.subr.bf16.mxu0 0
      %1890 = vmatpush1.bf16.msra.mxu0 0
      %1891 = vmatprep.mubr.bf16.mxu0 0
      %1892 = vmatmul.mubr.bf16.gmra.mrb[0].mxu0 %v1857
      %v1893 = vpop.f32.mrb[0].mxu0
      %v1894 = vadd.f32 %v1842, %v1893
      %v1895 = vpop.f32.mrb[0].mxu0
      %v1896 = vpop.f32.mrb[0].mxu0
      %v1897 = vpop.f32.mrb[0].mxu0
      %1898 = vdwg.mxu0
      %s1899 = scalar_lea.vmem %s6, 1
      %v1900 = vld [vmem:[%s1899] sm:$0x1]
      %s1901 = scalar_lea.vmem %s7, 1
      %v1902 = vld [vmem:[%s1901] sm:$0x1]
      %v1903 = vadd.f32 %v1894, %v1297
      %v1904 = vsel %vm507, %v1903, 0.0
      %1905 = vadd.xlane.f32.xlu0 %v1904
      %v1906 = vpop.xlane.xlu0 %1905
      %v1907 = vmul.f32 %v1906, %v1091
      %v1908 = vsub.f32 %v1903, %v1907
      %v1909 = vmul.f32 %v1908, %v1908
      %v1910 = vsel %vm507, %v1909, 0.0
      %1911 = vadd.xlane.f32.xlu0 %v1910
      %v1912 = vpop.xlane.xlu0 %1911
      %v1913 = vmul.f32 %v1912, %v1091
      %v1914 = vadd.f32 %v1913, 1e-05
      %v1915 = vrsqrt.pop %v1914
      %v1916 = vmul.f32 %v1908, %v1915
      %v1918 = vlaneseq
      %v1919 = vshrl.u32 %v1918, 7
      %v1920 = vsub.s32 0, %v1919
      %v1921 = vrot.slane %v1900, %v1920
      %v1923 = vmul.f32 %v1916, %v1921
      %v1925 = vlaneseq
      %v1926 = vshrl.u32 %v1925, 7
      %v1927 = vsub.s32 0, %v1926
      %v1928 = vrot.slane %v1902, %v1927
      %v1930 = vadd.f32 %v1923, %v1928
      %s1931 = scalar_lea.vmem %s8, 16
      %v1932 = vld [vmem:[%s1931] sm:$0xf]
      %v1933 = vld [vmem:[%s1931 + $0x4] sm:$0xf]
      %v1934 = vld [vmem:[%s1931 + $0x8] sm:$0xf]
      %v1935 = vld [vmem:[%s1931 + $0xc] sm:$0xf]
      %s1936 = scalar_lea.vmem %s9, 1
      %v1937 = vld [vmem:[%s1936] sm:$0x1]
      %s1938 = scalar_lea.vmem %s10, 32
      %v1939 = vld [vmem:[%s1938] sm:$0xf]
      %v1940 = vld [vmem:[%s1938 + $0x4] sm:$0xf]
      %v1941 = vld [vmem:[%s1938 + $0x8] sm:$0xf]
      %v1942 = vld [vmem:[%s1938 + $0xc] sm:$0xf]
      %v1943 = vld [vmem:[%s1938 + $0x10] sm:$0xf]
      %v1944 = vld [vmem:[%s1938 + $0x14] sm:$0xf]
      %v1945 = vld [vmem:[%s1938 + $0x18] sm:$0xf]
      %v1946 = vld [vmem:[%s1938 + $0x1c] sm:$0xf]
      %s1947 = scalar_lea.vmem %s11, 1
      %v1948 = vld [vmem:[%s1947] sm:$0x1]
      %v1949 = vpack.c.bf16 %v1930, %v1930
      %v1951 = vlaneseq
      %v1952 = vshrl.u32 %v1951, 7
      %v1953 = vsub.s32 0, %v1952
      %v1954 = vrot.slane %v1937, %v1953
      %v1960 = vunpack.c.l.b16 %v1932
      %v1961 = vunpack.c.l.b16 %v1933
      %v1962 = vunpack.c.l.b16 %v1934
      %v1963 = vunpack.c.l.b16 %v1935
      %v1964 = vpack.c.b16 %v1961, %v1960
      %v1965 = vpack.c.b16 %v1963, %v1962
      %v1969 = vsel %vm507, %v1949, 0
      %1971 = vmatprep.subr.bf16.mxu0 0
      %1972 = vmatpush1.bf16.msra.mxu0 %v1964
      %1973 = vmatprep.subr.bf16.mxu0 0
      %1974 = vmatpush1.bf16.msra.mxu0 %v1965
      %1975 = vmatprep.subr.bf16.mxu0 0
      %1976 = vmatpush1.bf16.msra.mxu0 0
      %1977 = vmatprep.subr.bf16.mxu0 0
      %1978 = vmatpush1.bf16.msra.mxu0 0
      %1979 = vmatprep.subr.bf16.mxu0 0
      %1980 = vmatpush1.bf16.msra.mxu0 0
      %1981 = vmatprep.subr.bf16.mxu0 0
      %1982 = vmatpush1.bf16.msra.mxu0 0
      %1983 = vmatprep.subr.bf16.mxu0 0
      %1984 = vmatpush1.bf16.msra.mxu0 0
      %1985 = vmatprep.subr.bf16.mxu0 0
      %1986 = vmatpush1.bf16.msra.mxu0 0
      %1987 = vmatprep.subr.bf16.mxu0 0
      %1988 = vmatpush1.bf16.msra.mxu0 0
      %1989 = vmatprep.subr.bf16.mxu0 0
      %1990 = vmatpush1.bf16.msra.mxu0 0
      %1991 = vmatprep.subr.bf16.mxu0 0
      %1992 = vmatpush1.bf16.msra.mxu0 0
      %1993 = vmatprep.subr.bf16.mxu0 0
      %1994 = vmatpush1.bf16.msra.mxu0 0
      %1995 = vmatprep.subr.bf16.mxu0 0
      %1996 = vmatpush1.bf16.msra.mxu0 0
      %1997 = vmatprep.subr.bf16.mxu0 0
      %1998 = vmatpush1.bf16.msra.mxu0 0
      %1999 = vmatprep.subr.bf16.mxu0 0
      %2000 = vmatpush1.bf16.msra.mxu0 0
      %2001 = vmatprep.subr.bf16.mxu0 0
      %2002 = vmatpush1.bf16.msra.mxu0 0
      %2003 = vmatprep.mubr.bf16.mxu0 0
      %2004 = vmatmul.mubr.bf16.gmra.mrb[0].mxu0 %v1969
      %v2005 = vpop.f32.mrb[0].mxu0
      %v2006 = vadd.f32 %v1954, %v2005
      %v2007 = vpop.f32.mrb[0].mxu0
      %v2008 = vpop.f32.mrb[0].mxu0
      %v2009 = vpop.f32.mrb[0].mxu0
      %2010 = vdwg.mxu0
      %v2011 = vmax.f32 %v2006, 0.0
      %v2012 = vpack.c.bf16 %v2011, %v2011
      %v2014 = vlaneseq
      %v2015 = vshrl.u32 %v2014, 7
      %v2016 = vsub.s32 0, %v2015
      %v2017 = vrot.slane %v1948, %v2016
      %v2027 = vunpack.c.l.b16 %v1939
      %v2028 = vunpack.c.l.b16 %v1940
      %v2029 = vunpack.c.l.b16 %v1941
      %v2030 = vunpack.c.l.b16 %v1942
      %v2031 = vunpack.c.l.b16 %v1943
      %v2032 = vunpack.c.l.b16 %v1944
      %v2033 = vunpack.c.l.b16 %v1945
      %v2034 = vunpack.c.l.b16 %v1946
      %v2035 = vpack.c.b16 %v2028, %v2027
      %v2036 = vpack.c.b16 %v2030, %v2029
      %v2037 = vpack.c.b16 %v2032, %v2031
      %v2038 = vpack.c.b16 %v2034, %v2033
      %v2044 = vsel %vm1224, %v2012, 0
      %2046 = vmatprep.subr.bf16.mxu0 0
      %2047 = vmatpush1.bf16.msra.mxu0 %v2035
      %2048 = vmatprep.subr.bf16.mxu0 0
      %2049 = vmatpush1.bf16.msra.mxu0 %v2036
      %2050 = vmatprep.subr.bf16.mxu0 0
      %2051 = vmatpush1.bf16.msra.mxu0 %v2037
      %2052 = vmatprep.subr.bf16.mxu0 0
      %2053 = vmatpush1.bf16.msra.mxu0 %v2038
      %2054 = vmatprep.subr.bf16.mxu0 0
      %2055 = vmatpush1.bf16.msra.mxu0 0
      %2056 = vmatprep.subr.bf16.mxu0 0
      %2057 = vmatpush1.bf16.msra.mxu0 0
      %2058 = vmatprep.subr.bf16.mxu0 0
      %2059 = vmatpush1.bf16.msra.mxu0 0
      %2060 = vmatprep.subr.bf16.mxu0 0
      %2061 = vmatpush1.bf16.msra.mxu0 0
      %2062 = vmatprep.subr.bf16.mxu0 0
      %2063 = vmatpush1.bf16.msra.mxu0 0
      %2064 = vmatprep.subr.bf16.mxu0 0
      %2065 = vmatpush1.bf16.msra.mxu0 0
      %2066 = vmatprep.subr.bf16.mxu0 0
      %2067 = vmatpush1.bf16.msra.mxu0 0
      %2068 = vmatprep.subr.bf16.mxu0 0
      %2069 = vmatpush1.bf16.msra.mxu0 0
      %2070 = vmatprep.subr.bf16.mxu0 0
      %2071 = vmatpush1.bf16.msra.mxu0 0
      %2072 = vmatprep.subr.bf16.mxu0 0
      %2073 = vmatpush1.bf16.msra.mxu0 0
      %2074 = vmatprep.subr.bf16.mxu0 0
      %2075 = vmatpush1.bf16.msra.mxu0 0
      %2076 = vmatprep.subr.bf16.mxu0 0
      %2077 = vmatpush1.bf16.msra.mxu0 0
      %2078 = vmatprep.mubr.bf16.mxu0 0
      %2079 = vmatmul.mubr.bf16.gmra.mrb[0].mxu0 %v2044
      %v2080 = vpop.f32.mrb[0].mxu0
      %v2081 = vadd.f32 %v2017, %v2080
      %v2082 = vpop.f32.mrb[0].mxu0
      %v2083 = vpop.f32.mrb[0].mxu0
      %v2084 = vpop.f32.mrb[0].mxu0
      %2085 = vdwg.mxu0
      %s2086 = scalar_lea.vmem %s12, 1
      %v2087 = vld [vmem:[%s2086] sm:$0x1]
      %s2088 = scalar_lea.vmem %s13, 1
      %v2089 = vld [vmem:[%s2088] sm:$0x1]
      %v2090 = vadd.f32 %v2081, %v1930
      %v2091 = vsel %vm507, %v2090, 0.0
      %2092 = vadd.xlane.f32.xlu0 %v2091
      %v2093 = vpop.xlane.xlu0 %2092
      %v2094 = vmul.f32 %v2093, %v1091
      %v2095 = vsub.f32 %v2090, %v2094
      %v2096 = vmul.f32 %v2095, %v2095
      %v2097 = vsel %vm507, %v2096, 0.0
      %2098 = vadd.xlane.f32.xlu0 %v2097
      %v2099 = vpop.xlane.xlu0 %2098
      %v2100 = vmul.f32 %v2099, %v1091
      %v2101 = vadd.f32 %v2100, 1e-05
      %v2102 = vrsqrt.pop %v2101
      %v2103 = vmul.f32 %v2095, %v2102
      %v2105 = vlaneseq
      %v2106 = vshrl.u32 %v2105, 7
      %v2107 = vsub.s32 0, %v2106
      %v2108 = vrot.slane %v2087, %v2107
      %v2110 = vmul.f32 %v2103, %v2108
      %v2112 = vlaneseq
      %v2113 = vshrl.u32 %v2112, 7
      %v2114 = vsub.s32 0, %v2113
      %v2115 = vrot.slane %v2089, %v2114
      %v2117 = vadd.f32 %v2110, %v2115
      %2118 = vst.msk [vmem:[%s479] sm:$0xff] %vm507, %v2117
      %p2119 = scmp.lt.s32.totalorder %s25, 1
      %s2120 = scalar_select %p2119, %s25, 1
      %s2121 = smul.addr %s2120, 8
      %s2122 = scalar_lea.vmem %s14, %s2121
      // Predicated region
      $region77: #{transformer_forward.2} parent=75 // pred_check
        %p2123 = pneg %p347
      $region78: #{transformer_forward.2} parent=75 // pred_check_branch
        %2125 = sbr.rel (%p2123) target = $region80
      $region79: #{transformer_forward.2} parent=75 // pred_region
        _
      $region80: #{transformer_forward.2} parent=75 // pred_fallthru
        _
    $region76: #{transformer_forward.2} parent=5 // pred_fallthru
      _
    %p2126 = scmp.le.s32.totalorder 2, %s20
    // Predicated region
    $region81: #{transformer_forward.2} parent=5 // pred_check
      %p2127 = pneg %p2126
    $region82: #{transformer_forward.2} parent=5 // pred_check_branch
      %2129 = sbr.rel (%p2127) target = $region84
    $region83: #{transformer_forward.2} parent=5 // pred_region
      %s2130 = ssub.s32 %s20, 2
      // Predicated region
      $region85: #{transformer_forward.2} parent=83 // pred_check
        %p2131 = pneg %p353
      $region86: #{transformer_forward.2} parent=83 // pred_check_branch
        %2133 = sbr.rel (%p2131) target = $region88
      $region87: #{transformer_forward.2} parent=83 // pred_region
        %p2134 = scmp.lt.s32.totalorder %s26, 1
        %s2135 = scalar_select %p2134, %s26, 1
        %s2136 = smul.addr %s2135, 8
        %s2137 = scalar_lea.vmem %s14, %s2136
      $region88: #{transformer_forward.2} parent=83 // pred_fallthru
        _
    $region84: #{transformer_forward.2} parent=5 // pred_fallthru
      _
  $region6: #{transformer_forward.2} parent=0 // loop_footer
    %s24 = sadd.s32 1, %s20
  $region7: #{transformer_forward.2} parent=0 // loop_footer_branch
    %19 = sbr.rel target = $region3
  $region8: #{transformer_forward.2} parent=0 // loop_exit
    _

// kernel: transformer_forward.3
$region0: #{transformer_forward.3}
  #allocation0 [shape = 'u32[]', space=smem, size = 0x4, offset = 0x4, fixed_abs, tag = 'smem constant byte address 0x4 - core index']
  #allocation1 [shape = 'u32[144,128]{1,0:T(1,128)}', space=vmem, size = 0x12000, scoped, tag = 'internal scratch']
  %s0 = inlined_call_operand.smem [shape: u32[30], index: -1, kind: input, shape index: {}]
  %s1 = sld [smem:[%s0]]
  %s2 = scalar_lea.smem %s0, 1
  %s3 = sld [smem:[%s2]]
  %s4 = scalar_lea.smem %s0, 2
  %s5 = sld [smem:[%s4]]
  %s6 = scalar_lea.smem %s0, 3
  %s7 = sld [smem:[%s6]]
  %s8 = scalar_lea.smem %s0, 4
  %s9 = sld [smem:[%s8]]
  %s10 = scalar_lea.smem %s0, 5
  %s11 = sld [smem:[%s10]]
  %s12 = scalar_lea.smem %s0, 6
  %s13 = sld [smem:[%s12]]
  %s14 = scalar_lea.smem %s0, 7
  %s15 = sld [smem:[%s14]]
  %s16 = scalar_lea.smem %s0, 8
  %s17 = sld [smem:[%s16]]
  %s18 = scalar_lea.smem %s0, 9
  %s19 = sld [smem:[%s18]]
  %s20 = scalar_lea.smem %s0, 10
  %s21 = sld [smem:[%s20]]
  %s22 = scalar_lea.smem %s0, 11
  %s23 = sld [smem:[%s22]]
  %s24 = scalar_lea.smem %s0, 12
  %s25 = sld [smem:[%s24]]
  %s26 = scalar_lea.smem %s0, 13
  %s27 = sld [smem:[%s26]]
  %s28 = scalar_lea.smem %s0, 14
  %s29 = sld [smem:[%s28]]
  %s30 = scalar_lea.smem %s0, 15
  %s31 = sld [smem:[%s30]]
  %s32 = scalar_lea.smem %s0, 16
  %s33 = sld [smem:[%s32]]
  %s34 = scalar_lea.smem %s0, 17
  %s35 = sld [smem:[%s34]]
  %s36 = scalar_lea.smem %s0, 18
  %s37 = sld [smem:[%s36]]
  %s38 = scalar_lea.smem %s0, 19
  %s39 = sld [smem:[%s38]]
  %s40 = scalar_lea.smem %s0, 20
  %s41 = sld [smem:[%s40]]
  %s42 = scalar_lea.smem %s0, 21
  %s43 = sld [smem:[%s42]]
  %s44 = scalar_lea.smem %s0, 22
  %s45 = sld [smem:[%s44]]
  %s46 = scalar_lea.smem %s0, 23
  %s47 = sld [smem:[%s46]]
  %s48 = scalar_lea.smem %s0, 24
  %s49 = sld [smem:[%s48]]
  %s50 = scalar_lea.smem %s0, 25
  %s51 = sld [smem:[%s50]]
  %s52 = scalar_lea.smem %s0, 26
  %s53 = sld [smem:[%s52]]
  %s54 = scalar_lea.smem %s0, 27
  %s55 = sld [smem:[%s54]]
  %s56 = scalar_lea.smem %s0, 28
  %s57 = sld [smem:[%s56]]
  %s58 = scalar_lea.smem %s0, 29
  %s59 = sld [smem:[%s58]]
  %60 = xla_tuple %s57, %s59
  %s61 = sld [smem:[#allocation0]]
  $region153: #{transformer_forward.3} parent=0
    _
  %s63 = ssub.s32 1, %s61
  %s64 = scalar_select 0, %s63, %s61
  $region1: #{transformer_forward.3} parent=0
    #allocation2 [shape = 'u8[8192]{0}', space=vmem, size = 0x2000, scoped, tag = 'output window, operand 0']
    #allocation3 [shape = 's32[2]{0}', space=sflag, size = 0x8, scoped, tag = 'scoped memory for transformer_forward.3']
    %65 = vsyncpa [#allocation3], 0
    %s66 = scalar_lea.sflag [#allocation3], 1
    %67 = vsyncpa %s66, 0
    loop: start=0, step=1, limit=4
    $region2: #{transformer_forward.3} parent=1 // loop_pre_header
      _
    $region3: #{transformer_forward.3} parent=1 // loop_header
      %s69 = sphi 0, %s73
      %p70 = scmp.ge.s32.totalorder %s69, 4
      %s79 = sphi 0, %s81
      %s82 = sphi 0, %s79
      %s83 = sphi 0, %s82
      %s99 = sphi 0, %s83
      %s105 = sphi 0, %s107
      %s108 = sphi 0, %s105
      %s109 = sphi 0, %s108
      %s125 = sphi 0, %s109
      %s131 = sphi 0, %s133
      %s134 = sphi 0, %s131
      %s135 = sphi 0, %s134
      %s151 = sphi 0, %s135
      %s157 = sphi 0, %s159
      %s160 = sphi 0, %s157
      %s161 = sphi 0, %s160
      %s177 = sphi 0, %s161
      %s183 = sphi 0, %s185
      %s186 = sphi 0, %s183
      %s187 = sphi 0, %s186
      %s203 = sphi 0, %s187
      %s207 = sphi 0, %s207
      %s209 = sphi 0, %s207
      %s210 = sphi 0, %s209
      %s224 = sphi 0, %s210
      %s228 = sphi 0, %s228
      %s230 = sphi 0, %s228
      %s231 = sphi 0, %s230
      %s245 = sphi 0, %s231
      %s249 = sphi 0, %s249
      %s251 = sphi 0, %s249
      %s252 = sphi 0, %s251
      %s266 = sphi 0, %s252
      %s270 = sphi 0, %s270
      %s272 = sphi 0, %s270
      %s273 = sphi 0, %s272
      %s287 = sphi 0, %s273
      %s291 = sphi 0, %s291
      %s293 = sphi 0, %s291
      %s294 = sphi 0, %s293
      %s308 = sphi 0, %s294
      %s312 = sphi 0, %s312
      %s314 = sphi 0, %s312
      %s315 = sphi 0, %s314
      %s329 = sphi 0, %s315
      %s333 = sphi 0, %s333
      %s335 = sphi 0, %s333
      %s336 = sphi 0, %s335
      %s350 = sphi 0, %s336
      %s354 = sphi 0, %s354
      %s356 = sphi 0, %s354
      %s357 = sphi 0, %s356
      %s371 = sphi 0, %s357
      %s375 = sphi 0, %s375
      %s377 = sphi 0, %s375
      %s378 = sphi 0, %s377
      %s392 = sphi 0, %s378
      %s396 = sphi 0, %s396
      %s398 = sphi 0, %s396
      %s399 = sphi 0, %s398
      %s413 = sphi 0, %s399
      %s417 = sphi 0, %s417
      %s419 = sphi 0, %s417
      %s420 = sphi 0, %s419
      %s434 = sphi 0, %s420
      %s438 = sphi 0, %s438
      %s440 = sphi 0, %s438
      %s441 = sphi 0, %s440
      %s455 = sphi 0, %s441
      %s459 = sphi 0, %s459
      %s461 = sphi 0, %s459
      %s462 = sphi 0, %s461
      %s476 = sphi 0, %s462
      %s480 = sphi 0, %s480
      %s482 = sphi 0, %s480
      %s483 = sphi 0, %s482
      %s497 = sphi 0, %s483
      %s501 = sphi 0, %s501
      %s503 = sphi 0, %s501
      %s504 = sphi 0, %s503
      %s518 = sphi 0, %s504
      %s522 = sphi 0, %s522
      %s524 = sphi 0, %s522
      %s525 = sphi 0, %s524
      %s539 = sphi 0, %s525
      %s543 = sphi 0, %s543
      %s545 = sphi 0, %s543
      %s546 = sphi 0, %s545
      %s560 = sphi 0, %s546
      %s564 = sphi 0, %s564
      %s566 = sphi 0, %s564
      %s567 = sphi 0, %s566
      %s581 = sphi 0, %s567
      %s585 = sphi 0, %s585
      %s587 = sphi 0, %s585
      %s588 = sphi 0, %s587
      %s602 = sphi 0, %s588
      %s606 = sphi 0, %s606
      %s608 = sphi 0, %s606
      %s609 = sphi 0, %s608
      %s623 = sphi 0, %s609
      %s627 = sphi 0, %s627
      %s629 = sphi 0, %s627
      %s630 = sphi 0, %s629
      %s644 = sphi 0, %s630
      %s648 = sphi 0, %s648
      %s650 = sphi 0, %s648
      %s651 = sphi 0, %s650
      %s665 = sphi 0, %s651
      %s669 = sphi 0, %s669
      %s671 = sphi 0, %s669
      %s672 = sphi 0, %s671
      %s686 = sphi 0, %s672
      %s692 = sphi 0, %s694
      %s695 = sphi 0, %s692
      %s696 = sphi 0, %s695
      %s712 = sphi 0, %s696
      %s718 = sphi 0, %s720
      %s721 = sphi 0, %s718
      %s722 = sphi 0, %s721
      %s738 = sphi 0, %s722
    $region4: #{transformer_forward.3} parent=1 // loop_header_branch
      %72 = sbr.rel (%p70) target = $region8
    $region5: #{transformer_forward.3} parent=1 // loop_body
      %s74 = ssub.s32 %s69, 1
      %s75 = ssub.s32 %s69, 2
      %s76 = sadd.s32 %s69, 1
      %s77 = ssub.s32 %s69, %s76
      %p78 = scmp.eq.s32.totalorder %s77, 0
      %s80 = sadd.s32 %s79, 1
      %s81 = scalar_select %p78, %s79, %s80
      %p84 = pneg %p78
      %p85 = scmp.eq.s32.totalorder %s69, 1
      %p86 = por %p84, %p85
      %p87 = scmp.ne.s32.totalorder %s79, %s82
      %p88 = scmp.eq.s32.totalorder %s69, 0
      %p89 = por %p87, %p88
      %p90 = scmp.ne.s32.totalorder %s79, %s82
      %p91 = scmp.eq.s32.totalorder %s74, 1
      %p92 = por %p90, %p91
      %p93 = scmp.ne.s32.totalorder %s82, %s83
      %p94 = scmp.eq.s32.totalorder %s74, 0
      %p95 = por %p93, %p94
      %p96 = scmp.ne.s32.totalorder %s82, %s83
      %p97 = scmp.eq.s32.totalorder %s75, 1
      %p98 = por %p96, %p97
      %p100 = scmp.ne.s32.totalorder %s83, %s99
      %p101 = scmp.eq.s32.totalorder %s75, 0
      %p102 = por %p100, %p101
      %s103 = ssub.s32 %s69, %s76
      %p104 = scmp.eq.s32.totalorder %s103, 0
      %s106 = sadd.s32 %s105, 1
      %s107 = scalar_select %p104, %s105, %s106
      %p110 = pneg %p104
      %p111 = scmp.eq.s32.totalorder %s69, 1
      %p112 = por %p110, %p111
      %p113 = scmp.ne.s32.totalorder %s105, %s108
      %p114 = scmp.eq.s32.totalorder %s69, 0
      %p115 = por %p113, %p114
      %p116 = scmp.ne.s32.totalorder %s105, %s108
      %p117 = scmp.eq.s32.totalorder %s74, 1
      %p118 = por %p116, %p117
      %p119 = scmp.ne.s32.totalorder %s108, %s109
      %p120 = scmp.eq.s32.totalorder %s74, 0
      %p121 = por %p119, %p120
      %p122 = scmp.ne.s32.totalorder %s108, %s109
      %p123 = scmp.eq.s32.totalorder %s75, 1
      %p124 = por %p122, %p123
      %p126 = scmp.ne.s32.totalorder %s109, %s125
      %p127 = scmp.eq.s32.totalorder %s75, 0
      %p128 = por %p126, %p127
      %s129 = ssub.s32 %s69, %s76
      %p130 = scmp.eq.s32.totalorder %s129, 0
      %s132 = sadd.s32 %s131, 1
      %s133 = scalar_select %p130, %s131, %s132
      %p136 = pneg %p130
      %p137 = scmp.eq.s32.totalorder %s69, 1
      %p138 = por %p136, %p137
      %p139 = scmp.ne.s32.totalorder %s131, %s134
      %p140 = scmp.eq.s32.totalorder %s69, 0
      %p141 = por %p139, %p140
      %p142 = scmp.ne.s32.totalorder %s131, %s134
      %p143 = scmp.eq.s32.totalorder %s74, 1
      %p144 = por %p142, %p143
      %p145 = scmp.ne.s32.totalorder %s134, %s135
      %p146 = scmp.eq.s32.totalorder %s74, 0
      %p147 = por %p145, %p146
      %p148 = scmp.ne.s32.totalorder %s134, %s135
      %p149 = scmp.eq.s32.totalorder %s75, 1
      %p150 = por %p148, %p149
      %p152 = scmp.ne.s32.totalorder %s135, %s151
      %p153 = scmp.eq.s32.totalorder %s75, 0
      %p154 = por %p152, %p153
      %s155 = ssub.s32 %s69, %s76
      %p156 = scmp.eq.s32.totalorder %s155, 0
      %s158 = sadd.s32 %s157, 1
      %s159 = scalar_select %p156, %s157, %s158
      %p162 = pneg %p156
      %p163 = scmp.eq.s32.totalorder %s69, 1
      %p164 = por %p162, %p163
      %p165 = scmp.ne.s32.totalorder %s157, %s160
      %p166 = scmp.eq.s32.totalorder %s69, 0
      %p167 = por %p165, %p166
      %p168 = scmp.ne.s32.totalorder %s157, %s160
      %p169 = scmp.eq.s32.totalorder %s74, 1
      %p170 = por %p168, %p169
      %p171 = scmp.ne.s32.totalorder %s160, %s161
      %p172 = scmp.eq.s32.totalorder %s74, 0
      %p173 = por %p171, %p172
      %p174 = scmp.ne.s32.totalorder %s160, %s161
      %p175 = scmp.eq.s32.totalorder %s75, 1
      %p176 = por %p174, %p175
      %p178 = scmp.ne.s32.totalorder %s161, %s177
      %p179 = scmp.eq.s32.totalorder %s75, 0
      %p180 = por %p178, %p179
      %s181 = ssub.s32 %s69, %s76
      %p182 = scmp.eq.s32.totalorder %s181, 0
      %s184 = sadd.s32 %s183, 1
      %s185 = scalar_select %p182, %s183, %s184
      %p188 = pneg %p182
      %p189 = scmp.eq.s32.totalorder %s69, 1
      %p190 = por %p188, %p189
      %p191 = scmp.ne.s32.totalorder %s183, %s186
      %p192 = scmp.eq.s32.totalorder %s69, 0
      %p193 = por %p191, %p192
      %p194 = scmp.ne.s32.totalorder %s183, %s186
      %p195 = scmp.eq.s32.totalorder %s74, 1
      %p196 = por %p194, %p195
      %p197 = scmp.ne.s32.totalorder %s186, %s187
      %p198 = scmp.eq.s32.totalorder %s74, 0
      %p199 = por %p197, %p198
      %p200 = scmp.ne.s32.totalorder %s186, %s187
      %p201 = scmp.eq.s32.totalorder %s75, 1
      %p202 = por %p200, %p201
      %p204 = scmp.ne.s32.totalorder %s187, %s203
      %p205 = scmp.eq.s32.totalorder %s75, 0
      %p206 = por %p204, %p205
      %s208 = sadd.s32 %s207, 1
      %p211 = scmp.eq.s32.totalorder %s69, 1
      %p212 = scmp.ne.s32.totalorder %s207, %s209
      %p213 = scmp.eq.s32.totalorder %s69, 0
      %p214 = por %p212, %p213
      %p215 = scmp.ne.s32.totalorder %s207, %s209
      %p216 = scmp.eq.s32.totalorder %s74, 1
      %p217 = por %p215, %p216
      %p218 = scmp.ne.s32.totalorder %s209, %s210
      %p219 = scmp.eq.s32.totalorder %s74, 0
      %p220 = por %p218, %p219
      %p221 = scmp.ne.s32.totalorder %s209, %s210
      %p222 = scmp.eq.s32.totalorder %s75, 1
      %p223 = por %p221, %p222
      %p225 = scmp.ne.s32.totalorder %s210, %s224
      %p226 = scmp.eq.s32.totalorder %s75, 0
      %p227 = por %p225, %p226
      %s229 = sadd.s32 %s228, 1
      %p232 = scmp.eq.s32.totalorder %s69, 1
      %p233 = scmp.ne.s32.totalorder %s228, %s230
      %p234 = scmp.eq.s32.totalorder %s69, 0
      %p235 = por %p233, %p234
      %p236 = scmp.ne.s32.totalorder %s228, %s230
      %p237 = scmp.eq.s32.totalorder %s74, 1
      %p238 = por %p236, %p237
      %p239 = scmp.ne.s32.totalorder %s230, %s231
      %p240 = scmp.eq.s32.totalorder %s74, 0
      %p241 = por %p239, %p240
      %p242 = scmp.ne.s32.totalorder %s230, %s231
      %p243 = scmp.eq.s32.totalorder %s75, 1
      %p244 = por %p242, %p243
      %p246 = scmp.ne.s32.totalorder %s231, %s245
      %p247 = scmp.eq.s32.totalorder %s75, 0
      %p248 = por %p246, %p247
      %s250 = sadd.s32 %s249, 1
      %p253 = scmp.eq.s32.totalorder %s69, 1
      %p254 = scmp.ne.s32.totalorder %s249, %s251
      %p255 = scmp.eq.s32.totalorder %s69, 0
      %p256 = por %p254, %p255
      %p257 = scmp.ne.s32.totalorder %s249, %s251
      %p258 = scmp.eq.s32.totalorder %s74, 1
      %p259 = por %p257, %p258
      %p260 = scmp.ne.s32.totalorder %s251, %s252
      %p261 = scmp.eq.s32.totalorder %s74, 0
      %p262 = por %p260, %p261
      %p263 = scmp.ne.s32.totalorder %s251, %s252
      %p264 = scmp.eq.s32.totalorder %s75, 1
      %p265 = por %p263, %p264
      %p267 = scmp.ne.s32.totalorder %s252, %s266
      %p268 = scmp.eq.s32.totalorder %s75, 0
      %p269 = por %p267, %p268
      %s271 = sadd.s32 %s270, 1
      %p274 = scmp.eq.s32.totalorder %s69, 1
      %p275 = scmp.ne.s32.totalorder %s270, %s272
      %p276 = scmp.eq.s32.totalorder %s69, 0
      %p277 = por %p275, %p276
      %p278 = scmp.ne.s32.totalorder %s270, %s272
      %p279 = scmp.eq.s32.totalorder %s74, 1
      %p280 = por %p278, %p279
      %p281 = scmp.ne.s32.totalorder %s272, %s273
      %p282 = scmp.eq.s32.totalorder %s74, 0
      %p283 = por %p281, %p282
      %p284 = scmp.ne.s32.totalorder %s272, %s273
      %p285 = scmp.eq.s32.totalorder %s75, 1
      %p286 = por %p284, %p285
      %p288 = scmp.ne.s32.totalorder %s273, %s287
      %p289 = scmp.eq.s32.totalorder %s75, 0
      %p290 = por %p288, %p289
      %s292 = sadd.s32 %s291, 1
      %p295 = scmp.eq.s32.totalorder %s69, 1
      %p296 = scmp.ne.s32.totalorder %s291, %s293
      %p297 = scmp.eq.s32.totalorder %s69, 0
      %p298 = por %p296, %p297
      %p299 = scmp.ne.s32.totalorder %s291, %s293
      %p300 = scmp.eq.s32.totalorder %s74, 1
      %p301 = por %p299, %p300
      %p302 = scmp.ne.s32.totalorder %s293, %s294
      %p303 = scmp.eq.s32.totalorder %s74, 0
      %p304 = por %p302, %p303
      %p305 = scmp.ne.s32.totalorder %s293, %s294
      %p306 = scmp.eq.s32.totalorder %s75, 1
      %p307 = por %p305, %p306
      %p309 = scmp.ne.s32.totalorder %s294, %s308
      %p310 = scmp.eq.s32.totalorder %s75, 0
      %p311 = por %p309, %p310
      %s313 = sadd.s32 %s312, 1
      %p316 = scmp.eq.s32.totalorder %s69, 1
      %p317 = scmp.ne.s32.totalorder %s312, %s314
      %p318 = scmp.eq.s32.totalorder %s69, 0
      %p319 = por %p317, %p318
      %p320 = scmp.ne.s32.totalorder %s312, %s314
      %p321 = scmp.eq.s32.totalorder %s74, 1
      %p322 = por %p320, %p321
      %p323 = scmp.ne.s32.totalorder %s314, %s315
      %p324 = scmp.eq.s32.totalorder %s74, 0
      %p325 = por %p323, %p324
      %p326 = scmp.ne.s32.totalorder %s314, %s315
      %p327 = scmp.eq.s32.totalorder %s75, 1
      %p328 = por %p326, %p327
      %p330 = scmp.ne.s32.totalorder %s315, %s329
      %p331 = scmp.eq.s32.totalorder %s75, 0
      %p332 = por %p330, %p331
      %s334 = sadd.s32 %s333, 1
      %p337 = scmp.eq.s32.totalorder %s69, 1
      %p338 = scmp.ne.s32.totalorder %s333, %s335
      %p339 = scmp.eq.s32.totalorder %s69, 0
      %p340 = por %p338, %p339
      %p341 = scmp.ne.s32.totalorder %s333, %s335
      %p342 = scmp.eq.s32.totalorder %s74, 1
      %p343 = por %p341, %p342
      %p344 = scmp.ne.s32.totalorder %s335, %s336
      %p345 = scmp.eq.s32.totalorder %s74, 0
      %p346 = por %p344, %p345
      %p347 = scmp.ne.s32.totalorder %s335, %s336
      %p348 = scmp.eq.s32.totalorder %s75, 1
      %p349 = por %p347, %p348
      %p351 = scmp.ne.s32.totalorder %s336, %s350
      %p352 = scmp.eq.s32.totalorder %s75, 0
      %p353 = por %p351, %p352
      %s355 = sadd.s32 %s354, 1
      %p358 = scmp.eq.s32.totalorder %s69, 1
      %p359 = scmp.ne.s32.totalorder %s354, %s356
      %p360 = scmp.eq.s32.totalorder %s69, 0
      %p361 = por %p359, %p360
      %p362 = scmp.ne.s32.totalorder %s354, %s356
      %p363 = scmp.eq.s32.totalorder %s74, 1
      %p364 = por %p362, %p363
      %p365 = scmp.ne.s32.totalorder %s356, %s357
      %p366 = scmp.eq.s32.totalorder %s74, 0
      %p367 = por %p365, %p366
      %p368 = scmp.ne.s32.totalorder %s356, %s357
      %p369 = scmp.eq.s32.totalorder %s75, 1
      %p370 = por %p368, %p369
      %p372 = scmp.ne.s32.totalorder %s357, %s371
      %p373 = scmp.eq.s32.totalorder %s75, 0
      %p374 = por %p372, %p373
      %s376 = sadd.s32 %s375, 1
      %p379 = scmp.eq.s32.totalorder %s69, 1
      %p380 = scmp.ne.s32.totalorder %s375, %s377
      %p381 = scmp.eq.s32.totalorder %s69, 0
      %p382 = por %p380, %p381
      %p383 = scmp.ne.s32.totalorder %s375, %s377
      %p384 = scmp.eq.s32.totalorder %s74, 1
      %p385 = por %p383, %p384
      %p386 = scmp.ne.s32.totalorder %s377, %s378
      %p387 = scmp.eq.s32.totalorder %s74, 0
      %p388 = por %p386, %p387
      %p389 = scmp.ne.s32.totalorder %s377, %s378
      %p390 = scmp.eq.s32.totalorder %s75, 1
      %p391 = por %p389, %p390
      %p393 = scmp.ne.s32.totalorder %s378, %s392
      %p394 = scmp.eq.s32.totalorder %s75, 0
      %p395 = por %p393, %p394
      %s397 = sadd.s32 %s396, 1
      %p400 = scmp.eq.s32.totalorder %s69, 1
      %p401 = scmp.ne.s32.totalorder %s396, %s398
      %p402 = scmp.eq.s32.totalorder %s69, 0
      %p403 = por %p401, %p402
      %p404 = scmp.ne.s32.totalorder %s396, %s398
      %p405 = scmp.eq.s32.totalorder %s74, 1
      %p406 = por %p404, %p405
      %p407 = scmp.ne.s32.totalorder %s398, %s399
      %p408 = scmp.eq.s32.totalorder %s74, 0
      %p409 = por %p407, %p408
      %p410 = scmp.ne.s32.totalorder %s398, %s399
      %p411 = scmp.eq.s32.totalorder %s75, 1
      %p412 = por %p410, %p411
      %p414 = scmp.ne.s32.totalorder %s399, %s413
      %p415 = scmp.eq.s32.totalorder %s75, 0
      %p416 = por %p414, %p415
      %s418 = sadd.s32 %s417, 1
      %p421 = scmp.eq.s32.totalorder %s69, 1
      %p422 = scmp.ne.s32.totalorder %s417, %s419
      %p423 = scmp.eq.s32.totalorder %s69, 0
      %p424 = por %p422, %p423
      %p425 = scmp.ne.s32.totalorder %s417, %s419
      %p426 = scmp.eq.s32.totalorder %s74, 1
      %p427 = por %p425, %p426
      %p428 = scmp.ne.s32.totalorder %s419, %s420
      %p429 = scmp.eq.s32.totalorder %s74, 0
      %p430 = por %p428, %p429
      %p431 = scmp.ne.s32.totalorder %s419, %s420
      %p432 = scmp.eq.s32.totalorder %s75, 1
      %p433 = por %p431, %p432
      %p435 = scmp.ne.s32.totalorder %s420, %s434
      %p436 = scmp.eq.s32.totalorder %s75, 0
      %p437 = por %p435, %p436
      %s439 = sadd.s32 %s438, 1
      %p442 = scmp.eq.s32.totalorder %s69, 1
      %p443 = scmp.ne.s32.totalorder %s438, %s440
      %p444 = scmp.eq.s32.totalorder %s69, 0
      %p445 = por %p443, %p444
      %p446 = scmp.ne.s32.totalorder %s438, %s440
      %p447 = scmp.eq.s32.totalorder %s74, 1
      %p448 = por %p446, %p447
      %p449 = scmp.ne.s32.totalorder %s440, %s441
      %p450 = scmp.eq.s32.totalorder %s74, 0
      %p451 = por %p449, %p450
      %p452 = scmp.ne.s32.totalorder %s440, %s441
      %p453 = scmp.eq.s32.totalorder %s75, 1
      %p454 = por %p452, %p453
      %p456 = scmp.ne.s32.totalorder %s441, %s455
      %p457 = scmp.eq.s32.totalorder %s75, 0
      %p458 = por %p456, %p457
      %s460 = sadd.s32 %s459, 1
      %p463 = scmp.eq.s32.totalorder %s69, 1
      %p464 = scmp.ne.s32.totalorder %s459, %s461
      %p465 = scmp.eq.s32.totalorder %s69, 0
      %p466 = por %p464, %p465
      %p467 = scmp.ne.s32.totalorder %s459, %s461
      %p468 = scmp.eq.s32.totalorder %s74, 1
      %p469 = por %p467, %p468
      %p470 = scmp.ne.s32.totalorder %s461, %s462
      %p471 = scmp.eq.s32.totalorder %s74, 0
      %p472 = por %p470, %p471
      %p473 = scmp.ne.s32.totalorder %s461, %s462
      %p474 = scmp.eq.s32.totalorder %s75, 1
      %p475 = por %p473, %p474
      %p477 = scmp.ne.s32.totalorder %s462, %s476
      %p478 = scmp.eq.s32.totalorder %s75, 0
      %p479 = por %p477, %p478
      %s481 = sadd.s32 %s480, 1
      %p484 = scmp.eq.s32.totalorder %s69, 1
      %p485 = scmp.ne.s32.totalorder %s480, %s482
      %p486 = scmp.eq.s32.totalorder %s69, 0
      %p487 = por %p485, %p486
      %p488 = scmp.ne.s32.totalorder %s480, %s482
      %p489 = scmp.eq.s32.totalorder %s74, 1
      %p490 = por %p488, %p489
      %p491 = scmp.ne.s32.totalorder %s482, %s483
      %p492 = scmp.eq.s32.totalorder %s74, 0
      %p493 = por %p491, %p492
      %p494 = scmp.ne.s32.totalorder %s482, %s483
      %p495 = scmp.eq.s32.totalorder %s75, 1
      %p496 = por %p494, %p495
      %p498 = scmp.ne.s32.totalorder %s483, %s497
      %p499 = scmp.eq.s32.totalorder %s75, 0
      %p500 = por %p498, %p499
      %s502 = sadd.s32 %s501, 1
      %p505 = scmp.eq.s32.totalorder %s69, 1
      %p506 = scmp.ne.s32.totalorder %s501, %s503
      %p507 = scmp.eq.s32.totalorder %s69, 0
      %p508 = por %p506, %p507
      %p509 = scmp.ne.s32.totalorder %s501, %s503
      %p510 = scmp.eq.s32.totalorder %s74, 1
      %p511 = por %p509, %p510
      %p512 = scmp.ne.s32.totalorder %s503, %s504
      %p513 = scmp.eq.s32.totalorder %s74, 0
      %p514 = por %p512, %p513
      %p515 = scmp.ne.s32.totalorder %s503, %s504
      %p516 = scmp.eq.s32.totalorder %s75, 1
      %p517 = por %p515, %p516
      %p519 = scmp.ne.s32.totalorder %s504, %s518
      %p520 = scmp.eq.s32.totalorder %s75, 0
      %p521 = por %p519, %p520
      %s523 = sadd.s32 %s522, 1
      %p526 = scmp.eq.s32.totalorder %s69, 1
      %p527 = scmp.ne.s32.totalorder %s522, %s524
      %p528 = scmp.eq.s32.totalorder %s69, 0
      %p529 = por %p527, %p528
      %p530 = scmp.ne.s32.totalorder %s522, %s524
      %p531 = scmp.eq.s32.totalorder %s74, 1
      %p532 = por %p530, %p531
      %p533 = scmp.ne.s32.totalorder %s524, %s525
      %p534 = scmp.eq.s32.totalorder %s74, 0
      %p535 = por %p533, %p534
      %p536 = scmp.ne.s32.totalorder %s524, %s525
      %p537 = scmp.eq.s32.totalorder %s75, 1
      %p538 = por %p536, %p537
      %p540 = scmp.ne.s32.totalorder %s525, %s539
      %p541 = scmp.eq.s32.totalorder %s75, 0
      %p542 = por %p540, %p541
      %s544 = sadd.s32 %s543, 1
      %p547 = scmp.eq.s32.totalorder %s69, 1
      %p548 = scmp.ne.s32.totalorder %s543, %s545
      %p549 = scmp.eq.s32.totalorder %s69, 0
      %p550 = por %p548, %p549
      %p551 = scmp.ne.s32.totalorder %s543, %s545
      %p552 = scmp.eq.s32.totalorder %s74, 1
      %p553 = por %p551, %p552
      %p554 = scmp.ne.s32.totalorder %s545, %s546
      %p555 = scmp.eq.s32.totalorder %s74, 0
      %p556 = por %p554, %p555
      %p557 = scmp.ne.s32.totalorder %s545, %s546
      %p558 = scmp.eq.s32.totalorder %s75, 1
      %p559 = por %p557, %p558
      %p561 = scmp.ne.s32.totalorder %s546, %s560
      %p562 = scmp.eq.s32.totalorder %s75, 0
      %p563 = por %p561, %p562
      %s565 = sadd.s32 %s564, 1
      %p568 = scmp.eq.s32.totalorder %s69, 1
      %p569 = scmp.ne.s32.totalorder %s564, %s566
      %p570 = scmp.eq.s32.totalorder %s69, 0
      %p571 = por %p569, %p570
      %p572 = scmp.ne.s32.totalorder %s564, %s566
      %p573 = scmp.eq.s32.totalorder %s74, 1
      %p574 = por %p572, %p573
      %p575 = scmp.ne.s32.totalorder %s566, %s567
      %p576 = scmp.eq.s32.totalorder %s74, 0
      %p577 = por %p575, %p576
      %p578 = scmp.ne.s32.totalorder %s566, %s567
      %p579 = scmp.eq.s32.totalorder %s75, 1
      %p580 = por %p578, %p579
      %p582 = scmp.ne.s32.totalorder %s567, %s581
      %p583 = scmp.eq.s32.totalorder %s75, 0
      %p584 = por %p582, %p583
      %s586 = sadd.s32 %s585, 1
      %p589 = scmp.eq.s32.totalorder %s69, 1
      %p590 = scmp.ne.s32.totalorder %s585, %s587
      %p591 = scmp.eq.s32.totalorder %s69, 0
      %p592 = por %p590, %p591
      %p593 = scmp.ne.s32.totalorder %s585, %s587
      %p594 = scmp.eq.s32.totalorder %s74, 1
      %p595 = por %p593, %p594
      %p596 = scmp.ne.s32.totalorder %s587, %s588
      %p597 = scmp.eq.s32.totalorder %s74, 0
      %p598 = por %p596, %p597
      %p599 = scmp.ne.s32.totalorder %s587, %s588
      %p600 = scmp.eq.s32.totalorder %s75, 1
      %p601 = por %p599, %p600
      %p603 = scmp.ne.s32.totalorder %s588, %s602
      %p604 = scmp.eq.s32.totalorder %s75, 0
      %p605 = por %p603, %p604
      %s607 = sadd.s32 %s606, 1
      %p610 = scmp.eq.s32.totalorder %s69, 1
      %p611 = scmp.ne.s32.totalorder %s606, %s608
      %p612 = scmp.eq.s32.totalorder %s69, 0
      %p613 = por %p611, %p612
      %p614 = scmp.ne.s32.totalorder %s606, %s608
      %p615 = scmp.eq.s32.totalorder %s74, 1
      %p616 = por %p614, %p615
      %p617 = scmp.ne.s32.totalorder %s608, %s609
      %p618 = scmp.eq.s32.totalorder %s74, 0
      %p619 = por %p617, %p618
      %p620 = scmp.ne.s32.totalorder %s608, %s609
      %p621 = scmp.eq.s32.totalorder %s75, 1
      %p622 = por %p620, %p621
      %p624 = scmp.ne.s32.totalorder %s609, %s623
      %p625 = scmp.eq.s32.totalorder %s75, 0
      %p626 = por %p624, %p625
      %s628 = sadd.s32 %s627, 1
      %p631 = scmp.eq.s32.totalorder %s69, 1
      %p632 = scmp.ne.s32.totalorder %s627, %s629
      %p633 = scmp.eq.s32.totalorder %s69, 0
      %p634 = por %p632, %p633
      %p635 = scmp.ne.s32.totalorder %s627, %s629
      %p636 = scmp.eq.s32.totalorder %s74, 1
      %p637 = por %p635, %p636
      %p638 = scmp.ne.s32.totalorder %s629, %s630
      %p639 = scmp.eq.s32.totalorder %s74, 0
      %p640 = por %p638, %p639
      %p641 = scmp.ne.s32.totalorder %s629, %s630
      %p642 = scmp.eq.s32.totalorder %s75, 1
      %p643 = por %p641, %p642
      %p645 = scmp.ne.s32.totalorder %s630, %s644
      %p646 = scmp.eq.s32.totalorder %s75, 0
      %p647 = por %p645, %p646
      %s649 = sadd.s32 %s648, 1
      %p652 = scmp.eq.s32.totalorder %s69, 1
      %p653 = scmp.ne.s32.totalorder %s648, %s650
      %p654 = scmp.eq.s32.totalorder %s69, 0
      %p655 = por %p653, %p654
      %p656 = scmp.ne.s32.totalorder %s648, %s650
      %p657 = scmp.eq.s32.totalorder %s74, 1
      %p658 = por %p656, %p657
      %p659 = scmp.ne.s32.totalorder %s650, %s651
      %p660 = scmp.eq.s32.totalorder %s74, 0
      %p661 = por %p659, %p660
      %p662 = scmp.ne.s32.totalorder %s650, %s651
      %p663 = scmp.eq.s32.totalorder %s75, 1
      %p664 = por %p662, %p663
      %p666 = scmp.ne.s32.totalorder %s651, %s665
      %p667 = scmp.eq.s32.totalorder %s75, 0
      %p668 = por %p666, %p667
      %s670 = sadd.s32 %s669, 1
      %p673 = scmp.eq.s32.totalorder %s69, 1
      %p674 = scmp.ne.s32.totalorder %s669, %s671
      %p675 = scmp.eq.s32.totalorder %s69, 0
      %p676 = por %p674, %p675
      %p677 = scmp.ne.s32.totalorder %s669, %s671
      %p678 = scmp.eq.s32.totalorder %s74, 1
      %p679 = por %p677, %p678
      %p680 = scmp.ne.s32.totalorder %s671, %s672
      %p681 = scmp.eq.s32.totalorder %s74, 0
      %p682 = por %p680, %p681
      %p683 = scmp.ne.s32.totalorder %s671, %s672
      %p684 = scmp.eq.s32.totalorder %s75, 1
      %p685 = por %p683, %p684
      %p687 = scmp.ne.s32.totalorder %s672, %s686
      %p688 = scmp.eq.s32.totalorder %s75, 0
      %p689 = por %p687, %p688
      %s690 = ssub.s32 %s69, %s76
      %p691 = scmp.eq.s32.totalorder %s690, 0
      %s693 = sadd.s32 %s692, 1
      %s694 = scalar_select %p691, %s692, %s693
      %p697 = pneg %p691
      %p698 = scmp.eq.s32.totalorder %s69, 1
      %p699 = por %p697, %p698
      %p700 = scmp.ne.s32.totalorder %s692, %s695
      %p701 = scmp.eq.s32.totalorder %s69, 0
      %p702 = por %p700, %p701
      %p703 = scmp.ne.s32.totalorder %s692, %s695
      %p704 = scmp.eq.s32.totalorder %s74, 1
      %p705 = por %p703, %p704
      %p706 = scmp.ne.s32.totalorder %s695, %s696
      %p707 = scmp.eq.s32.totalorder %s74, 0
      %p708 = por %p706, %p707
      %p709 = scmp.ne.s32.totalorder %s695, %s696
      %p710 = scmp.eq.s32.totalorder %s75, 1
      %p711 = por %p709, %p710
      %p713 = scmp.ne.s32.totalorder %s696, %s712
      %p714 = scmp.eq.s32.totalorder %s75, 0
      %p715 = por %p713, %p714
      %s716 = ssub.s32 %s69, %s76
      %p717 = scmp.eq.s32.totalorder %s716, 0
      %s719 = sadd.s32 %s718, 1
      %s720 = scalar_select %p717, %s718, %s719
      %p723 = pneg %p717
      %p724 = scmp.eq.s32.totalorder %s69, 1
      %p725 = por %p723, %p724
      %p726 = scmp.ne.s32.totalorder %s718, %s721
      %p727 = scmp.eq.s32.totalorder %s69, 0
      %p728 = por %p726, %p727
      %p729 = scmp.ne.s32.totalorder %s718, %s721
      %p730 = scmp.eq.s32.totalorder %s74, 1
      %p731 = por %p729, %p730
      %p732 = scmp.ne.s32.totalorder %s721, %s722
      %p733 = scmp.eq.s32.totalorder %s74, 0
      %p734 = por %p732, %p733
      %p735 = scmp.ne.s32.totalorder %s721, %s722
      %p736 = scmp.eq.s32.totalorder %s75, 1
      %p737 = por %p735, %p736
      %p739 = scmp.ne.s32.totalorder %s722, %s738
      %p740 = scmp.eq.s32.totalorder %s75, 0
      %p741 = por %p739, %p740
      %p742 = scmp.le.s32.totalorder 1, %s69
      %p743 = scmp.lt.s32.totalorder %s69, 3
      %p744 = pnand %p742, %p743
      %p745 = pneg %p744
      // Predicated region
      $region9: #{transformer_forward.3} parent=5 // pred_check
        _
      $region10: #{transformer_forward.3} parent=5 // pred_check_branch
        %747 = sbr.rel (%p744) target = $region12
      $region11: #{transformer_forward.3} parent=5 // pred_region
        %s748 = ssub.s32 %s69, 1
        // Predicated region
        $region13: #{transformer_forward.3} parent=11 // pred_check
          %p749 = pneg %p220
        $region14: #{transformer_forward.3} parent=11 // pred_check_branch
          %751 = sbr.rel (%p749) target = $region16
        $region15: #{transformer_forward.3} parent=11 // pred_region
          _
        $region16: #{transformer_forward.3} parent=11 // pred_fallthru
          _
        // Predicated region
        $region17: #{transformer_forward.3} parent=11 // pred_check
          %p752 = pneg %p241
        $region18: #{transformer_forward.3} parent=11 // pred_check_branch
          %754 = sbr.rel (%p752) target = $region20
        $region19: #{transformer_forward.3} parent=11 // pred_region
          _
        $region20: #{transformer_forward.3} parent=11 // pred_fallthru
          _
        // Predicated region
        $region21: #{transformer_forward.3} parent=11 // pred_check
          %p755 = pneg %p262
        $region22: #{transformer_forward.3} parent=11 // pred_check_branch
          %757 = sbr.rel (%p755) target = $region24
        $region23: #{transformer_forward.3} parent=11 // pred_region
          _
        $region24: #{transformer_forward.3} parent=11 // pred_fallthru
          _
        // Predicated region
        $region25: #{transformer_forward.3} parent=11 // pred_check
          %p758 = pneg %p283
        $region26: #{transformer_forward.3} parent=11 // pred_check_branch
          %760 = sbr.rel (%p758) target = $region28
        $region27: #{transformer_forward.3} parent=11 // pred_region
          _
        $region28: #{transformer_forward.3} parent=11 // pred_fallthru
          _
        // Predicated region
        $region29: #{transformer_forward.3} parent=11 // pred_check
          %p761 = pneg %p304
        $region30: #{transformer_forward.3} parent=11 // pred_check_branch
          %763 = sbr.rel (%p761) target = $region32
        $region31: #{transformer_forward.3} parent=11 // pred_region
          _
        $region32: #{transformer_forward.3} parent=11 // pred_fallthru
          _
        // Predicated region
        $region33: #{transformer_forward.3} parent=11 // pred_check
          %p764 = pneg %p325
        $region34: #{transformer_forward.3} parent=11 // pred_check_branch
          %766 = sbr.rel (%p764) target = $region36
        $region35: #{transformer_forward.3} parent=11 // pred_region
          _
        $region36: #{transformer_forward.3} parent=11 // pred_fallthru
          _
        // Predicated region
        $region37: #{transformer_forward.3} parent=11 // pred_check
          %p767 = pneg %p346
        $region38: #{transformer_forward.3} parent=11 // pred_check_branch
          %769 = sbr.rel (%p767) target = $region40
        $region39: #{transformer_forward.3} parent=11 // pred_region
          _
        $region40: #{transformer_forward.3} parent=11 // pred_fallthru
          _
        // Predicated region
        $region41: #{transformer_forward.3} parent=11 // pred_check
          %p770 = pneg %p367
        $region42: #{transformer_forward.3} parent=11 // pred_check_branch
          %772 = sbr.rel (%p770) target = $region44
        $region43: #{transformer_forward.3} parent=11 // pred_region
          _
        $region44: #{transformer_forward.3} parent=11 // pred_fallthru
          _
        // Predicated region
        $region45: #{transformer_forward.3} parent=11 // pred_check
          %p773 = pneg %p388
        $region46: #{transformer_forward.3} parent=11 // pred_check_branch
          %775 = sbr.rel (%p773) target = $region48
        $region47: #{transformer_forward.3} parent=11 // pred_region
          _
        $region48: #{transformer_forward.3} parent=11 // pred_fallthru
          _
        // Predicated region
        $region49: #{transformer_forward.3} parent=11 // pred_check
          %p776 = pneg %p409
        $region50: #{transformer_forward.3} parent=11 // pred_check_branch
          %778 = sbr.rel (%p776) target = $region52
        $region51: #{transformer_forward.3} parent=11 // pred_region
          _
        $region52: #{transformer_forward.3} parent=11 // pred_fallthru
          _
        // Predicated region
        $region53: #{transformer_forward.3} parent=11 // pred_check
          %p779 = pneg %p430
        $region54: #{transformer_forward.3} parent=11 // pred_check_branch
          %781 = sbr.rel (%p779) target = $region56
        $region55: #{transformer_forward.3} parent=11 // pred_region
          _
        $region56: #{transformer_forward.3} parent=11 // pred_fallthru
          _
        // Predicated region
        $region57: #{transformer_forward.3} parent=11 // pred_check
          %p782 = pneg %p451
        $region58: #{transformer_forward.3} parent=11 // pred_check_branch
          %784 = sbr.rel (%p782) target = $region60
        $region59: #{transformer_forward.3} parent=11 // pred_region
          _
        $region60: #{transformer_forward.3} parent=11 // pred_fallthru
          _
        // Predicated region
        $region61: #{transformer_forward.3} parent=11 // pred_check
          %p785 = pneg %p472
        $region62: #{transformer_forward.3} parent=11 // pred_check_branch
          %787 = sbr.rel (%p785) target = $region64
        $region63: #{transformer_forward.3} parent=11 // pred_region
          _
        $region64: #{transformer_forward.3} parent=11 // pred_fallthru
          _
        // Predicated region
        $region65: #{transformer_forward.3} parent=11 // pred_check
          %p788 = pneg %p493
        $region66: #{transformer_forward.3} parent=11 // pred_check_branch
          %790 = sbr.rel (%p788) target = $region68
        $region67: #{transformer_forward.3} parent=11 // pred_region
          _
        $region68: #{transformer_forward.3} parent=11 // pred_fallthru
          _
        // Predicated region
        $region69: #{transformer_forward.3} parent=11 // pred_check
          %p791 = pneg %p514
        $region70: #{transformer_forward.3} parent=11 // pred_check_branch
          %793 = sbr.rel (%p791) target = $region72
        $region71: #{transformer_forward.3} parent=11 // pred_region
          _
        $region72: #{transformer_forward.3} parent=11 // pred_fallthru
          _
        // Predicated region
        $region73: #{transformer_forward.3} parent=11 // pred_check
          %p794 = pneg %p535
        $region74: #{transformer_forward.3} parent=11 // pred_check_branch
          %796 = sbr.rel (%p794) target = $region76
        $region75: #{transformer_forward.3} parent=11 // pred_region
          _
        $region76: #{transformer_forward.3} parent=11 // pred_fallthru
          _
        // Predicated region
        $region77: #{transformer_forward.3} parent=11 // pred_check
          %p797 = pneg %p556
        $region78: #{transformer_forward.3} parent=11 // pred_check_branch
          %799 = sbr.rel (%p797) target = $region80
        $region79: #{transformer_forward.3} parent=11 // pred_region
          _
        $region80: #{transformer_forward.3} parent=11 // pred_fallthru
          _
        // Predicated region
        $region81: #{transformer_forward.3} parent=11 // pred_check
          %p800 = pneg %p577
        $region82: #{transformer_forward.3} parent=11 // pred_check_branch
          %802 = sbr.rel (%p800) target = $region84
        $region83: #{transformer_forward.3} parent=11 // pred_region
          _
        $region84: #{transformer_forward.3} parent=11 // pred_fallthru
          _
        // Predicated region
        $region85: #{transformer_forward.3} parent=11 // pred_check
          %p803 = pneg %p598
        $region86: #{transformer_forward.3} parent=11 // pred_check_branch
          %805 = sbr.rel (%p803) target = $region88
        $region87: #{transformer_forward.3} parent=11 // pred_region
          _
        $region88: #{transformer_forward.3} parent=11 // pred_fallthru
          _
        // Predicated region
        $region89: #{transformer_forward.3} parent=11 // pred_check
          %p806 = pneg %p619
        $region90: #{transformer_forward.3} parent=11 // pred_check_branch
          %808 = sbr.rel (%p806) target = $region92
        $region91: #{transformer_forward.3} parent=11 // pred_region
          _
        $region92: #{transformer_forward.3} parent=11 // pred_fallthru
          _
        // Predicated region
        $region93: #{transformer_forward.3} parent=11 // pred_check
          %p809 = pneg %p640
        $region94: #{transformer_forward.3} parent=11 // pred_check_branch
          %811 = sbr.rel (%p809) target = $region96
        $region95: #{transformer_forward.3} parent=11 // pred_region
          _
        $region96: #{transformer_forward.3} parent=11 // pred_fallthru
          _
        // Predicated region
        $region97: #{transformer_forward.3} parent=11 // pred_check
          %p812 = pneg %p661
        $region98: #{transformer_forward.3} parent=11 // pred_check_branch
          %814 = sbr.rel (%p812) target = $region100
        $region99: #{transformer_forward.3} parent=11 // pred_region
          _
        $region100: #{transformer_forward.3} parent=11 // pred_fallthru
          _
        // Predicated region
        $region101: #{transformer_forward.3} parent=11 // pred_check
          %p815 = pneg %p682
        $region102: #{transformer_forward.3} parent=11 // pred_check_branch
          %817 = sbr.rel (%p815) target = $region104
        $region103: #{transformer_forward.3} parent=11 // pred_region
          _
        $region104: #{transformer_forward.3} parent=11 // pred_fallthru
          _
      $region12: #{transformer_forward.3} parent=5 // pred_fallthru
        _
      %p818 = scmp.lt.s32.totalorder %s69, 2
      // Predicated region
      $region105: #{transformer_forward.3} parent=5 // pred_check
        %p819 = pneg %p818
      $region106: #{transformer_forward.3} parent=5 // pred_check_branch
        %821 = sbr.rel (%p819) target = $region108
      $region107: #{transformer_forward.3} parent=5 // pred_region
        // Predicated region
        $region109: #{transformer_forward.3} parent=107 // pred_check
          %p822 = pneg %p89
        $region110: #{transformer_forward.3} parent=107 // pred_check_branch
          %824 = sbr.rel (%p822) target = $region112
        $region111: #{transformer_forward.3} parent=107 // pred_region
          %p825 = scmp.lt.s32.totalorder %s69, 1
          %s826 = scalar_select %p825, %s69, 1
          %s827 = smul.addr %s826, 8
          %s828 = scalar_lea.vmem %s1, %s827
        $region112: #{transformer_forward.3} parent=107 // pred_fallthru
          _
        // Predicated region
        $region113: #{transformer_forward.3} parent=107 // pred_check
          %p829 = pneg %p115
        $region114: #{transformer_forward.3} parent=107 // pred_check_branch
          %831 = sbr.rel (%p829) target = $region116
        $region115: #{transformer_forward.3} parent=107 // pred_region
          %p832 = scmp.lt.s32.totalorder %s69, 1
          %s833 = scalar_select %p832, %s69, 1
          %s834 = smul.addr %s833, 8
          %s835 = scalar_lea.vmem %s3, %s834
        $region116: #{transformer_forward.3} parent=107 // pred_fallthru
          _
        // Predicated region
        $region117: #{transformer_forward.3} parent=107 // pred_check
          %p836 = pneg %p141
        $region118: #{transformer_forward.3} parent=107 // pred_check_branch
          %838 = sbr.rel (%p836) target = $region120
        $region119: #{transformer_forward.3} parent=107 // pred_region
          %p839 = scmp.lt.s32.totalorder %s69, 1
          %s840 = scalar_select %p839, %s69, 1
          %s841 = smul.addr %s840, 8
          %s842 = scalar_lea.vmem %s5, %s841
        $region120: #{transformer_forward.3} parent=107 // pred_fallthru
          _
        // Predicated region
        $region121: #{transformer_forward.3} parent=107 // pred_check
          %p843 = pneg %p167
        $region122: #{transformer_forward.3} parent=107 // pred_check_branch
          %845 = sbr.rel (%p843) target = $region124
        $region123: #{transformer_forward.3} parent=107 // pred_region
          %p846 = scmp.lt.s32.totalorder %s69, 1
          %s847 = scalar_select %p846, %s69, 1
          %s848 = smul.addr %s847, 8
          %s849 = scalar_lea.vmem %s7, %s848
        $region124: #{transformer_forward.3} parent=107 // pred_fallthru
          _
        // Predicated region
        $region125: #{transformer_forward.3} parent=107 // pred_check
          %p850 = pneg %p193
        $region126: #{transformer_forward.3} parent=107 // pred_check_branch
          %852 = sbr.rel (%p850) target = $region128
        $region127: #{transformer_forward.3} parent=107 // pred_region
          %p853 = scmp.lt.s32.totalorder %s69, 1
          %s854 = scalar_select %p853, %s69, 1
          %s855 = scalar_lea.vmem %s9, %s854
        $region128: #{transformer_forward.3} parent=107 // pred_fallthru
          _
      $region108: #{transformer_forward.3} parent=5 // pred_fallthru
        _
      %p856 = scmp.le.s32.totalorder 1, %s69
      %p857 = scmp.lt.s32.totalorder %s69, 3
      %p858 = pnand %p856, %p857
      %p859 = pneg %p858
      // Predicated region
      $region129: #{transformer_forward.3} parent=5 // pred_check
        _
      $region130: #{transformer_forward.3} parent=5 // pred_check_branch
        %861 = sbr.rel (%p858) target = $region132
      $region131: #{transformer_forward.3} parent=5 // pred_region
        %s862 = ssub.s32 %s69, 1
        %p863 = scmp.lt.s32.totalorder %s74, 1
        %s864 = scalar_select %p863, %s74, 1
        %s865 = smul.addr %s864, 8
        %s866 = scalar_lea.vmem %s1, %s865
        %p867 = pneg %p95
        %p868 = pneg %p92
        %p869 = scmp.lt.s32.totalorder %s74, 1
        %s870 = scalar_select %p869, %s74, 1
        %s871 = smul.addr %s870, 8
        %s872 = scalar_lea.vmem %s3, %s871
        %p873 = pneg %p121
        %p874 = pneg %p118
        %p875 = scmp.lt.s32.totalorder %s74, 1
        %s876 = scalar_select %p875, %s74, 1
        %s877 = smul.addr %s876, 8
        %s878 = scalar_lea.vmem %s5, %s877
        %p879 = pneg %p147
        %p880 = pneg %p144
        %p881 = scmp.lt.s32.totalorder %s74, 1
        %s882 = scalar_select %p881, %s74, 1
        %s883 = smul.addr %s882, 8
        %s884 = scalar_lea.vmem %s7, %s883
        %p885 = pneg %p173
        %p886 = pneg %p170
        %p887 = scmp.lt.s32.totalorder %s74, 1
        %s888 = scalar_select %p887, %s74, 1
        %s889 = scalar_lea.vmem %s9, %s888
        %p890 = pneg %p199
        %p891 = pneg %p196
        %p892 = pneg %p220
        %p893 = pneg %p217
        %p894 = pneg %p241
        %p895 = pneg %p238
        %p896 = pneg %p262
        %p897 = pneg %p259
        %p898 = pneg %p283
        %p899 = pneg %p280
        %p900 = pneg %p304
        %p901 = pneg %p301
        %p902 = pneg %p325
        %p903 = pneg %p322
        %p904 = pneg %p346
        %p905 = pneg %p343
        %p906 = pneg %p367
        %p907 = pneg %p364
        %p908 = pneg %p388
        %p909 = pneg %p385
        %p910 = pneg %p409
        %p911 = pneg %p406
        %p912 = pneg %p430
        %p913 = pneg %p427
        %p914 = pneg %p451
        %p915 = pneg %p448
        %p916 = pneg %p472
        %p917 = pneg %p469
        %p918 = pneg %p493
        %p919 = pneg %p490
        %p920 = pneg %p514
        %p921 = pneg %p511
        %p922 = pneg %p535
        %p923 = pneg %p532
        %p924 = pneg %p556
        %p925 = pneg %p553
        %p926 = pneg %p577
        %p927 = pneg %p574
        %p928 = pneg %p598
        %p929 = pneg %p595
        %p930 = pneg %p619
        %p931 = pneg %p616
        %p932 = pneg %p640
        %p933 = pneg %p637
        %p934 = pneg %p661
        %p935 = pneg %p658
        %p936 = pneg %p682
        %p937 = pneg %p679
        %p938 = pneg %p708
        %p939 = pneg %p705
        %s940 = sand.u32 %s695, 1
        %s941 = scalar_lea.sflag [#allocation3], %s940
        %s942 = sand.u32 %s695, 1
        %s943 = smul.addr %s942, 8
        %s944 = scalar_lea.vmem [#allocation2], %s943
        %p945 = pneg %p734
        %p946 = pneg %p731
        %p947 = scmp.lt.s32.totalorder %s74, 1
        %s948 = scalar_select %p947, %s74, 1
        %s949 = scalar_lea.vmem %s59, %s948
        %p950 = scmp.lt.s32.totalorder %s74, 1
        %s951 = scalar_select %p950, %s74, 1
        %s952 = smul.addr %s951, 8
        %s953 = scalar_lea.vmem %s1, %s952
        %p954 = scmp.lt.s32.totalorder %s74, 1
        %s955 = scalar_select %p954, %s74, 1
        %s956 = smul.addr %s955, 8
        %s957 = scalar_lea.vmem %s3, %s956
        %p958 = scmp.lt.s32.totalorder %s74, 1
        %s959 = scalar_select %p958, %s74, 1
        %s960 = smul.addr %s959, 8
        %s961 = scalar_lea.vmem %s5, %s960
        %p962 = scmp.lt.s32.totalorder %s74, 1
        %s963 = scalar_select %p962, %s74, 1
        %s964 = smul.addr %s963, 8
        %s965 = scalar_lea.vmem %s7, %s964
        %p966 = scmp.lt.s32.totalorder %s74, 1
        %s967 = scalar_select %p966, %s74, 1
        %s968 = scalar_lea.vmem %s9, %s967
        %p969 = scmp.lt.s32.totalorder %s74, 1
        %s970 = scalar_select %p969, %s74, 1
        %s971 = scalar_lea.vmem %s59, %s970
        %v973 = vld [vmem:[%s953] sm:$0xff]
        %v974 = vld [vmem:[%s957] sm:$0xff]
        %v975 = vld [vmem:[%s961] sm:$0xff]
        %v976 = vld [vmem:[%s965] sm:$0xff]
        %v977 = vld [vmem:[%s968] sm:$0x1]
        %v978 = vld [vmem:[%s11] sm:$0xf]
        %v979 = vld [vmem:[%s11 + $0x4] sm:$0xf]
        %v980 = vld [vmem:[%s11 + $0x8] sm:$0xf]
        %v981 = vld [vmem:[%s11 + $0xc] sm:$0xf]
        %v982 = vpack.c.bf16 %v973, %v973
        %v983 = vld [vmem:[%s13] sm:$0x1]
        %v985 = vlaneseq
        %v986 = vshrl.u32 %v985, 7
        %v987 = vsub.s32 0, %v986
        %v988 = vrot.slane %v983, %v987
        %v994 = vunpack.c.l.b16 %v978
        %v995 = vunpack.c.l.b16 %v979
        %v996 = vunpack.c.l.b16 %v980
        %v997 = vunpack.c.l.b16 %v981
        %v998 = vpack.c.b16 %v995, %v994
        %v999 = vpack.c.b16 %v997, %v996
        %vm1002 = vcmask 261120
        %v1004 = vsel %vm1002, %v982, 0
        %1006 = vmatprep.subr.bf16.mxu0 0
        %1007 = vmatpush1.bf16.msra.mxu0 %v998
        %1008 = vmatprep.subr.bf16.mxu0 0
        %1009 = vmatpush1.bf16.msra.mxu0 %v999
        %1010 = vmatprep.subr.bf16.mxu0 0
        %1011 = vmatpush1.bf16.msra.mxu0 0
        %1012 = vmatprep.subr.bf16.mxu0 0
        %1013 = vmatpush1.bf16.msra.mxu0 0
        %1014 = vmatprep.subr.bf16.mxu0 0
        %1015 = vmatpush1.bf16.msra.mxu0 0
        %1016 = vmatprep.subr.bf16.mxu0 0
        %1017 = vmatpush1.bf16.msra.mxu0 0
        %1018 = vmatprep.subr.bf16.mxu0 0
        %1019 = vmatpush1.bf16.msra.mxu0 0
        %1020 = vmatprep.subr.bf16.mxu0 0
        %1021 = vmatpush1.bf16.msra.mxu0 0
        %1022 = vmatprep.subr.bf16.mxu0 0
        %1023 = vmatpush1.bf16.msra.mxu0 0
        %1024 = vmatprep.subr.bf16.mxu0 0
        %1025 = vmatpush1.bf16.msra.mxu0 0
        %1026 = vmatprep.subr.bf16.mxu0 0
        %1027 = vmatpush1.bf16.msra.mxu0 0
        %1028 = vmatprep.subr.bf16.mxu0 0
        %1029 = vmatpush1.bf16.msra.mxu0 0
        %1030 = vmatprep.subr.bf16.mxu0 0
        %1031 = vmatpush1.bf16.msra.mxu0 0
        %1032 = vmatprep.subr.bf16.mxu0 0
        %1033 = vmatpush1.bf16.msra.mxu0 0
        %1034 = vmatprep.subr.bf16.mxu0 0
        %1035 = vmatpush1.bf16.msra.mxu0 0
        %1036 = vmatprep.subr.bf16.mxu0 0
        %1037 = vmatpush1.bf16.msra.mxu0 0
        %1038 = vmatprep.mubr.bf16.mxu0 0
        %1039 = vmatmul.mubr.bf16.gmra.mrb[0].mxu0 %v1004
        %v1040 = vpop.f32.mrb[0].mxu0
        %v1041 = vadd.f32 %v988, %v1040
        %v1042 = vpop.f32.mrb[0].mxu0
        %v1043 = vpop.f32.mrb[0].mxu0
        %v1044 = vpop.f32.mrb[0].mxu0
        %1045 = vdwg.mxu0
        %v1046 = vld [vmem:[%s15] sm:$0xf]
        %v1047 = vld [vmem:[%s15 + $0x4] sm:$0xf]
        %v1048 = vld [vmem:[%s15 + $0x8] sm:$0xf]
        %v1049 = vld [vmem:[%s15 + $0xc] sm:$0xf]
        %v1050 = vld [vmem:[%s17] sm:$0x1]
        %v1051 = vpack.c.bf16 %v1041, %v1041
        %1053 = vrot.lane.b32.xlu0 %v1051, 96
        %v1054 = vpop.permute.xlu0 %1053
        %vm1055 = vcmask 64512
        %v1057 = vsel %vm1055, %v1051, 0
        %v1060 = vsel %vm1055, %v1054, 0
        %1062 = vmatprep.subr.bf16.mxu0 0
        %1063 = vmatpush1.bf16.xpose.msra.mxu0 %v1060
        %1064 = vmatprep.subr.bf16.mxu0 0
        %1065 = vmatpush1.bf16.xpose.msra.mxu0 0
        %1066 = vmatprep.subr.bf16.mxu0 0
        %1067 = vmatpush1.bf16.xpose.msra.mxu0 0
        %1068 = vmatprep.subr.bf16.mxu0 0
        %1069 = vmatpush1.bf16.xpose.msra.mxu0 0
        %1070 = vmatprep.subr.bf16.mxu0 0
        %1071 = vmatpush1.bf16.xpose.msra.mxu0 0
        %1072 = vmatprep.subr.bf16.mxu0 0
        %1073 = vmatpush1.bf16.xpose.msra.mxu0 0
        %1074 = vmatprep.subr.bf16.mxu0 0
        %1075 = vmatpush1.bf16.xpose.msra.mxu0 0
        %1076 = vmatprep.subr.bf16.mxu0 0
        %1077 = vmatpush1.bf16.xpose.msra.mxu0 0
        %1078 = vmatprep.subr.bf16.mxu0 0
        %1079 = vmatpush1.bf16.xpose.msra.mxu0 0
        %1080 = vmatprep.subr.bf16.mxu0 0
        %1081 = vmatpush1.bf16.xpose.msra.mxu0 0
        %1082 = vmatprep.subr.bf16.mxu0 0
        %1083 = vmatpush1.bf16.xpose.msra.mxu0 0
        %1084 = vmatprep.subr.bf16.mxu0 0
        %1085 = vmatpush1.bf16.xpose.msra.mxu0 0
        %1086 = vmatprep.subr.bf16.mxu0 0
        %1087 = vmatpush1.bf16.xpose.msra.mxu0 0
        %1088 = vmatprep.subr.bf16.mxu0 0
        %1089 = vmatpush1.bf16.xpose.msra.mxu0 0
        %1090 = vmatprep.subr.bf16.mxu0 0
        %1091 = vmatpush1.bf16.xpose.msra.mxu0 0
        %1092 = vmatprep.subr.bf16.mxu0 0
        %1093 = vmatpush1.bf16.xpose.msra.mxu0 0
        %1094 = vmatprep.mubr.bf16.mxu0 0
        %1095 = vmatmul.mubr.bf16.gmra.mrb[0].mxu0 %v1057
        %v1096 = vpop.f32.mrb[0].mxu0
        %v1097 = vadd.f32 0.0, %v1096
        %v1098 = vpop.f32.mrb[0].mxu0
        %v1099 = vpop.f32.mrb[0].mxu0
        %v1100 = vpop.f32.mrb[0].mxu0
        %1101 = vdwg.mxu0
        %v1102 = vmul.f32 %v1097, 0.35355338
        %v1103 = vadd.f32 %v1102, %v975
        %v1104 = vsel %vm1055, %v1103, -inf
        %1105 = vmax.xlane.f32.xlu0 %v1104
        %v1106 = vpop.xlane.xlu0 %1105
        %v1107 = vsub.f32 %v1103, %v1106
        %v1108 = vmul.f32 %v1107, 1.442695
        %v1109 = vpow.pop %v1108
        %v1110 = vsel %vm1055, %v1109, 0.0
        %1111 = vadd.xlane.f32.xlu0 %v1110
        %v1112 = vpop.xlane.xlu0 %1111
        %v1113 = vrcp.pop %v1112
        %v1114 = vmul.f32 %v1109, %v1113
        %v1115 = vpack.c.bf16 %v1114, %v1114
        %1116 = vrot.lane.b32.xlu0 %v1051, 64
        %v1117 = vpop.permute.xlu0 %1116
        %v1119 = vsel %vm1055, %v1115, 0
        %vm1121 = vcmask 1043456
        %v1123 = vsel %vm1121, %v1117, 0
        %1125 = vmatprep.subr.bf16.mxu0 0
        %1126 = vmatpush1.bf16.msra.mxu0 %v1123
        %1127 = vmatprep.subr.bf16.mxu0 0
        %1128 = vmatpush1.bf16.msra.mxu0 0
        %1129 = vmatprep.subr.bf16.mxu0 0
        %1130 = vmatpush1.bf16.msra.mxu0 0
        %1131 = vmatprep.subr.bf16.mxu0 0
        %1132 = vmatpush1.bf16.msra.mxu0 0
        %1133 = vmatprep.subr.bf16.mxu0 0
        %1134 = vmatpush1.bf16.msra.mxu0 0
        %1135 = vmatprep.subr.bf16.mxu0 0
        %1136 = vmatpush1.bf16.msra.mxu0 0
        %1137 = vmatprep.subr.bf16.mxu0 0
        %1138 = vmatpush1.bf16.msra.mxu0 0
        %1139 = vmatprep.subr.bf16.mxu0 0
        %1140 = vmatpush1.bf16.msra.mxu0 0
        %1141 = vmatprep.subr.bf16.mxu0 0
        %1142 = vmatpush1.bf16.msra.mxu0 0
        %1143 = vmatprep.subr.bf16.mxu0 0
        %1144 = vmatpush1.bf16.msra.mxu0 0
        %1145 = vmatprep.subr.bf16.mxu0 0
        %1146 = vmatpush1.bf16.msra.mxu0 0
        %1147 = vmatprep.subr.bf16.mxu0 0
        %1148 = vmatpush1.bf16.msra.mxu0 0
        %1149 = vmatprep.subr.bf16.mxu0 0
        %1150 = vmatpush1.bf16.msra.mxu0 0
        %1151 = vmatprep.subr.bf16.mxu0 0
        %1152 = vmatpush1.bf16.msra.mxu0 0
        %1153 = vmatprep.subr.bf16.mxu0 0
        %1154 = vmatpush1.bf16.msra.mxu0 0
        %1155 = vmatprep.subr.bf16.mxu0 0
        %1156 = vmatpush1.bf16.msra.mxu0 0
        %1157 = vmatprep.mubr.bf16.mxu0 0
        %1158 = vmatmul.mubr.bf16.gmra.mrb[0].mxu0 %v1119
        %v1159 = vpop.f32.mrb[0].mxu0
        %v1160 = vadd.f32 0.0, %v1159
        %v1161 = vpop.f32.mrb[0].mxu0
        %v1162 = vpop.f32.mrb[0].mxu0
        %v1163 = vpop.f32.mrb[0].mxu0
        %1164 = vdwg.mxu0
        %1165 = vrot.lane.b32.xlu0 %v1051, 120
        %v1166 = vpop.permute.xlu0 %1165
        %1167 = vrot.lane.b32.xlu0 %v1051, 88
        %v1168 = vpop.permute.xlu0 %1167
        %v1170 = vsel %vm1055, %v1166, 0
        %v1173 = vsel %vm1055, %v1168, 0
        %1175 = vmatprep.subr.bf16.mxu0 0
        %1176 = vmatpush1.bf16.xpose.msra.mxu0 %v1173
        %1177 = vmatprep.subr.bf16.mxu0 0
        %1178 = vmatpush1.bf16.xpose.msra.mxu0 0
        %1179 = vmatprep.subr.bf16.mxu0 0
        %1180 = vmatpush1.bf16.xpose.msra.mxu0 0
        %1181 = vmatprep.subr.bf16.mxu0 0
        %1182 = vmatpush1.bf16.xpose.msra.mxu0 0
        %1183 = vmatprep.subr.bf16.mxu0 0
        %1184 = vmatpush1.bf16.xpose.msra.mxu0 0
        %1185 = vmatprep.subr.bf16.mxu0 0
        %1186 = vmatpush1.bf16.xpose.msra.mxu0 0
        %1187 = vmatprep.subr.bf16.mxu0 0
        %1188 = vmatpush1.bf16.xpose.msra.mxu0 0
        %1189 = vmatprep.subr.bf16.mxu0 0
        %1190 = vmatpush1.bf16.xpose.msra.mxu0 0
        %1191 = vmatprep.subr.bf16.mxu0 0
        %1192 = vmatpush1.bf16.xpose.msra.mxu0 0
        %1193 = vmatprep.subr.bf16.mxu0 0
        %1194 = vmatpush1.bf16.xpose.msra.mxu0 0
        %1195 = vmatprep.subr.bf16.mxu0 0
        %1196 = vmatpush1.bf16.xpose.msra.mxu0 0
        %1197 = vmatprep.subr.bf16.mxu0 0
        %1198 = vmatpush1.bf16.xpose.msra.mxu0 0
        %1199 = vmatprep.subr.bf16.mxu0 0
        %1200 = vmatpush1.bf16.xpose.msra.mxu0 0
        %1201 = vmatprep.subr.bf16.mxu0 0
        %1202 = vmatpush1.bf16.xpose.msra.mxu0 0
        %1203 = vmatprep.subr.bf16.mxu0 0
        %1204 = vmatpush1.bf16.xpose.msra.mxu0 0
        %1205 = vmatprep.subr.bf16.mxu0 0
        %1206 = vmatpush1.bf16.xpose.msra.mxu0 0
        %1207 = vmatprep.mubr.bf16.mxu0 0
        %1208 = vmatmul.mubr.bf16.gmra.mrb[0].mxu0 %v1170
        %v1209 = vpop.f32.mrb[0].mxu0
        %v1210 = vadd.f32 0.0, %v1209
        %v1211 = vpop.f32.mrb[0].mxu0
        %v1212 = vpop.f32.mrb[0].mxu0
        %v1213 = vpop.f32.mrb[0].mxu0
        %1214 = vdwg.mxu0
        %v1215 = vmul.f32 %v1210, 0.35355338
        %v1216 = vadd.f32 %v1215, %v975
        %v1217 = vsel %vm1055, %v1216, -inf
        %1218 = vmax.xlane.f32.xlu0 %v1217
        %v1219 = vpop.xlane.xlu0 %1218
        %v1220 = vsub.f32 %v1216, %v1219
        %v1221 = vmul.f32 %v1220, 1.442695
        %v1222 = vpow.pop %v1221
        %v1223 = vsel %vm1055, %v1222, 0.0
        %1224 = vadd.xlane.f32.xlu0 %v1223
        %v1225 = vpop.xlane.xlu0 %1224
        %v1226 = vrcp.pop %v1225
        %v1227 = vmul.f32 %v1222, %v1226
        %v1228 = vpack.c.bf16 %v1227, %v1227
        %1229 = vrot.lane.b32.xlu0 %v1051, 56
        %v1230 = vpop.permute.xlu0 %1229
        %v1232 = vsel %vm1055, %v1228, 0
        %v1235 = vsel %vm1121, %v1230, 0
        %1237 = vmatprep.subr.bf16.mxu0 0
        %1238 = vmatpush1.bf16.msra.mxu0 %v1235
        %1239 = vmatprep.subr.bf16.mxu0 0
        %1240 = vmatpush1.bf16.msra.mxu0 0
        %1241 = vmatprep.subr.bf16.mxu0 0
        %1242 = vmatpush1.bf16.msra.mxu0 0
        %1243 = vmatprep.subr.bf16.mxu0 0
        %1244 = vmatpush1.bf16.msra.mxu0 0
        %1245 = vmatprep.subr.bf16.mxu0 0
        %1246 = vmatpush1.bf16.msra.mxu0 0
        %1247 = vmatprep.subr.bf16.mxu0 0
        %1248 = vmatpush1.bf16.msra.mxu0 0
        %1249 = vmatprep.subr.bf16.mxu0 0
        %1250 = vmatpush1.bf16.msra.mxu0 0
        %1251 = vmatprep.subr.bf16.mxu0 0
        %1252 = vmatpush1.bf16.msra.mxu0 0
        %1253 = vmatprep.subr.bf16.mxu0 0
        %1254 = vmatpush1.bf16.msra.mxu0 0
        %1255 = vmatprep.subr.bf16.mxu0 0
        %1256 = vmatpush1.bf16.msra.mxu0 0
        %1257 = vmatprep.subr.bf16.mxu0 0
        %1258 = vmatpush1.bf16.msra.mxu0 0
        %1259 = vmatprep.subr.bf16.mxu0 0
        %1260 = vmatpush1.bf16.msra.mxu0 0
        %1261 = vmatprep.subr.bf16.mxu0 0
        %1262 = vmatpush1.bf16.msra.mxu0 0
        %1263 = vmatprep.subr.bf16.mxu0 0
        %1264 = vmatpush1.bf16.msra.mxu0 0
        %1265 = vmatprep.subr.bf16.mxu0 0
        %1266 = vmatpush1.bf16.msra.mxu0 0
        %1267 = vmatprep.subr.bf16.mxu0 0
        %1268 = vmatpush1.bf16.msra.mxu0 0
        %1269 = vmatprep.mubr.bf16.mxu0 0
        %1270 = vmatmul.mubr.bf16.gmra.mrb[0].mxu0 %v1232
        %v1271 = vpop.f32.mrb[0].mxu0
        %v1272 = vadd.f32 0.0, %v1271
        %v1273 = vpop.f32.mrb[0].mxu0
        %v1274 = vpop.f32.mrb[0].mxu0
        %v1275 = vpop.f32.mrb[0].mxu0
        %1276 = vdwg.mxu0
        %1277 = vrot.lane.b32.xlu0 %v1051, 112
        %v1278 = vpop.permute.xlu0 %1277
        %1279 = vrot.lane.b32.xlu0 %v1051, 80
        %v1280 = vpop.permute.xlu0 %1279
        %v1282 = vsel %vm1055, %v1278, 0
        %v1285 = vsel %vm1055, %v1280, 0
        %1287 = vmatprep.subr.bf16.mxu0 0
        %1288 = vmatpush1.bf16.xpose.msra.mxu0 %v1285
        %1289 = vmatprep.subr.bf16.mxu0 0
        %1290 = vmatpush1.bf16.xpose.msra.mxu0 0
        %1291 = vmatprep.subr.bf16.mxu0 0
        %1292 = vmatpush1.bf16.xpose.msra.mxu0 0
        %1293 = vmatprep.subr.bf16.mxu0 0
        %1294 = vmatpush1.bf16.xpose.msra.mxu0 0
        %1295 = vmatprep.subr.bf16.mxu0 0
        %1296 = vmatpush1.bf16.xpose.msra.mxu0 0
        %1297 = vmatprep.subr.bf16.mxu0 0
        %1298 = vmatpush1.bf16.xpose.msra.mxu0 0
        %1299 = vmatprep.subr.bf16.mxu0 0
        %1300 = vmatpush1.bf16.xpose.msra.mxu0 0
        %1301 = vmatprep.subr.bf16.mxu0 0
        %1302 = vmatpush1.bf16.xpose.msra.mxu0 0
        %1303 = vmatprep.subr.bf16.mxu0 0
        %1304 = vmatpush1.bf16.xpose.msra.mxu0 0
        %1305 = vmatprep.subr.bf16.mxu0 0
        %1306 = vmatpush1.bf16.xpose.msra.mxu0 0
        %1307 = vmatprep.subr.bf16.mxu0 0
        %1308 = vmatpush1.bf16.xpose.msra.mxu0 0
        %1309 = vmatprep.subr.bf16.mxu0 0
        %1310 = vmatpush1.bf16.xpose.msra.mxu0 0
        %1311 = vmatprep.subr.bf16.mxu0 0
        %1312 = vmatpush1.bf16.xpose.msra.mxu0 0
        %1313 = vmatprep.subr.bf16.mxu0 0
        %1314 = vmatpush1.bf16.xpose.msra.mxu0 0
        %1315 = vmatprep.subr.bf16.mxu0 0
        %1316 = vmatpush1.bf16.xpose.msra.mxu0 0
        %1317 = vmatprep.subr.bf16.mxu0 0
        %1318 = vmatpush1.bf16.xpose.msra.mxu0 0
        %1319 = vmatprep.mubr.bf16.mxu0 0
        %1320 = vmatmul.mubr.bf16.gmra.mrb[0].mxu0 %v1282
        %v1321 = vpop.f32.mrb[0].mxu0
        %v1322 = vadd.f32 0.0, %v1321
        %v1323 = vpop.f32.mrb[0].mxu0
        %v1324 = vpop.f32.mrb[0].mxu0
        %v1325 = vpop.f32.mrb[0].mxu0
        %1326 = vdwg.mxu0
        %v1327 = vmul.f32 %v1322, 0.35355338
        %v1328 = vadd.f32 %v1327, %v975
        %v1329 = vsel %vm1055, %v1328, -inf
        %1330 = vmax.xlane.f32.xlu0 %v1329
        %v1331 = vpop.xlane.xlu0 %1330
        %v1332 = vsub.f32 %v1328, %v1331
        %v1333 = vmul.f32 %v1332, 1.442695
        %v1334 = vpow.pop %v1333
        %v1335 = vsel %vm1055, %v1334, 0.0
        %1336 = vadd.xlane.f32.xlu0 %v1335
        %v1337 = vpop.xlane.xlu0 %1336
        %v1338 = vrcp.pop %v1337
        %v1339 = vmul.f32 %v1334, %v1338
        %v1340 = vpack.c.bf16 %v1339, %v1339
        %1341 = vrot.lane.b32.xlu0 %v1051, 48
        %v1342 = vpop.permute.xlu0 %1341
        %v1344 = vsel %vm1055, %v1340, 0
        %v1347 = vsel %vm1121, %v1342, 0
        %1349 = vmatprep.subr.bf16.mxu0 0
        %1350 = vmatpush1.bf16.msra.mxu0 %v1347
        %1351 = vmatprep.subr.bf16.mxu0 0
        %1352 = vmatpush1.bf16.msra.mxu0 0
        %1353 = vmatprep.subr.bf16.mxu0 0
        %1354 = vmatpush1.bf16.msra.mxu0 0
        %1355 = vmatprep.subr.bf16.mxu0 0
        %1356 = vmatpush1.bf16.msra.mxu0 0
        %1357 = vmatprep.subr.bf16.mxu0 0
        %1358 = vmatpush1.bf16.msra.mxu0 0
        %1359 = vmatprep.subr.bf16.mxu0 0
        %1360 = vmatpush1.bf16.msra.mxu0 0
        %1361 = vmatprep.subr.bf16.mxu0 0
        %1362 = vmatpush1.bf16.msra.mxu0 0
        %1363 = vmatprep.subr.bf16.mxu0 0
        %1364 = vmatpush1.bf16.msra.mxu0 0
        %1365 = vmatprep.subr.bf16.mxu0 0
        %1366 = vmatpush1.bf16.msra.mxu0 0
        %1367 = vmatprep.subr.bf16.mxu0 0
        %1368 = vmatpush1.bf16.msra.mxu0 0
        %1369 = vmatprep.subr.bf16.mxu0 0
        %1370 = vmatpush1.bf16.msra.mxu0 0
        %1371 = vmatprep.subr.bf16.mxu0 0
        %1372 = vmatpush1.bf16.msra.mxu0 0
        %1373 = vmatprep.subr.bf16.mxu0 0
        %1374 = vmatpush1.bf16.msra.mxu0 0
        %1375 = vmatprep.subr.bf16.mxu0 0
        %1376 = vmatpush1.bf16.msra.mxu0 0
        %1377 = vmatprep.subr.bf16.mxu0 0
        %1378 = vmatpush1.bf16.msra.mxu0 0
        %1379 = vmatprep.subr.bf16.mxu0 0
        %1380 = vmatpush1.bf16.msra.mxu0 0
        %1381 = vmatprep.mubr.bf16.mxu0 0
        %1382 = vmatmul.mubr.bf16.gmra.mrb[0].mxu0 %v1344
        %v1383 = vpop.f32.mrb[0].mxu0
        %v1384 = vadd.f32 0.0, %v1383
        %v1385 = vpop.f32.mrb[0].mxu0
        %v1386 = vpop.f32.mrb[0].mxu0
        %v1387 = vpop.f32.mrb[0].mxu0
        %1388 = vdwg.mxu0
        %1389 = vrot.lane.b32.xlu0 %v1051, 104
        %v1390 = vpop.permute.xlu0 %1389
        %1391 = vrot.lane.b32.xlu0 %v1051, 72
        %v1392 = vpop.permute.xlu0 %1391
        %v1394 = vsel %vm1055, %v1390, 0
        %v1397 = vsel %vm1055, %v1392, 0
        %1399 = vmatprep.subr.bf16.mxu0 0
        %1400 = vmatpush1.bf16.xpose.msra.mxu0 %v1397
        %1401 = vmatprep.subr.bf16.mxu0 0
        %1402 = vmatpush1.bf16.xpose.msra.mxu0 0
        %1403 = vmatprep.subr.bf16.mxu0 0
        %1404 = vmatpush1.bf16.xpose.msra.mxu0 0
        %1405 = vmatprep.subr.bf16.mxu0 0
        %1406 = vmatpush1.bf16.xpose.msra.mxu0 0
        %1407 = vmatprep.subr.bf16.mxu0 0
        %1408 = vmatpush1.bf16.xpose.msra.mxu0 0
        %1409 = vmatprep.subr.bf16.mxu0 0
        %1410 = vmatpush1.bf16.xpose.msra.mxu0 0
        %1411 = vmatprep.subr.bf16.mxu0 0
        %1412 = vmatpush1.bf16.xpose.msra.mxu0 0
        %1413 = vmatprep.subr.bf16.mxu0 0
        %1414 = vmatpush1.bf16.xpose.msra.mxu0 0
        %1415 = vmatprep.subr.bf16.mxu0 0
        %1416 = vmatpush1.bf16.xpose.msra.mxu0 0
        %1417 = vmatprep.subr.bf16.mxu0 0
        %1418 = vmatpush1.bf16.xpose.msra.mxu0 0
        %1419 = vmatprep.subr.bf16.mxu0 0
        %1420 = vmatpush1.bf16.xpose.msra.mxu0 0
        %1421 = vmatprep.subr.bf16.mxu0 0
        %1422 = vmatpush1.bf16.xpose.msra.mxu0 0
        %1423 = vmatprep.subr.bf16.mxu0 0
        %1424 = vmatpush1.bf16.xpose.msra.mxu0 0
        %1425 = vmatprep.subr.bf16.mxu0 0
        %1426 = vmatpush1.bf16.xpose.msra.mxu0 0
        %1427 = vmatprep.subr.bf16.mxu0 0
        %1428 = vmatpush1.bf16.xpose.msra.mxu0 0
        %1429 = vmatprep.subr.bf16.mxu0 0
        %1430 = vmatpush1.bf16.xpose.msra.mxu0 0
        %1431 = vmatprep.mubr.bf16.mxu0 0
        %1432 = vmatmul.mubr.bf16.gmra.mrb[0].mxu0 %v1394
        %v1433 = vpop.f32.mrb[0].mxu0
        %v1434 = vadd.f32 0.0, %v1433
        %v1435 = vpop.f32.mrb[0].mxu0
        %v1436 = vpop.f32.mrb[0].mxu0
        %v1437 = vpop.f32.mrb[0].mxu0
        %1438 = vdwg.mxu0
        %v1439 = vmul.f32 %v1434, 0.35355338
        %v1440 = vadd.f32 %v1439, %v975
        %v1441 = vsel %vm1055, %v1440, -inf
        %1442 = vmax.xlane.f32.xlu0 %v1441
        %v1443 = vpop.xlane.xlu0 %1442
        %v1444 = vsub.f32 %v1440, %v1443
        %v1445 = vmul.f32 %v1444, 1.442695
        %v1446 = vpow.pop %v1445
        %v1447 = vsel %vm1055, %v1446, 0.0
        %1448 = vadd.xlane.f32.xlu0 %v1447
        %v1449 = vpop.xlane.xlu0 %1448
        %v1450 = vrcp.pop %v1449
        %v1451 = vmul.f32 %v1446, %v1450
        %v1452 = vpack.c.bf16 %v1451, %v1451
        %1453 = vrot.lane.b32.xlu0 %v1051, 40
        %v1454 = vpop.permute.xlu0 %1453
        %v1456 = vsel %vm1055, %v1452, 0
        %v1459 = vsel %vm1121, %v1454, 0
        %1461 = vmatprep.subr.bf16.mxu0 0
        %1462 = vmatpush1.bf16.msra.mxu0 %v1459
        %1463 = vmatprep.subr.bf16.mxu0 0
        %1464 = vmatpush1.bf16.msra.mxu0 0
        %1465 = vmatprep.subr.bf16.mxu0 0
        %1466 = vmatpush1.bf16.msra.mxu0 0
        %1467 = vmatprep.subr.bf16.mxu0 0
        %1468 = vmatpush1.bf16.msra.mxu0 0
        %1469 = vmatprep.subr.bf16.mxu0 0
        %1470 = vmatpush1.bf16.msra.mxu0 0
        %1471 = vmatprep.subr.bf16.mxu0 0
        %1472 = vmatpush1.bf16.msra.mxu0 0
        %1473 = vmatprep.subr.bf16.mxu0 0
        %1474 = vmatpush1.bf16.msra.mxu0 0
        %1475 = vmatprep.subr.bf16.mxu0 0
        %1476 = vmatpush1.bf16.msra.mxu0 0
        %1477 = vmatprep.subr.bf16.mxu0 0
        %1478 = vmatpush1.bf16.msra.mxu0 0
        %1479 = vmatprep.subr.bf16.mxu0 0
        %1480 = vmatpush1.bf16.msra.mxu0 0
        %1481 = vmatprep.subr.bf16.mxu0 0
        %1482 = vmatpush1.bf16.msra.mxu0 0
        %1483 = vmatprep.subr.bf16.mxu0 0
        %1484 = vmatpush1.bf16.msra.mxu0 0
        %1485 = vmatprep.subr.bf16.mxu0 0
        %1486 = vmatpush1.bf16.msra.mxu0 0
        %1487 = vmatprep.subr.bf16.mxu0 0
        %1488 = vmatpush1.bf16.msra.mxu0 0
        %1489 = vmatprep.subr.bf16.mxu0 0
        %1490 = vmatpush1.bf16.msra.mxu0 0
        %1491 = vmatprep.subr.bf16.mxu0 0
        %1492 = vmatpush1.bf16.msra.mxu0 0
        %1493 = vmatprep.mubr.bf16.mxu0 0
        %1494 = vmatmul.mubr.bf16.gmra.mrb[0].mxu0 %v1456
        %v1495 = vpop.f32.mrb[0].mxu0
        %v1496 = vadd.f32 0.0, %v1495
        %v1497 = vpop.f32.mrb[0].mxu0
        %v1498 = vpop.f32.mrb[0].mxu0
        %v1499 = vpop.f32.mrb[0].mxu0
        %1500 = vdwg.mxu0
        %1502 = vrot.lane.b32.xlu0 %v1272, 8
        %v1503 = vpop.permute.xlu0 %1502
        %1506 = vrot.lane.b32.xlu0 %v1384, 16
        %v1507 = vpop.permute.xlu0 %1506
        %1510 = vrot.lane.b32.xlu0 %v1496, 24
        %v1511 = vpop.permute.xlu0 %1510
        %v1513 = vsel %vm1055, %v1160, %v1503
        %vm1514 = vcmask 130048
        %v1515 = vsel %vm1514, %v1513, %v1507
        %vm1516 = vcmask 195584
        %v1517 = vsel %vm1516, %v1515, %v1511
        %v1518 = vpack.c.bf16 %v1517, %v1517
        %v1520 = vlaneseq
        %v1521 = vshrl.u32 %v1520, 7
        %v1522 = vsub.s32 0, %v1521
        %v1523 = vrot.slane %v1050, %v1522
        %v1529 = vunpack.c.l.b16 %v1046
        %v1530 = vunpack.c.l.b16 %v1047
        %v1531 = vunpack.c.l.b16 %v1048
        %v1532 = vunpack.c.l.b16 %v1049
        %v1533 = vpack.c.b16 %v1530, %v1529
        %v1534 = vpack.c.b16 %v1532, %v1531
        %v1538 = vsel %vm1002, %v1518, 0
        %1540 = vmatprep.subr.bf16.mxu0 0
        %1541 = vmatpush1.bf16.msra.mxu0 %v1533
        %1542 = vmatprep.subr.bf16.mxu0 0
        %1543 = vmatpush1.bf16.msra.mxu0 %v1534
        %1544 = vmatprep.subr.bf16.mxu0 0
        %1545 = vmatpush1.bf16.msra.mxu0 0
        %1546 = vmatprep.subr.bf16.mxu0 0
        %1547 = vmatpush1.bf16.msra.mxu0 0
        %1548 = vmatprep.subr.bf16.mxu0 0
        %1549 = vmatpush1.bf16.msra.mxu0 0
        %1550 = vmatprep.subr.bf16.mxu0 0
        %1551 = vmatpush1.bf16.msra.mxu0 0
        %1552 = vmatprep.subr.bf16.mxu0 0
        %1553 = vmatpush1.bf16.msra.mxu0 0
        %1554 = vmatprep.subr.bf16.mxu0 0
        %1555 = vmatpush1.bf16.msra.mxu0 0
        %1556 = vmatprep.subr.bf16.mxu0 0
        %1557 = vmatpush1.bf16.msra.mxu0 0
        %1558 = vmatprep.subr.bf16.mxu0 0
        %1559 = vmatpush1.bf16.msra.mxu0 0
        %1560 = vmatprep.subr.bf16.mxu0 0
        %1561 = vmatpush1.bf16.msra.mxu0 0
        %1562 = vmatprep.subr.bf16.mxu0 0
        %1563 = vmatpush1.bf16.msra.mxu0 0
        %1564 = vmatprep.subr.bf16.mxu0 0
        %1565 = vmatpush1.bf16.msra.mxu0 0
        %1566 = vmatprep.subr.bf16.mxu0 0
        %1567 = vmatpush1.bf16.msra.mxu0 0
        %1568 = vmatprep.subr.bf16.mxu0 0
        %1569 = vmatpush1.bf16.msra.mxu0 0
        %1570 = vmatprep.subr.bf16.mxu0 0
        %1571 = vmatpush1.bf16.msra.mxu0 0
        %1572 = vmatprep.mubr.bf16.mxu0 0
        %1573 = vmatmul.mubr.bf16.gmra.mrb[0].mxu0 %v1538
        %v1574 = vpop.f32.mrb[0].mxu0
        %v1575 = vadd.f32 %v1523, %v1574
        %v1576 = vpop.f32.mrb[0].mxu0
        %v1577 = vpop.f32.mrb[0].mxu0
        %v1578 = vpop.f32.mrb[0].mxu0
        %1579 = vdwg.mxu0
        %v1580 = vld [vmem:[%s19] sm:$0x1]
        %v1581 = vld [vmem:[%s21] sm:$0x1]
        %v1582 = vadd.f32 %v1575, %v973
        %v1583 = vsel %vm1002, %v1582, 0.0
        %1584 = vadd.xlane.f32.xlu0 %v1583
        %v1585 = vpop.xlane.xlu0 %1584
        %v1586 = vrcp.pop 32.0
        %v1587 = vmul.f32 %v1585, %v1586
        %v1588 = vsub.f32 %v1582, %v1587
        %v1589 = vmul.f32 %v1588, %v1588
        %v1590 = vsel %vm1002, %v1589, 0.0
        %1591 = vadd.xlane.f32.xlu0 %v1590
        %v1592 = vpop.xlane.xlu0 %1591
        %v1593 = vmul.f32 %v1592, %v1586
        %v1594 = vadd.f32 %v1593, 1e-05
        %v1595 = vrsqrt.pop %v1594
        %v1596 = vmul.f32 %v1588, %v1595
        %v1598 = vlaneseq
        %v1599 = vshrl.u32 %v1598, 7
        %v1600 = vsub.s32 0, %v1599
        %v1601 = vrot.slane %v1580, %v1600
        %v1603 = vmul.f32 %v1596, %v1601
        %v1605 = vlaneseq
        %v1606 = vshrl.u32 %v1605, 7
        %v1607 = vsub.s32 0, %v1606
        %v1608 = vrot.slane %v1581, %v1607
        %v1610 = vadd.f32 %v1603, %v1608
        %v1611 = vld [vmem:[%s23] sm:$0xf]
        %v1612 = vld [vmem:[%s23 + $0x4] sm:$0xf]
        %v1613 = vld [vmem:[%s23 + $0x8] sm:$0xf]
        %v1614 = vld [vmem:[%s23 + $0xc] sm:$0xf]
        %v1615 = vpack.c.bf16 %v1610, %v1610
        %v1616 = vld [vmem:[%s25] sm:$0x1]
        %v1618 = vlaneseq
        %v1619 = vshrl.u32 %v1618, 7
        %v1620 = vsub.s32 0, %v1619
        %v1621 = vrot.slane %v1616, %v1620
        %v1627 = vunpack.c.l.b16 %v1611
        %v1628 = vunpack.c.l.b16 %v1612
        %v1629 = vunpack.c.l.b16 %v1613
        %v1630 = vunpack.c.l.b16 %v1614
        %v1631 = vpack.c.b16 %v1628, %v1627
        %v1632 = vpack.c.b16 %v1630, %v1629
        %v1636 = vsel %vm1002, %v1615, 0
        %1638 = vmatprep.subr.bf16.mxu0 0
        %1639 = vmatpush1.bf16.msra.mxu0 %v1631
        %1640 = vmatprep.subr.bf16.mxu0 0
        %1641 = vmatpush1.bf16.msra.mxu0 %v1632
        %1642 = vmatprep.subr.bf16.mxu0 0
        %1643 = vmatpush1.bf16.msra.mxu0 0
        %1644 = vmatprep.subr.bf16.mxu0 0
        %1645 = vmatpush1.bf16.msra.mxu0 0
        %1646 = vmatprep.subr.bf16.mxu0 0
        %1647 = vmatpush1.bf16.msra.mxu0 0
        %1648 = vmatprep.subr.bf16.mxu0 0
        %1649 = vmatpush1.bf16.msra.mxu0 0
        %1650 = vmatprep.subr.bf16.mxu0 0
        %1651 = vmatpush1.bf16.msra.mxu0 0
        %1652 = vmatprep.subr.bf16.mxu0 0
        %1653 = vmatpush1.bf16.msra.mxu0 0
        %1654 = vmatprep.subr.bf16.mxu0 0
        %1655 = vmatpush1.bf16.msra.mxu0 0
        %1656 = vmatprep.subr.bf16.mxu0 0
        %1657 = vmatpush1.bf16.msra.mxu0 0
        %1658 = vmatprep.subr.bf16.mxu0 0
        %1659 = vmatpush1.bf16.msra.mxu0 0
        %1660 = vmatprep.subr.bf16.mxu0 0
        %1661 = vmatpush1.bf16.msra.mxu0 0
        %1662 = vmatprep.subr.bf16.mxu0 0
        %1663 = vmatpush1.bf16.msra.mxu0 0
        %1664 = vmatprep.subr.bf16.mxu0 0
        %1665 = vmatpush1.bf16.msra.mxu0 0
        %1666 = vmatprep.subr.bf16.mxu0 0
        %1667 = vmatpush1.bf16.msra.mxu0 0
        %1668 = vmatprep.subr.bf16.mxu0 0
        %1669 = vmatpush1.bf16.msra.mxu0 0
        %1670 = vmatprep.mubr.bf16.mxu0 0
        %1671 = vmatmul.mubr.bf16.gmra.mrb[0].mxu0 %v1636
        %v1672 = vpop.f32.mrb[0].mxu0
        %v1673 = vadd.f32 %v1621, %v1672
        %v1674 = vpop.f32.mrb[0].mxu0
        %v1675 = vpop.f32.mrb[0].mxu0
        %v1676 = vpop.f32.mrb[0].mxu0
        %1677 = vdwg.mxu0
        %v1678 = vld [vmem:[%s27] sm:$0xf]
        %v1679 = vld [vmem:[%s27 + $0x4] sm:$0xf]
        %v1680 = vld [vmem:[%s27 + $0x8] sm:$0xf]
        %v1681 = vld [vmem:[%s27 + $0xc] sm:$0xf]
        %v1682 = vpack.c.bf16 %v974, %v974
        %v1683 = vld [vmem:[%s29] sm:$0x1]
        %v1685 = vlaneseq
        %v1686 = vshrl.u32 %v1685, 7
        %v1687 = vsub.s32 0, %v1686
        %v1688 = vrot.slane %v1683, %v1687
        %v1694 = vunpack.c.l.b16 %v1678
        %v1695 = vunpack.c.l.b16 %v1679
        %v1696 = vunpack.c.l.b16 %v1680
        %v1697 = vunpack.c.l.b16 %v1681
        %v1698 = vpack.c.b16 %v1695, %v1694
        %v1699 = vpack.c.b16 %v1697, %v1696
        %v1703 = vsel %vm1002, %v1682, 0
        %1705 = vmatprep.subr.bf16.mxu0 0
        %1706 = vmatpush1.bf16.msra.mxu0 %v1698
        %1707 = vmatprep.subr.bf16.mxu0 0
        %1708 = vmatpush1.bf16.msra.mxu0 %v1699
        %1709 = vmatprep.subr.bf16.mxu0 0
        %1710 = vmatpush1.bf16.msra.mxu0 0
        %1711 = vmatprep.subr.bf16.mxu0 0
        %1712 = vmatpush1.bf16.msra.mxu0 0
        %1713 = vmatprep.subr.bf16.mxu0 0
        %1714 = vmatpush1.bf16.msra.mxu0 0
        %1715 = vmatprep.subr.bf16.mxu0 0
        %1716 = vmatpush1.bf16.msra.mxu0 0
        %1717 = vmatprep.subr.bf16.mxu0 0
        %1718 = vmatpush1.bf16.msra.mxu0 0
        %1719 = vmatprep.subr.bf16.mxu0 0
        %1720 = vmatpush1.bf16.msra.mxu0 0
        %1721 = vmatprep.subr.bf16.mxu0 0
        %1722 = vmatpush1.bf16.msra.mxu0 0
        %1723 = vmatprep.subr.bf16.mxu0 0
        %1724 = vmatpush1.bf16.msra.mxu0 0
        %1725 = vmatprep.subr.bf16.mxu0 0
        %1726 = vmatpush1.bf16.msra.mxu0 0
        %1727 = vmatprep.subr.bf16.mxu0 0
        %1728 = vmatpush1.bf16.msra.mxu0 0
        %1729 = vmatprep.subr.bf16.mxu0 0
        %1730 = vmatpush1.bf16.msra.mxu0 0
        %1731 = vmatprep.subr.bf16.mxu0 0
        %1732 = vmatpush1.bf16.msra.mxu0 0
        %1733 = vmatprep.subr.bf16.mxu0 0
        %1734 = vmatpush1.bf16.msra.mxu0 0
        %1735 = vmatprep.subr.bf16.mxu0 0
        %1736 = vmatpush1.bf16.msra.mxu0 0
        %1737 = vmatprep.mubr.bf16.mxu0 0
        %1738 = vmatmul.mubr.bf16.gmra.mrb[0].mxu0 %v1703
        %v1739 = vpop.f32.mrb[0].mxu0
        %v1740 = vadd.f32 %v1688, %v1739
        %v1741 = vpop.f32.mrb[0].mxu0
        %v1742 = vpop.f32.mrb[0].mxu0
        %v1743 = vpop.f32.mrb[0].mxu0
        %1744 = vdwg.mxu0
        %v1745 = vld [vmem:[%s31] sm:$0xf]
        %v1746 = vld [vmem:[%s31 + $0x4] sm:$0xf]
        %v1747 = vld [vmem:[%s31 + $0x8] sm:$0xf]
        %v1748 = vld [vmem:[%s31 + $0xc] sm:$0xf]
        %v1749 = vld [vmem:[%s33] sm:$0x1]
        %v1750 = vpack.c.bf16 %v1673, %v1673
        %v1751 = vpack.c.bf16 %v1740, %v1740
        %v1753 = vsel %vm1055, %v1750, 0
        %v1756 = vsel %vm1055, %v1751, 0
        %1758 = vmatprep.subr.bf16.mxu0 0
        %1759 = vmatpush1.bf16.xpose.msra.mxu0 %v1756
        %1760 = vmatprep.subr.bf16.mxu0 0
        %1761 = vmatpush1.bf16.xpose.msra.mxu0 0
        %1762 = vmatprep.subr.bf16.mxu0 0
        %1763 = vmatpush1.bf16.xpose.msra.mxu0 0
        %1764 = vmatprep.subr.bf16.mxu0 0
        %1765 = vmatpush1.bf16.xpose.msra.mxu0 0
        %1766 = vmatprep.subr.bf16.mxu0 0
        %1767 = vmatpush1.bf16.xpose.msra.mxu0 0
        %1768 = vmatprep.subr.bf16.mxu0 0
        %1769 = vmatpush1.bf16.xpose.msra.mxu0 0
        %1770 = vmatprep.subr.bf16.mxu0 0
        %1771 = vmatpush1.bf16.xpose.msra.mxu0 0
        %1772 = vmatprep.subr.bf16.mxu0 0
        %1773 = vmatpush1.bf16.xpose.msra.mxu0 0
        %1774 = vmatprep.subr.bf16.mxu0 0
        %1775 = vmatpush1.bf16.xpose.msra.mxu0 0
        %1776 = vmatprep.subr.bf16.mxu0 0
        %1777 = vmatpush1.bf16.xpose.msra.mxu0 0
        %1778 = vmatprep.subr.bf16.mxu0 0
        %1779 = vmatpush1.bf16.xpose.msra.mxu0 0
        %1780 = vmatprep.subr.bf16.mxu0 0
        %1781 = vmatpush1.bf16.xpose.msra.mxu0 0
        %1782 = vmatprep.subr.bf16.mxu0 0
        %1783 = vmatpush1.bf16.xpose.msra.mxu0 0
        %1784 = vmatprep.subr.bf16.mxu0 0
        %1785 = vmatpush1.bf16.xpose.msra.mxu0 0
        %1786 = vmatprep.subr.bf16.mxu0 0
        %1787 = vmatpush1.bf16.xpose.msra.mxu0 0
        %1788 = vmatprep.subr.bf16.mxu0 0
        %1789 = vmatpush1.bf16.xpose.msra.mxu0 0
        %1790 = vmatprep.mubr.bf16.mxu0 0
        %1791 = vmatmul.mubr.bf16.gmra.mrb[0].mxu0 %v1753
        %v1792 = vpop.f32.mrb[0].mxu0
        %v1793 = vadd.f32 0.0, %v1792
        %v1794 = vpop.f32.mrb[0].mxu0
        %v1795 = vpop.f32.mrb[0].mxu0
        %v1796 = vpop.f32.mrb[0].mxu0
        %1797 = vdwg.mxu0
        %v1798 = vmul.f32 %v1793, 0.35355338
        %v1799 = vadd.f32 %v1798, %v976
        %v1800 = vsel %vm1055, %v1799, -inf
        %1801 = vmax.xlane.f32.xlu0 %v1800
        %v1802 = vpop.xlane.xlu0 %1801
        %v1803 = vsub.f32 %v1799, %v1802
        %v1804 = vmul.f32 %v1803, 1.442695
        %v1805 = vpow.pop %v1804
        %v1806 = vsel %vm1055, %v1805, 0.0
        %1807 = vadd.xlane.f32.xlu0 %v1806
        %v1808 = vpop.xlane.xlu0 %1807
        %v1809 = vrcp.pop %v1808
        %v1810 = vmul.f32 %v1805, %v1809
        %v1811 = vpack.c.bf16 %v1810, %v1810
        %1813 = vrot.lane.b32.xlu0 %v1751, 96
        %v1814 = vpop.permute.xlu0 %1813
        %v1816 = vsel %vm1055, %v1811, 0
        %v1819 = vsel %vm1121, %v1814, 0
        %1821 = vmatprep.subr.bf16.mxu0 0
        %1822 = vmatpush1.bf16.msra.mxu0 %v1819
        %1823 = vmatprep.subr.bf16.mxu0 0
        %1824 = vmatpush1.bf16.msra.mxu0 0
        %1825 = vmatprep.subr.bf16.mxu0 0
        %1826 = vmatpush1.bf16.msra.mxu0 0
        %1827 = vmatprep.subr.bf16.mxu0 0
        %1828 = vmatpush1.bf16.msra.mxu0 0
        %1829 = vmatprep.subr.bf16.mxu0 0
        %1830 = vmatpush1.bf16.msra.mxu0 0
        %1831 = vmatprep.subr.bf16.mxu0 0
        %1832 = vmatpush1.bf16.msra.mxu0 0
        %1833 = vmatprep.subr.bf16.mxu0 0
        %1834 = vmatpush1.bf16.msra.mxu0 0
        %1835 = vmatprep.subr.bf16.mxu0 0
        %1836 = vmatpush1.bf16.msra.mxu0 0
        %1837 = vmatprep.subr.bf16.mxu0 0
        %1838 = vmatpush1.bf16.msra.mxu0 0
        %1839 = vmatprep.subr.bf16.mxu0 0
        %1840 = vmatpush1.bf16.msra.mxu0 0
        %1841 = vmatprep.subr.bf16.mxu0 0
        %1842 = vmatpush1.bf16.msra.mxu0 0
        %1843 = vmatprep.subr.bf16.mxu0 0
        %1844 = vmatpush1.bf16.msra.mxu0 0
        %1845 = vmatprep.subr.bf16.mxu0 0
        %1846 = vmatpush1.bf16.msra.mxu0 0
        %1847 = vmatprep.subr.bf16.mxu0 0
        %1848 = vmatpush1.bf16.msra.mxu0 0
        %1849 = vmatprep.subr.bf16.mxu0 0
        %1850 = vmatpush1.bf16.msra.mxu0 0
        %1851 = vmatprep.subr.bf16.mxu0 0
        %1852 = vmatpush1.bf16.msra.mxu0 0
        %1853 = vmatprep.mubr.bf16.mxu0 0
        %1854 = vmatmul.mubr.bf16.gmra.mrb[0].mxu0 %v1816
        %v1855 = vpop.f32.mrb[0].mxu0
        %v1856 = vadd.f32 0.0, %v1855
        %v1857 = vpop.f32.mrb[0].mxu0
        %v1858 = vpop.f32.mrb[0].mxu0
        %v1859 = vpop.f32.mrb[0].mxu0
        %1860 = vdwg.mxu0
        %1862 = vrot.lane.b32.xlu0 %v1750, 120
        %v1863 = vpop.permute.xlu0 %1862
        %1864 = vrot.lane.b32.xlu0 %v1751, 120
        %v1865 = vpop.permute.xlu0 %1864
        %v1867 = vsel %vm1055, %v1863, 0
        %v1870 = vsel %vm1055, %v1865, 0
        %1872 = vmatprep.subr.bf16.mxu0 0
        %1873 = vmatpush1.bf16.xpose.msra.mxu0 %v1870
        %1874 = vmatprep.subr.bf16.mxu0 0
        %1875 = vmatpush1.bf16.xpose.msra.mxu0 0
        %1876 = vmatprep.subr.bf16.mxu0 0
        %1877 = vmatpush1.bf16.xpose.msra.mxu0 0
        %1878 = vmatprep.subr.bf16.mxu0 0
        %1879 = vmatpush1.bf16.xpose.msra.mxu0 0
        %1880 = vmatprep.subr.bf16.mxu0 0
        %1881 = vmatpush1.bf16.xpose.msra.mxu0 0
        %1882 = vmatprep.subr.bf16.mxu0 0
        %1883 = vmatpush1.bf16.xpose.msra.mxu0 0
        %1884 = vmatprep.subr.bf16.mxu0 0
        %1885 = vmatpush1.bf16.xpose.msra.mxu0 0
        %1886 = vmatprep.subr.bf16.mxu0 0
        %1887 = vmatpush1.bf16.xpose.msra.mxu0 0
        %1888 = vmatprep.subr.bf16.mxu0 0
        %1889 = vmatpush1.bf16.xpose.msra.mxu0 0
        %1890 = vmatprep.subr.bf16.mxu0 0
        %1891 = vmatpush1.bf16.xpose.msra.mxu0 0
        %1892 = vmatprep.subr.bf16.mxu0 0
        %1893 = vmatpush1.bf16.xpose.msra.mxu0 0
        %1894 = vmatprep.subr.bf16.mxu0 0
        %1895 = vmatpush1.bf16.xpose.msra.mxu0 0
        %1896 = vmatprep.subr.bf16.mxu0 0
        %1897 = vmatpush1.bf16.xpose.msra.mxu0 0
        %1898 = vmatprep.subr.bf16.mxu0 0
        %1899 = vmatpush1.bf16.xpose.msra.mxu0 0
        %1900 = vmatprep.subr.bf16.mxu0 0
        %1901 = vmatpush1.bf16.xpose.msra.mxu0 0
        %1902 = vmatprep.subr.bf16.mxu0 0
        %1903 = vmatpush1.bf16.xpose.msra.mxu0 0
        %1904 = vmatprep.mubr.bf16.mxu0 0
        %1905 = vmatmul.mubr.bf16.gmra.mrb[0].mxu0 %v1867
        %v1906 = vpop.f32.mrb[0].mxu0
        %v1907 = vadd.f32 0.0, %v1906
        %v1908 = vpop.f32.mrb[0].mxu0
        %v1909 = vpop.f32.mrb[0].mxu0
        %v1910 = vpop.f32.mrb[0].mxu0
        %1911 = vdwg.mxu0
        %v1912 = vmul.f32 %v1907, 0.35355338
        %v1913 = vadd.f32 %v1912, %v976
        %v1914 = vsel %vm1055, %v1913, -inf
        %1915 = vmax.xlane.f32.xlu0 %v1914
        %v1916 = vpop.xlane.xlu0 %1915
        %v1917 = vsub.f32 %v1913, %v1916
        %v1918 = vmul.f32 %v1917, 1.442695
        %v1919 = vpow.pop %v1918
        %v1920 = vsel %vm1055, %v1919, 0.0
        %1921 = vadd.xlane.f32.xlu0 %v1920
        %v1922 = vpop.xlane.xlu0 %1921
        %v1923 = vrcp.pop %v1922
        %v1924 = vmul.f32 %v1919, %v1923
        %v1925 = vpack.c.bf16 %v1924, %v1924
        %1926 = vrot.lane.b32.xlu0 %v1751, 88
        %v1927 = vpop.permute.xlu0 %1926
        %v1929 = vsel %vm1055, %v1925, 0
        %v1932 = vsel %vm1121, %v1927, 0
        %1934 = vmatprep.subr.bf16.mxu0 0
        %1935 = vmatpush1.bf16.msra.mxu0 %v1932
        %1936 = vmatprep.subr.bf16.mxu0 0
        %1937 = vmatpush1.bf16.msra.mxu0 0
        %1938 = vmatprep.subr.bf16.mxu0 0
        %1939 = vmatpush1.bf16.msra.mxu0 0
        %1940 = vmatprep.subr.bf16.mxu0 0
        %1941 = vmatpush1.bf16.msra.mxu0 0
        %1942 = vmatprep.subr.bf16.mxu0 0
        %1943 = vmatpush1.bf16.msra.mxu0 0
        %1944 = vmatprep.subr.bf16.mxu0 0
        %1945 = vmatpush1.bf16.msra.mxu0 0
        %1946 = vmatprep.subr.bf16.mxu0 0
        %1947 = vmatpush1.bf16.msra.mxu0 0
        %1948 = vmatprep.subr.bf16.mxu0 0
        %1949 = vmatpush1.bf16.msra.mxu0 0
        %1950 = vmatprep.subr.bf16.mxu0 0
        %1951 = vmatpush1.bf16.msra.mxu0 0
        %1952 = vmatprep.subr.bf16.mxu0 0
        %1953 = vmatpush1.bf16.msra.mxu0 0
        %1954 = vmatprep.subr.bf16.mxu0 0
        %1955 = vmatpush1.bf16.msra.mxu0 0
        %1956 = vmatprep.subr.bf16.mxu0 0
        %1957 = vmatpush1.bf16.msra.mxu0 0
        %1958 = vmatprep.subr.bf16.mxu0 0
        %1959 = vmatpush1.bf16.msra.mxu0 0
        %1960 = vmatprep.subr.bf16.mxu0 0
        %1961 = vmatpush1.bf16.msra.mxu0 0
        %1962 = vmatprep.subr.bf16.mxu0 0
        %1963 = vmatpush1.bf16.msra.mxu0 0
        %1964 = vmatprep.subr.bf16.mxu0 0
        %1965 = vmatpush1.bf16.msra.mxu0 0
        %1966 = vmatprep.mubr.bf16.mxu0 0
        %1967 = vmatmul.mubr.bf16.gmra.mrb[0].mxu0 %v1929
        %v1968 = vpop.f32.mrb[0].mxu0
        %v1969 = vadd.f32 0.0, %v1968
        %v1970 = vpop.f32.mrb[0].mxu0
        %v1971 = vpop.f32.mrb[0].mxu0
        %v1972 = vpop.f32.mrb[0].mxu0
        %1973 = vdwg.mxu0
        %1974 = vrot.lane.b32.xlu0 %v1750, 112
        %v1975 = vpop.permute.xlu0 %1974
        %1976 = vrot.lane.b32.xlu0 %v1751, 112
        %v1977 = vpop.permute.xlu0 %1976
        %v1979 = vsel %vm1055, %v1975, 0
        %v1982 = vsel %vm1055, %v1977, 0
        %1984 = vmatprep.subr.bf16.mxu0 0
        %1985 = vmatpush1.bf16.xpose.msra.mxu0 %v1982
        %1986 = vmatprep.subr.bf16.mxu0 0
        %1987 = vmatpush1.bf16.xpose.msra.mxu0 0
        %1988 = vmatprep.subr.bf16.mxu0 0
        %1989 = vmatpush1.bf16.xpose.msra.mxu0 0
        %1990 = vmatprep.subr.bf16.mxu0 0
        %1991 = vmatpush1.bf16.xpose.msra.mxu0 0
        %1992 = vmatprep.subr.bf16.mxu0 0
        %1993 = vmatpush1.bf16.xpose.msra.mxu0 0
        %1994 = vmatprep.subr.bf16.mxu0 0
        %1995 = vmatpush1.bf16.xpose.msra.mxu0 0
        %1996 = vmatprep.subr.bf16.mxu0 0
        %1997 = vmatpush1.bf16.xpose.msra.mxu0 0
        %1998 = vmatprep.subr.bf16.mxu0 0
        %1999 = vmatpush1.bf16.xpose.msra.mxu0 0
        %2000 = vmatprep.subr.bf16.mxu0 0
        %2001 = vmatpush1.bf16.xpose.msra.mxu0 0
        %2002 = vmatprep.subr.bf16.mxu0 0
        %2003 = vmatpush1.bf16.xpose.msra.mxu0 0
        %2004 = vmatprep.subr.bf16.mxu0 0
        %2005 = vmatpush1.bf16.xpose.msra.mxu0 0
        %2006 = vmatprep.subr.bf16.mxu0 0
        %2007 = vmatpush1.bf16.xpose.msra.mxu0 0
        %2008 = vmatprep.subr.bf16.mxu0 0
        %2009 = vmatpush1.bf16.xpose.msra.mxu0 0
        %2010 = vmatprep.subr.bf16.mxu0 0
        %2011 = vmatpush1.bf16.xpose.msra.mxu0 0
        %2012 = vmatprep.subr.bf16.mxu0 0
        %2013 = vmatpush1.bf16.xpose.msra.mxu0 0
        %2014 = vmatprep.subr.bf16.mxu0 0
        %2015 = vmatpush1.bf16.xpose.msra.mxu0 0
        %2016 = vmatprep.mubr.bf16.mxu0 0
        %2017 = vmatmul.mubr.bf16.gmra.mrb[0].mxu0 %v1979
        %v2018 = vpop.f32.mrb[0].mxu0
        %v2019 = vadd.f32 0.0, %v2018
        %v2020 = vpop.f32.mrb[0].mxu0
        %v2021 = vpop.f32.mrb[0].mxu0
        %v2022 = vpop.f32.mrb[0].mxu0
        %2023 = vdwg.mxu0
        %v2024 = vmul.f32 %v2019, 0.35355338
        %v2025 = vadd.f32 %v2024, %v976
        %v2026 = vsel %vm1055, %v2025, -inf
        %2027 = vmax.xlane.f32.xlu0 %v2026
        %v2028 = vpop.xlane.xlu0 %2027
        %v2029 = vsub.f32 %v2025, %v2028
        %v2030 = vmul.f32 %v2029, 1.442695
        %v2031 = vpow.pop %v2030
        %v2032 = vsel %vm1055, %v2031, 0.0
        %2033 = vadd.xlane.f32.xlu0 %v2032
        %v2034 = vpop.xlane.xlu0 %2033
        %v2035 = vrcp.pop %v2034
        %v2036 = vmul.f32 %v2031, %v2035
        %v2037 = vpack.c.bf16 %v2036, %v2036
        %2038 = vrot.lane.b32.xlu0 %v1751, 80
        %v2039 = vpop.permute.xlu0 %2038
        %v2041 = vsel %vm1055, %v2037, 0
        %v2044 = vsel %vm1121, %v2039, 0
        %2046 = vmatprep.subr.bf16.mxu0 0
        %2047 = vmatpush1.bf16.msra.mxu0 %v2044
        %2048 = vmatprep.subr.bf16.mxu0 0
        %2049 = vmatpush1.bf16.msra.mxu0 0
        %2050 = vmatprep.subr.bf16.mxu0 0
        %2051 = vmatpush1.bf16.msra.mxu0 0
        %2052 = vmatprep.subr.bf16.mxu0 0
        %2053 = vmatpush1.bf16.msra.mxu0 0
        %2054 = vmatprep.subr.bf16.mxu0 0
        %2055 = vmatpush1.bf16.msra.mxu0 0
        %2056 = vmatprep.subr.bf16.mxu0 0
        %2057 = vmatpush1.bf16.msra.mxu0 0
        %2058 = vmatprep.subr.bf16.mxu0 0
        %2059 = vmatpush1.bf16.msra.mxu0 0
        %2060 = vmatprep.subr.bf16.mxu0 0
        %2061 = vmatpush1.bf16.msra.mxu0 0
        %2062 = vmatprep.subr.bf16.mxu0 0
        %2063 = vmatpush1.bf16.msra.mxu0 0
        %2064 = vmatprep.subr.bf16.mxu0 0
        %2065 = vmatpush1.bf16.msra.mxu0 0
        %2066 = vmatprep.subr.bf16.mxu0 0
        %2067 = vmatpush1.bf16.msra.mxu0 0
        %2068 = vmatprep.subr.bf16.mxu0 0
        %2069 = vmatpush1.bf16.msra.mxu0 0
        %2070 = vmatprep.subr.bf16.mxu0 0
        %2071 = vmatpush1.bf16.msra.mxu0 0
        %2072 = vmatprep.subr.bf16.mxu0 0
        %2073 = vmatpush1.bf16.msra.mxu0 0
        %2074 = vmatprep.subr.bf16.mxu0 0
        %2075 = vmatpush1.bf16.msra.mxu0 0
        %2076 = vmatprep.subr.bf16.mxu0 0
        %2077 = vmatpush1.bf16.msra.mxu0 0
        %2078 = vmatprep.mubr.bf16.mxu0 0
        %2079 = vmatmul.mubr.bf16.gmra.mrb[0].mxu0 %v2041
        %v2080 = vpop.f32.mrb[0].mxu0
        %v2081 = vadd.f32 0.0, %v2080
        %v2082 = vpop.f32.mrb[0].mxu0
        %v2083 = vpop.f32.mrb[0].mxu0
        %v2084 = vpop.f32.mrb[0].mxu0
        %2085 = vdwg.mxu0
        %2086 = vrot.lane.b32.xlu0 %v1750, 104
        %v2087 = vpop.permute.xlu0 %2086
        %2088 = vrot.lane.b32.xlu0 %v1751, 104
        %v2089 = vpop.permute.xlu0 %2088
        %v2091 = vsel %vm1055, %v2087, 0
        %v2094 = vsel %vm1055, %v2089, 0
        %2096 = vmatprep.subr.bf16.mxu0 0
        %2097 = vmatpush1.bf16.xpose.msra.mxu0 %v2094
        %2098 = vmatprep.subr.bf16.mxu0 0
        %2099 = vmatpush1.bf16.xpose.msra.mxu0 0
        %2100 = vmatprep.subr.bf16.mxu0 0
        %2101 = vmatpush1.bf16.xpose.msra.mxu0 0
        %2102 = vmatprep.subr.bf16.mxu0 0
        %2103 = vmatpush1.bf16.xpose.msra.mxu0 0
        %2104 = vmatprep.subr.bf16.mxu0 0
        %2105 = vmatpush1.bf16.xpose.msra.mxu0 0
        %2106 = vmatprep.subr.bf16.mxu0 0
        %2107 = vmatpush1.bf16.xpose.msra.mxu0 0
        %2108 = vmatprep.subr.bf16.mxu0 0
        %2109 = vmatpush1.bf16.xpose.msra.mxu0 0
        %2110 = vmatprep.subr.bf16.mxu0 0
        %2111 = vmatpush1.bf16.xpose.msra.mxu0 0
        %2112 = vmatprep.subr.bf16.mxu0 0
        %2113 = vmatpush1.bf16.xpose.msra.mxu0 0
        %2114 = vmatprep.subr.bf16.mxu0 0
        %2115 = vmatpush1.bf16.xpose.msra.mxu0 0
        %2116 = vmatprep.subr.bf16.mxu0 0
        %2117 = vmatpush1.bf16.xpose.msra.mxu0 0
        %2118 = vmatprep.subr.bf16.mxu0 0
        %2119 = vmatpush1.bf16.xpose.msra.mxu0 0
        %2120 = vmatprep.subr.bf16.mxu0 0
        %2121 = vmatpush1.bf16.xpose.msra.mxu0 0
        %2122 = vmatprep.subr.bf16.mxu0 0
        %2123 = vmatpush1.bf16.xpose.msra.mxu0 0
        %2124 = vmatprep.subr.bf16.mxu0 0
        %2125 = vmatpush1.bf16.xpose.msra.mxu0 0
        %2126 = vmatprep.subr.bf16.mxu0 0
        %2127 = vmatpush1.bf16.xpose.msra.mxu0 0
        %2128 = vmatprep.mubr.bf16.mxu0 0
        %2129 = vmatmul.mubr.bf16.gmra.mrb[0].mxu0 %v2091
        %v2130 = vpop.f32.mrb[0].mxu0
        %v2131 = vadd.f32 0.0, %v2130
        %v2132 = vpop.f32.mrb[0].mxu0
        %v2133 = vpop.f32.mrb[0].mxu0
        %v2134 = vpop.f32.mrb[0].mxu0
        %2135 = vdwg.mxu0
        %v2136 = vmul.f32 %v2131, 0.35355338
        %v2137 = vadd.f32 %v2136, %v976
        %v2138 = vsel %vm1055, %v2137, -inf
        %2139 = vmax.xlane.f32.xlu0 %v2138
        %v2140 = vpop.xlane.xlu0 %2139
        %v2141 = vsub.f32 %v2137, %v2140
        %v2142 = vmul.f32 %v2141, 1.442695
        %v2143 = vpow.pop %v2142
        %v2144 = vsel %vm1055, %v2143, 0.0
        %2145 = vadd.xlane.f32.xlu0 %v2144
        %v2146 = vpop.xlane.xlu0 %2145
        %v2147 = vrcp.pop %v2146
        %v2148 = vmul.f32 %v2143, %v2147
        %v2149 = vpack.c.bf16 %v2148, %v2148
        %2150 = vrot.lane.b32.xlu0 %v1751, 72
        %v2151 = vpop.permute.xlu0 %2150
        %v2153 = vsel %vm1055, %v2149, 0
        %v2156 = vsel %vm1121, %v2151, 0
        %2158 = vmatprep.subr.bf16.mxu0 0
        %2159 = vmatpush1.bf16.msra.mxu0 %v2156
        %2160 = vmatprep.subr.bf16.mxu0 0
        %2161 = vmatpush1.bf16.msra.mxu0 0
        %2162 = vmatprep.subr.bf16.mxu0 0
        %2163 = vmatpush1.bf16.msra.mxu0 0
        %2164 = vmatprep.subr.bf16.mxu0 0
        %2165 = vmatpush1.bf16.msra.mxu0 0
        %2166 = vmatprep.subr.bf16.mxu0 0
        %2167 = vmatpush1.bf16.msra.mxu0 0
        %2168 = vmatprep.subr.bf16.mxu0 0
        %2169 = vmatpush1.bf16.msra.mxu0 0
        %2170 = vmatprep.subr.bf16.mxu0 0
        %2171 = vmatpush1.bf16.msra.mxu0 0
        %2172 = vmatprep.subr.bf16.mxu0 0
        %2173 = vmatpush1.bf16.msra.mxu0 0
        %2174 = vmatprep.subr.bf16.mxu0 0
        %2175 = vmatpush1.bf16.msra.mxu0 0
        %2176 = vmatprep.subr.bf16.mxu0 0
        %2177 = vmatpush1.bf16.msra.mxu0 0
        %2178 = vmatprep.subr.bf16.mxu0 0
        %2179 = vmatpush1.bf16.msra.mxu0 0
        %2180 = vmatprep.subr.bf16.mxu0 0
        %2181 = vmatpush1.bf16.msra.mxu0 0
        %2182 = vmatprep.subr.bf16.mxu0 0
        %2183 = vmatpush1.bf16.msra.mxu0 0
        %2184 = vmatprep.subr.bf16.mxu0 0
        %2185 = vmatpush1.bf16.msra.mxu0 0
        %2186 = vmatprep.subr.bf16.mxu0 0
        %2187 = vmatpush1.bf16.msra.mxu0 0
        %2188 = vmatprep.subr.bf16.mxu0 0
        %2189 = vmatpush1.bf16.msra.mxu0 0
        %2190 = vmatprep.mubr.bf16.mxu0 0
        %2191 = vmatmul.mubr.bf16.gmra.mrb[0].mxu0 %v2153
        %v2192 = vpop.f32.mrb[0].mxu0
        %v2193 = vadd.f32 0.0, %v2192
        %v2194 = vpop.f32.mrb[0].mxu0
        %v2195 = vpop.f32.mrb[0].mxu0
        %v2196 = vpop.f32.mrb[0].mxu0
        %2197 = vdwg.mxu0
        %2199 = vrot.lane.b32.xlu0 %v1969, 8
        %v2200 = vpop.permute.xlu0 %2199
        %2203 = vrot.lane.b32.xlu0 %v2081, 16
        %v2204 = vpop.permute.xlu0 %2203
        %2207 = vrot.lane.b32.xlu0 %v2193, 24
        %v2208 = vpop.permute.xlu0 %2207
        %v2210 = vsel %vm1055, %v1856, %v2200
        %v2211 = vsel %vm1514, %v2210, %v2204
        %v2212 = vsel %vm1516, %v2211, %v2208
        %v2213 = vpack.c.bf16 %v2212, %v2212
        %v2215 = vlaneseq
        %v2216 = vshrl.u32 %v2215, 7
        %v2217 = vsub.s32 0, %v2216
        %v2218 = vrot.slane %v1749, %v2217
        %v2224 = vunpack.c.l.b16 %v1745
        %v2225 = vunpack.c.l.b16 %v1746
        %v2226 = vunpack.c.l.b16 %v1747
        %v2227 = vunpack.c.l.b16 %v1748
        %v2228 = vpack.c.b16 %v2225, %v2224
        %v2229 = vpack.c.b16 %v2227, %v2226
        %v2233 = vsel %vm1002, %v2213, 0
        %2235 = vmatprep.subr.bf16.mxu0 0
        %2236 = vmatpush1.bf16.msra.mxu0 %v2228
        %2237 = vmatprep.subr.bf16.mxu0 0
        %2238 = vmatpush1.bf16.msra.mxu0 %v2229
        %2239 = vmatprep.subr.bf16.mxu0 0
        %2240 = vmatpush1.bf16.msra.mxu0 0
        %2241 = vmatprep.subr.bf16.mxu0 0
        %2242 = vmatpush1.bf16.msra.mxu0 0
        %2243 = vmatprep.subr.bf16.mxu0 0
        %2244 = vmatpush1.bf16.msra.mxu0 0
        %2245 = vmatprep.subr.bf16.mxu0 0
        %2246 = vmatpush1.bf16.msra.mxu0 0
        %2247 = vmatprep.subr.bf16.mxu0 0
        %2248 = vmatpush1.bf16.msra.mxu0 0
        %2249 = vmatprep.subr.bf16.mxu0 0
        %2250 = vmatpush1.bf16.msra.mxu0 0
        %2251 = vmatprep.subr.bf16.mxu0 0
        %2252 = vmatpush1.bf16.msra.mxu0 0
        %2253 = vmatprep.subr.bf16.mxu0 0
        %2254 = vmatpush1.bf16.msra.mxu0 0
        %2255 = vmatprep.subr.bf16.mxu0 0
        %2256 = vmatpush1.bf16.msra.mxu0 0
        %2257 = vmatprep.subr.bf16.mxu0 0
        %2258 = vmatpush1.bf16.msra.mxu0 0
        %2259 = vmatprep.subr.bf16.mxu0 0
        %2260 = vmatpush1.bf16.msra.mxu0 0
        %2261 = vmatprep.subr.bf16.mxu0 0
        %2262 = vmatpush1.bf16.msra.mxu0 0
        %2263 = vmatprep.subr.bf16.mxu0 0
        %2264 = vmatpush1.bf16.msra.mxu0 0
        %2265 = vmatprep.subr.bf16.mxu0 0
        %2266 = vmatpush1.bf16.msra.mxu0 0
        %2267 = vmatprep.mubr.bf16.mxu0 0
        %2268 = vmatmul.mubr.bf16.gmra.mrb[0].mxu0 %v2233
        %v2269 = vpop.f32.mrb[0].mxu0
        %v2270 = vadd.f32 %v2218, %v2269
        %v2271 = vpop.f32.mrb[0].mxu0
        %v2272 = vpop.f32.mrb[0].mxu0
        %v2273 = vpop.f32.mrb[0].mxu0
        %2274 = vdwg.mxu0
        %v2275 = vld [vmem:[%s35] sm:$0x1]
        %v2276 = vld [vmem:[%s37] sm:$0x1]
        %v2277 = vadd.f32 %v2270, %v1610
        %v2278 = vsel %vm1002, %v2277, 0.0
        %2279 = vadd.xlane.f32.xlu0 %v2278
        %v2280 = vpop.xlane.xlu0 %2279
        %v2281 = vmul.f32 %v2280, %v1586
        %v2282 = vsub.f32 %v2277, %v2281
        %v2283 = vmul.f32 %v2282, %v2282
        %v2284 = vsel %vm1002, %v2283, 0.0
        %2285 = vadd.xlane.f32.xlu0 %v2284
        %v2286 = vpop.xlane.xlu0 %2285
        %v2287 = vmul.f32 %v2286, %v1586
        %v2288 = vadd.f32 %v2287, 1e-05
        %v2289 = vrsqrt.pop %v2288
        %v2290 = vmul.f32 %v2282, %v2289
        %v2292 = vlaneseq
        %v2293 = vshrl.u32 %v2292, 7
        %v2294 = vsub.s32 0, %v2293
        %v2295 = vrot.slane %v2275, %v2294
        %v2297 = vmul.f32 %v2290, %v2295
        %v2299 = vlaneseq
        %v2300 = vshrl.u32 %v2299, 7
        %v2301 = vsub.s32 0, %v2300
        %v2302 = vrot.slane %v2276, %v2301
        %v2304 = vadd.f32 %v2297, %v2302
        %v2305 = vld [vmem:[%s39] sm:$0xf]
        %v2306 = vld [vmem:[%s39 + $0x4] sm:$0xf]
        %v2307 = vld [vmem:[%s39 + $0x8] sm:$0xf]
        %v2308 = vld [vmem:[%s39 + $0xc] sm:$0xf]
        %v2309 = vld [vmem:[%s41] sm:$0x1]
        %v2310 = vld [vmem:[%s43] sm:$0xf]
        %v2311 = vld [vmem:[%s43 + $0x4] sm:$0xf]
        %v2312 = vld [vmem:[%s43 + $0x8] sm:$0xf]
        %v2313 = vld [vmem:[%s43 + $0xc] sm:$0xf]
        %v2314 = vld [vmem:[%s43 + $0x10] sm:$0xf]
        %v2315 = vld [vmem:[%s43 + $0x14] sm:$0xf]
        %v2316 = vld [vmem:[%s43 + $0x18] sm:$0xf]
        %v2317 = vld [vmem:[%s43 + $0x1c] sm:$0xf]
        %v2318 = vld [vmem:[%s45] sm:$0x1]
        %v2319 = vpack.c.bf16 %v2304, %v2304
        %v2321 = vlaneseq
        %v2322 = vshrl.u32 %v2321, 7
        %v2323 = vsub.s32 0, %v2322
        %v2324 = vrot.slane %v2309, %v2323
        %v2330 = vunpack.c.l.b16 %v2305
        %v2331 = vunpack.c.l.b16 %v2306
        %v2332 = vunpack.c.l.b16 %v2307
        %v2333 = vunpack.c.l.b16 %v2308
        %v2334 = vpack.c.b16 %v2331, %v2330
        %v2335 = vpack.c.b16 %v2333, %v2332
        %v2339 = vsel %vm1002, %v2319, 0
        %2341 = vmatprep.subr.bf16.mxu0 0
        %2342 = vmatpush1.bf16.msra.mxu0 %v2334
        %2343 = vmatprep.subr.bf16.mxu0 0
        %2344 = vmatpush1.bf16.msra.mxu0 %v2335
        %2345 = vmatprep.subr.bf16.mxu0 0
        %2346 = vmatpush1.bf16.msra.mxu0 0
        %2347 = vmatprep.subr.bf16.mxu0 0
        %2348 = vmatpush1.bf16.msra.mxu0 0
        %2349 = vmatprep.subr.bf16.mxu0 0
        %2350 = vmatpush1.bf16.msra.mxu0 0
        %2351 = vmatprep.subr.bf16.mxu0 0
        %2352 = vmatpush1.bf16.msra.mxu0 0
        %2353 = vmatprep.subr.bf16.mxu0 0
        %2354 = vmatpush1.bf16.msra.mxu0 0
        %2355 = vmatprep.subr.bf16.mxu0 0
        %2356 = vmatpush1.bf16.msra.mxu0 0
        %2357 = vmatprep.subr.bf16.mxu0 0
        %2358 = vmatpush1.bf16.msra.mxu0 0
        %2359 = vmatprep.subr.bf16.mxu0 0
        %2360 = vmatpush1.bf16.msra.mxu0 0
        %2361 = vmatprep.subr.bf16.mxu0 0
        %2362 = vmatpush1.bf16.msra.mxu0 0
        %2363 = vmatprep.subr.bf16.mxu0 0
        %2364 = vmatpush1.bf16.msra.mxu0 0
        %2365 = vmatprep.subr.bf16.mxu0 0
        %2366 = vmatpush1.bf16.msra.mxu0 0
        %2367 = vmatprep.subr.bf16.mxu0 0
        %2368 = vmatpush1.bf16.msra.mxu0 0
        %2369 = vmatprep.subr.bf16.mxu0 0
        %2370 = vmatpush1.bf16.msra.mxu0 0
        %2371 = vmatprep.subr.bf16.mxu0 0
        %2372 = vmatpush1.bf16.msra.mxu0 0
        %2373 = vmatprep.mubr.bf16.mxu0 0
        %2374 = vmatmul.mubr.bf16.gmra.mrb[0].mxu0 %v2339
        %v2375 = vpop.f32.mrb[0].mxu0
        %v2376 = vadd.f32 %v2324, %v2375
        %v2377 = vpop.f32.mrb[0].mxu0
        %v2378 = vpop.f32.mrb[0].mxu0
        %v2379 = vpop.f32.mrb[0].mxu0
        %2380 = vdwg.mxu0
        %v2381 = vmax.f32 %v2376, 0.0
        %v2382 = vpack.c.bf16 %v2381, %v2381
        %v2384 = vlaneseq
        %v2385 = vshrl.u32 %v2384, 7
        %v2386 = vsub.s32 0, %v2385
        %v2387 = vrot.slane %v2318, %v2386
        %v2397 = vunpack.c.l.b16 %v2310
        %v2398 = vunpack.c.l.b16 %v2311
        %v2399 = vunpack.c.l.b16 %v2312
        %v2400 = vunpack.c.l.b16 %v2313
        %v2401 = vunpack.c.l.b16 %v2314
        %v2402 = vunpack.c.l.b16 %v2315
        %v2403 = vunpack.c.l.b16 %v2316
        %v2404 = vunpack.c.l.b16 %v2317
        %v2405 = vpack.c.b16 %v2398, %v2397
        %v2406 = vpack.c.b16 %v2400, %v2399
        %v2407 = vpack.c.b16 %v2402, %v2401
        %v2408 = vpack.c.b16 %v2404, %v2403
        %vm2413 = vcmask 523264
        %v2415 = vsel %vm2413, %v2382, 0
        %2417 = vmatprep.subr.bf16.mxu0 0
        %2418 = vmatpush1.bf16.msra.mxu0 %v2405
        %2419 = vmatprep.subr.bf16.mxu0 0
        %2420 = vmatpush1.bf16.msra.mxu0 %v2406
        %2421 = vmatprep.subr.bf16.mxu0 0
        %2422 = vmatpush1.bf16.msra.mxu0 %v2407
        %2423 = vmatprep.subr.bf16.mxu0 0
        %2424 = vmatpush1.bf16.msra.mxu0 %v2408
        %2425 = vmatprep.subr.bf16.mxu0 0
        %2426 = vmatpush1.bf16.msra.mxu0 0
        %2427 = vmatprep.subr.bf16.mxu0 0
        %2428 = vmatpush1.bf16.msra.mxu0 0
        %2429 = vmatprep.subr.bf16.mxu0 0
        %2430 = vmatpush1.bf16.msra.mxu0 0
        %2431 = vmatprep.subr.bf16.mxu0 0
        %2432 = vmatpush1.bf16.msra.mxu0 0
        %2433 = vmatprep.subr.bf16.mxu0 0
        %2434 = vmatpush1.bf16.msra.mxu0 0
        %2435 = vmatprep.subr.bf16.mxu0 0
        %2436 = vmatpush1.bf16.msra.mxu0 0
        %2437 = vmatprep.subr.bf16.mxu0 0
        %2438 = vmatpush1.bf16.msra.mxu0 0
        %2439 = vmatprep.subr.bf16.mxu0 0
        %2440 = vmatpush1.bf16.msra.mxu0 0
        %2441 = vmatprep.subr.bf16.mxu0 0
        %2442 = vmatpush1.bf16.msra.mxu0 0
        %2443 = vmatprep.subr.bf16.mxu0 0
        %2444 = vmatpush1.bf16.msra.mxu0 0
        %2445 = vmatprep.subr.bf16.mxu0 0
        %2446 = vmatpush1.bf16.msra.mxu0 0
        %2447 = vmatprep.subr.bf16.mxu0 0
        %2448 = vmatpush1.bf16.msra.mxu0 0
        %2449 = vmatprep.mubr.bf16.mxu0 0
        %2450 = vmatmul.mubr.bf16.gmra.mrb[0].mxu0 %v2415
        %v2451 = vpop.f32.mrb[0].mxu0
        %v2452 = vadd.f32 %v2387, %v2451
        %v2453 = vpop.f32.mrb[0].mxu0
        %v2454 = vpop.f32.mrb[0].mxu0
        %v2455 = vpop.f32.mrb[0].mxu0
        %2456 = vdwg.mxu0
        %v2457 = vld [vmem:[%s47] sm:$0x1]
        %v2458 = vld [vmem:[%s49] sm:$0x1]
        %v2459 = vadd.f32 %v2452, %v2304
        %v2460 = vsel %vm1002, %v2459, 0.0
        %2461 = vadd.xlane.f32.xlu0 %v2460
        %v2462 = vpop.xlane.xlu0 %2461
        %v2463 = vmul.f32 %v2462, %v1586
        %v2464 = vsub.f32 %v2459, %v2463
        %v2465 = vmul.f32 %v2464, %v2464
        %v2466 = vsel %vm1002, %v2465, 0.0
        %2467 = vadd.xlane.f32.xlu0 %v2466
        %v2468 = vpop.xlane.xlu0 %2467
        %v2469 = vmul.f32 %v2468, %v1586
        %v2470 = vadd.f32 %v2469, 1e-05
        %v2471 = vrsqrt.pop %v2470
        %v2472 = vmul.f32 %v2464, %v2471
        %v2474 = vlaneseq
        %v2475 = vshrl.u32 %v2474, 7
        %v2476 = vsub.s32 0, %v2475
        %v2477 = vrot.slane %v2457, %v2476
        %v2479 = vmul.f32 %v2472, %v2477
        %v2481 = vlaneseq
        %v2482 = vshrl.u32 %v2481, 7
        %v2483 = vsub.s32 0, %v2482
        %v2484 = vrot.slane %v2458, %v2483
        %v2486 = vadd.f32 %v2479, %v2484
        %s2487 = scalar_lea.vmem %s11, 16
        %v2488 = vld [vmem:[%s2487] sm:$0xf]
        %v2489 = vld [vmem:[%s2487 + $0x4] sm:$0xf]
        %v2490 = vld [vmem:[%s2487 + $0x8] sm:$0xf]
        %v2491 = vld [vmem:[%s2487 + $0xc] sm:$0xf]
        %v2492 = vpack.c.bf16 %v2486, %v2486
        %s2493 = scalar_lea.vmem %s13, 1
        %v2494 = vld [vmem:[%s2493] sm:$0x1]
        %v2496 = vlaneseq
        %v2497 = vshrl.u32 %v2496, 7
        %v2498 = vsub.s32 0, %v2497
        %v2499 = vrot.slane %v2494, %v2498
        %v2505 = vunpack.c.l.b16 %v2488
        %v2506 = vunpack.c.l.b16 %v2489
        %v2507 = vunpack.c.l.b16 %v2490
        %v2508 = vunpack.c.l.b16 %v2491
        %v2509 = vpack.c.b16 %v2506, %v2505
        %v2510 = vpack.c.b16 %v2508, %v2507
        %v2514 = vsel %vm1002, %v2492, 0
        %2516 = vmatprep.subr.bf16.mxu0 0
        %2517 = vmatpush1.bf16.msra.mxu0 %v2509
        %2518 = vmatprep.subr.bf16.mxu0 0
        %2519 = vmatpush1.bf16.msra.mxu0 %v2510
        %2520 = vmatprep.subr.bf16.mxu0 0
        %2521 = vmatpush1.bf16.msra.mxu0 0
        %2522 = vmatprep.subr.bf16.mxu0 0
        %2523 = vmatpush1.bf16.msra.mxu0 0
        %2524 = vmatprep.subr.bf16.mxu0 0
        %2525 = vmatpush1.bf16.msra.mxu0 0
        %2526 = vmatprep.subr.bf16.mxu0 0
        %2527 = vmatpush1.bf16.msra.mxu0 0
        %2528 = vmatprep.subr.bf16.mxu0 0
        %2529 = vmatpush1.bf16.msra.mxu0 0
        %2530 = vmatprep.subr.bf16.mxu0 0
        %2531 = vmatpush1.bf16.msra.mxu0 0
        %2532 = vmatprep.subr.bf16.mxu0 0
        %2533 = vmatpush1.bf16.msra.mxu0 0
        %2534 = vmatprep.subr.bf16.mxu0 0
        %2535 = vmatpush1.bf16.msra.mxu0 0
        %2536 = vmatprep.subr.bf16.mxu0 0
        %2537 = vmatpush1.bf16.msra.mxu0 0
        %2538 = vmatprep.subr.bf16.mxu0 0
        %2539 = vmatpush1.bf16.msra.mxu0 0
        %2540 = vmatprep.subr.bf16.mxu0 0
        %2541 = vmatpush1.bf16.msra.mxu0 0
        %2542 = vmatprep.subr.bf16.mxu0 0
        %2543 = vmatpush1.bf16.msra.mxu0 0
        %2544 = vmatprep.subr.bf16.mxu0 0
        %2545 = vmatpush1.bf16.msra.mxu0 0
        %2546 = vmatprep.subr.bf16.mxu0 0
        %2547 = vmatpush1.bf16.msra.mxu0 0
        %2548 = vmatprep.mubr.bf16.mxu0 0
        %2549 = vmatmul.mubr.bf16.gmra.mrb[0].mxu0 %v2514
        %v2550 = vpop.f32.mrb[0].mxu0
        %v2551 = vadd.f32 %v2499, %v2550
        %v2552 = vpop.f32.mrb[0].mxu0
        %v2553 = vpop.f32.mrb[0].mxu0
        %v2554 = vpop.f32.mrb[0].mxu0
        %2555 = vdwg.mxu0
        %s2556 = scalar_lea.vmem %s15, 16
        %v2557 = vld [vmem:[%s2556] sm:$0xf]
        %v2558 = vld [vmem:[%s2556 + $0x4] sm:$0xf]
        %v2559 = vld [vmem:[%s2556 + $0x8] sm:$0xf]
        %v2560 = vld [vmem:[%s2556 + $0xc] sm:$0xf]
        %s2561 = scalar_lea.vmem %s17, 1
        %v2562 = vld [vmem:[%s2561] sm:$0x1]
        %v2563 = vpack.c.bf16 %v2551, %v2551
        %2565 = vrot.lane.b32.xlu0 %v2563, 96
        %v2566 = vpop.permute.xlu0 %2565
        %v2568 = vsel %vm1055, %v2563, 0
        %v2571 = vsel %vm1055, %v2566, 0
        %2573 = vmatprep.subr.bf16.mxu0 0
        %2574 = vmatpush1.bf16.xpose.msra.mxu0 %v2571
        %2575 = vmatprep.subr.bf16.mxu0 0
        %2576 = vmatpush1.bf16.xpose.msra.mxu0 0
        %2577 = vmatprep.subr.bf16.mxu0 0
        %2578 = vmatpush1.bf16.xpose.msra.mxu0 0
        %2579 = vmatprep.subr.bf16.mxu0 0
        %2580 = vmatpush1.bf16.xpose.msra.mxu0 0
        %2581 = vmatprep.subr.bf16.mxu0 0
        %2582 = vmatpush1.bf16.xpose.msra.mxu0 0
        %2583 = vmatprep.subr.bf16.mxu0 0
        %2584 = vmatpush1.bf16.xpose.msra.mxu0 0
        %2585 = vmatprep.subr.bf16.mxu0 0
        %2586 = vmatpush1.bf16.xpose.msra.mxu0 0
        %2587 = vmatprep.subr.bf16.mxu0 0
        %2588 = vmatpush1.bf16.xpose.msra.mxu0 0
        %2589 = vmatprep.subr.bf16.mxu0 0
        %2590 = vmatpush1.bf16.xpose.msra.mxu0 0
        %2591 = vmatprep.subr.bf16.mxu0 0
        %2592 = vmatpush1.bf16.xpose.msra.mxu0 0
        %2593 = vmatprep.subr.bf16.mxu0 0
        %2594 = vmatpush1.bf16.xpose.msra.mxu0 0
        %2595 = vmatprep.subr.bf16.mxu0 0
        %2596 = vmatpush1.bf16.xpose.msra.mxu0 0
        %2597 = vmatprep.subr.bf16.mxu0 0
        %2598 = vmatpush1.bf16.xpose.msra.mxu0 0
        %2599 = vmatprep.subr.bf16.mxu0 0
        %2600 = vmatpush1.bf16.xpose.msra.mxu0 0
        %2601 = vmatprep.subr.bf16.mxu0 0
        %2602 = vmatpush1.bf16.xpose.msra.mxu0 0
        %2603 = vmatprep.subr.bf16.mxu0 0
        %2604 = vmatpush1.bf16.xpose.msra.mxu0 0
        %2605 = vmatprep.mubr.bf16.mxu0 0
        %2606 = vmatmul.mubr.bf16.gmra.mrb[0].mxu0 %v2568
        %v2607 = vpop.f32.mrb[0].mxu0
        %v2608 = vadd.f32 0.0, %v2607
        %v2609 = vpop.f32.mrb[0].mxu0
        %v2610 = vpop.f32.mrb[0].mxu0
        %v2611 = vpop.f32.mrb[0].mxu0
        %2612 = vdwg.mxu0
        %v2613 = vmul.f32 %v2608, 0.35355338
        %v2614 = vadd.f32 %v2613, %v975
        %v2615 = vsel %vm1055, %v2614, -inf
        %2616 = vmax.xlane.f32.xlu0 %v2615
        %v2617 = vpop.xlane.xlu0 %2616
        %v2618 = vsub.f32 %v2614, %v2617
        %v2619 = vmul.f32 %v2618, 1.442695
        %v2620 = vpow.pop %v2619
        %v2621 = vsel %vm1055, %v2620, 0.0
        %2622 = vadd.xlane.f32.xlu0 %v2621
        %v2623 = vpop.xlane.xlu0 %2622
        %v2624 = vrcp.pop %v2623
        %v2625 = vmul.f32 %v2620, %v2624
        %v2626 = vpack.c.bf16 %v2625, %v2625
        %2627 = vrot.lane.b32.xlu0 %v2563, 64
        %v2628 = vpop.permute.xlu0 %2627
        %v2630 = vsel %vm1055, %v2626, 0
        %v2633 = vsel %vm1121, %v2628, 0
        %2635 = vmatprep.subr.bf16.mxu0 0
        %2636 = vmatpush1.bf16.msra.mxu0 %v2633
        %2637 = vmatprep.subr.bf16.mxu0 0
        %2638 = vmatpush1.bf16.msra.mxu0 0
        %2639 = vmatprep.subr.bf16.mxu0 0
        %2640 = vmatpush1.bf16.msra.mxu0 0
        %2641 = vmatprep.subr.bf16.mxu0 0
        %2642 = vmatpush1.bf16.msra.mxu0 0
        %2643 = vmatprep.subr.bf16.mxu0 0
        %2644 = vmatpush1.bf16.msra.mxu0 0
        %2645 = vmatprep.subr.bf16.mxu0 0
        %2646 = vmatpush1.bf16.msra.mxu0 0
        %2647 = vmatprep.subr.bf16.mxu0 0
        %2648 = vmatpush1.bf16.msra.mxu0 0
        %2649 = vmatprep.subr.bf16.mxu0 0
        %2650 = vmatpush1.bf16.msra.mxu0 0
        %2651 = vmatprep.subr.bf16.mxu0 0
        %2652 = vmatpush1.bf16.msra.mxu0 0
        %2653 = vmatprep.subr.bf16.mxu0 0
        %2654 = vmatpush1.bf16.msra.mxu0 0
        %2655 = vmatprep.subr.bf16.mxu0 0
        %2656 = vmatpush1.bf16.msra.mxu0 0
        %2657 = vmatprep.subr.bf16.mxu0 0
        %2658 = vmatpush1.bf16.msra.mxu0 0
        %2659 = vmatprep.subr.bf16.mxu0 0
        %2660 = vmatpush1.bf16.msra.mxu0 0
        %2661 = vmatprep.subr.bf16.mxu0 0
        %2662 = vmatpush1.bf16.msra.mxu0 0
        %2663 = vmatprep.subr.bf16.mxu0 0
        %2664 = vmatpush1.bf16.msra.mxu0 0
        %2665 = vmatprep.subr.bf16.mxu0 0
        %2666 = vmatpush1.bf16.msra.mxu0 0
        %2667 = vmatprep.mubr.bf16.mxu0 0
        %2668 = vmatmul.mubr.bf16.gmra.mrb[0].mxu0 %v2630
        %v2669 = vpop.f32.mrb[0].mxu0
        %v2670 = vadd.f32 0.0, %v2669
        %v2671 = vpop.f32.mrb[0].mxu0
        %v2672 = vpop.f32.mrb[0].mxu0
        %v2673 = vpop.f32.mrb[0].mxu0
        %2674 = vdwg.mxu0
        %2675 = vrot.lane.b32.xlu0 %v2563, 120
        %v2676 = vpop.permute.xlu0 %2675
        %2677 = vrot.lane.b32.xlu0 %v2563, 88
        %v2678 = vpop.permute.xlu0 %2677
        %v2680 = vsel %vm1055, %v2676, 0
        %v2683 = vsel %vm1055, %v2678, 0
        %2685 = vmatprep.subr.bf16.mxu0 0
        %2686 = vmatpush1.bf16.xpose.msra.mxu0 %v2683
        %2687 = vmatprep.subr.bf16.mxu0 0
        %2688 = vmatpush1.bf16.xpose.msra.mxu0 0
        %2689 = vmatprep.subr.bf16.mxu0 0
        %2690 = vmatpush1.bf16.xpose.msra.mxu0 0
        %2691 = vmatprep.subr.bf16.mxu0 0
        %2692 = vmatpush1.bf16.xpose.msra.mxu0 0
        %2693 = vmatprep.subr.bf16.mxu0 0
        %2694 = vmatpush1.bf16.xpose.msra.mxu0 0
        %2695 = vmatprep.subr.bf16.mxu0 0
        %2696 = vmatpush1.bf16.xpose.msra.mxu0 0
        %2697 = vmatprep.subr.bf16.mxu0 0
        %2698 = vmatpush1.bf16.xpose.msra.mxu0 0
        %2699 = vmatprep.subr.bf16.mxu0 0
        %2700 = vmatpush1.bf16.xpose.msra.mxu0 0
        %2701 = vmatprep.subr.bf16.mxu0 0
        %2702 = vmatpush1.bf16.xpose.msra.mxu0 0
        %2703 = vmatprep.subr.bf16.mxu0 0
        %2704 = vmatpush1.bf16.xpose.msra.mxu0 0
        %2705 = vmatprep.subr.bf16.mxu0 0
        %2706 = vmatpush1.bf16.xpose.msra.mxu0 0
        %2707 = vmatprep.subr.bf16.mxu0 0
        %2708 = vmatpush1.bf16.xpose.msra.mxu0 0
        %2709 = vmatprep.subr.bf16.mxu0 0
        %2710 = vmatpush1.bf16.xpose.msra.mxu0 0
        %2711 = vmatprep.subr.bf16.mxu0 0
        %2712 = vmatpush1.bf16.xpose.msra.mxu0 0
        %2713 = vmatprep.subr.bf16.mxu0 0
        %2714 = vmatpush1.bf16.xpose.msra.mxu0 0
        %2715 = vmatprep.subr.bf16.mxu0 0
        %2716 = vmatpush1.bf16.xpose.msra.mxu0 0
        %2717 = vmatprep.mubr.bf16.mxu0 0
        %2718 = vmatmul.mubr.bf16.gmra.mrb[0].mxu0 %v2680
        %v2719 = vpop.f32.mrb[0].mxu0
        %v2720 = vadd.f32 0.0, %v2719
        %v2721 = vpop.f32.mrb[0].mxu0
        %v2722 = vpop.f32.mrb[0].mxu0
        %v2723 = vpop.f32.mrb[0].mxu0
        %2724 = vdwg.mxu0
        %v2725 = vmul.f32 %v2720, 0.35355338
        %v2726 = vadd.f32 %v2725, %v975
        %v2727 = vsel %vm1055, %v2726, -inf
        %2728 = vmax.xlane.f32.xlu0 %v2727
        %v2729 = vpop.xlane.xlu0 %2728
        %v2730 = vsub.f32 %v2726, %v2729
        %v2731 = vmul.f32 %v2730, 1.442695
        %v2732 = vpow.pop %v2731
        %v2733 = vsel %vm1055, %v2732, 0.0
        %2734 = vadd.xlane.f32.xlu0 %v2733
        %v2735 = vpop.xlane.xlu0 %2734
        %v2736 = vrcp.pop %v2735
        %v2737 = vmul.f32 %v2732, %v2736
        %v2738 = vpack.c.bf16 %v2737, %v2737
        %2739 = vrot.lane.b32.xlu0 %v2563, 56
        %v2740 = vpop.permute.xlu0 %2739
        %v2742 = vsel %vm1055, %v2738, 0
        %v2745 = vsel %vm1121, %v2740, 0
        %2747 = vmatprep.subr.bf16.mxu0 0
        %2748 = vmatpush1.bf16.msra.mxu0 %v2745
        %2749 = vmatprep.subr.bf16.mxu0 0
        %2750 = vmatpush1.bf16.msra.mxu0 0
        %2751 = vmatprep.subr.bf16.mxu0 0
        %2752 = vmatpush1.bf16.msra.mxu0 0
        %2753 = vmatprep.subr.bf16.mxu0 0
        %2754 = vmatpush1.bf16.msra.mxu0 0
        %2755 = vmatprep.subr.bf16.mxu0 0
        %2756 = vmatpush1.bf16.msra.mxu0 0
        %2757 = vmatprep.subr.bf16.mxu0 0
        %2758 = vmatpush1.bf16.msra.mxu0 0
        %2759 = vmatprep.subr.bf16.mxu0 0
        %2760 = vmatpush1.bf16.msra.mxu0 0
        %2761 = vmatprep.subr.bf16.mxu0 0
        %2762 = vmatpush1.bf16.msra.mxu0 0
        %2763 = vmatprep.subr.bf16.mxu0 0
        %2764 = vmatpush1.bf16.msra.mxu0 0
        %2765 = vmatprep.subr.bf16.mxu0 0
        %2766 = vmatpush1.bf16.msra.mxu0 0
        %2767 = vmatprep.subr.bf16.mxu0 0
        %2768 = vmatpush1.bf16.msra.mxu0 0
        %2769 = vmatprep.subr.bf16.mxu0 0
        %2770 = vmatpush1.bf16.msra.mxu0 0
        %2771 = vmatprep.subr.bf16.mxu0 0
        %2772 = vmatpush1.bf16.msra.mxu0 0
        %2773 = vmatprep.subr.bf16.mxu0 0
        %2774 = vmatpush1.bf16.msra.mxu0 0
        %2775 = vmatprep.subr.bf16.mxu0 0
        %2776 = vmatpush1.bf16.msra.mxu0 0
        %2777 = vmatprep.subr.bf16.mxu0 0
        %2778 = vmatpush1.bf16.msra.mxu0 0
        %2779 = vmatprep.mubr.bf16.mxu0 0
        %2780 = vmatmul.mubr.bf16.gmra.mrb[0].mxu0 %v2742
        %v2781 = vpop.f32.mrb[0].mxu0
        %v2782 = vadd.f32 0.0, %v2781
        %v2783 = vpop.f32.mrb[0].mxu0
        %v2784 = vpop.f32.mrb[0].mxu0
        %v2785 = vpop.f32.mrb[0].mxu0
        %2786 = vdwg.mxu0
        %2787 = vrot.lane.b32.xlu0 %v2563, 112
        %v2788 = vpop.permute.xlu0 %2787
        %2789 = vrot.lane.b32.xlu0 %v2563, 80
        %v2790 = vpop.permute.xlu0 %2789
        %v2792 = vsel %vm1055, %v2788, 0
        %v2795 = vsel %vm1055, %v2790, 0
        %2797 = vmatprep.subr.bf16.mxu0 0
        %2798 = vmatpush1.bf16.xpose.msra.mxu0 %v2795
        %2799 = vmatprep.subr.bf16.mxu0 0
        %2800 = vmatpush1.bf16.xpose.msra.mxu0 0
        %2801 = vmatprep.subr.bf16.mxu0 0
        %2802 = vmatpush1.bf16.xpose.msra.mxu0 0
        %2803 = vmatprep.subr.bf16.mxu0 0
        %2804 = vmatpush1.bf16.xpose.msra.mxu0 0
        %2805 = vmatprep.subr.bf16.mxu0 0
        %2806 = vmatpush1.bf16.xpose.msra.mxu0 0
        %2807 = vmatprep.subr.bf16.mxu0 0
        %2808 = vmatpush1.bf16.xpose.msra.mxu0 0
        %2809 = vmatprep.subr.bf16.mxu0 0
        %2810 = vmatpush1.bf16.xpose.msra.mxu0 0
        %2811 = vmatprep.subr.bf16.mxu0 0
        %2812 = vmatpush1.bf16.xpose.msra.mxu0 0
        %2813 = vmatprep.subr.bf16.mxu0 0
        %2814 = vmatpush1.bf16.xpose.msra.mxu0 0
        %2815 = vmatprep.subr.bf16.mxu0 0
        %2816 = vmatpush1.bf16.xpose.msra.mxu0 0
        %2817 = vmatprep.subr.bf16.mxu0 0
        %2818 = vmatpush1.bf16.xpose.msra.mxu0 0
        %2819 = vmatprep.subr.bf16.mxu0 0
        %2820 = vmatpush1.bf16.xpose.msra.mxu0 0
        %2821 = vmatprep.subr.bf16.mxu0 0
        %2822 = vmatpush1.bf16.xpose.msra.mxu0 0
        %2823 = vmatprep.subr.bf16.mxu0 0
        %2824 = vmatpush1.bf16.xpose.msra.mxu0 0
        %2825 = vmatprep.subr.bf16.mxu0 0
        %2826 = vmatpush1.bf16.xpose.msra.mxu0 0
        %2827 = vmatprep.subr.bf16.mxu0 0
        %2828 = vmatpush1.bf16.xpose.msra.mxu0 0
        %2829 = vmatprep.mubr.bf16.mxu0 0
        %2830 = vmatmul.mubr.bf16.gmra.mrb[0].mxu0 %v2792
        %v2831 = vpop.f32.mrb[0].mxu0
        %v2832 = vadd.f32 0.0, %v2831
        %v2833 = vpop.f32.mrb[0].mxu0
        %v2834 = vpop.f32.mrb[0].mxu0
        %v2835 = vpop.f32.mrb[0].mxu0
        %2836 = vdwg.mxu0
        %v2837 = vmul.f32 %v2832, 0.35355338
        %v2838 = vadd.f32 %v2837, %v975
        %v2839 = vsel %vm1055, %v2838, -inf
        %2840 = vmax.xlane.f32.xlu0 %v2839
        %v2841 = vpop.xlane.xlu0 %2840
        %v2842 = vsub.f32 %v2838, %v2841
        %v2843 = vmul.f32 %v2842, 1.442695
        %v2844 = vpow.pop %v2843
        %v2845 = vsel %vm1055, %v2844, 0.0
        %2846 = vadd.xlane.f32.xlu0 %v2845
        %v2847 = vpop.xlane.xlu0 %2846
        %v2848 = vrcp.pop %v2847
        %v2849 = vmul.f32 %v2844, %v2848
        %v2850 = vpack.c.bf16 %v2849, %v2849
        %2851 = vrot.lane.b32.xlu0 %v2563, 48
        %v2852 = vpop.permute.xlu0 %2851
        %v2854 = vsel %vm1055, %v2850, 0
        %v2857 = vsel %vm1121, %v2852, 0
        %2859 = vmatprep.subr.bf16.mxu0 0
        %2860 = vmatpush1.bf16.msra.mxu0 %v2857
        %2861 = vmatprep.subr.bf16.mxu0 0
        %2862 = vmatpush1.bf16.msra.mxu0 0
        %2863 = vmatprep.subr.bf16.mxu0 0
        %2864 = vmatpush1.bf16.msra.mxu0 0
        %2865 = vmatprep.subr.bf16.mxu0 0
        %2866 = vmatpush1.bf16.msra.mxu0 0
        %2867 = vmatprep.subr.bf16.mxu0 0
        %2868 = vmatpush1.bf16.msra.mxu0 0
        %2869 = vmatprep.subr.bf16.mxu0 0
        %2870 = vmatpush1.bf16.msra.mxu0 0
        %2871 = vmatprep.subr.bf16.mxu0 0
        %2872 = vmatpush1.bf16.msra.mxu0 0
        %2873 = vmatprep.subr.bf16.mxu0 0
        %2874 = vmatpush1.bf16.msra.mxu0 0
        %2875 = vmatprep.subr.bf16.mxu0 0
        %2876 = vmatpush1.bf16.msra.mxu0 0
        %2877 = vmatprep.subr.bf16.mxu0 0
        %2878 = vmatpush1.bf16.msra.mxu0 0
        %2879 = vmatprep.subr.bf16.mxu0 0
        %2880 = vmatpush1.bf16.msra.mxu0 0
        %2881 = vmatprep.subr.bf16.mxu0 0
        %2882 = vmatpush1.bf16.msra.mxu0 0
        %2883 = vmatprep.subr.bf16.mxu0 0
        %2884 = vmatpush1.bf16.msra.mxu0 0
        %2885 = vmatprep.subr.bf16.mxu0 0
        %2886 = vmatpush1.bf16.msra.mxu0 0
        %2887 = vmatprep.subr.bf16.mxu0 0
        %2888 = vmatpush1.bf16.msra.mxu0 0
        %2889 = vmatprep.subr.bf16.mxu0 0
        %2890 = vmatpush1.bf16.msra.mxu0 0
        %2891 = vmatprep.mubr.bf16.mxu0 0
        %2892 = vmatmul.mubr.bf16.gmra.mrb[0].mxu0 %v2854
        %v2893 = vpop.f32.mrb[0].mxu0
        %v2894 = vadd.f32 0.0, %v2893
        %v2895 = vpop.f32.mrb[0].mxu0
        %v2896 = vpop.f32.mrb[0].mxu0
        %v2897 = vpop.f32.mrb[0].mxu0
        %2898 = vdwg.mxu0
        %2899 = vrot.lane.b32.xlu0 %v2563, 104
        %v2900 = vpop.permute.xlu0 %2899
        %2901 = vrot.lane.b32.xlu0 %v2563, 72
        %v2902 = vpop.permute.xlu0 %2901
        %v2904 = vsel %vm1055, %v2900, 0
        %v2907 = vsel %vm1055, %v2902, 0
        %2909 = vmatprep.subr.bf16.mxu0 0
        %2910 = vmatpush1.bf16.xpose.msra.mxu0 %v2907
        %2911 = vmatprep.subr.bf16.mxu0 0
        %2912 = vmatpush1.bf16.xpose.msra.mxu0 0
        %2913 = vmatprep.subr.bf16.mxu0 0
        %2914 = vmatpush1.bf16.xpose.msra.mxu0 0
        %2915 = vmatprep.subr.bf16.mxu0 0
        %2916 = vmatpush1.bf16.xpose.msra.mxu0 0
        %2917 = vmatprep.subr.bf16.mxu0 0
        %2918 = vmatpush1.bf16.xpose.msra.mxu0 0
        %2919 = vmatprep.subr.bf16.mxu0 0
        %2920 = vmatpush1.bf16.xpose.msra.mxu0 0
        %2921 = vmatprep.subr.bf16.mxu0 0
        %2922 = vmatpush1.bf16.xpose.msra.mxu0 0
        %2923 = vmatprep.subr.bf16.mxu0 0
        %2924 = vmatpush1.bf16.xpose.msra.mxu0 0
        %2925 = vmatprep.subr.bf16.mxu0 0
        %2926 = vmatpush1.bf16.xpose.msra.mxu0 0
        %2927 = vmatprep.subr.bf16.mxu0 0
        %2928 = vmatpush1.bf16.xpose.msra.mxu0 0
        %2929 = vmatprep.subr.bf16.mxu0 0
        %2930 = vmatpush1.bf16.xpose.msra.mxu0 0
        %2931 = vmatprep.subr.bf16.mxu0 0
        %2932 = vmatpush1.bf16.xpose.msra.mxu0 0
        %2933 = vmatprep.subr.bf16.mxu0 0
        %2934 = vmatpush1.bf16.xpose.msra.mxu0 0
        %2935 = vmatprep.subr.bf16.mxu0 0
        %2936 = vmatpush1.bf16.xpose.msra.mxu0 0
        %2937 = vmatprep.subr.bf16.mxu0 0
        %2938 = vmatpush1.bf16.xpose.msra.mxu0 0
        %2939 = vmatprep.subr.bf16.mxu0 0
        %2940 = vmatpush1.bf16.xpose.msra.mxu0 0
        %2941 = vmatprep.mubr.bf16.mxu0 0
        %2942 = vmatmul.mubr.bf16.gmra.mrb[0].mxu0 %v2904
        %v2943 = vpop.f32.mrb[0].mxu0
        %v2944 = vadd.f32 0.0, %v2943
        %v2945 = vpop.f32.mrb[0].mxu0
        %v2946 = vpop.f32.mrb[0].mxu0
        %v2947 = vpop.f32.mrb[0].mxu0
        %2948 = vdwg.mxu0
        %v2949 = vmul.f32 %v2944, 0.35355338
        %v2950 = vadd.f32 %v2949, %v975
        %v2951 = vsel %vm1055, %v2950, -inf
        %2952 = vmax.xlane.f32.xlu0 %v2951
        %v2953 = vpop.xlane.xlu0 %2952
        %v2954 = vsub.f32 %v2950, %v2953
        %v2955 = vmul.f32 %v2954, 1.442695
        %v2956 = vpow.pop %v2955
        %v2957 = vsel %vm1055, %v2956, 0.0
        %2958 = vadd.xlane.f32.xlu0 %v2957
        %v2959 = vpop.xlane.xlu0 %2958
        %v2960 = vrcp.pop %v2959
        %v2961 = vmul.f32 %v2956, %v2960
        %v2962 = vpack.c.bf16 %v2961, %v2961
        %2963 = vrot.lane.b32.xlu0 %v2563, 40
        %v2964 = vpop.permute.xlu0 %2963
        %v2966 = vsel %vm1055, %v2962, 0
        %v2969 = vsel %vm1121, %v2964, 0
        %2971 = vmatprep.subr.bf16.mxu0 0
        %2972 = vmatpush1.bf16.msra.mxu0 %v2969
        %2973 = vmatprep.subr.bf16.mxu0 0
        %2974 = vmatpush1.bf16.msra.mxu0 0
        %2975 = vmatprep.subr.bf16.mxu0 0
        %2976 = vmatpush1.bf16.msra.mxu0 0
        %2977 = vmatprep.subr.bf16.mxu0 0
        %2978 = vmatpush1.bf16.msra.mxu0 0
        %2979 = vmatprep.subr.bf16.mxu0 0
        %2980 = vmatpush1.bf16.msra.mxu0 0
        %2981 = vmatprep.subr.bf16.mxu0 0
        %2982 = vmatpush1.bf16.msra.mxu0 0
        %2983 = vmatprep.subr.bf16.mxu0 0
        %2984 = vmatpush1.bf16.msra.mxu0 0
        %2985 = vmatprep.subr.bf16.mxu0 0
        %2986 = vmatpush1.bf16.msra.mxu0 0
        %2987 = vmatprep.subr.bf16.mxu0 0
        %2988 = vmatpush1.bf16.msra.mxu0 0
        %2989 = vmatprep.subr.bf16.mxu0 0
        %2990 = vmatpush1.bf16.msra.mxu0 0
        %2991 = vmatprep.subr.bf16.mxu0 0
        %2992 = vmatpush1.bf16.msra.mxu0 0
        %2993 = vmatprep.subr.bf16.mxu0 0
        %2994 = vmatpush1.bf16.msra.mxu0 0
        %2995 = vmatprep.subr.bf16.mxu0 0
        %2996 = vmatpush1.bf16.msra.mxu0 0
        %2997 = vmatprep.subr.bf16.mxu0 0
        %2998 = vmatpush1.bf16.msra.mxu0 0
        %2999 = vmatprep.subr.bf16.mxu0 0
        %3000 = vmatpush1.bf16.msra.mxu0 0
        %3001 = vmatprep.subr.bf16.mxu0 0
        %3002 = vmatpush1.bf16.msra.mxu0 0
        %3003 = vmatprep.mubr.bf16.mxu0 0
        %3004 = vmatmul.mubr.bf16.gmra.mrb[0].mxu0 %v2966
        %v3005 = vpop.f32.mrb[0].mxu0
        %v3006 = vadd.f32 0.0, %v3005
        %v3007 = vpop.f32.mrb[0].mxu0
        %v3008 = vpop.f32.mrb[0].mxu0
        %v3009 = vpop.f32.mrb[0].mxu0
        %3010 = vdwg.mxu0
        %3012 = vrot.lane.b32.xlu0 %v2782, 8
        %v3013 = vpop.permute.xlu0 %3012
        %3016 = vrot.lane.b32.xlu0 %v2894, 16
        %v3017 = vpop.permute.xlu0 %3016
        %3020 = vrot.lane.b32.xlu0 %v3006, 24
        %v3021 = vpop.permute.xlu0 %3020
        %v3023 = vsel %vm1055, %v2670, %v3013
        %v3024 = vsel %vm1514, %v3023, %v3017
        %v3025 = vsel %vm1516, %v3024, %v3021
        %v3026 = vpack.c.bf16 %v3025, %v3025
        %v3028 = vlaneseq
        %v3029 = vshrl.u32 %v3028, 7
        %v3030 = vsub.s32 0, %v3029
        %v3031 = vrot.slane %v2562, %v3030
        %v3037 = vunpack.c.l.b16 %v2557
        %v3038 = vunpack.c.l.b16 %v2558
        %v3039 = vunpack.c.l.b16 %v2559
        %v3040 = vunpack.c.l.b16 %v2560
        %v3041 = vpack.c.b16 %v3038, %v3037
        %v3042 = vpack.c.b16 %v3040, %v3039
        %v3046 = vsel %vm1002, %v3026, 0
        %3048 = vmatprep.subr.bf16.mxu0 0
        %3049 = vmatpush1.bf16.msra.mxu0 %v3041
        %3050 = vmatprep.subr.bf16.mxu0 0
        %3051 = vmatpush1.bf16.msra.mxu0 %v3042
        %3052 = vmatprep.subr.bf16.mxu0 0
        %3053 = vmatpush1.bf16.msra.mxu0 0
        %3054 = vmatprep.subr.bf16.mxu0 0
        %3055 = vmatpush1.bf16.msra.mxu0 0
        %3056 = vmatprep.subr.bf16.mxu0 0
        %3057 = vmatpush1.bf16.msra.mxu0 0
        %3058 = vmatprep.subr.bf16.mxu0 0
        %3059 = vmatpush1.bf16.msra.mxu0 0
        %3060 = vmatprep.subr.bf16.mxu0 0
        %3061 = vmatpush1.bf16.msra.mxu0 0
        %3062 = vmatprep.subr.bf16.mxu0 0
        %3063 = vmatpush1.bf16.msra.mxu0 0
        %3064 = vmatprep.subr.bf16.mxu0 0
        %3065 = vmatpush1.bf16.msra.mxu0 0
        %3066 = vmatprep.subr.bf16.mxu0 0
        %3067 = vmatpush1.bf16.msra.mxu0 0
        %3068 = vmatprep.subr.bf16.mxu0 0
        %3069 = vmatpush1.bf16.msra.mxu0 0
        %3070 = vmatprep.subr.bf16.mxu0 0
        %3071 = vmatpush1.bf16.msra.mxu0 0
        %3072 = vmatprep.subr.bf16.mxu0 0
        %3073 = vmatpush1.bf16.msra.mxu0 0
        %3074 = vmatprep.subr.bf16.mxu0 0
        %3075 = vmatpush1.bf16.msra.mxu0 0
        %3076 = vmatprep.subr.bf16.mxu0 0
        %3077 = vmatpush1.bf16.msra.mxu0 0
        %3078 = vmatprep.subr.bf16.mxu0 0
        %3079 = vmatpush1.bf16.msra.mxu0 0
        %3080 = vmatprep.mubr.bf16.mxu0 0
        %3081 = vmatmul.mubr.bf16.gmra.mrb[0].mxu0 %v3046
        %v3082 = vpop.f32.mrb[0].mxu0
        %v3083 = vadd.f32 %v3031, %v3082
        %v3084 = vpop.f32.mrb[0].mxu0
        %v3085 = vpop.f32.mrb[0].mxu0
        %v3086 = vpop.f32.mrb[0].mxu0
        %3087 = vdwg.mxu0
        %s3088 = scalar_lea.vmem %s19, 1
        %v3089 = vld [vmem:[%s3088] sm:$0x1]
        %s3090 = scalar_lea.vmem %s21, 1
        %v3091 = vld [vmem:[%s3090] sm:$0x1]
        %v3092 = vadd.f32 %v3083, %v2486
        %v3093 = vsel %vm1002, %v3092, 0.0
        %3094 = vadd.xlane.f32.xlu0 %v3093
        %v3095 = vpop.xlane.xlu0 %3094
        %v3096 = vmul.f32 %v3095, %v1586
        %v3097 = vsub.f32 %v3092, %v3096
        %v3098 = vmul.f32 %v3097, %v3097
        %v3099 = vsel %vm1002, %v3098, 0.0
        %3100 = vadd.xlane.f32.xlu0 %v3099
        %v3101 = vpop.xlane.xlu0 %3100
        %v3102 = vmul.f32 %v3101, %v1586
        %v3103 = vadd.f32 %v3102, 1e-05
        %v3104 = vrsqrt.pop %v3103
        %v3105 = vmul.f32 %v3097, %v3104
        %v3107 = vlaneseq
        %v3108 = vshrl.u32 %v3107, 7
        %v3109 = vsub.s32 0, %v3108
        %v3110 = vrot.slane %v3089, %v3109
        %v3112 = vmul.f32 %v3105, %v3110
        %v3114 = vlaneseq
        %v3115 = vshrl.u32 %v3114, 7
        %v3116 = vsub.s32 0, %v3115
        %v3117 = vrot.slane %v3091, %v3116
        %v3119 = vadd.f32 %v3112, %v3117
        %s3120 = scalar_lea.vmem %s23, 16
        %v3121 = vld [vmem:[%s3120] sm:$0xf]
        %v3122 = vld [vmem:[%s3120 + $0x4] sm:$0xf]
        %v3123 = vld [vmem:[%s3120 + $0x8] sm:$0xf]
        %v3124 = vld [vmem:[%s3120 + $0xc] sm:$0xf]
        %v3125 = vpack.c.bf16 %v3119, %v3119
        %s3126 = scalar_lea.vmem %s25, 1
        %v3127 = vld [vmem:[%s3126] sm:$0x1]
        %v3129 = vlaneseq
        %v3130 = vshrl.u32 %v3129, 7
        %v3131 = vsub.s32 0, %v3130
        %v3132 = vrot.slane %v3127, %v3131
        %v3138 = vunpack.c.l.b16 %v3121
        %v3139 = vunpack.c.l.b16 %v3122
        %v3140 = vunpack.c.l.b16 %v3123
        %v3141 = vunpack.c.l.b16 %v3124
        %v3142 = vpack.c.b16 %v3139, %v3138
        %v3143 = vpack.c.b16 %v3141, %v3140
        %v3147 = vsel %vm1002, %v3125, 0
        %3149 = vmatprep.subr.bf16.mxu0 0
        %3150 = vmatpush1.bf16.msra.mxu0 %v3142
        %3151 = vmatprep.subr.bf16.mxu0 0
        %3152 = vmatpush1.bf16.msra.mxu0 %v3143
        %3153 = vmatprep.subr.bf16.mxu0 0
        %3154 = vmatpush1.bf16.msra.mxu0 0
        %3155 = vmatprep.subr.bf16.mxu0 0
        %3156 = vmatpush1.bf16.msra.mxu0 0
        %3157 = vmatprep.subr.bf16.mxu0 0
        %3158 = vmatpush1.bf16.msra.mxu0 0
        %3159 = vmatprep.subr.bf16.mxu0 0
        %3160 = vmatpush1.bf16.msra.mxu0 0
        %3161 = vmatprep.subr.bf16.mxu0 0
        %3162 = vmatpush1.bf16.msra.mxu0 0
        %3163 = vmatprep.subr.bf16.mxu0 0
        %3164 = vmatpush1.bf16.msra.mxu0 0
        %3165 = vmatprep.subr.bf16.mxu0 0
        %3166 = vmatpush1.bf16.msra.mxu0 0
        %3167 = vmatprep.subr.bf16.mxu0 0
        %3168 = vmatpush1.bf16.msra.mxu0 0
        %3169 = vmatprep.subr.bf16.mxu0 0
        %3170 = vmatpush1.bf16.msra.mxu0 0
        %3171 = vmatprep.subr.bf16.mxu0 0
        %3172 = vmatpush1.bf16.msra.mxu0 0
        %3173 = vmatprep.subr.bf16.mxu0 0
        %3174 = vmatpush1.bf16.msra.mxu0 0
        %3175 = vmatprep.subr.bf16.mxu0 0
        %3176 = vmatpush1.bf16.msra.mxu0 0
        %3177 = vmatprep.subr.bf16.mxu0 0
        %3178 = vmatpush1.bf16.msra.mxu0 0
        %3179 = vmatprep.subr.bf16.mxu0 0
        %3180 = vmatpush1.bf16.msra.mxu0 0
        %3181 = vmatprep.mubr.bf16.mxu0 0
        %3182 = vmatmul.mubr.bf16.gmra.mrb[0].mxu0 %v3147
        %v3183 = vpop.f32.mrb[0].mxu0
        %v3184 = vadd.f32 %v3132, %v3183
        %v3185 = vpop.f32.mrb[0].mxu0
        %v3186 = vpop.f32.mrb[0].mxu0
        %v3187 = vpop.f32.mrb[0].mxu0
        %3188 = vdwg.mxu0
        %s3189 = scalar_lea.vmem %s27, 16
        %v3190 = vld [vmem:[%s3189] sm:$0xf]
        %v3191 = vld [vmem:[%s3189 + $0x4] sm:$0xf]
        %v3192 = vld [vmem:[%s3189 + $0x8] sm:$0xf]
        %v3193 = vld [vmem:[%s3189 + $0xc] sm:$0xf]
        %s3194 = scalar_lea.vmem %s29, 1
        %v3195 = vld [vmem:[%s3194] sm:$0x1]
        %v3197 = vlaneseq
        %v3198 = vshrl.u32 %v3197, 7
        %v3199 = vsub.s32 0, %v3198
        %v3200 = vrot.slane %v3195, %v3199
        %v3206 = vunpack.c.l.b16 %v3190
        %v3207 = vunpack.c.l.b16 %v3191
        %v3208 = vunpack.c.l.b16 %v3192
        %v3209 = vunpack.c.l.b16 %v3193
        %v3210 = vpack.c.b16 %v3207, %v3206
        %v3211 = vpack.c.b16 %v3209, %v3208
        %3214 = vmatprep.subr.bf16.mxu0 0
        %3215 = vmatpush1.bf16.msra.mxu0 %v3210
        %3216 = vmatprep.subr.bf16.mxu0 0
        %3217 = vmatpush1.bf16.msra.mxu0 %v3211
        %3218 = vmatprep.subr.bf16.mxu0 0
        %3219 = vmatpush1.bf16.msra.mxu0 0
        %3220 = vmatprep.subr.bf16.mxu0 0
        %3221 = vmatpush1.bf16.msra.mxu0 0
        %3222 = vmatprep.subr.bf16.mxu0 0
        %3223 = vmatpush1.bf16.msra.mxu0 0
        %3224 = vmatprep.subr.bf16.mxu0 0
        %3225 = vmatpush1.bf16.msra.mxu0 0
        %3226 = vmatprep.subr.bf16.mxu0 0
        %3227 = vmatpush1.bf16.msra.mxu0 0
        %3228 = vmatprep.subr.bf16.mxu0 0
        %3229 = vmatpush1.bf16.msra.mxu0 0
        %3230 = vmatprep.subr.bf16.mxu0 0
        %3231 = vmatpush1.bf16.msra.mxu0 0
        %3232 = vmatprep.subr.bf16.mxu0 0
        %3233 = vmatpush1.bf16.msra.mxu0 0
        %3234 = vmatprep.subr.bf16.mxu0 0
        %3235 = vmatpush1.bf16.msra.mxu0 0
        %3236 = vmatprep.subr.bf16.mxu0 0
        %3237 = vmatpush1.bf16.msra.mxu0 0
        %3238 = vmatprep.subr.bf16.mxu0 0
        %3239 = vmatpush1.bf16.msra.mxu0 0
        %3240 = vmatprep.subr.bf16.mxu0 0
        %3241 = vmatpush1.bf16.msra.mxu0 0
        %3242 = vmatprep.subr.bf16.mxu0 0
        %3243 = vmatpush1.bf16.msra.mxu0 0
        %3244 = vmatprep.subr.bf16.mxu0 0
        %3245 = vmatpush1.bf16.msra.mxu0 0
        %3246 = vmatprep.mubr.bf16.mxu0 0
        %3247 = vmatmul.mubr.bf16.gmra.mrb[0].mxu0 %v1703
        %v3248 = vpop.f32.mrb[0].mxu0
        %v3249 = vadd.f32 %v3200, %v3248
        %v3250 = vpop.f32.mrb[0].mxu0
        %v3251 = vpop.f32.mrb[0].mxu0
        %v3252 = vpop.f32.mrb[0].mxu0
        %3253 = vdwg.mxu0
        %s3254 = scalar_lea.vmem %s31, 16
        %v3255 = vld [vmem:[%s3254] sm:$0xf]
        %v3256 = vld [vmem:[%s3254 + $0x4] sm:$0xf]
        %v3257 = vld [vmem:[%s3254 + $0x8] sm:$0xf]
        %v3258 = vld [vmem:[%s3254 + $0xc] sm:$0xf]
        %s3259 = scalar_lea.vmem %s33, 1
        %v3260 = vld [vmem:[%s3259] sm:$0x1]
        %v3261 = vpack.c.bf16 %v3184, %v3184
        %v3262 = vpack.c.bf16 %v3249, %v3249
        %v3264 = vsel %vm1055, %v3261, 0
        %v3267 = vsel %vm1055, %v3262, 0
        %3269 = vmatprep.subr.bf16.mxu0 0
        %3270 = vmatpush1.bf16.xpose.msra.mxu0 %v3267
        %3271 = vmatprep.subr.bf16.mxu0 0
        %3272 = vmatpush1.bf16.xpose.msra.mxu0 0
        %3273 = vmatprep.subr.bf16.mxu0 0
        %3274 = vmatpush1.bf16.xpose.msra.mxu0 0
        %3275 = vmatprep.subr.bf16.mxu0 0
        %3276 = vmatpush1.bf16.xpose.msra.mxu0 0
        %3277 = vmatprep.subr.bf16.mxu0 0
        %3278 = vmatpush1.bf16.xpose.msra.mxu0 0
        %3279 = vmatprep.subr.bf16.mxu0 0
        %3280 = vmatpush1.bf16.xpose.msra.mxu0 0
        %3281 = vmatprep.subr.bf16.mxu0 0
        %3282 = vmatpush1.bf16.xpose.msra.mxu0 0
        %3283 = vmatprep.subr.bf16.mxu0 0
        %3284 = vmatpush1.bf16.xpose.msra.mxu0 0
        %3285 = vmatprep.subr.bf16.mxu0 0
        %3286 = vmatpush1.bf16.xpose.msra.mxu0 0
        %3287 = vmatprep.subr.bf16.mxu0 0
        %3288 = vmatpush1.bf16.xpose.msra.mxu0 0
        %3289 = vmatprep.subr.bf16.mxu0 0
        %3290 = vmatpush1.bf16.xpose.msra.mxu0 0
        %3291 = vmatprep.subr.bf16.mxu0 0
        %3292 = vmatpush1.bf16.xpose.msra.mxu0 0
        %3293 = vmatprep.subr.bf16.mxu0 0
        %3294 = vmatpush1.bf16.xpose.msra.mxu0 0
        %3295 = vmatprep.subr.bf16.mxu0 0
        %3296 = vmatpush1.bf16.xpose.msra.mxu0 0
        %3297 = vmatprep.subr.bf16.mxu0 0
        %3298 = vmatpush1.bf16.xpose.msra.mxu0 0
        %3299 = vmatprep.subr.bf16.mxu0 0
        %3300 = vmatpush1.bf16.xpose.msra.mxu0 0
        %3301 = vmatprep.mubr.bf16.mxu0 0
        %3302 = vmatmul.mubr.bf16.gmra.mrb[0].mxu0 %v3264
        %v3303 = vpop.f32.mrb[0].mxu0
        %v3304 = vadd.f32 0.0, %v3303
        %v3305 = vpop.f32.mrb[0].mxu0
        %v3306 = vpop.f32.mrb[0].mxu0
        %v3307 = vpop.f32.mrb[0].mxu0
        %3308 = vdwg.mxu0
        %v3309 = vmul.f32 %v3304, 0.35355338
        %v3310 = vadd.f32 %v3309, %v976
        %v3311 = vsel %vm1055, %v3310, -inf
        %3312 = vmax.xlane.f32.xlu0 %v3311
        %v3313 = vpop.xlane.xlu0 %3312
        %v3314 = vsub.f32 %v3310, %v3313
        %v3315 = vmul.f32 %v3314, 1.442695
        %v3316 = vpow.pop %v3315
        %v3317 = vsel %vm1055, %v3316, 0.0
        %3318 = vadd.xlane.f32.xlu0 %v3317
        %v3319 = vpop.xlane.xlu0 %3318
        %v3320 = vrcp.pop %v3319
        %v3321 = vmul.f32 %v3316, %v3320
        %v3322 = vpack.c.bf16 %v3321, %v3321
        %3324 = vrot.lane.b32.xlu0 %v3262, 96
        %v3325 = vpop.permute.xlu0 %3324
        %v3327 = vsel %vm1055, %v3322, 0
        %v3330 = vsel %vm1121, %v3325, 0
        %3332 = vmatprep.subr.bf16.mxu0 0
        %3333 = vmatpush1.bf16.msra.mxu0 %v3330
        %3334 = vmatprep.subr.bf16.mxu0 0
        %3335 = vmatpush1.bf16.msra.mxu0 0
        %3336 = vmatprep.subr.bf16.mxu0 0
        %3337 = vmatpush1.bf16.msra.mxu0 0
        %3338 = vmatprep.subr.bf16.mxu0 0
        %3339 = vmatpush1.bf16.msra.mxu0 0
        %3340 = vmatprep.subr.bf16.mxu0 0
        %3341 = vmatpush1.bf16.msra.mxu0 0
        %3342 = vmatprep.subr.bf16.mxu0 0
        %3343 = vmatpush1.bf16.msra.mxu0 0
        %3344 = vmatprep.subr.bf16.mxu0 0
        %3345 = vmatpush1.bf16.msra.mxu0 0
        %3346 = vmatprep.subr.bf16.mxu0 0
        %3347 = vmatpush1.bf16.msra.mxu0 0
        %3348 = vmatprep.subr.bf16.mxu0 0
        %3349 = vmatpush1.bf16.msra.mxu0 0
        %3350 = vmatprep.subr.bf16.mxu0 0
        %3351 = vmatpush1.bf16.msra.mxu0 0
        %3352 = vmatprep.subr.bf16.mxu0 0
        %3353 = vmatpush1.bf16.msra.mxu0 0
        %3354 = vmatprep.subr.bf16.mxu0 0
        %3355 = vmatpush1.bf16.msra.mxu0 0
        %3356 = vmatprep.subr.bf16.mxu0 0
        %3357 = vmatpush1.bf16.msra.mxu0 0
        %3358 = vmatprep.subr.bf16.mxu0 0
        %3359 = vmatpush1.bf16.msra.mxu0 0
        %3360 = vmatprep.subr.bf16.mxu0 0
        %3361 = vmatpush1.bf16.msra.mxu0 0
        %3362 = vmatprep.subr.bf16.mxu0 0
        %3363 = vmatpush1.bf16.msra.mxu0 0
        %3364 = vmatprep.mubr.bf16.mxu0 0
        %3365 = vmatmul.mubr.bf16.gmra.mrb[0].mxu0 %v3327
        %v3366 = vpop.f32.mrb[0].mxu0
        %v3367 = vadd.f32 0.0, %v3366
        %v3368 = vpop.f32.mrb[0].mxu0
        %v3369 = vpop.f32.mrb[0].mxu0
        %v3370 = vpop.f32.mrb[0].mxu0
        %3371 = vdwg.mxu0
        %3373 = vrot.lane.b32.xlu0 %v3261, 120
        %v3374 = vpop.permute.xlu0 %3373
        %3375 = vrot.lane.b32.xlu0 %v3262, 120
        %v3376 = vpop.permute.xlu0 %3375
        %v3378 = vsel %vm1055, %v3374, 0
        %v3381 = vsel %vm1055, %v3376, 0
        %3383 = vmatprep.subr.bf16.mxu0 0
        %3384 = vmatpush1.bf16.xpose.msra.mxu0 %v3381
        %3385 = vmatprep.subr.bf16.mxu0 0
        %3386 = vmatpush1.bf16.xpose.msra.mxu0 0
        %3387 = vmatprep.subr.bf16.mxu0 0
        %3388 = vmatpush1.bf16.xpose.msra.mxu0 0
        %3389 = vmatprep.subr.bf16.mxu0 0
        %3390 = vmatpush1.bf16.xpose.msra.mxu0 0
        %3391 = vmatprep.subr.bf16.mxu0 0
        %3392 = vmatpush1.bf16.xpose.msra.mxu0 0
        %3393 = vmatprep.subr.bf16.mxu0 0
        %3394 = vmatpush1.bf16.xpose.msra.mxu0 0
        %3395 = vmatprep.subr.bf16.mxu0 0
        %3396 = vmatpush1.bf16.xpose.msra.mxu0 0
        %3397 = vmatprep.subr.bf16.mxu0 0
        %3398 = vmatpush1.bf16.xpose.msra.mxu0 0
        %3399 = vmatprep.subr.bf16.mxu0 0
        %3400 = vmatpush1.bf16.xpose.msra.mxu0 0
        %3401 = vmatprep.subr.bf16.mxu0 0
        %3402 = vmatpush1.bf16.xpose.msra.mxu0 0
        %3403 = vmatprep.subr.bf16.mxu0 0
        %3404 = vmatpush1.bf16.xpose.msra.mxu0 0
        %3405 = vmatprep.subr.bf16.mxu0 0
        %3406 = vmatpush1.bf16.xpose.msra.mxu0 0
        %3407 = vmatprep.subr.bf16.mxu0 0
        %3408 = vmatpush1.bf16.xpose.msra.mxu0 0
        %3409 = vmatprep.subr.bf16.mxu0 0
        %3410 = vmatpush1.bf16.xpose.msra.mxu0 0
        %3411 = vmatprep.subr.bf16.mxu0 0
        %3412 = vmatpush1.bf16.xpose.msra.mxu0 0
        %3413 = vmatprep.subr.bf16.mxu0 0
        %3414 = vmatpush1.bf16.xpose.msra.mxu0 0
        %3415 = vmatprep.mubr.bf16.mxu0 0
        %3416 = vmatmul.mubr.bf16.gmra.mrb[0].mxu0 %v3378
        %v3417 = vpop.f32.mrb[0].mxu0
        %v3418 = vadd.f32 0.0, %v3417
        %v3419 = vpop.f32.mrb[0].mxu0
        %v3420 = vpop.f32.mrb[0].mxu0
        %v3421 = vpop.f32.mrb[0].mxu0
        %3422 = vdwg.mxu0
        %v3423 = vmul.f32 %v3418, 0.35355338
        %v3424 = vadd.f32 %v3423, %v976
        %v3425 = vsel %vm1055, %v3424, -inf
        %3426 = vmax.xlane.f32.xlu0 %v3425
        %v3427 = vpop.xlane.xlu0 %3426
        %v3428 = vsub.f32 %v3424, %v3427
        %v3429 = vmul.f32 %v3428, 1.442695
        %v3430 = vpow.pop %v3429
        %v3431 = vsel %vm1055, %v3430, 0.0
        %3432 = vadd.xlane.f32.xlu0 %v3431
        %v3433 = vpop.xlane.xlu0 %3432
        %v3434 = vrcp.pop %v3433
        %v3435 = vmul.f32 %v3430, %v3434
        %v3436 = vpack.c.bf16 %v3435, %v3435
        %3437 = vrot.lane.b32.xlu0 %v3262, 88
        %v3438 = vpop.permute.xlu0 %3437
        %v3440 = vsel %vm1055, %v3436, 0
        %v3443 = vsel %vm1121, %v3438, 0
        %3445 = vmatprep.subr.bf16.mxu0 0
        %3446 = vmatpush1.bf16.msra.mxu0 %v3443
        %3447 = vmatprep.subr.bf16.mxu0 0
        %3448 = vmatpush1.bf16.msra.mxu0 0
        %3449 = vmatprep.subr.bf16.mxu0 0
        %3450 = vmatpush1.bf16.msra.mxu0 0
        %3451 = vmatprep.subr.bf16.mxu0 0
        %3452 = vmatpush1.bf16.msra.mxu0 0
        %3453 = vmatprep.subr.bf16.mxu0 0
        %3454 = vmatpush1.bf16.msra.mxu0 0
        %3455 = vmatprep.subr.bf16.mxu0 0
        %3456 = vmatpush1.bf16.msra.mxu0 0
        %3457 = vmatprep.subr.bf16.mxu0 0
        %3458 = vmatpush1.bf16.msra.mxu0 0
        %3459 = vmatprep.subr.bf16.mxu0 0
        %3460 = vmatpush1.bf16.msra.mxu0 0
        %3461 = vmatprep.subr.bf16.mxu0 0
        %3462 = vmatpush1.bf16.msra.mxu0 0
        %3463 = vmatprep.subr.bf16.mxu0 0
        %3464 = vmatpush1.bf16.msra.mxu0 0
        %3465 = vmatprep.subr.bf16.mxu0 0
        %3466 = vmatpush1.bf16.msra.mxu0 0
        %3467 = vmatprep.subr.bf16.mxu0 0
        %3468 = vmatpush1.bf16.msra.mxu0 0
        %3469 = vmatprep.subr.bf16.mxu0 0
        %3470 = vmatpush1.bf16.msra.mxu0 0
        %3471 = vmatprep.subr.bf16.mxu0 0
        %3472 = vmatpush1.bf16.msra.mxu0 0
        %3473 = vmatprep.subr.bf16.mxu0 0
        %3474 = vmatpush1.bf16.msra.mxu0 0
        %3475 = vmatprep.subr.bf16.mxu0 0
        %3476 = vmatpush1.bf16.msra.mxu0 0
        %3477 = vmatprep.mubr.bf16.mxu0 0
        %3478 = vmatmul.mubr.bf16.gmra.mrb[0].mxu0 %v3440
        %v3479 = vpop.f32.mrb[0].mxu0
        %v3480 = vadd.f32 0.0, %v3479
        %v3481 = vpop.f32.mrb[0].mxu0
        %v3482 = vpop.f32.mrb[0].mxu0
        %v3483 = vpop.f32.mrb[0].mxu0
        %3484 = vdwg.mxu0
        %3485 = vrot.lane.b32.xlu0 %v3261, 112
        %v3486 = vpop.permute.xlu0 %3485
        %3487 = vrot.lane.b32.xlu0 %v3262, 112
        %v3488 = vpop.permute.xlu0 %3487
        %v3490 = vsel %vm1055, %v3486, 0
        %v3493 = vsel %vm1055, %v3488, 0
        %3495 = vmatprep.subr.bf16.mxu0 0
        %3496 = vmatpush1.bf16.xpose.msra.mxu0 %v3493
        %3497 = vmatprep.subr.bf16.mxu0 0
        %3498 = vmatpush1.bf16.xpose.msra.mxu0 0
        %3499 = vmatprep.subr.bf16.mxu0 0
        %3500 = vmatpush1.bf16.xpose.msra.mxu0 0
        %3501 = vmatprep.subr.bf16.mxu0 0
        %3502 = vmatpush1.bf16.xpose.msra.mxu0 0
        %3503 = vmatprep.subr.bf16.mxu0 0
        %3504 = vmatpush1.bf16.xpose.msra.mxu0 0
        %3505 = vmatprep.subr.bf16.mxu0 0
        %3506 = vmatpush1.bf16.xpose.msra.mxu0 0
        %3507 = vmatprep.subr.bf16.mxu0 0
        %3508 = vmatpush1.bf16.xpose.msra.mxu0 0
        %3509 = vmatprep.subr.bf16.mxu0 0
        %3510 = vmatpush1.bf16.xpose.msra.mxu0 0
        %3511 = vmatprep.subr.bf16.mxu0 0
        %3512 = vmatpush1.bf16.xpose.msra.mxu0 0
        %3513 = vmatprep.subr.bf16.mxu0 0
        %3514 = vmatpush1.bf16.xpose.msra.mxu0 0
        %3515 = vmatprep.subr.bf16.mxu0 0
        %3516 = vmatpush1.bf16.xpose.msra.mxu0 0
        %3517 = vmatprep.subr.bf16.mxu0 0
        %3518 = vmatpush1.bf16.xpose.msra.mxu0 0
        %3519 = vmatprep.subr.bf16.mxu0 0
        %3520 = vmatpush1.bf16.xpose.msra.mxu0 0
        %3521 = vmatprep.subr.bf16.mxu0 0
        %3522 = vmatpush1.bf16.xpose.msra.mxu0 0
        %3523 = vmatprep.subr.bf16.mxu0 0
        %3524 = vmatpush1.bf16.xpose.msra.mxu0 0
        %3525 = vmatprep.subr.bf16.mxu0 0
        %3526 = vmatpush1.bf16.xpose.msra.mxu0 0
        %3527 = vmatprep.mubr.bf16.mxu0 0
        %3528 = vmatmul.mubr.bf16.gmra.mrb[0].mxu0 %v3490
        %v3529 = vpop.f32.mrb[0].mxu0
        %v3530 = vadd.f32 0.0, %v3529
        %v3531 = vpop.f32.mrb[0].mxu0
        %v3532 = vpop.f32.mrb[0].mxu0
        %v3533 = vpop.f32.mrb[0].mxu0
        %3534 = vdwg.mxu0
        %v3535 = vmul.f32 %v3530, 0.35355338
        %v3536 = vadd.f32 %v3535, %v976
        %v3537 = vsel %vm1055, %v3536, -inf
        %3538 = vmax.xlane.f32.xlu0 %v3537
        %v3539 = vpop.xlane.xlu0 %3538
        %v3540 = vsub.f32 %v3536, %v3539
        %v3541 = vmul.f32 %v3540, 1.442695
        %v3542 = vpow.pop %v3541
        %v3543 = vsel %vm1055, %v3542, 0.0
        %3544 = vadd.xlane.f32.xlu0 %v3543
        %v3545 = vpop.xlane.xlu0 %3544
        %v3546 = vrcp.pop %v3545
        %v3547 = vmul.f32 %v3542, %v3546
        %v3548 = vpack.c.bf16 %v3547, %v3547
        %3549 = vrot.lane.b32.xlu0 %v3262, 80
        %v3550 = vpop.permute.xlu0 %3549
        %v3552 = vsel %vm1055, %v3548, 0
        %v3555 = vsel %vm1121, %v3550, 0
        %3557 = vmatprep.subr.bf16.mxu0 0
        %3558 = vmatpush1.bf16.msra.mxu0 %v3555
        %3559 = vmatprep.subr.bf16.mxu0 0
        %3560 = vmatpush1.bf16.msra.mxu0 0
        %3561 = vmatprep.subr.bf16.mxu0 0
        %3562 = vmatpush1.bf16.msra.mxu0 0
        %3563 = vmatprep.subr.bf16.mxu0 0
        %3564 = vmatpush1.bf16.msra.mxu0 0
        %3565 = vmatprep.subr.bf16.mxu0 0
        %3566 = vmatpush1.bf16.msra.mxu0 0
        %3567 = vmatprep.subr.bf16.mxu0 0
        %3568 = vmatpush1.bf16.msra.mxu0 0
        %3569 = vmatprep.subr.bf16.mxu0 0
        %3570 = vmatpush1.bf16.msra.mxu0 0
        %3571 = vmatprep.subr.bf16.mxu0 0
        %3572 = vmatpush1.bf16.msra.mxu0 0
        %3573 = vmatprep.subr.bf16.mxu0 0
        %3574 = vmatpush1.bf16.msra.mxu0 0
        %3575 = vmatprep.subr.bf16.mxu0 0
        %3576 = vmatpush1.bf16.msra.mxu0 0
        %3577 = vmatprep.subr.bf16.mxu0 0
        %3578 = vmatpush1.bf16.msra.mxu0 0
        %3579 = vmatprep.subr.bf16.mxu0 0
        %3580 = vmatpush1.bf16.msra.mxu0 0
        %3581 = vmatprep.subr.bf16.mxu0 0
        %3582 = vmatpush1.bf16.msra.mxu0 0
        %3583 = vmatprep.subr.bf16.mxu0 0
        %3584 = vmatpush1.bf16.msra.mxu0 0
        %3585 = vmatprep.subr.bf16.mxu0 0
        %3586 = vmatpush1.bf16.msra.mxu0 0
        %3587 = vmatprep.subr.bf16.mxu0 0
        %3588 = vmatpush1.bf16.msra.mxu0 0
        %3589 = vmatprep.mubr.bf16.mxu0 0
        %3590 = vmatmul.mubr.bf16.gmra.mrb[0].mxu0 %v3552
        %v3591 = vpop.f32.mrb[0].mxu0
        %v3592 = vadd.f32 0.0, %v3591
        %v3593 = vpop.f32.mrb[0].mxu0
        %v3594 = vpop.f32.mrb[0].mxu0
        %v3595 = vpop.f32.mrb[0].mxu0
        %3596 = vdwg.mxu0
        %3597 = vrot.lane.b32.xlu0 %v3261, 104
        %v3598 = vpop.permute.xlu0 %3597
        %3599 = vrot.lane.b32.xlu0 %v3262, 104
        %v3600 = vpop.permute.xlu0 %3599
        %v3602 = vsel %vm1055, %v3598, 0
        %v3605 = vsel %vm1055, %v3600, 0
        %3607 = vmatprep.subr.bf16.mxu0 0
        %3608 = vmatpush1.bf16.xpose.msra.mxu0 %v3605
        %3609 = vmatprep.subr.bf16.mxu0 0
        %3610 = vmatpush1.bf16.xpose.msra.mxu0 0
        %3611 = vmatprep.subr.bf16.mxu0 0
        %3612 = vmatpush1.bf16.xpose.msra.mxu0 0
        %3613 = vmatprep.subr.bf16.mxu0 0
        %3614 = vmatpush1.bf16.xpose.msra.mxu0 0
        %3615 = vmatprep.subr.bf16.mxu0 0
        %3616 = vmatpush1.bf16.xpose.msra.mxu0 0
        %3617 = vmatprep.subr.bf16.mxu0 0
        %3618 = vmatpush1.bf16.xpose.msra.mxu0 0
        %3619 = vmatprep.subr.bf16.mxu0 0
        %3620 = vmatpush1.bf16.xpose.msra.mxu0 0
        %3621 = vmatprep.subr.bf16.mxu0 0
        %3622 = vmatpush1.bf16.xpose.msra.mxu0 0
        %3623 = vmatprep.subr.bf16.mxu0 0
        %3624 = vmatpush1.bf16.xpose.msra.mxu0 0
        %3625 = vmatprep.subr.bf16.mxu0 0
        %3626 = vmatpush1.bf16.xpose.msra.mxu0 0
        %3627 = vmatprep.subr.bf16.mxu0 0
        %3628 = vmatpush1.bf16.xpose.msra.mxu0 0
        %3629 = vmatprep.subr.bf16.mxu0 0
        %3630 = vmatpush1.bf16.xpose.msra.mxu0 0
        %3631 = vmatprep.subr.bf16.mxu0 0
        %3632 = vmatpush1.bf16.xpose.msra.mxu0 0
        %3633 = vmatprep.subr.bf16.mxu0 0
        %3634 = vmatpush1.bf16.xpose.msra.mxu0 0
        %3635 = vmatprep.subr.bf16.mxu0 0
        %3636 = vmatpush1.bf16.xpose.msra.mxu0 0
        %3637 = vmatprep.subr.bf16.mxu0 0
        %3638 = vmatpush1.bf16.xpose.msra.mxu0 0
        %3639 = vmatprep.mubr.bf16.mxu0 0
        %3640 = vmatmul.mubr.bf16.gmra.mrb[0].mxu0 %v3602
        %v3641 = vpop.f32.mrb[0].mxu0
        %v3642 = vadd.f32 0.0, %v3641
        %v3643 = vpop.f32.mrb[0].mxu0
        %v3644 = vpop.f32.mrb[0].mxu0
        %v3645 = vpop.f32.mrb[0].mxu0
        %3646 = vdwg.mxu0
        %v3647 = vmul.f32 %v3642, 0.35355338
        %v3648 = vadd.f32 %v3647, %v976
        %v3649 = vsel %vm1055, %v3648, -inf
        %3650 = vmax.xlane.f32.xlu0 %v3649
        %v3651 = vpop.xlane.xlu0 %3650
        %v3652 = vsub.f32 %v3648, %v3651
        %v3653 = vmul.f32 %v3652, 1.442695
        %v3654 = vpow.pop %v3653
        %v3655 = vsel %vm1055, %v3654, 0.0
        %3656 = vadd.xlane.f32.xlu0 %v3655
        %v3657 = vpop.xlane.xlu0 %3656
        %v3658 = vrcp.pop %v3657
        %v3659 = vmul.f32 %v3654, %v3658
        %v3660 = vpack.c.bf16 %v3659, %v3659
        %3661 = vrot.lane.b32.xlu0 %v3262, 72
        %v3662 = vpop.permute.xlu0 %3661
        %v3664 = vsel %vm1055, %v3660, 0
        %v3667 = vsel %vm1121, %v3662, 0
        %3669 = vmatprep.subr.bf16.mxu0 0
        %3670 = vmatpush1.bf16.msra.mxu0 %v3667
        %3671 = vmatprep.subr.bf16.mxu0 0
        %3672 = vmatpush1.bf16.msra.mxu0 0
        %3673 = vmatprep.subr.bf16.mxu0 0
        %3674 = vmatpush1.bf16.msra.mxu0 0
        %3675 = vmatprep.subr.bf16.mxu0 0
        %3676 = vmatpush1.bf16.msra.mxu0 0
        %3677 = vmatprep.subr.bf16.mxu0 0
        %3678 = vmatpush1.bf16.msra.mxu0 0
        %3679 = vmatprep.subr.bf16.mxu0 0
        %3680 = vmatpush1.bf16.msra.mxu0 0
        %3681 = vmatprep.subr.bf16.mxu0 0
        %3682 = vmatpush1.bf16.msra.mxu0 0
        %3683 = vmatprep.subr.bf16.mxu0 0
        %3684 = vmatpush1.bf16.msra.mxu0 0
        %3685 = vmatprep.subr.bf16.mxu0 0
        %3686 = vmatpush1.bf16.msra.mxu0 0
        %3687 = vmatprep.subr.bf16.mxu0 0
        %3688 = vmatpush1.bf16.msra.mxu0 0
        %3689 = vmatprep.subr.bf16.mxu0 0
        %3690 = vmatpush1.bf16.msra.mxu0 0
        %3691 = vmatprep.subr.bf16.mxu0 0
        %3692 = vmatpush1.bf16.msra.mxu0 0
        %3693 = vmatprep.subr.bf16.mxu0 0
        %3694 = vmatpush1.bf16.msra.mxu0 0
        %3695 = vmatprep.subr.bf16.mxu0 0
        %3696 = vmatpush1.bf16.msra.mxu0 0
        %3697 = vmatprep.subr.bf16.mxu0 0
        %3698 = vmatpush1.bf16.msra.mxu0 0
        %3699 = vmatprep.subr.bf16.mxu0 0
        %3700 = vmatpush1.bf16.msra.mxu0 0
        %3701 = vmatprep.mubr.bf16.mxu0 0
        %3702 = vmatmul.mubr.bf16.gmra.mrb[0].mxu0 %v3664
        %v3703 = vpop.f32.mrb[0].mxu0
        %v3704 = vadd.f32 0.0, %v3703
        %v3705 = vpop.f32.mrb[0].mxu0
        %v3706 = vpop.f32.mrb[0].mxu0
        %v3707 = vpop.f32.mrb[0].mxu0
        %3708 = vdwg.mxu0
        %3710 = vrot.lane.b32.xlu0 %v3480, 8
        %v3711 = vpop.permute.xlu0 %3710
        %3714 = vrot.lane.b32.xlu0 %v3592, 16
        %v3715 = vpop.permute.xlu0 %3714
        %3718 = vrot.lane.b32.xlu0 %v3704, 24
        %v3719 = vpop.permute.xlu0 %3718
        %v3721 = vsel %vm1055, %v3367, %v3711
        %v3722 = vsel %vm1514, %v3721, %v3715
        %v3723 = vsel %vm1516, %v3722, %v3719
        %v3724 = vpack.c.bf16 %v3723, %v3723
        %v3726 = vlaneseq
        %v3727 = vshrl.u32 %v3726, 7
        %v3728 = vsub.s32 0, %v3727
        %v3729 = vrot.slane %v3260, %v3728
        %v3735 = vunpack.c.l.b16 %v3255
        %v3736 = vunpack.c.l.b16 %v3256
        %v3737 = vunpack.c.l.b16 %v3257
        %v3738 = vunpack.c.l.b16 %v3258
        %v3739 = vpack.c.b16 %v3736, %v3735
        %v3740 = vpack.c.b16 %v3738, %v3737
        %v3744 = vsel %vm1002, %v3724, 0
        %3746 = vmatprep.subr.bf16.mxu0 0
        %3747 = vmatpush1.bf16.msra.mxu0 %v3739
        %3748 = vmatprep.subr.bf16.mxu0 0
        %3749 = vmatpush1.bf16.msra.mxu0 %v3740
        %3750 = vmatprep.subr.bf16.mxu0 0
        %3751 = vmatpush1.bf16.msra.mxu0 0
        %3752 = vmatprep.subr.bf16.mxu0 0
        %3753 = vmatpush1.bf16.msra.mxu0 0
        %3754 = vmatprep.subr.bf16.mxu0 0
        %3755 = vmatpush1.bf16.msra.mxu0 0
        %3756 = vmatprep.subr.bf16.mxu0 0
        %3757 = vmatpush1.bf16.msra.mxu0 0
        %3758 = vmatprep.subr.bf16.mxu0 0
        %3759 = vmatpush1.bf16.msra.mxu0 0
        %3760 = vmatprep.subr.bf16.mxu0 0
        %3761 = vmatpush1.bf16.msra.mxu0 0
        %3762 = vmatprep.subr.bf16.mxu0 0
        %3763 = vmatpush1.bf16.msra.mxu0 0
        %3764 = vmatprep.subr.bf16.mxu0 0
        %3765 = vmatpush1.bf16.msra.mxu0 0
        %3766 = vmatprep.subr.bf16.mxu0 0
        %3767 = vmatpush1.bf16.msra.mxu0 0
        %3768 = vmatprep.subr.bf16.mxu0 0
        %3769 = vmatpush1.bf16.msra.mxu0 0
        %3770 = vmatprep.subr.bf16.mxu0 0
        %3771 = vmatpush1.bf16.msra.mxu0 0
        %3772 = vmatprep.subr.bf16.mxu0 0
        %3773 = vmatpush1.bf16.msra.mxu0 0
        %3774 = vmatprep.subr.bf16.mxu0 0
        %3775 = vmatpush1.bf16.msra.mxu0 0
        %3776 = vmatprep.subr.bf16.mxu0 0
        %3777 = vmatpush1.bf16.msra.mxu0 0
        %3778 = vmatprep.mubr.bf16.mxu0 0
        %3779 = vmatmul.mubr.bf16.gmra.mrb[0].mxu0 %v3744
        %v3780 = vpop.f32.mrb[0].mxu0
        %v3781 = vadd.f32 %v3729, %v3780
        %v3782 = vpop.f32.mrb[0].mxu0
        %v3783 = vpop.f32.mrb[0].mxu0
        %v3784 = vpop.f32.mrb[0].mxu0
        %3785 = vdwg.mxu0
        %s3786 = scalar_lea.vmem %s35, 1
        %v3787 = vld [vmem:[%s3786] sm:$0x1]
        %s3788 = scalar_lea.vmem %s37, 1
        %v3789 = vld [vmem:[%s3788] sm:$0x1]
        %v3790 = vadd.f32 %v3781, %v3119
        %v3791 = vsel %vm1002, %v3790, 0.0
        %3792 = vadd.xlane.f32.xlu0 %v3791
        %v3793 = vpop.xlane.xlu0 %3792
        %v3794 = vmul.f32 %v3793, %v1586
        %v3795 = vsub.f32 %v3790, %v3794
        %v3796 = vmul.f32 %v3795, %v3795
        %v3797 = vsel %vm1002, %v3796, 0.0
        %3798 = vadd.xlane.f32.xlu0 %v3797
        %v3799 = vpop.xlane.xlu0 %3798
        %v3800 = vmul.f32 %v3799, %v1586
        %v3801 = vadd.f32 %v3800, 1e-05
        %v3802 = vrsqrt.pop %v3801
        %v3803 = vmul.f32 %v3795, %v3802
        %v3805 = vlaneseq
        %v3806 = vshrl.u32 %v3805, 7
        %v3807 = vsub.s32 0, %v3806
        %v3808 = vrot.slane %v3787, %v3807
        %v3810 = vmul.f32 %v3803, %v3808
        %v3812 = vlaneseq
        %v3813 = vshrl.u32 %v3812, 7
        %v3814 = vsub.s32 0, %v3813
        %v3815 = vrot.slane %v3789, %v3814
        %v3817 = vadd.f32 %v3810, %v3815
        %s3818 = scalar_lea.vmem %s39, 16
        %v3819 = vld [vmem:[%s3818] sm:$0xf]
        %v3820 = vld [vmem:[%s3818 + $0x4] sm:$0xf]
        %v3821 = vld [vmem:[%s3818 + $0x8] sm:$0xf]
        %v3822 = vld [vmem:[%s3818 + $0xc] sm:$0xf]
        %s3823 = scalar_lea.vmem %s41, 1
        %v3824 = vld [vmem:[%s3823] sm:$0x1]
        %s3825 = scalar_lea.vmem %s43, 32
        %v3826 = vld [vmem:[%s3825] sm:$0xf]
        %v3827 = vld [vmem:[%s3825 + $0x4] sm:$0xf]
        %v3828 = vld [vmem:[%s3825 + $0x8] sm:$0xf]
        %v3829 = vld [vmem:[%s3825 + $0xc] sm:$0xf]
        %v3830 = vld [vmem:[%s3825 + $0x10] sm:$0xf]
        %v3831 = vld [vmem:[%s3825 + $0x14] sm:$0xf]
        %v3832 = vld [vmem:[%s3825 + $0x18] sm:$0xf]
        %v3833 = vld [vmem:[%s3825 + $0x1c] sm:$0xf]
        %s3834 = scalar_lea.vmem %s45, 1
        %v3835 = vld [vmem:[%s3834] sm:$0x1]
        %v3836 = vpack.c.bf16 %v3817, %v3817
        %v3838 = vlaneseq
        %v3839 = vshrl.u32 %v3838, 7
        %v3840 = vsub.s32 0, %v3839
        %v3841 = vrot.slane %v3824, %v3840
        %v3847 = vunpack.c.l.b16 %v3819
        %v3848 = vunpack.c.l.b16 %v3820
        %v3849 = vunpack.c.l.b16 %v3821
        %v3850 = vunpack.c.l.b16 %v3822
        %v3851 = vpack.c.b16 %v3848, %v3847
        %v3852 = vpack.c.b16 %v3850, %v3849
        %v3856 = vsel %vm1002, %v3836, 0
        %3858 = vmatprep.subr.bf16.mxu0 0
        %3859 = vmatpush1.bf16.msra.mxu0 %v3851
        %3860 = vmatprep.subr.bf16.mxu0 0
        %3861 = vmatpush1.bf16.msra.mxu0 %v3852
        %3862 = vmatprep.subr.bf16.mxu0 0
        %3863 = vmatpush1.bf16.msra.mxu0 0
        %3864 = vmatprep.subr.bf16.mxu0 0
        %3865 = vmatpush1.bf16.msra.mxu0 0
        %3866 = vmatprep.subr.bf16.mxu0 0
        %3867 = vmatpush1.bf16.msra.mxu0 0
        %3868 = vmatprep.subr.bf16.mxu0 0
        %3869 = vmatpush1.bf16.msra.mxu0 0
        %3870 = vmatprep.subr.bf16.mxu0 0
        %3871 = vmatpush1.bf16.msra.mxu0 0
        %3872 = vmatprep.subr.bf16.mxu0 0
        %3873 = vmatpush1.bf16.msra.mxu0 0
        %3874 = vmatprep.subr.bf16.mxu0 0
        %3875 = vmatpush1.bf16.msra.mxu0 0
        %3876 = vmatprep.subr.bf16.mxu0 0
        %3877 = vmatpush1.bf16.msra.mxu0 0
        %3878 = vmatprep.subr.bf16.mxu0 0
        %3879 = vmatpush1.bf16.msra.mxu0 0
        %3880 = vmatprep.subr.bf16.mxu0 0
        %3881 = vmatpush1.bf16.msra.mxu0 0
        %3882 = vmatprep.subr.bf16.mxu0 0
        %3883 = vmatpush1.bf16.msra.mxu0 0
        %3884 = vmatprep.subr.bf16.mxu0 0
        %3885 = vmatpush1.bf16.msra.mxu0 0
        %3886 = vmatprep.subr.bf16.mxu0 0
        %3887 = vmatpush1.bf16.msra.mxu0 0
        %3888 = vmatprep.subr.bf16.mxu0 0
        %3889 = vmatpush1.bf16.msra.mxu0 0
        %3890 = vmatprep.mubr.bf16.mxu0 0
        %3891 = vmatmul.mubr.bf16.gmra.mrb[0].mxu0 %v3856
        %v3892 = vpop.f32.mrb[0].mxu0
        %v3893 = vadd.f32 %v3841, %v3892
        %v3894 = vpop.f32.mrb[0].mxu0
        %v3895 = vpop.f32.mrb[0].mxu0
        %v3896 = vpop.f32.mrb[0].mxu0
        %3897 = vdwg.mxu0
        %v3898 = vmax.f32 %v3893, 0.0
        %v3899 = vpack.c.bf16 %v3898, %v3898
        %v3901 = vlaneseq
        %v3902 = vshrl.u32 %v3901, 7
        %v3903 = vsub.s32 0, %v3902
        %v3904 = vrot.slane %v3835, %v3903
        %v3914 = vunpack.c.l.b16 %v3826
        %v3915 = vunpack.c.l.b16 %v3827
        %v3916 = vunpack.c.l.b16 %v3828
        %v3917 = vunpack.c.l.b16 %v3829
        %v3918 = vunpack.c.l.b16 %v3830
        %v3919 = vunpack.c.l.b16 %v3831
        %v3920 = vunpack.c.l.b16 %v3832
        %v3921 = vunpack.c.l.b16 %v3833
        %v3922 = vpack.c.b16 %v3915, %v3914
        %v3923 = vpack.c.b16 %v3917, %v3916
        %v3924 = vpack.c.b16 %v3919, %v3918
        %v3925 = vpack.c.b16 %v3921, %v3920
        %v3931 = vsel %vm2413, %v3899, 0
        %3933 = vmatprep.subr.bf16.mxu0 0
        %3934 = vmatpush1.bf16.msra.mxu0 %v3922
        %3935 = vmatprep.subr.bf16.mxu0 0
        %3936 = vmatpush1.bf16.msra.mxu0 %v3923
        %3937 = vmatprep.subr.bf16.mxu0 0
        %3938 = vmatpush1.bf16.msra.mxu0 %v3924
        %3939 = vmatprep.subr.bf16.mxu0 0
        %3940 = vmatpush1.bf16.msra.mxu0 %v3925
        %3941 = vmatprep.subr.bf16.mxu0 0
        %3942 = vmatpush1.bf16.msra.mxu0 0
        %3943 = vmatprep.subr.bf16.mxu0 0
        %3944 = vmatpush1.bf16.msra.mxu0 0
        %3945 = vmatprep.subr.bf16.mxu0 0
        %3946 = vmatpush1.bf16.msra.mxu0 0
        %3947 = vmatprep.subr.bf16.mxu0 0
        %3948 = vmatpush1.bf16.msra.mxu0 0
        %3949 = vmatprep.subr.bf16.mxu0 0
        %3950 = vmatpush1.bf16.msra.mxu0 0
        %3951 = vmatprep.subr.bf16.mxu0 0
        %3952 = vmatpush1.bf16.msra.mxu0 0
        %3953 = vmatprep.subr.bf16.mxu0 0
        %3954 = vmatpush1.bf16.msra.mxu0 0
        %3955 = vmatprep.subr.bf16.mxu0 0
        %3956 = vmatpush1.bf16.msra.mxu0 0
        %3957 = vmatprep.subr.bf16.mxu0 0
        %3958 = vmatpush1.bf16.msra.mxu0 0
        %3959 = vmatprep.subr.bf16.mxu0 0
        %3960 = vmatpush1.bf16.msra.mxu0 0
        %3961 = vmatprep.subr.bf16.mxu0 0
        %3962 = vmatpush1.bf16.msra.mxu0 0
        %3963 = vmatprep.subr.bf16.mxu0 0
        %3964 = vmatpush1.bf16.msra.mxu0 0
        %3965 = vmatprep.mubr.bf16.mxu0 0
        %3966 = vmatmul.mubr.bf16.gmra.mrb[0].mxu0 %v3931
        %v3967 = vpop.f32.mrb[0].mxu0
        %v3968 = vadd.f32 %v3904, %v3967
        %v3969 = vpop.f32.mrb[0].mxu0
        %v3970 = vpop.f32.mrb[0].mxu0
        %v3971 = vpop.f32.mrb[0].mxu0
        %3972 = vdwg.mxu0
        %s3973 = scalar_lea.vmem %s47, 1
        %v3974 = vld [vmem:[%s3973] sm:$0x1]
        %s3975 = scalar_lea.vmem %s49, 1
        %v3976 = vld [vmem:[%s3975] sm:$0x1]
        %v3977 = vadd.f32 %v3968, %v3817
        %v3978 = vsel %vm1002, %v3977, 0.0
        %3979 = vadd.xlane.f32.xlu0 %v3978
        %v3980 = vpop.xlane.xlu0 %3979
        %v3981 = vmul.f32 %v3980, %v1586
        %v3982 = vsub.f32 %v3977, %v3981
        %v3983 = vmul.f32 %v3982, %v3982
        %v3984 = vsel %vm1002, %v3983, 0.0
        %3985 = vadd.xlane.f32.xlu0 %v3984
        %v3986 = vpop.xlane.xlu0 %3985
        %v3987 = vmul.f32 %v3986, %v1586
        %v3988 = vadd.f32 %v3987, 1e-05
        %v3989 = vrsqrt.pop %v3988
        %v3990 = vmul.f32 %v3982, %v3989
        %v3992 = vlaneseq
        %v3993 = vshrl.u32 %v3992, 7
        %v3994 = vsub.s32 0, %v3993
        %v3995 = vrot.slane %v3974, %v3994
        %v3997 = vmul.f32 %v3990, %v3995
        %v3999 = vlaneseq
        %v4000 = vshrl.u32 %v3999, 7
        %v4001 = vsub.s32 0, %v4000
        %v4002 = vrot.slane %v3976, %v4001
        %v4004 = vadd.f32 %v3997, %v4002
        %v4005 = vld [vmem:[%s51] sm:$0xf]
        %v4006 = vld [vmem:[%s51 + $0x4] sm:$0xf]
        %v4007 = vld [vmem:[%s51 + $0x8] sm:$0xf]
        %v4008 = vld [vmem:[%s51 + $0xc] sm:$0x3]
        %v4009 = vpack.c.bf16 %v4004, %v4004
        %v4010 = vld [vmem:[%s53] sm:$0x1]
        %v4012 = vlaneseq
        %v4013 = vshrl.u32 %v4012, 7
        %v4014 = vsub.s32 0, %v4013
        %v4015 = vrot.slane %v4010, %v4014
        %v4021 = vunpack.c.l.b16 %v4005
        %v4022 = vunpack.c.l.b16 %v4006
        %v4023 = vunpack.c.l.b16 %v4007
        %v4024 = vunpack.c.l.b16 %v4008
        %v4025 = vpack.c.b16 %v4022, %v4021
        %v4026 = vpack.c.b16 %v4024, %v4023
        %v4028 = vsel %vm1002, %v4009, 0
        %v4031 = vsel %vm1002, %v4025, 0
        %v4034 = vsel %vm1002, %v4026, 0
        %4036 = vmatprep.subr.bf16.mxu0 0
        %4037 = vmatpush1.bf16.xpose.msra.mxu0 %v4031
        %4038 = vmatprep.subr.bf16.mxu0 0
        %4039 = vmatpush1.bf16.xpose.msra.mxu0 %v4034
        %4040 = vmatprep.subr.bf16.mxu0 0
        %4041 = vmatpush1.bf16.xpose.msra.mxu0 0
        %4042 = vmatprep.subr.bf16.mxu0 0
        %4043 = vmatpush1.bf16.xpose.msra.mxu0 0
        %4044 = vmatprep.subr.bf16.mxu0 0
        %4045 = vmatpush1.bf16.xpose.msra.mxu0 0
        %4046 = vmatprep.subr.bf16.mxu0 0
        %4047 = vmatpush1.bf16.xpose.msra.mxu0 0
        %4048 = vmatprep.subr.bf16.mxu0 0
        %4049 = vmatpush1.bf16.xpose.msra.mxu0 0
        %4050 = vmatprep.subr.bf16.mxu0 0
        %4051 = vmatpush1.bf16.xpose.msra.mxu0 0
        %4052 = vmatprep.subr.bf16.mxu0 0
        %4053 = vmatpush1.bf16.xpose.msra.mxu0 0
        %4054 = vmatprep.subr.bf16.mxu0 0
        %4055 = vmatpush1.bf16.xpose.msra.mxu0 0
        %4056 = vmatprep.subr.bf16.mxu0 0
        %4057 = vmatpush1.bf16.xpose.msra.mxu0 0
        %4058 = vmatprep.subr.bf16.mxu0 0
        %4059 = vmatpush1.bf16.xpose.msra.mxu0 0
        %4060 = vmatprep.subr.bf16.mxu0 0
        %4061 = vmatpush1.bf16.xpose.msra.mxu0 0
        %4062 = vmatprep.subr.bf16.mxu0 0
        %4063 = vmatpush1.bf16.xpose.msra.mxu0 0
        %4064 = vmatprep.subr.bf16.mxu0 0
        %4065 = vmatpush1.bf16.xpose.msra.mxu0 0
        %4066 = vmatprep.subr.bf16.mxu0 0
        %4067 = vmatpush1.bf16.xpose.msra.mxu0 0
        %4068 = vmatprep.mubr.bf16.mxu0 0
        %4069 = vmatmul.mubr.bf16.gmra.mrb[0].mxu0 %v4028
        %v4070 = vpop.f32.mrb[0].mxu0
        %v4071 = vadd.f32 %v4015, %v4070
        %v4072 = vpop.f32.mrb[0].mxu0
        %v4073 = vpop.f32.mrb[0].mxu0
        %v4074 = vpop.f32.mrb[0].mxu0
        %4075 = vdwg.mxu0
        %vm4076 = vcmask 228352
        %4077 = vst.msk [vmem:[%s944] sm:$0xff] %vm4076, %v4071
        %v4078 = vld [vmem:[%s55] sm:$0xff]
        %v4079 = vld [vmem:[%s55 + $0x8] sm:$0xff]
        %v4080 = vld [vmem:[%s55 + $0x10] sm:$0xff]
        %v4081 = vld [vmem:[%s55 + $0x18] sm:$0xf]
        %4083 = vset.pattern.permute.xlu0 0
        %4084 = vperm.xlu0 %4083, %v4078
        %v4085 = vpop.permute.xlu0 %4084
        %4088 = vset.pattern.permute.xlu0 0
        %4089 = vperm.xlu0 %4088, %v4079
        %v4090 = vpop.permute.xlu0 %4089
        %4093 = vset.pattern.permute.xlu0 0
        %4094 = vperm.xlu0 %4093, %v4080
        %v4095 = vpop.permute.xlu0 %4094
        %4098 = vset.pattern.permute.xlu0 0
        %4099 = vperm.xlu0 %4098, %v4081
        %v4100 = vpop.permute.xlu0 %4099
        %4102 = vmatprep.subr.bf16.mxu0 0
        %4103 = vmatpush1.bf16.xpose.msra.mxu0 %v4028
        %4104 = vmatprep.subr.bf16.mxu0 0
        %4105 = vmatpush1.bf16.xpose.msra.mxu0 0
        %4106 = vmatprep.subr.bf16.mxu0 0
        %4107 = vmatpush1.bf16.xpose.msra.mxu0 0
        %4108 = vmatprep.subr.bf16.mxu0 0
        %4109 = vmatpush1.bf16.xpose.msra.mxu0 0
        %4110 = vmatprep.subr.bf16.mxu0 0
        %4111 = vmatpush1.bf16.xpose.msra.mxu0 0
        %4112 = vmatprep.subr.bf16.mxu0 0
        %4113 = vmatpush1.bf16.xpose.msra.mxu0 0
        %4114 = vmatprep.subr.bf16.mxu0 0
        %4115 = vmatpush1.bf16.xpose.msra.mxu0 0
        %4116 = vmatprep.subr.bf16.mxu0 0
        %4117 = vmatpush1.bf16.xpose.msra.mxu0 0
        %4118 = vmatprep.subr.bf16.mxu0 0
        %4119 = vmatpush1.bf16.xpose.msra.mxu0 0
        %4120 = vmatprep.subr.bf16.mxu0 0
        %4121 = vmatpush1.bf16.xpose.msra.mxu0 0
        %4122 = vmatprep.subr.bf16.mxu0 0
        %4123 = vmatpush1.bf16.xpose.msra.mxu0 0
        %4124 = vmatprep.subr.bf16.mxu0 0
        %4125 = vmatpush1.bf16.xpose.msra.mxu0 0
        %4126 = vmatprep.subr.bf16.mxu0 0
        %4127 = vmatpush1.bf16.xpose.msra.mxu0 0
        %4128 = vmatprep.subr.bf16.mxu0 0
        %4129 = vmatpush1.bf16.xpose.msra.mxu0 0
        %4130 = vmatprep.subr.bf16.mxu0 0
        %4131 = vmatpush1.bf16.xpose.msra.mxu0 0
        %4132 = vmatprep.subr.bf16.mxu0 0
        %4133 = vmatpush1.bf16.xpose.msra.mxu0 0
        %4134 = vmatprep.mubr.bf16.mxu0 0
        %4135 = vmatmul.mubr.bf16.gmra.mrb[0].mxu0 %v4031
        %v4136 = vpop.f32.mrb[0].mxu0
        %v4137 = vadd.f32 %v4085, %v4136
        %v4138 = vpop.f32.mrb[0].mxu0
        %v4139 = vpop.f32.mrb[0].mxu0
        %v4140 = vadd.f32 %v4090, %v4139
        %v4141 = vpop.f32.mrb[0].mxu0
        %4142 = vmatprep.mubr.bf16.mxu0 0
        %4143 = vmatmul.mubr.bf16.gmra.mrb[0].mxu0 %v4034
        %v4144 = vpop.f32.mrb[0].mxu0
        %v4145 = vadd.f32 %v4095, %v4144
        %v4146 = vpop.f32.mrb[0].mxu0
        %v4147 = vpop.f32.mrb[0].mxu0
        %v4148 = vadd.f32 %v4100, %v4147
        %v4149 = vpop.f32.mrb[0].mxu0
        %4150 = vdwg.mxu0
        %v4151 = vsel %vm1055, %v4137, -inf
        %v4152 = vsel %vm1055, %v4140, -inf
        %v4153 = vsel %vm1055, %v4145, -inf
        %vm4154 = vcmask 60416
        %v4155 = vsel %vm4154, %v4148, -inf
        %v4156 = vmax.f32 %v4151, %v4152
        %v4157 = vmax.f32 %v4153, %v4155
        %v4158 = vmax.f32 %v4156, %v4157
        %v4159 = vrot.slane %v4158, 4
        %v4160 = vmax.f32 %v4158, %v4159
        %v4161 = vrot.slane %v4160, 2
        %v4162 = vmax.f32 %v4160, %v4161
        %v4163 = vrot.slane %v4162, 1
        %v4164 = vmax.f32 %v4162, %v4163
        %v4165 = vsub.f32 %v4137, %v4164
        %v4166 = vsub.f32 %v4140, %v4164
        %v4167 = vsub.f32 %v4145, %v4164
        %v4168 = vsub.f32 %v4148, %v4164
        %v4169 = vmul.f32 %v4165, 1.442695
        %v4170 = vpow.pop %v4169
        %v4171 = vmul.f32 %v4166, 1.442695
        %v4172 = vpow.pop %v4171
        %v4173 = vmul.f32 %v4167, 1.442695
        %v4174 = vpow.pop %v4173
        %v4175 = vmul.f32 %v4168, 1.442695
        %v4176 = vpow.pop %v4175
        %v4177 = vsel %vm1055, %v4170, 0.0
        %v4178 = vsel %vm1055, %v4172, 0.0
        %v4179 = vadd.f32 %v4177, %v4178
        %v4180 = vsel %vm1055, %v4174, 0.0
        %v4181 = vadd.f32 %v4179, %v4180
        %v4182 = vsel %vm4154, %v4176, 0.0
        %v4183 = vadd.f32 %v4181, %v4182
        %v4184 = vrot.slane %v4183, 4
        %v4185 = vadd.f32 %v4183, %v4184
        %v4186 = vrot.slane %v4185, 2
        %v4187 = vadd.f32 %v4185, %v4186
        %v4188 = vrot.slane %v4187, 1
        %v4189 = vadd.f32 %v4187, %v4188
        %v4190 = vlog2.pop %v4189
        %v4191 = vmul.f32 %v4190, 0.6931472
        %v4192 = vadd.f32 %v4191, %v4164
        %v4193 = vlaneseq
        %v4194 = vshrl.u32 %v4193, 7
        %v4195 = vadd.s32 %v4194, 8
        %v4196 = vadd.s32 %v4194, 16
        %v4197 = vadd.s32 %v4194, 24
        %v4198 = vlaneseq
        %v4199 = vshrl.u32 %v4198, 7
        %v4200 = vsub.s32 0, %v4199
        %v4201 = vrot.slane %v977, %v4200
        %vm4202 = vcmp.eq.s32.totalorder %v4194, %v4201
        %vm4203 = vcmp.eq.s32.totalorder %v4195, %v4201
        %vm4204 = vcmp.eq.s32.totalorder %v4196, %v4201
        %vm4205 = vcmp.eq.s32.totalorder %v4197, %v4201
        %v4206 = vsel %vm4202, %v4137, 0.0
        %v4207 = vsel %vm4203, %v4140, 0.0
        %v4208 = vsel %vm4204, %v4145, 0.0
        %v4209 = vsel %vm4205, %v4148, 0.0
        %v4210 = vsel %vm1055, %v4206, 0.0
        %v4211 = vsel %vm1055, %v4207, 0.0
        %v4212 = vadd.f32 %v4210, %v4211
        %v4213 = vsel %vm1055, %v4208, 0.0
        %v4214 = vadd.f32 %v4212, %v4213
        %v4215 = vsel %vm4154, %v4209, 0.0
        %v4216 = vadd.f32 %v4214, %v4215
        %v4217 = vrot.slane %v4216, 4
        %v4218 = vadd.f32 %v4216, %v4217
        %v4219 = vrot.slane %v4218, 2
        %v4220 = vadd.f32 %v4218, %v4219
        %v4221 = vrot.slane %v4220, 1
        %v4222 = vadd.f32 %v4220, %v4221
        %vm4223 = vcmp.eq.s32.totalorder %v977, 0
        %v4224 = vsub.f32 %v4192, %v4222
        %v4225 = vsel %vm4223, 0.0, %v4224
        %vm4226 = vcmask 57344
        %4227 = vst.msk [vmem:[%s971] sm:$0x1] %vm4226, %v4225
        %s4228 = sand.u32 %s695, 1
        %s4229 = scalar_lea.sflag [#allocation3], %s4228
        %s4230 = sand.u32 %s695, 1
        %s4231 = smul.addr %s4230, 8
        %s4232 = scalar_lea.vmem [#allocation2], %s4231
        %p4233 = scmp.lt.s32.totalorder %s74, 1
        %s4234 = scalar_select %p4233, %s74, 1
        %s4235 = scalar_lea.vmem %s59, %s4234
        // Predicated region
        $region133: #{transformer_forward.3} parent=131 // pred_check
          %p4236 = pneg %p705
        $region134: #{transformer_forward.3} parent=131 // pred_check_branch
          %4238 = sbr.rel (%p4236) target = $region136
        $region135: #{transformer_forward.3} parent=131 // pred_region
          %s4240 = ssub.s32 128, 128
          %4241 = vsyncadd %s4229, %s4240
          %s4242 = smul.addr %s74, 128
          %s4243 = scalar_lea.hbm %s57, %s4242
          %s4245 = sshll.u32 %s4232, 4
          %s4246 = int_to_ptr.vmem [resolvable:$true] %s4245
          %4248 = dma.vmem_to_hbm [thread:$0]  %s4246, 128, %s4243, %s4229
        $region136: #{transformer_forward.3} parent=131 // pred_fallthru
          _
        // Predicated region
        $region137: #{transformer_forward.3} parent=131 // pred_check
          %p4249 = pneg %p731
        $region138: #{transformer_forward.3} parent=131 // pred_check_branch
          %4251 = sbr.rel (%p4249) target = $region140
        $region139: #{transformer_forward.3} parent=131 // pred_region
          _
        $region140: #{transformer_forward.3} parent=131 // pred_fallthru
          _
      $region132: #{transformer_forward.3} parent=5 // pred_fallthru
        _
      %p4252 = scmp.le.s32.totalorder 2, %s69
      // Predicated region
      $region141: #{transformer_forward.3} parent=5 // pred_check
        %p4253 = pneg %p4252
      $region142: #{transformer_forward.3} parent=5 // pred_check_branch
        %4255 = sbr.rel (%p4253) target = $region144
      $region143: #{transformer_forward.3} parent=5 // pred_region
        %s4256 = ssub.s32 %s69, 2
        // Predicated region
        $region145: #{transformer_forward.3} parent=143 // pred_check
          %p4257 = pneg %p711
        $region146: #{transformer_forward.3} parent=143 // pred_check_branch
          %4259 = sbr.rel (%p4257) target = $region148
        $region147: #{transformer_forward.3} parent=143 // pred_region
          %s4260 = sand.u32 %s696, 1
          %s4261 = scalar_lea.sflag [#allocation3], %s4260
          %s4262 = sand.u32 %s696, 1
          %s4263 = smul.addr %s4262, 8
          %s4264 = scalar_lea.vmem [#allocation2], %s4263
          %4265 = dma.done %s4261, 128
        $region148: #{transformer_forward.3} parent=143 // pred_fallthru
          _
        // Predicated region
        $region149: #{transformer_forward.3} parent=143 // pred_check
          %p4266 = pneg %p737
        $region150: #{transformer_forward.3} parent=143 // pred_check_branch
          %4268 = sbr.rel (%p4266) target = $region152
        $region151: #{transformer_forward.3} parent=143 // pred_region
          %p4269 = scmp.lt.s32.totalorder %s75, 1
          %s4270 = scalar_select %p4269, %s75, 1
          %s4271 = scalar_lea.vmem %s59, %s4270
        $region152: #{transformer_forward.3} parent=143 // pred_fallthru
          _
      $region144: #{transformer_forward.3} parent=5 // pred_fallthru
        _
    $region6: #{transformer_forward.3} parent=1 // loop_footer
      %s73 = sadd.s32 1, %s69
    $region7: #{transformer_forward.3} parent=1 // loop_footer_branch
      %68 = sbr.rel target = $region3
    $region8: #{transformer_forward.3} parent=1 // loop_exit
      _
    %4272 = vsyncpa [#allocation3], 1
    %s4273 = scalar_lea.sflag [#allocation3], 1
    %4274 = vsyncpa %s4273, 1

</llo_original>
